<compile_context>
chip_gen: v7x
topology: tpu7x:2x2x1
jax: 0.10.0
libtpu: 0.0.40
codegen_flags: <defaults>
</compile_context>

<pallas_src>
import jax
import jax.numpy as jnp
from jax.experimental import pallas as pl
from jax.experimental.pallas import tpu as pltpu

C = 64                      # fixed by the module definition (Conv2d(64, 64, 3, 1, 1))
_ACT_DTYPE = jnp.bfloat16   # staging / MXU operand dtype


def _pick_nb(n, h, w):
    """Largest divisor of n such that NB*H*W stays near/over 256 MXU rows."""
    target = max(1, -(-256 // (h * w)))
    best = 1
    for d in range(1, n + 1):
        if n % d == 0 and d <= target:
            best = d
    return best


def _basic_group_kernel(x_ref, w_ref, b_ref, o_ref, pad_a, pad_b):
    """x_ref:  (NB, H, W, C)          f32
       w_ref:  (4, 3, 3*C, C)         bf16   (conv, ky, kx*Cin, Cout)
       b_ref:  (4, 1, C)              f32
       o_ref:  (NB, H, W, C)          f32
       pad_a/pad_b: (NB, H+2, W+2, C) bf16 VMEM ping-pong staging buffers."""
    NB, H, W, _ = x_ref.shape
    M = NB * H * W

    # Zero only the 1-px halo border of both staging buffers.  The interiors
    # are always fully overwritten before being read, so no full-buffer zeroing.
    # Done every grid step (not gated on program_id == 0) so the kernel stays
    # correct under megacore grid splits (scratch is per-core).
    for pad in (pad_a, pad_b):
        pad[:, 0:1, :, :] = jnp.zeros((NB, 1, W + 2, C), _ACT_DTYPE)
        pad[:, H + 1:H + 2, :, :] = jnp.zeros((NB, 1, W + 2, C), _ACT_DTYPE)
        pad[:, :, 0:1, :] = jnp.zeros((NB, H + 2, 1, C), _ACT_DTYPE)
        pad[:, :, W + 1:W + 2, :] = jnp.zeros((NB, H + 2, 1, C), _ACT_DTYPE)

    x = x_ref[...]  # (NB, H, W, C) f32, kept live for the residual add

    def conv(pad_src, idx):
        """3x3 SAME conv reading the padded (bf16) interior of pad_src.
        Returns (M, C) f32 pre-activation (bias already added).
        3 matmuls with K = 3*C = 192, M = NB*H*W, bf16 operands, f32 accum."""
        acc = jnp.zeros((M, C), jnp.float32)
        for ky in range(3):
            patch = jnp.concatenate(
                [pad_src[:, ky:ky + H, kx:kx + W, :] for kx in range(3)],
                axis=-1).reshape(M, 3 * C)                 # bf16 (M, 192)
            acc = acc + jnp.dot(patch, w_ref[idx, ky],
                                preferred_element_type=jnp.float32)
        return acc + b_ref[idx]  # (1, C) broadcasts over rows

    # relu(input) staged (cast to bf16 once) straight into pad A's interior.
    pad_a[:, 1:H + 1, 1:W + 1, :] = jnp.maximum(x, 0.0).astype(_ACT_DTYPE)

    # Block 1: relu->conv1->relu->conv2 ; Block 2: relu->conv3->relu->conv4.
    # Each conv's epilogue writes relu(result) straight into the other buffer.
    h = conv(pad_a, 0)
    pad_b[:, 1:H + 1, 1:W + 1, :] = (
        jnp.maximum(h, 0.0).reshape(NB, H, W, C).astype(_ACT_DTYPE))
    h = conv(pad_b, 1)
    pad_a[:, 1:H + 1, 1:W + 1, :] = (
        jnp.maximum(h, 0.0).reshape(NB, H, W, C).astype(_ACT_DTYPE))
    h = conv(pad_a, 2)
    pad_b[:, 1:H + 1, 1:W + 1, :] = (
        jnp.maximum(h, 0.0).reshape(NB, H, W, C).astype(_ACT_DTYPE))
    h = conv(pad_b, 3)

    # Residual add with the (f32) group input, final store.
    o_ref[...] = (h.reshape(NB, H, W, C) + x).astype(o_ref.dtype)


@jax.jit
def basic_group(x_nchw, weights, biases):
    """x_nchw: (N, 64, H, W). weights: list of 4 (3,3,64,64) HWIO arrays.
    biases: list of 4 (64,) arrays. Returns (N, 64, H, W)."""
    N, Cin, H, W = x_nchw.shape
    assert Cin == C
    x = jnp.transpose(x_nchw, (0, 2, 3, 1)).astype(jnp.float32)  # NCHW -> NHWC

    # Pack weights as (4, 3, 3*C, C): kx taps concatenated into the K dim
    # (kx-major, cin-minor), matching the kx-concatenated patch in the kernel.
    w_all = jnp.stack(
        [w.astype(jnp.float32).reshape(3, 3 * C, C) for w in weights]
    ).astype(_ACT_DTYPE)                                      # (4, 3, 192, 64)
    b_all = jnp.stack(
        [b.astype(jnp.float32).reshape(1, C) for b in biases])  # (4, 1, 64)

    NB = _pick_nb(N, H, W)
    grid = (N // NB,)

    # Advisory cost hint: 4 convs, each 2*M*K*N flops with K = 9*C.
    flops = 4 * 2 * N * H * W * (9 * C) * C
    bytes_accessed = (N * H * W * C * 4) * 2 + w_all.size * 2 + b_all.size * 4

    out = pl.pallas_call(
        _basic_group_kernel,
        out_shape=jax.ShapeDtypeStruct((N, H, W, C), jnp.float32),
        grid_spec=pltpu.PrefetchScalarGridSpec(
            num_scalar_prefetch=0,
            grid=grid,
            in_specs=[
                pl.BlockSpec((NB, H, W, C), lambda n: (n, 0, 0, 0)),
                pl.BlockSpec((4, 3, 3 * C, C), lambda n: (0, 0, 0, 0)),
                pl.BlockSpec((4, 1, C), lambda n: (0, 0, 0)),
            ],
            out_specs=pl.BlockSpec((NB, H, W, C), lambda n: (n, 0, 0, 0)),
            scratch_shapes=[
                pltpu.VMEM((NB, H + 2, W + 2, C), _ACT_DTYPE),  # ping
                pltpu.VMEM((NB, H + 2, W + 2, C), _ACT_DTYPE),  # pong
            ],
        ),
        compiler_params=pltpu.CompilerParams(
            dimension_semantics=("parallel",),
            vmem_limit_bytes=32 * 1024 * 1024,
        ),
        cost_estimate=pl.CostEstimate(
            flops=flops, transcendentals=0, bytes_accessed=bytes_accessed),
    )(x, w_all, b_all)

    return jnp.transpose(out, (0, 3, 1, 2))  # NHWC -> NCHW


def _reference(x_nchw, weights, biases):
    """Pure-JAX f32 reference (lax.conv) of BasicGroup forward."""
    x = jnp.transpose(x_nchw, (0, 2, 3, 1))

    def conv(h, w, b):
        y = jax.lax.conv_general_dilated(
            h, w, window_strides=(1, 1), padding="SAME",
            dimension_numbers=("NHWC", "HWIO", "NHWC"))
        return y + b[None, None, None, :]

    h = x
    for i in range(4):
        h = conv(jnp.maximum(h, 0.0), weights[i], biases[i])
    out = h + x
    return jnp.transpose(out, (0, 3, 1, 2))


if __name__ == "__main__":
    key = jax.random.PRNGKey(0)
    N, H, W = 2, 8, 8

    kx_, *kws = jax.random.split(key, 9)
    x = jax.random.normal(kx_, (N, C, H, W), jnp.float32)

    # 4 convolutions total (2 per BasicBlock), HWIO layout, deterministic init.
    weights = [0.05 * jax.random.normal(kws[2 * i], (3, 3, C, C), jnp.float32)
               for i in range(4)]
    biases = [0.05 * jax.random.normal(kws[2 * i + 1], (C,), jnp.float32)
              for i in range(4)]

    out = basic_group(x, weights, biases)
    out = jax.block_until_ready(out)

    ref = _reference(x, weights, biases)
    assert out.shape == (N, C, H, W)
    max_err = float(jnp.max(jnp.abs(out - ref)))
    # bf16 MXU operands / bf16 staged activations (f32 accumulation) vs f32
    # reference -> relaxed tolerance.
    assert jnp.allclose(out, ref, rtol=3e-2, atol=3e-2), (
        f"mismatch vs reference (max abs err {max_err})")

    print("KERNEL_OK")
</pallas_src>

<mosaic_0001>
module attributes {stable_mosaic.version = 11 : i64} {
  func.func @_basic_group_kernel(%arg0: i32, %arg1: memref<2x8x8x64xf32, #tpu.memory_space<vmem>>, %arg2: memref<4x3x192x64xbf16, #tpu.memory_space<vmem>>, %arg3: memref<4x1x64xf32, #tpu.memory_space<vmem>>, %arg4: memref<2x8x8x64xf32, #tpu.memory_space<vmem>>, %arg5: memref<2x10x10x64xbf16, #tpu.memory_space<vmem>>, %arg6: memref<2x10x10x64xbf16, #tpu.memory_space<vmem>>) attributes {dimension_semantics = [#tpu.dimension_semantics<parallel>], iteration_bounds = array<i64: 1>, scalar_prefetch = 0 : i64, scratch_operands = 2 : i64, tpu.core_type = #tpu.core_type<tc>, window_params = [{transform_indices = @transform_0, window_bounds = array<i64: 2, 8, 8, 64>}, {pipeline_mode = #tpu.pipeline_mode<synchronous>, transform_indices = @transform_1, window_bounds = array<i64: 4, 3, 192, 64>}, {pipeline_mode = #tpu.pipeline_mode<synchronous>, transform_indices = @transform_2, window_bounds = array<i64: 4, 1, 64>}, {transform_indices = @transform_3, window_bounds = array<i64: 2, 8, 8, 64>}]} {
    %cst = arith.constant 0.000000e+00 : bf16
    %0 = vector.broadcast %cst : bf16 to vector<2x1x10x64xbf16>
    %c0 = arith.constant 0 : index
    %c0_0 = arith.constant 0 : index
    %c0_1 = arith.constant 0 : index
    %c0_2 = arith.constant 0 : index
    %1 = vector.load %arg5[%c0, %c0_0, %c0_1, %c0_2] : memref<2x10x10x64xbf16, #tpu.memory_space<vmem>>, vector<2x1x10x64xbf16>
    tpu.vector_store %arg5[%c0, %c0_0, %c0_1, %c0_2], %0 {strides = array<i32>} : memref<2x10x10x64xbf16, #tpu.memory_space<vmem>>, vector<2x1x10x64xbf16>,
    %cst_3 = arith.constant 0.000000e+00 : bf16
    %2 = vector.broadcast %cst_3 : bf16 to vector<2x1x10x64xbf16>
    %c0_4 = arith.constant 0 : index
    %c9 = arith.constant 9 : index
    %c0_5 = arith.constant 0 : index
    %c0_6 = arith.constant 0 : index
    %3 = vector.load %arg5[%c0_4, %c9, %c0_5, %c0_6] : memref<2x10x10x64xbf16, #tpu.memory_space<vmem>>, vector<2x1x10x64xbf16>
    tpu.vector_store %arg5[%c0_4, %c9, %c0_5, %c0_6], %2 {strides = array<i32>} : memref<2x10x10x64xbf16, #tpu.memory_space<vmem>>, vector<2x1x10x64xbf16>,
    %cst_7 = arith.constant 0.000000e+00 : bf16
    %4 = vector.broadcast %cst_7 : bf16 to vector<2x10x1x64xbf16>
    %c0_8 = arith.constant 0 : index
    %c0_9 = arith.constant 0 : index
    %c0_10 = arith.constant 0 : index
    %c0_11 = arith.constant 0 : index
    %5 = vector.load %arg5[%c0_8, %c0_9, %c0_10, %c0_11] : memref<2x10x10x64xbf16, #tpu.memory_space<vmem>>, vector<2x10x1x64xbf16>
    tpu.vector_store %arg5[%c0_8, %c0_9, %c0_10, %c0_11], %4 {strides = array<i32>} : memref<2x10x10x64xbf16, #tpu.memory_space<vmem>>, vector<2x10x1x64xbf16>,
    %cst_12 = arith.constant 0.000000e+00 : bf16
    %6 = vector.broadcast %cst_12 : bf16 to vector<2x10x1x64xbf16>
    %c0_13 = arith.constant 0 : index
    %c0_14 = arith.constant 0 : index
    %c9_15 = arith.constant 9 : index
    %c0_16 = arith.constant 0 : index
    %7 = vector.load %arg5[%c0_13, %c0_14, %c9_15, %c0_16] : memref<2x10x10x64xbf16, #tpu.memory_space<vmem>>, vector<2x10x1x64xbf16>
    tpu.vector_store %arg5[%c0_13, %c0_14, %c9_15, %c0_16], %6 {strides = array<i32>} : memref<2x10x10x64xbf16, #tpu.memory_space<vmem>>, vector<2x10x1x64xbf16>,
    %cst_17 = arith.constant 0.000000e+00 : bf16
    %8 = vector.broadcast %cst_17 : bf16 to vector<2x1x10x64xbf16>
    %c0_18 = arith.constant 0 : index
    %c0_19 = arith.constant 0 : index
    %c0_20 = arith.constant 0 : index
    %c0_21 = arith.constant 0 : index
    %9 = vector.load %arg6[%c0_18, %c0_19, %c0_20, %c0_21] : memref<2x10x10x64xbf16, #tpu.memory_space<vmem>>, vector<2x1x10x64xbf16>
    tpu.vector_store %arg6[%c0_18, %c0_19, %c0_20, %c0_21], %8 {strides = array<i32>} : memref<2x10x10x64xbf16, #tpu.memory_space<vmem>>, vector<2x1x10x64xbf16>,
    %cst_22 = arith.constant 0.000000e+00 : bf16
    %10 = vector.broadcast %cst_22 : bf16 to vector<2x1x10x64xbf16>
    %c0_23 = arith.constant 0 : index
    %c9_24 = arith.constant 9 : index
    %c0_25 = arith.constant 0 : index
    %c0_26 = arith.constant 0 : index
    %11 = vector.load %arg6[%c0_23, %c9_24, %c0_25, %c0_26] : memref<2x10x10x64xbf16, #tpu.memory_space<vmem>>, vector<2x1x10x64xbf16>
    tpu.vector_store %arg6[%c0_23, %c9_24, %c0_25, %c0_26], %10 {strides = array<i32>} : memref<2x10x10x64xbf16, #tpu.memory_space<vmem>>, vector<2x1x10x64xbf16>,
    %cst_27 = arith.constant 0.000000e+00 : bf16
    %12 = vector.broadcast %cst_27 : bf16 to vector<2x10x1x64xbf16>
    %c0_28 = arith.constant 0 : index
    %c0_29 = arith.constant 0 : index
    %c0_30 = arith.constant 0 : index
    %c0_31 = arith.constant 0 : index
    %13 = vector.load %arg6[%c0_28, %c0_29, %c0_30, %c0_31] : memref<2x10x10x64xbf16, #tpu.memory_space<vmem>>, vector<2x10x1x64xbf16>
    tpu.vector_store %arg6[%c0_28, %c0_29, %c0_30, %c0_31], %12 {strides = array<i32>} : memref<2x10x10x64xbf16, #tpu.memory_space<vmem>>, vector<2x10x1x64xbf16>,
    %cst_32 = arith.constant 0.000000e+00 : bf16
    %14 = vector.broadcast %cst_32 : bf16 to vector<2x10x1x64xbf16>
    %c0_33 = arith.constant 0 : index
    %c0_34 = arith.constant 0 : index
    %c9_35 = arith.constant 9 : index
    %c0_36 = arith.constant 0 : index
    %15 = vector.load %arg6[%c0_33, %c0_34, %c9_35, %c0_36] : memref<2x10x10x64xbf16, #tpu.memory_space<vmem>>, vector<2x10x1x64xbf16>
    tpu.vector_store %arg6[%c0_33, %c0_34, %c9_35, %c0_36], %14 {strides = array<i32>} : memref<2x10x10x64xbf16, #tpu.memory_space<vmem>>, vector<2x10x1x64xbf16>,
    %c0_37 = arith.constant 0 : index
    %c0_38 = arith.constant 0 : index
    %c0_39 = arith.constant 0 : index
    %c0_40 = arith.constant 0 : index
    %16 = vector.load %arg1[%c0_37, %c0_38, %c0_39, %c0_40] : memref<2x8x8x64xf32, #tpu.memory_space<vmem>>, vector<2x8x8x64xf32>
    %cst_41 = arith.constant 0.000000e+00 : f32
    %17 = vector.broadcast %cst_41 : f32 to vector<2x8x8x64xf32>
    %18 = arith.maximumf %16, %17 : vector<2x8x8x64xf32>
    %19 = arith.truncf %18 : vector<2x8x8x64xf32> to vector<2x8x8x64xbf16>
    %c0_42 = arith.constant 0 : index
    %c1 = arith.constant 1 : index
    %c1_43 = arith.constant 1 : index
    %c0_44 = arith.constant 0 : index
    %20 = vector.load %arg5[%c0_42, %c1, %c1_43, %c0_44] : memref<2x10x10x64xbf16, #tpu.memory_space<vmem>>, vector<2x8x8x64xbf16>
    tpu.vector_store %arg5[%c0_42, %c1, %c1_43, %c0_44], %19 {strides = array<i32>} : memref<2x10x10x64xbf16, #tpu.memory_space<vmem>>, vector<2x8x8x64xbf16>,
    %cst_45 = arith.constant 0.000000e+00 : f32
    %21 = vector.broadcast %cst_45 : f32 to vector<128x64xf32>
    %c0_46 = arith.constant 0 : index
    %c0_47 = arith.constant 0 : index
    %c0_48 = arith.constant 0 : index
    %c0_49 = arith.constant 0 : index
    %22 = vector.load %arg5[%c0_46, %c0_47, %c0_48, %c0_49] : memref<2x10x10x64xbf16, #tpu.memory_space<vmem>>, vector<2x8x8x64xbf16>
    %c0_50 = arith.constant 0 : index
    %c0_51 = arith.constant 0 : index
    %c1_52 = arith.constant 1 : index
    %c0_53 = arith.constant 0 : index
    %23 = vector.load %arg5[%c0_50, %c0_51, %c1_52, %c0_53] : memref<2x10x10x64xbf16, #tpu.memory_space<vmem>>, vector<2x8x8x64xbf16>
    %c0_54 = arith.constant 0 : index
    %c0_55 = arith.constant 0 : index
    %c2 = arith.constant 2 : index
    %c0_56 = arith.constant 0 : index
    %24 = vector.load %arg5[%c0_54, %c0_55, %c2, %c0_56] : memref<2x10x10x64xbf16, #tpu.memory_space<vmem>>, vector<2x8x8x64xbf16>
    %25 = tpu.concatenate %22, %23, %24 in 3 : vector<2x8x8x64xbf16>, vector<2x8x8x64xbf16>, vector<2x8x8x64xbf16> -> vector<2x8x8x192xbf16>
    %26 = vector.shape_cast %25 : vector<2x8x8x192xbf16> to vector<128x192xbf16>
    %c0_57 = arith.constant 0 : index
    %c0_58 = arith.constant 0 : index
    %c0_59 = arith.constant 0 : index
    %c0_60 = arith.constant 0 : index
    %27 = vector.load %arg2[%c0_57, %c0_58, %c0_59, %c0_60] : memref<4x3x192x64xbf16, #tpu.memory_space<vmem>>, vector<1x1x192x64xbf16>
    %28 = vector.shape_cast %27 : vector<1x1x192x64xbf16> to vector<192x64xbf16>
    %cst_61 = arith.constant dense<0.000000e+00> : vector<128x64xf32>
    %29 = tpu.matmul %26, %28, %cst_61 {dimension_numbers = #tpu.dot_dimension_numbers<[1], [0], [0], [1], [0, 0, 1, 1], [], []>} : vector<128x192xbf16>, vector<192x64xbf16>, vector<128x64xf32> -> vector<128x64xf32>
    %30 = arith.addf %21, %29 : vector<128x64xf32>
    %c0_62 = arith.constant 0 : index
    %c1_63 = arith.constant 1 : index
    %c0_64 = arith.constant 0 : index
    %c0_65 = arith.constant 0 : index
    %31 = vector.load %arg5[%c0_62, %c1_63, %c0_64, %c0_65] : memref<2x10x10x64xbf16, #tpu.memory_space<vmem>>, vector<2x8x8x64xbf16>
    %c0_66 = arith.constant 0 : index
    %c1_67 = arith.constant 1 : index
    %c1_68 = arith.constant 1 : index
    %c0_69 = arith.constant 0 : index
    %32 = vector.load %arg5[%c0_66, %c1_67, %c1_68, %c0_69] : memref<2x10x10x64xbf16, #tpu.memory_space<vmem>>, vector<2x8x8x64xbf16>
    %c0_70 = arith.constant 0 : index
    %c1_71 = arith.constant 1 : index
    %c2_72 = arith.constant 2 : index
    %c0_73 = arith.constant 0 : index
    %33 = vector.load %arg5[%c0_70, %c1_71, %c2_72, %c0_73] : memref<2x10x10x64xbf16, #tpu.memory_space<vmem>>, vector<2x8x8x64xbf16>
    %34 = tpu.concatenate %31, %32, %33 in 3 : vector<2x8x8x64xbf16>, vector<2x8x8x64xbf16>, vector<2x8x8x64xbf16> -> vector<2x8x8x192xbf16>
    %35 = vector.shape_cast %34 : vector<2x8x8x192xbf16> to vector<128x192xbf16>
    %c0_74 = arith.constant 0 : index
    %c1_75 = arith.constant 1 : index
    %c0_76 = arith.constant 0 : index
    %c0_77 = arith.constant 0 : index
    %36 = vector.load %arg2[%c0_74, %c1_75, %c0_76, %c0_77] : memref<4x3x192x64xbf16, #tpu.memory_space<vmem>>, vector<1x1x192x64xbf16>
    %37 = vector.shape_cast %36 : vector<1x1x192x64xbf16> to vector<192x64xbf16>
    %cst_78 = arith.constant dense<0.000000e+00> : vector<128x64xf32>
    %38 = tpu.matmul %35, %37, %cst_78 {dimension_numbers = #tpu.dot_dimension_numbers<[1], [0], [0], [1], [0, 0, 1, 1], [], []>} : vector<128x192xbf16>, vector<192x64xbf16>, vector<128x64xf32> -> vector<128x64xf32>
    %39 = arith.addf %30, %38 : vector<128x64xf32>
    %c0_79 = arith.constant 0 : index
    %c2_80 = arith.constant 2 : index
    %c0_81 = arith.constant 0 : index
    %c0_82 = arith.constant 0 : index
    %40 = vector.load %arg5[%c0_79, %c2_80, %c0_81, %c0_82] : memref<2x10x10x64xbf16, #tpu.memory_space<vmem>>, vector<2x8x8x64xbf16>
    %c0_83 = arith.constant 0 : index
    %c2_84 = arith.constant 2 : index
    %c1_85 = arith.constant 1 : index
    %c0_86 = arith.constant 0 : index
    %41 = vector.load %arg5[%c0_83, %c2_84, %c1_85, %c0_86] : memref<2x10x10x64xbf16, #tpu.memory_space<vmem>>, vector<2x8x8x64xbf16>
    %c0_87 = arith.constant 0 : index
    %c2_88 = arith.constant 2 : index
    %c2_89 = arith.constant 2 : index
    %c0_90 = arith.constant 0 : index
    %42 = vector.load %arg5[%c0_87, %c2_88, %c2_89, %c0_90] : memref<2x10x10x64xbf16, #tpu.memory_space<vmem>>, vector<2x8x8x64xbf16>
    %43 = tpu.concatenate %40, %41, %42 in 3 : vector<2x8x8x64xbf16>, vector<2x8x8x64xbf16>, vector<2x8x8x64xbf16> -> vector<2x8x8x192xbf16>
    %44 = vector.shape_cast %43 : vector<2x8x8x192xbf16> to vector<128x192xbf16>
    %c0_91 = arith.constant 0 : index
    %c2_92 = arith.constant 2 : index
    %c0_93 = arith.constant 0 : index
    %c0_94 = arith.constant 0 : index
    %45 = vector.load %arg2[%c0_91, %c2_92, %c0_93, %c0_94] : memref<4x3x192x64xbf16, #tpu.memory_space<vmem>>, vector<1x1x192x64xbf16>
    %46 = vector.shape_cast %45 : vector<1x1x192x64xbf16> to vector<192x64xbf16>
    %cst_95 = arith.constant dense<0.000000e+00> : vector<128x64xf32>
    %47 = tpu.matmul %44, %46, %cst_95 {dimension_numbers = #tpu.dot_dimension_numbers<[1], [0], [0], [1], [0, 0, 1, 1], [], []>} : vector<128x192xbf16>, vector<192x64xbf16>, vector<128x64xf32> -> vector<128x64xf32>
    %48 = arith.addf %39, %47 : vector<128x64xf32>
    %c0_96 = arith.constant 0 : index
    %c0_97 = arith.constant 0 : index
    %c0_98 = arith.constant 0 : index
    %49 = vector.load %arg3[%c0_96, %c0_97, %c0_98] : memref<4x1x64xf32, #tpu.memory_space<vmem>>, vector<1x1x64xf32>
    %50 = vector.shape_cast %49 : vector<1x1x64xf32> to vector<1x64xf32>
    %51 = vector.broadcast %50 : vector<1x64xf32> to vector<128x64xf32>
    %52 = arith.addf %48, %51 : vector<128x64xf32>
    %cst_99 = arith.constant 0.000000e+00 : f32
    %53 = vector.broadcast %cst_99 : f32 to vector<128x64xf32>
    %54 = arith.maximumf %52, %53 : vector<128x64xf32>
    %55 = vector.shape_cast %54 : vector<128x64xf32> to vector<2x8x8x64xf32>
    %56 = arith.truncf %55 : vector<2x8x8x64xf32> to vector<2x8x8x64xbf16>
    %c0_100 = arith.constant 0 : index
    %c1_101 = arith.constant 1 : index
    %c1_102 = arith.constant 1 : index
    %c0_103 = arith.constant 0 : index
    %57 = vector.load %arg6[%c0_100, %c1_101, %c1_102, %c0_103] : memref<2x10x10x64xbf16, #tpu.memory_space<vmem>>, vector<2x8x8x64xbf16>
    tpu.vector_store %arg6[%c0_100, %c1_101, %c1_102, %c0_103], %56 {strides = array<i32>} : memref<2x10x10x64xbf16, #tpu.memory_space<vmem>>, vector<2x8x8x64xbf16>,
    %cst_104 = arith.constant 0.000000e+00 : f32
    %58 = vector.broadcast %cst_104 : f32 to vector<128x64xf32>
    %c0_105 = arith.constant 0 : index
    %c0_106 = arith.constant 0 : index
    %c0_107 = arith.constant 0 : index
    %c0_108 = arith.constant 0 : index
    %59 = vector.load %arg6[%c0_105, %c0_106, %c0_107, %c0_108] : memref<2x10x10x64xbf16, #tpu.memory_space<vmem>>, vector<2x8x8x64xbf16>
    %c0_109 = arith.constant 0 : index
    %c0_110 = arith.constant 0 : index
    %c1_111 = arith.constant 1 : index
    %c0_112 = arith.constant 0 : index
    %60 = vector.load %arg6[%c0_109, %c0_110, %c1_111, %c0_112] : memref<2x10x10x64xbf16, #tpu.memory_space<vmem>>, vector<2x8x8x64xbf16>
    %c0_113 = arith.constant 0 : index
    %c0_114 = arith.constant 0 : index
    %c2_115 = arith.constant 2 : index
    %c0_116 = arith.constant 0 : index
    %61 = vector.load %arg6[%c0_113, %c0_114, %c2_115, %c0_116] : memref<2x10x10x64xbf16, #tpu.memory_space<vmem>>, vector<2x8x8x64xbf16>
    %62 = tpu.concatenate %59, %60, %61 in 3 : vector<2x8x8x64xbf16>, vector<2x8x8x64xbf16>, vector<2x8x8x64xbf16> -> vector<2x8x8x192xbf16>
    %63 = vector.shape_cast %62 : vector<2x8x8x192xbf16> to vector<128x192xbf16>
    %c1_117 = arith.constant 1 : index
    %c0_118 = arith.constant 0 : index
    %c0_119 = arith.constant 0 : index
    %c0_120 = arith.constant 0 : index
    %64 = vector.load %arg2[%c1_117, %c0_118, %c0_119, %c0_120] : memref<4x3x192x64xbf16, #tpu.memory_space<vmem>>, vector<1x1x192x64xbf16>
    %65 = vector.shape_cast %64 : vector<1x1x192x64xbf16> to vector<192x64xbf16>
    %cst_121 = arith.constant dense<0.000000e+00> : vector<128x64xf32>
    %66 = tpu.matmul %63, %65, %cst_121 {dimension_numbers = #tpu.dot_dimension_numbers<[1], [0], [0], [1], [0, 0, 1, 1], [], []>} : vector<128x192xbf16>, vector<192x64xbf16>, vector<128x64xf32> -> vector<128x64xf32>
    %67 = arith.addf %58, %66 : vector<128x64xf32>
    %c0_122 = arith.constant 0 : index
    %c1_123 = arith.constant 1 : index
    %c0_124 = arith.constant 0 : index
    %c0_125 = arith.constant 0 : index
    %68 = vector.load %arg6[%c0_122, %c1_123, %c0_124, %c0_125] : memref<2x10x10x64xbf16, #tpu.memory_space<vmem>>, vector<2x8x8x64xbf16>
    %c0_126 = arith.constant 0 : index
    %c1_127 = arith.constant 1 : index
    %c1_128 = arith.constant 1 : index
    %c0_129 = arith.constant 0 : index
    %69 = vector.load %arg6[%c0_126, %c1_127, %c1_128, %c0_129] : memref<2x10x10x64xbf16, #tpu.memory_space<vmem>>, vector<2x8x8x64xbf16>
    %c0_130 = arith.constant 0 : index
    %c1_131 = arith.constant 1 : index
    %c2_132 = arith.constant 2 : index
    %c0_133 = arith.constant 0 : index
    %70 = vector.load %arg6[%c0_130, %c1_131, %c2_132, %c0_133] : memref<2x10x10x64xbf16, #tpu.memory_space<vmem>>, vector<2x8x8x64xbf16>
    %71 = tpu.concatenate %68, %69, %70 in 3 : vector<2x8x8x64xbf16>, vector<2x8x8x64xbf16>, vector<2x8x8x64xbf16> -> vector<2x8x8x192xbf16>
    %72 = vector.shape_cast %71 : vector<2x8x8x192xbf16> to vector<128x192xbf16>
    %c1_134 = arith.constant 1 : index
    %c1_135 = arith.constant 1 : index
    %c0_136 = arith.constant 0 : index
    %c0_137 = arith.constant 0 : index
    %73 = vector.load %arg2[%c1_134, %c1_135, %c0_136, %c0_137] : memref<4x3x192x64xbf16, #tpu.memory_space<vmem>>, vector<1x1x192x64xbf16>
    %74 = vector.shape_cast %73 : vector<1x1x192x64xbf16> to vector<192x64xbf16>
    %cst_138 = arith.constant dense<0.000000e+00> : vector<128x64xf32>
    %75 = tpu.matmul %72, %74, %cst_138 {dimension_numbers = #tpu.dot_dimension_numbers<[1], [0], [0], [1], [0, 0, 1, 1], [], []>} : vector<128x192xbf16>, vector<192x64xbf16>, vector<128x64xf32> -> vector<128x64xf32>
    %76 = arith.addf %67, %75 : vector<128x64xf32>
    %c0_139 = arith.constant 0 : index
    %c2_140 = arith.constant 2 : index
    %c0_141 = arith.constant 0 : index
    %c0_142 = arith.constant 0 : index
    %77 = vector.load %arg6[%c0_139, %c2_140, %c0_141, %c0_142] : memref<2x10x10x64xbf16, #tpu.memory_space<vmem>>, vector<2x8x8x64xbf16>
    %c0_143 = arith.constant 0 : index
    %c2_144 = arith.constant 2 : index
    %c1_145 = arith.constant 1 : index
    %c0_146 = arith.constant 0 : index
    %78 = vector.load %arg6[%c0_143, %c2_144, %c1_145, %c0_146] : memref<2x10x10x64xbf16, #tpu.memory_space<vmem>>, vector<2x8x8x64xbf16>
    %c0_147 = arith.constant 0 : index
    %c2_148 = arith.constant 2 : index
    %c2_149 = arith.constant 2 : index
    %c0_150 = arith.constant 0 : index
    %79 = vector.load %arg6[%c0_147, %c2_148, %c2_149, %c0_150] : memref<2x10x10x64xbf16, #tpu.memory_space<vmem>>, vector<2x8x8x64xbf16>
    %80 = tpu.concatenate %77, %78, %79 in 3 : vector<2x8x8x64xbf16>, vector<2x8x8x64xbf16>, vector<2x8x8x64xbf16> -> vector<2x8x8x192xbf16>
    %81 = vector.shape_cast %80 : vector<2x8x8x192xbf16> to vector<128x192xbf16>
    %c1_151 = arith.constant 1 : index
    %c2_152 = arith.constant 2 : index
    %c0_153 = arith.constant 0 : index
    %c0_154 = arith.constant 0 : index
    %82 = vector.load %arg2[%c1_151, %c2_152, %c0_153, %c0_154] : memref<4x3x192x64xbf16, #tpu.memory_space<vmem>>, vector<1x1x192x64xbf16>
    %83 = vector.shape_cast %82 : vector<1x1x192x64xbf16> to vector<192x64xbf16>
    %cst_155 = arith.constant dense<0.000000e+00> : vector<128x64xf32>
    %84 = tpu.matmul %81, %83, %cst_155 {dimension_numbers = #tpu.dot_dimension_numbers<[1], [0], [0], [1], [0, 0, 1, 1], [], []>} : vector<128x192xbf16>, vector<192x64xbf16>, vector<128x64xf32> -> vector<128x64xf32>
    %85 = arith.addf %76, %84 : vector<128x64xf32>
    %c1_156 = arith.constant 1 : index
    %c0_157 = arith.constant 0 : index
    %c0_158 = arith.constant 0 : index
    %86 = vector.load %arg3[%c1_156, %c0_157, %c0_158] : memref<4x1x64xf32, #tpu.memory_space<vmem>>, vector<1x1x64xf32>
    %87 = vector.shape_cast %86 : vector<1x1x64xf32> to vector<1x64xf32>
    %88 = vector.broadcast %87 : vector<1x64xf32> to vector<128x64xf32>
    %89 = arith.addf %85, %88 : vector<128x64xf32>
    %cst_159 = arith.constant 0.000000e+00 : f32
    %90 = vector.broadcast %cst_159 : f32 to vector<128x64xf32>
    %91 = arith.maximumf %89, %90 : vector<128x64xf32>
    %92 = vector.shape_cast %91 : vector<128x64xf32> to vector<2x8x8x64xf32>
    %93 = arith.truncf %92 : vector<2x8x8x64xf32> to vector<2x8x8x64xbf16>
    %c0_160 = arith.constant 0 : index
    %c1_161 = arith.constant 1 : index
    %c1_162 = arith.constant 1 : index
    %c0_163 = arith.constant 0 : index
    %94 = vector.load %arg5[%c0_160, %c1_161, %c1_162, %c0_163] : memref<2x10x10x64xbf16, #tpu.memory_space<vmem>>, vector<2x8x8x64xbf16>
    tpu.vector_store %arg5[%c0_160, %c1_161, %c1_162, %c0_163], %93 {strides = array<i32>} : memref<2x10x10x64xbf16, #tpu.memory_space<vmem>>, vector<2x8x8x64xbf16>,
    %cst_164 = arith.constant 0.000000e+00 : f32
    %95 = vector.broadcast %cst_164 : f32 to vector<128x64xf32>
    %c0_165 = arith.constant 0 : index
    %c0_166 = arith.constant 0 : index
    %c0_167 = arith.constant 0 : index
    %c0_168 = arith.constant 0 : index
    %96 = vector.load %arg5[%c0_165, %c0_166, %c0_167, %c0_168] : memref<2x10x10x64xbf16, #tpu.memory_space<vmem>>, vector<2x8x8x64xbf16>
    %c0_169 = arith.constant 0 : index
    %c0_170 = arith.constant 0 : index
    %c1_171 = arith.constant 1 : index
    %c0_172 = arith.constant 0 : index
    %97 = vector.load %arg5[%c0_169, %c0_170, %c1_171, %c0_172] : memref<2x10x10x64xbf16, #tpu.memory_space<vmem>>, vector<2x8x8x64xbf16>
    %c0_173 = arith.constant 0 : index
    %c0_174 = arith.constant 0 : index
    %c2_175 = arith.constant 2 : index
    %c0_176 = arith.constant 0 : index
    %98 = vector.load %arg5[%c0_173, %c0_174, %c2_175, %c0_176] : memref<2x10x10x64xbf16, #tpu.memory_space<vmem>>, vector<2x8x8x64xbf16>
    %99 = tpu.concatenate %96, %97, %98 in 3 : vector<2x8x8x64xbf16>, vector<2x8x8x64xbf16>, vector<2x8x8x64xbf16> -> vector<2x8x8x192xbf16>
    %100 = vector.shape_cast %99 : vector<2x8x8x192xbf16> to vector<128x192xbf16>
    %c2_177 = arith.constant 2 : index
    %c0_178 = arith.constant 0 : index
    %c0_179 = arith.constant 0 : index
    %c0_180 = arith.constant 0 : index
    %101 = vector.load %arg2[%c2_177, %c0_178, %c0_179, %c0_180] : memref<4x3x192x64xbf16, #tpu.memory_space<vmem>>, vector<1x1x192x64xbf16>
    %102 = vector.shape_cast %101 : vector<1x1x192x64xbf16> to vector<192x64xbf16>
    %cst_181 = arith.constant dense<0.000000e+00> : vector<128x64xf32>
    %103 = tpu.matmul %100, %102, %cst_181 {dimension_numbers = #tpu.dot_dimension_numbers<[1], [0], [0], [1], [0, 0, 1, 1], [], []>} : vector<128x192xbf16>, vector<192x64xbf16>, vector<128x64xf32> -> vector<128x64xf32>
    %104 = arith.addf %95, %103 : vector<128x64xf32>
    %c0_182 = arith.constant 0 : index
    %c1_183 = arith.constant 1 : index
    %c0_184 = arith.constant 0 : index
    %c0_185 = arith.constant 0 : index
    %105 = vector.load %arg5[%c0_182, %c1_183, %c0_184, %c0_185] : memref<2x10x10x64xbf16, #tpu.memory_space<vmem>>, vector<2x8x8x64xbf16>
    %c0_186 = arith.constant 0 : index
    %c1_187 = arith.constant 1 : index
    %c1_188 = arith.constant 1 : index
    %c0_189 = arith.constant 0 : index
    %106 = vector.load %arg5[%c0_186, %c1_187, %c1_188, %c0_189] : memref<2x10x10x64xbf16, #tpu.memory_space<vmem>>, vector<2x8x8x64xbf16>
    %c0_190 = arith.constant 0 : index
    %c1_191 = arith.constant 1 : index
    %c2_192 = arith.constant 2 : index
    %c0_193 = arith.constant 0 : index
    %107 = vector.load %arg5[%c0_190, %c1_191, %c2_192, %c0_193] : memref<2x10x10x64xbf16, #tpu.memory_space<vmem>>, vector<2x8x8x64xbf16>
    %108 = tpu.concatenate %105, %106, %107 in 3 : vector<2x8x8x64xbf16>, vector<2x8x8x64xbf16>, vector<2x8x8x64xbf16> -> vector<2x8x8x192xbf16>
    %109 = vector.shape_cast %108 : vector<2x8x8x192xbf16> to vector<128x192xbf16>
    %c2_194 = arith.constant 2 : index
    %c1_195 = arith.constant 1 : index
    %c0_196 = arith.constant 0 : index
    %c0_197 = arith.constant 0 : index
    %110 = vector.load %arg2[%c2_194, %c1_195, %c0_196, %c0_197] : memref<4x3x192x64xbf16, #tpu.memory_space<vmem>>, vector<1x1x192x64xbf16>
    %111 = vector.shape_cast %110 : vector<1x1x192x64xbf16> to vector<192x64xbf16>
    %cst_198 = arith.constant dense<0.000000e+00> : vector<128x64xf32>
    %112 = tpu.matmul %109, %111, %cst_198 {dimension_numbers = #tpu.dot_dimension_numbers<[1], [0], [0], [1], [0, 0, 1, 1], [], []>} : vector<128x192xbf16>, vector<192x64xbf16>, vector<128x64xf32> -> vector<128x64xf32>
    %113 = arith.addf %104, %112 : vector<128x64xf32>
    %c0_199 = arith.constant 0 : index
    %c2_200 = arith.constant 2 : index
    %c0_201 = arith.constant 0 : index
    %c0_202 = arith.constant 0 : index
    %114 = vector.load %arg5[%c0_199, %c2_200, %c0_201, %c0_202] : memref<2x10x10x64xbf16, #tpu.memory_space<vmem>>, vector<2x8x8x64xbf16>
    %c0_203 = arith.constant 0 : index
    %c2_204 = arith.constant 2 : index
    %c1_205 = arith.constant 1 : index
    %c0_206 = arith.constant 0 : index
    %115 = vector.load %arg5[%c0_203, %c2_204, %c1_205, %c0_206] : memref<2x10x10x64xbf16, #tpu.memory_space<vmem>>, vector<2x8x8x64xbf16>
    %c0_207 = arith.constant 0 : index
    %c2_208 = arith.constant 2 : index
    %c2_209 = arith.constant 2 : index
    %c0_210 = arith.constant 0 : index
    %116 = vector.load %arg5[%c0_207, %c2_208, %c2_209, %c0_210] : memref<2x10x10x64xbf16, #tpu.memory_space<vmem>>, vector<2x8x8x64xbf16>
    %117 = tpu.concatenate %114, %115, %116 in 3 : vector<2x8x8x64xbf16>, vector<2x8x8x64xbf16>, vector<2x8x8x64xbf16> -> vector<2x8x8x192xbf16>
    %118 = vector.shape_cast %117 : vector<2x8x8x192xbf16> to vector<128x192xbf16>
    %c2_211 = arith.constant 2 : index
    %c2_212 = arith.constant 2 : index
    %c0_213 = arith.constant 0 : index
    %c0_214 = arith.constant 0 : index
    %119 = vector.load %arg2[%c2_211, %c2_212, %c0_213, %c0_214] : memref<4x3x192x64xbf16, #tpu.memory_space<vmem>>, vector<1x1x192x64xbf16>
    %120 = vector.shape_cast %119 : vector<1x1x192x64xbf16> to vector<192x64xbf16>
    %cst_215 = arith.constant dense<0.000000e+00> : vector<128x64xf32>
    %121 = tpu.matmul %118, %120, %cst_215 {dimension_numbers = #tpu.dot_dimension_numbers<[1], [0], [0], [1], [0, 0, 1, 1], [], []>} : vector<128x192xbf16>, vector<192x64xbf16>, vector<128x64xf32> -> vector<128x64xf32>
    %122 = arith.addf %113, %121 : vector<128x64xf32>
    %c2_216 = arith.constant 2 : index
    %c0_217 = arith.constant 0 : index
    %c0_218 = arith.constant 0 : index
    %123 = vector.load %arg3[%c2_216, %c0_217, %c0_218] : memref<4x1x64xf32, #tpu.memory_space<vmem>>, vector<1x1x64xf32>
    %124 = vector.shape_cast %123 : vector<1x1x64xf32> to vector<1x64xf32>
    %125 = vector.broadcast %124 : vector<1x64xf32> to vector<128x64xf32>
    %126 = arith.addf %122, %125 : vector<128x64xf32>
    %cst_219 = arith.constant 0.000000e+00 : f32
    %127 = vector.broadcast %cst_219 : f32 to vector<128x64xf32>
    %128 = arith.maximumf %126, %127 : vector<128x64xf32>
    %129 = vector.shape_cast %128 : vector<128x64xf32> to vector<2x8x8x64xf32>
    %130 = arith.truncf %129 : vector<2x8x8x64xf32> to vector<2x8x8x64xbf16>
    %c0_220 = arith.constant 0 : index
    %c1_221 = arith.constant 1 : index
    %c1_222 = arith.constant 1 : index
    %c0_223 = arith.constant 0 : index
    %131 = vector.load %arg6[%c0_220, %c1_221, %c1_222, %c0_223] : memref<2x10x10x64xbf16, #tpu.memory_space<vmem>>, vector<2x8x8x64xbf16>
    tpu.vector_store %arg6[%c0_220, %c1_221, %c1_222, %c0_223], %130 {strides = array<i32>} : memref<2x10x10x64xbf16, #tpu.memory_space<vmem>>, vector<2x8x8x64xbf16>,
    %cst_224 = arith.constant 0.000000e+00 : f32
    %132 = vector.broadcast %cst_224 : f32 to vector<128x64xf32>
    %c0_225 = arith.constant 0 : index
    %c0_226 = arith.constant 0 : index
    %c0_227 = arith.constant 0 : index
    %c0_228 = arith.constant 0 : index
    %133 = vector.load %arg6[%c0_225, %c0_226, %c0_227, %c0_228] : memref<2x10x10x64xbf16, #tpu.memory_space<vmem>>, vector<2x8x8x64xbf16>
    %c0_229 = arith.constant 0 : index
    %c0_230 = arith.constant 0 : index
    %c1_231 = arith.constant 1 : index
    %c0_232 = arith.constant 0 : index
    %134 = vector.load %arg6[%c0_229, %c0_230, %c1_231, %c0_232] : memref<2x10x10x64xbf16, #tpu.memory_space<vmem>>, vector<2x8x8x64xbf16>
    %c0_233 = arith.constant 0 : index
    %c0_234 = arith.constant 0 : index
    %c2_235 = arith.constant 2 : index
    %c0_236 = arith.constant 0 : index
    %135 = vector.load %arg6[%c0_233, %c0_234, %c2_235, %c0_236] : memref<2x10x10x64xbf16, #tpu.memory_space<vmem>>, vector<2x8x8x64xbf16>
    %136 = tpu.concatenate %133, %134, %135 in 3 : vector<2x8x8x64xbf16>, vector<2x8x8x64xbf16>, vector<2x8x8x64xbf16> -> vector<2x8x8x192xbf16>
    %137 = vector.shape_cast %136 : vector<2x8x8x192xbf16> to vector<128x192xbf16>
    %c3 = arith.constant 3 : index
    %c0_237 = arith.constant 0 : index
    %c0_238 = arith.constant 0 : index
    %c0_239 = arith.constant 0 : index
    %138 = vector.load %arg2[%c3, %c0_237, %c0_238, %c0_239] : memref<4x3x192x64xbf16, #tpu.memory_space<vmem>>, vector<1x1x192x64xbf16>
    %139 = vector.shape_cast %138 : vector<1x1x192x64xbf16> to vector<192x64xbf16>
    %cst_240 = arith.constant dense<0.000000e+00> : vector<128x64xf32>
    %140 = tpu.matmul %137, %139, %cst_240 {dimension_numbers = #tpu.dot_dimension_numbers<[1], [0], [0], [1], [0, 0, 1, 1], [], []>} : vector<128x192xbf16>, vector<192x64xbf16>, vector<128x64xf32> -> vector<128x64xf32>
    %141 = arith.addf %132, %140 : vector<128x64xf32>
    %c0_241 = arith.constant 0 : index
    %c1_242 = arith.constant 1 : index
    %c0_243 = arith.constant 0 : index
    %c0_244 = arith.constant 0 : index
    %142 = vector.load %arg6[%c0_241, %c1_242, %c0_243, %c0_244] : memref<2x10x10x64xbf16, #tpu.memory_space<vmem>>, vector<2x8x8x64xbf16>
    %c0_245 = arith.constant 0 : index
    %c1_246 = arith.constant 1 : index
    %c1_247 = arith.constant 1 : index
    %c0_248 = arith.constant 0 : index
    %143 = vector.load %arg6[%c0_245, %c1_246, %c1_247, %c0_248] : memref<2x10x10x64xbf16, #tpu.memory_space<vmem>>, vector<2x8x8x64xbf16>
    %c0_249 = arith.constant 0 : index
    %c1_250 = arith.constant 1 : index
    %c2_251 = arith.constant 2 : index
    %c0_252 = arith.constant 0 : index
    %144 = vector.load %arg6[%c0_249, %c1_250, %c2_251, %c0_252] : memref<2x10x10x64xbf16, #tpu.memory_space<vmem>>, vector<2x8x8x64xbf16>
    %145 = tpu.concatenate %142, %143, %144 in 3 : vector<2x8x8x64xbf16>, vector<2x8x8x64xbf16>, vector<2x8x8x64xbf16> -> vector<2x8x8x192xbf16>
    %146 = vector.shape_cast %145 : vector<2x8x8x192xbf16> to vector<128x192xbf16>
    %c3_253 = arith.constant 3 : index
    %c1_254 = arith.constant 1 : index
    %c0_255 = arith.constant 0 : index
    %c0_256 = arith.constant 0 : index
    %147 = vector.load %arg2[%c3_253, %c1_254, %c0_255, %c0_256] : memref<4x3x192x64xbf16, #tpu.memory_space<vmem>>, vector<1x1x192x64xbf16>
    %148 = vector.shape_cast %147 : vector<1x1x192x64xbf16> to vector<192x64xbf16>
    %cst_257 = arith.constant dense<0.000000e+00> : vector<128x64xf32>
    %149 = tpu.matmul %146, %148, %cst_257 {dimension_numbers = #tpu.dot_dimension_numbers<[1], [0], [0], [1], [0, 0, 1, 1], [], []>} : vector<128x192xbf16>, vector<192x64xbf16>, vector<128x64xf32> -> vector<128x64xf32>
    %150 = arith.addf %141, %149 : vector<128x64xf32>
    %c0_258 = arith.constant 0 : index
    %c2_259 = arith.constant 2 : index
    %c0_260 = arith.constant 0 : index
    %c0_261 = arith.constant 0 : index
    %151 = vector.load %arg6[%c0_258, %c2_259, %c0_260, %c0_261] : memref<2x10x10x64xbf16, #tpu.memory_space<vmem>>, vector<2x8x8x64xbf16>
    %c0_262 = arith.constant 0 : index
    %c2_263 = arith.constant 2 : index
    %c1_264 = arith.constant 1 : index
    %c0_265 = arith.constant 0 : index
    %152 = vector.load %arg6[%c0_262, %c2_263, %c1_264, %c0_265] : memref<2x10x10x64xbf16, #tpu.memory_space<vmem>>, vector<2x8x8x64xbf16>
    %c0_266 = arith.constant 0 : index
    %c2_267 = arith.constant 2 : index
    %c2_268 = arith.constant 2 : index
    %c0_269 = arith.constant 0 : index
    %153 = vector.load %arg6[%c0_266, %c2_267, %c2_268, %c0_269] : memref<2x10x10x64xbf16, #tpu.memory_space<vmem>>, vector<2x8x8x64xbf16>
    %154 = tpu.concatenate %151, %152, %153 in 3 : vector<2x8x8x64xbf16>, vector<2x8x8x64xbf16>, vector<2x8x8x64xbf16> -> vector<2x8x8x192xbf16>
    %155 = vector.shape_cast %154 : vector<2x8x8x192xbf16> to vector<128x192xbf16>
    %c3_270 = arith.constant 3 : index
    %c2_271 = arith.constant 2 : index
    %c0_272 = arith.constant 0 : index
    %c0_273 = arith.constant 0 : index
    %156 = vector.load %arg2[%c3_270, %c2_271, %c0_272, %c0_273] : memref<4x3x192x64xbf16, #tpu.memory_space<vmem>>, vector<1x1x192x64xbf16>
    %157 = vector.shape_cast %156 : vector<1x1x192x64xbf16> to vector<192x64xbf16>
    %cst_274 = arith.constant dense<0.000000e+00> : vector<128x64xf32>
    %158 = tpu.matmul %155, %157, %cst_274 {dimension_numbers = #tpu.dot_dimension_numbers<[1], [0], [0], [1], [0, 0, 1, 1], [], []>} : vector<128x192xbf16>, vector<192x64xbf16>, vector<128x64xf32> -> vector<128x64xf32>
    %159 = arith.addf %150, %158 : vector<128x64xf32>
    %c3_275 = arith.constant 3 : index
    %c0_276 = arith.constant 0 : index
    %c0_277 = arith.constant 0 : index
    %160 = vector.load %arg3[%c3_275, %c0_276, %c0_277] : memref<4x1x64xf32, #tpu.memory_space<vmem>>, vector<1x1x64xf32>
    %161 = vector.shape_cast %160 : vector<1x1x64xf32> to vector<1x64xf32>
    %162 = vector.broadcast %161 : vector<1x64xf32> to vector<128x64xf32>
    %163 = arith.addf %159, %162 : vector<128x64xf32>
    %164 = vector.shape_cast %163 : vector<128x64xf32> to vector<2x8x8x64xf32>
    %165 = arith.addf %164, %16 : vector<2x8x8x64xf32>
    %c0_278 = arith.constant 0 : index
    %c0_279 = arith.constant 0 : index
    %c0_280 = arith.constant 0 : index
    %c0_281 = arith.constant 0 : index
    %166 = vector.load %arg4[%c0_278, %c0_279, %c0_280, %c0_281] : memref<2x8x8x64xf32, #tpu.memory_space<vmem>>, vector<2x8x8x64xf32>
    tpu.vector_store %arg4[%c0_278, %c0_279, %c0_280, %c0_281], %165 {strides = array<i32>} : memref<2x8x8x64xf32, #tpu.memory_space<vmem>>, vector<2x8x8x64xf32>,
    return
  }
  func.func @transform_0(%arg0: i32) -> (i32, i32, i32, i32) {
    %c0_i32 = arith.constant 0 : i32
    %c0_i32_0 = arith.constant 0 : i32
    %c0_i32_1 = arith.constant 0 : i32
    %c0_i32_2 = arith.constant 0 : i32
    return %arg0, %c0_i32, %c0_i32_0, %c0_i32_1 : i32, i32, i32, i32
  }
  func.func @transform_1(%arg0: i32) -> (i32, i32, i32, i32) {
    %c0_i32 = arith.constant 0 : i32
    %c0_i32_0 = arith.constant 0 : i32
    %c0_i32_1 = arith.constant 0 : i32
    %c0_i32_2 = arith.constant 0 : i32
    %c0_i32_3 = arith.constant 0 : i32
    return %c0_i32, %c0_i32_0, %c0_i32_1, %c0_i32_2 : i32, i32, i32, i32
  }
  func.func @transform_2(%arg0: i32) -> (i32, i32, i32) {
    %c0_i32 = arith.constant 0 : i32
    %c0_i32_0 = arith.constant 0 : i32
    %c0_i32_1 = arith.constant 0 : i32
    %c0_i32_2 = arith.constant 0 : i32
    return %c0_i32, %c0_i32_0, %c0_i32_1 : i32, i32, i32
  }
  func.func @transform_3(%arg0: i32) -> (i32, i32, i32, i32) {
    %c0_i32 = arith.constant 0 : i32
    %c0_i32_0 = arith.constant 0 : i32
    %c0_i32_1 = arith.constant 0 : i32
    %c0_i32_2 = arith.constant 0 : i32
    return %arg0, %c0_i32, %c0_i32_0, %c0_i32_1 : i32, i32, i32, i32
  }
}

</mosaic_0001>

<llo_original>
// kernel: basic_group.1
$region0: #{basic_group.1}
  #allocation0 [shape = 'u32[]', space=smem, size = 0x4, offset = 0x4, fixed_abs, tag = 'smem constant byte address 0x4 - core index']
  #allocation1 [shape = 'u32[144,128]{1,0:T(1,128)}', space=vmem, size = 0x12000, scoped, tag = 'internal scratch']
  #allocation2 [shape = 'bf16[2,10,10,64]{3,2,1,0:T(8,128)(2,1)}', space=vmem, size = 0x14000, scoped, tag = 'scratch operand']
  #allocation3 [shape = 'bf16[2,10,10,64]{3,2,1,0:T(8,128)(2,1)}', space=vmem, size = 0x14000, scoped, tag = 'scratch operand']
  %s0 = inlined_call_operand.vmem [shape: f32[2,8,8,64], index: 0, kind: input, shape index: {}]
  %s1 = inlined_call_operand.vmem [shape: bf16[4,3,192,64], index: 1, kind: input, shape index: {}]
  %s2 = inlined_call_operand.vmem [shape: f32[4,1,64], index: 2, kind: input, shape index: {}]
  %s3 = inlined_call_operand.hbm [shape: f32[2,8,8,64], index: 3, kind: output, shape index: {}]
  %s4 = sld [smem:[#allocation0]]
  $region22: #{basic_group.1} parent=0
    _
  %s6 = ssub.s32 1, %s4
  %s7 = scalar_select 0, %s6, %s4
  $region1: #{basic_group.1} parent=0
    #allocation4 [shape = 'u8[65536]{0}', space=vmem, size = 0x10000, scoped, tag = 'output window, operand 0, single buffered']
    #allocation5 [shape = 's32[1]{0}', space=sflag, size = 0x4, scoped, tag = 'scoped memory for basic_group.1']
    %8 = vsyncpa [#allocation5], 0
    // Predicated region
    $region2: #{basic_group.1} parent=1 // pred_check
      _
    $region3: #{basic_group.1} parent=1 // pred_check_branch
      %10 = sbr.rel (0) target = $region5
    $region4: #{basic_group.1} parent=1 // pred_region
      _
    $region5: #{basic_group.1} parent=1 // pred_fallthru
      _
    // Predicated region
    $region6: #{basic_group.1} parent=1 // pred_check
      _
    $region7: #{basic_group.1} parent=1 // pred_check_branch
      %12 = sbr.rel (0) target = $region9
    $region8: #{basic_group.1} parent=1 // pred_region
      _
    $region9: #{basic_group.1} parent=1 // pred_fallthru
      _
    // Predicated region
    $region10: #{basic_group.1} parent=1 // pred_check
      _
    $region11: #{basic_group.1} parent=1 // pred_check_branch
      %14 = sbr.rel (0) target = $region13
    $region12: #{basic_group.1} parent=1 // pred_region
      _
    $region13: #{basic_group.1} parent=1 // pred_fallthru
      _
    %vm16 = vcmask 519168
    %17 = vst.msk [vmem:[#allocation2] sm:$0xf] %vm16, 0
    %vm18 = vcmask 516096
    %19 = vst.msk [vmem:[#allocation2 + $0x4] sm:$0x1] %vm18, 0
    %20 = vst.msk [vmem:[#allocation2 + $0x50] sm:$0xf] %vm16, 0
    %21 = vst.msk [vmem:[#allocation2 + $0x54] sm:$0x1] %vm18, 0
    %s22 = scalar_lea.vmem [#allocation2], 72
    %23 = vst.msk [vmem:[%s22] sm:$0xf] %vm16, 0
    %24 = vst.msk [vmem:[%s22 + $0x4] sm:$0x1] %vm18, 0
    %25 = vst.msk [vmem:[%s22 + $0x50] sm:$0xf] %vm16, 0
    %26 = vst.msk [vmem:[%s22 + $0x54] sm:$0x1] %vm18, 0
    %vm27 = vcmask 516096
    %vm28 = vsmask.f32 256
    %vm29 = vmand %vm27, %vm28
    %v30 = vld [vmem:[#allocation2] sm:$0x1]
    %v31 = vsel %vm29, 0, %v30
    %32 = vst [vmem:[#allocation2] sm:$0x1] %v31
    %v33 = vld [vmem:[#allocation2 + $0x8] sm:$0x1]
    %v34 = vsel %vm29, 0, %v33
    %35 = vst [vmem:[#allocation2 + $0x8] sm:$0x1] %v34
    %v36 = vld [vmem:[#allocation2 + $0x10] sm:$0x1]
    %v37 = vsel %vm29, 0, %v36
    %38 = vst [vmem:[#allocation2 + $0x10] sm:$0x1] %v37
    %v39 = vld [vmem:[#allocation2 + $0x18] sm:$0x1]
    %v40 = vsel %vm29, 0, %v39
    %41 = vst [vmem:[#allocation2 + $0x18] sm:$0x1] %v40
    %v42 = vld [vmem:[#allocation2 + $0x20] sm:$0x1]
    %v43 = vsel %vm29, 0, %v42
    %44 = vst [vmem:[#allocation2 + $0x20] sm:$0x1] %v43
    %v45 = vld [vmem:[#allocation2 + $0x28] sm:$0x1]
    %v46 = vsel %vm29, 0, %v45
    %47 = vst [vmem:[#allocation2 + $0x28] sm:$0x1] %v46
    %v48 = vld [vmem:[#allocation2 + $0x30] sm:$0x1]
    %v49 = vsel %vm29, 0, %v48
    %50 = vst [vmem:[#allocation2 + $0x30] sm:$0x1] %v49
    %v51 = vld [vmem:[#allocation2 + $0x38] sm:$0x1]
    %v52 = vsel %vm29, 0, %v51
    %53 = vst [vmem:[#allocation2 + $0x38] sm:$0x1] %v52
    %v54 = vld [vmem:[#allocation2 + $0x40] sm:$0x1]
    %v55 = vsel %vm29, 0, %v54
    %56 = vst [vmem:[#allocation2 + $0x40] sm:$0x1] %v55
    %v57 = vld [vmem:[#allocation2 + $0x48] sm:$0x1]
    %v58 = vsel %vm29, 0, %v57
    %59 = vst [vmem:[#allocation2 + $0x48] sm:$0x1] %v58
    %v60 = vld [vmem:[#allocation2 + $0x50] sm:$0x1]
    %v61 = vsel %vm29, 0, %v60
    %62 = vst [vmem:[#allocation2 + $0x50] sm:$0x1] %v61
    %v63 = vld [vmem:[#allocation2 + $0x58] sm:$0x1]
    %v64 = vsel %vm29, 0, %v63
    %65 = vst [vmem:[#allocation2 + $0x58] sm:$0x1] %v64
    %v66 = vld [vmem:[#allocation2 + $0x60] sm:$0x1]
    %v67 = vsel %vm29, 0, %v66
    %68 = vst [vmem:[#allocation2 + $0x60] sm:$0x1] %v67
    %v69 = vld [vmem:[#allocation2 + $0x68] sm:$0x1]
    %v70 = vsel %vm29, 0, %v69
    %71 = vst [vmem:[#allocation2 + $0x68] sm:$0x1] %v70
    %v72 = vld [vmem:[#allocation2 + $0x70] sm:$0x1]
    %v73 = vsel %vm29, 0, %v72
    %74 = vst [vmem:[#allocation2 + $0x70] sm:$0x1] %v73
    %v75 = vld [vmem:[#allocation2 + $0x78] sm:$0x1]
    %v76 = vsel %vm29, 0, %v75
    %77 = vst [vmem:[#allocation2 + $0x78] sm:$0x1] %v76
    %v78 = vld [vmem:[#allocation2 + $0x80] sm:$0x1]
    %v79 = vsel %vm29, 0, %v78
    %80 = vst [vmem:[#allocation2 + $0x80] sm:$0x1] %v79
    %v81 = vld [vmem:[#allocation2 + $0x88] sm:$0x1]
    %v82 = vsel %vm29, 0, %v81
    %83 = vst [vmem:[#allocation2 + $0x88] sm:$0x1] %v82
    %v84 = vld [vmem:[#allocation2 + $0x90] sm:$0x1]
    %v85 = vsel %vm29, 0, %v84
    %86 = vst [vmem:[#allocation2 + $0x90] sm:$0x1] %v85
    %v87 = vld [vmem:[#allocation2 + $0x98] sm:$0x1]
    %v88 = vsel %vm29, 0, %v87
    %89 = vst [vmem:[#allocation2 + $0x98] sm:$0x1] %v88
    %vm90 = vsmask.f32 7938
    %vm91 = vmand %vm27, %vm90
    %v92 = vld [vmem:[#allocation2 + $0x4] sm:$0x1]
    %v93 = vsel %vm91, 0, %v92
    %94 = vst [vmem:[#allocation2 + $0x4] sm:$0x1] %v93
    %v95 = vld [vmem:[#allocation2 + $0xc] sm:$0x1]
    %v96 = vsel %vm91, 0, %v95
    %97 = vst [vmem:[#allocation2 + $0xc] sm:$0x1] %v96
    %v98 = vld [vmem:[#allocation2 + $0x14] sm:$0x1]
    %v99 = vsel %vm91, 0, %v98
    %100 = vst [vmem:[#allocation2 + $0x14] sm:$0x1] %v99
    %v101 = vld [vmem:[#allocation2 + $0x1c] sm:$0x1]
    %v102 = vsel %vm91, 0, %v101
    %103 = vst [vmem:[#allocation2 + $0x1c] sm:$0x1] %v102
    %v104 = vld [vmem:[#allocation2 + $0x24] sm:$0x1]
    %v105 = vsel %vm91, 0, %v104
    %106 = vst [vmem:[#allocation2 + $0x24] sm:$0x1] %v105
    %v107 = vld [vmem:[#allocation2 + $0x2c] sm:$0x1]
    %v108 = vsel %vm91, 0, %v107
    %109 = vst [vmem:[#allocation2 + $0x2c] sm:$0x1] %v108
    %v110 = vld [vmem:[#allocation2 + $0x34] sm:$0x1]
    %v111 = vsel %vm91, 0, %v110
    %112 = vst [vmem:[#allocation2 + $0x34] sm:$0x1] %v111
    %v113 = vld [vmem:[#allocation2 + $0x3c] sm:$0x1]
    %v114 = vsel %vm91, 0, %v113
    %115 = vst [vmem:[#allocation2 + $0x3c] sm:$0x1] %v114
    %v116 = vld [vmem:[#allocation2 + $0x44] sm:$0x1]
    %v117 = vsel %vm91, 0, %v116
    %118 = vst [vmem:[#allocation2 + $0x44] sm:$0x1] %v117
    %v119 = vld [vmem:[#allocation2 + $0x4c] sm:$0x1]
    %v120 = vsel %vm91, 0, %v119
    %121 = vst [vmem:[#allocation2 + $0x4c] sm:$0x1] %v120
    %v122 = vld [vmem:[#allocation2 + $0x54] sm:$0x1]
    %v123 = vsel %vm91, 0, %v122
    %124 = vst [vmem:[#allocation2 + $0x54] sm:$0x1] %v123
    %v125 = vld [vmem:[#allocation2 + $0x5c] sm:$0x1]
    %v126 = vsel %vm91, 0, %v125
    %127 = vst [vmem:[#allocation2 + $0x5c] sm:$0x1] %v126
    %v128 = vld [vmem:[#allocation2 + $0x64] sm:$0x1]
    %v129 = vsel %vm91, 0, %v128
    %130 = vst [vmem:[#allocation2 + $0x64] sm:$0x1] %v129
    %v131 = vld [vmem:[#allocation2 + $0x6c] sm:$0x1]
    %v132 = vsel %vm91, 0, %v131
    %133 = vst [vmem:[#allocation2 + $0x6c] sm:$0x1] %v132
    %v134 = vld [vmem:[#allocation2 + $0x74] sm:$0x1]
    %v135 = vsel %vm91, 0, %v134
    %136 = vst [vmem:[#allocation2 + $0x74] sm:$0x1] %v135
    %v137 = vld [vmem:[#allocation2 + $0x7c] sm:$0x1]
    %v138 = vsel %vm91, 0, %v137
    %139 = vst [vmem:[#allocation2 + $0x7c] sm:$0x1] %v138
    %v140 = vld [vmem:[#allocation2 + $0x84] sm:$0x1]
    %v141 = vsel %vm91, 0, %v140
    %142 = vst [vmem:[#allocation2 + $0x84] sm:$0x1] %v141
    %v143 = vld [vmem:[#allocation2 + $0x8c] sm:$0x1]
    %v144 = vsel %vm91, 0, %v143
    %145 = vst [vmem:[#allocation2 + $0x8c] sm:$0x1] %v144
    %v146 = vld [vmem:[#allocation2 + $0x94] sm:$0x1]
    %v147 = vsel %vm91, 0, %v146
    %148 = vst [vmem:[#allocation2 + $0x94] sm:$0x1] %v147
    %v149 = vld [vmem:[#allocation2 + $0x9c] sm:$0x1]
    %v150 = vsel %vm91, 0, %v149
    %151 = vst [vmem:[#allocation2 + $0x9c] sm:$0x1] %v150
    %152 = vst.msk [vmem:[#allocation3] sm:$0xf] %vm16, 0
    %153 = vst.msk [vmem:[#allocation3 + $0x4] sm:$0x1] %vm18, 0
    %154 = vst.msk [vmem:[#allocation3 + $0x50] sm:$0xf] %vm16, 0
    %155 = vst.msk [vmem:[#allocation3 + $0x54] sm:$0x1] %vm18, 0
    %s156 = scalar_lea.vmem [#allocation3], 72
    %157 = vst.msk [vmem:[%s156] sm:$0xf] %vm16, 0
    %158 = vst.msk [vmem:[%s156 + $0x4] sm:$0x1] %vm18, 0
    %159 = vst.msk [vmem:[%s156 + $0x50] sm:$0xf] %vm16, 0
    %160 = vst.msk [vmem:[%s156 + $0x54] sm:$0x1] %vm18, 0
    %v161 = vld [vmem:[#allocation3] sm:$0x1]
    %v162 = vsel %vm29, 0, %v161
    %163 = vst [vmem:[#allocation3] sm:$0x1] %v162
    %v164 = vld [vmem:[#allocation3 + $0x8] sm:$0x1]
    %v165 = vsel %vm29, 0, %v164
    %166 = vst [vmem:[#allocation3 + $0x8] sm:$0x1] %v165
    %v167 = vld [vmem:[#allocation3 + $0x10] sm:$0x1]
    %v168 = vsel %vm29, 0, %v167
    %169 = vst [vmem:[#allocation3 + $0x10] sm:$0x1] %v168
    %v170 = vld [vmem:[#allocation3 + $0x18] sm:$0x1]
    %v171 = vsel %vm29, 0, %v170
    %172 = vst [vmem:[#allocation3 + $0x18] sm:$0x1] %v171
    %v173 = vld [vmem:[#allocation3 + $0x20] sm:$0x1]
    %v174 = vsel %vm29, 0, %v173
    %175 = vst [vmem:[#allocation3 + $0x20] sm:$0x1] %v174
    %v176 = vld [vmem:[#allocation3 + $0x28] sm:$0x1]
    %v177 = vsel %vm29, 0, %v176
    %178 = vst [vmem:[#allocation3 + $0x28] sm:$0x1] %v177
    %v179 = vld [vmem:[#allocation3 + $0x30] sm:$0x1]
    %v180 = vsel %vm29, 0, %v179
    %181 = vst [vmem:[#allocation3 + $0x30] sm:$0x1] %v180
    %v182 = vld [vmem:[#allocation3 + $0x38] sm:$0x1]
    %v183 = vsel %vm29, 0, %v182
    %184 = vst [vmem:[#allocation3 + $0x38] sm:$0x1] %v183
    %v185 = vld [vmem:[#allocation3 + $0x40] sm:$0x1]
    %v186 = vsel %vm29, 0, %v185
    %187 = vst [vmem:[#allocation3 + $0x40] sm:$0x1] %v186
    %v188 = vld [vmem:[#allocation3 + $0x48] sm:$0x1]
    %v189 = vsel %vm29, 0, %v188
    %190 = vst [vmem:[#allocation3 + $0x48] sm:$0x1] %v189
    %v191 = vld [vmem:[#allocation3 + $0x50] sm:$0x1]
    %v192 = vsel %vm29, 0, %v191
    %193 = vst [vmem:[#allocation3 + $0x50] sm:$0x1] %v192
    %v194 = vld [vmem:[#allocation3 + $0x58] sm:$0x1]
    %v195 = vsel %vm29, 0, %v194
    %196 = vst [vmem:[#allocation3 + $0x58] sm:$0x1] %v195
    %v197 = vld [vmem:[#allocation3 + $0x60] sm:$0x1]
    %v198 = vsel %vm29, 0, %v197
    %199 = vst [vmem:[#allocation3 + $0x60] sm:$0x1] %v198
    %v200 = vld [vmem:[#allocation3 + $0x68] sm:$0x1]
    %v201 = vsel %vm29, 0, %v200
    %202 = vst [vmem:[#allocation3 + $0x68] sm:$0x1] %v201
    %v203 = vld [vmem:[#allocation3 + $0x70] sm:$0x1]
    %v204 = vsel %vm29, 0, %v203
    %205 = vst [vmem:[#allocation3 + $0x70] sm:$0x1] %v204
    %v206 = vld [vmem:[#allocation3 + $0x78] sm:$0x1]
    %v207 = vsel %vm29, 0, %v206
    %208 = vst [vmem:[#allocation3 + $0x78] sm:$0x1] %v207
    %v209 = vld [vmem:[#allocation3 + $0x80] sm:$0x1]
    %v210 = vsel %vm29, 0, %v209
    %211 = vst [vmem:[#allocation3 + $0x80] sm:$0x1] %v210
    %v212 = vld [vmem:[#allocation3 + $0x88] sm:$0x1]
    %v213 = vsel %vm29, 0, %v212
    %214 = vst [vmem:[#allocation3 + $0x88] sm:$0x1] %v213
    %v215 = vld [vmem:[#allocation3 + $0x90] sm:$0x1]
    %v216 = vsel %vm29, 0, %v215
    %217 = vst [vmem:[#allocation3 + $0x90] sm:$0x1] %v216
    %v218 = vld [vmem:[#allocation3 + $0x98] sm:$0x1]
    %v219 = vsel %vm29, 0, %v218
    %220 = vst [vmem:[#allocation3 + $0x98] sm:$0x1] %v219
    %v221 = vld [vmem:[#allocation3 + $0x4] sm:$0x1]
    %v222 = vsel %vm91, 0, %v221
    %223 = vst [vmem:[#allocation3 + $0x4] sm:$0x1] %v222
    %v224 = vld [vmem:[#allocation3 + $0xc] sm:$0x1]
    %v225 = vsel %vm91, 0, %v224
    %226 = vst [vmem:[#allocation3 + $0xc] sm:$0x1] %v225
    %v227 = vld [vmem:[#allocation3 + $0x14] sm:$0x1]
    %v228 = vsel %vm91, 0, %v227
    %229 = vst [vmem:[#allocation3 + $0x14] sm:$0x1] %v228
    %v230 = vld [vmem:[#allocation3 + $0x1c] sm:$0x1]
    %v231 = vsel %vm91, 0, %v230
    %232 = vst [vmem:[#allocation3 + $0x1c] sm:$0x1] %v231
    %v233 = vld [vmem:[#allocation3 + $0x24] sm:$0x1]
    %v234 = vsel %vm91, 0, %v233
    %235 = vst [vmem:[#allocation3 + $0x24] sm:$0x1] %v234
    %v236 = vld [vmem:[#allocation3 + $0x2c] sm:$0x1]
    %v237 = vsel %vm91, 0, %v236
    %238 = vst [vmem:[#allocation3 + $0x2c] sm:$0x1] %v237
    %v239 = vld [vmem:[#allocation3 + $0x34] sm:$0x1]
    %v240 = vsel %vm91, 0, %v239
    %241 = vst [vmem:[#allocation3 + $0x34] sm:$0x1] %v240
    %v242 = vld [vmem:[#allocation3 + $0x3c] sm:$0x1]
    %v243 = vsel %vm91, 0, %v242
    %244 = vst [vmem:[#allocation3 + $0x3c] sm:$0x1] %v243
    %v245 = vld [vmem:[#allocation3 + $0x44] sm:$0x1]
    %v246 = vsel %vm91, 0, %v245
    %247 = vst [vmem:[#allocation3 + $0x44] sm:$0x1] %v246
    %v248 = vld [vmem:[#allocation3 + $0x4c] sm:$0x1]
    %v249 = vsel %vm91, 0, %v248
    %250 = vst [vmem:[#allocation3 + $0x4c] sm:$0x1] %v249
    %v251 = vld [vmem:[#allocation3 + $0x54] sm:$0x1]
    %v252 = vsel %vm91, 0, %v251
    %253 = vst [vmem:[#allocation3 + $0x54] sm:$0x1] %v252
    %v254 = vld [vmem:[#allocation3 + $0x5c] sm:$0x1]
    %v255 = vsel %vm91, 0, %v254
    %256 = vst [vmem:[#allocation3 + $0x5c] sm:$0x1] %v255
    %v257 = vld [vmem:[#allocation3 + $0x64] sm:$0x1]
    %v258 = vsel %vm91, 0, %v257
    %259 = vst [vmem:[#allocation3 + $0x64] sm:$0x1] %v258
    %v260 = vld [vmem:[#allocation3 + $0x6c] sm:$0x1]
    %v261 = vsel %vm91, 0, %v260
    %262 = vst [vmem:[#allocation3 + $0x6c] sm:$0x1] %v261
    %v263 = vld [vmem:[#allocation3 + $0x74] sm:$0x1]
    %v264 = vsel %vm91, 0, %v263
    %265 = vst [vmem:[#allocation3 + $0x74] sm:$0x1] %v264
    %v266 = vld [vmem:[#allocation3 + $0x7c] sm:$0x1]
    %v267 = vsel %vm91, 0, %v266
    %268 = vst [vmem:[#allocation3 + $0x7c] sm:$0x1] %v267
    %v269 = vld [vmem:[#allocation3 + $0x84] sm:$0x1]
    %v270 = vsel %vm91, 0, %v269
    %271 = vst [vmem:[#allocation3 + $0x84] sm:$0x1] %v270
    %v272 = vld [vmem:[#allocation3 + $0x8c] sm:$0x1]
    %v273 = vsel %vm91, 0, %v272
    %274 = vst [vmem:[#allocation3 + $0x8c] sm:$0x1] %v273
    %v275 = vld [vmem:[#allocation3 + $0x94] sm:$0x1]
    %v276 = vsel %vm91, 0, %v275
    %277 = vst [vmem:[#allocation3 + $0x94] sm:$0x1] %v276
    %v278 = vld [vmem:[#allocation3 + $0x9c] sm:$0x1]
    %v279 = vsel %vm91, 0, %v278
    %280 = vst [vmem:[#allocation3 + $0x9c] sm:$0x1] %v279
    %v281 = vld [vmem:[%s0] sm:$0xff]
    %v282 = vld [vmem:[%s0 + $0x8] sm:$0xff]
    %v283 = vld [vmem:[%s0 + $0x10] sm:$0xff]
    %v284 = vld [vmem:[%s0 + $0x18] sm:$0xff]
    %v285 = vld [vmem:[%s0 + $0x20] sm:$0xff]
    %v286 = vld [vmem:[%s0 + $0x28] sm:$0xff]
    %v287 = vld [vmem:[%s0 + $0x30] sm:$0xff]
    %v288 = vld [vmem:[%s0 + $0x38] sm:$0xff]
    %v289 = vld [vmem:[%s0 + $0x40] sm:$0xff]
    %v290 = vld [vmem:[%s0 + $0x48] sm:$0xff]
    %v291 = vld [vmem:[%s0 + $0x50] sm:$0xff]
    %v292 = vld [vmem:[%s0 + $0x58] sm:$0xff]
    %v293 = vld [vmem:[%s0 + $0x60] sm:$0xff]
    %v294 = vld [vmem:[%s0 + $0x68] sm:$0xff]
    %v295 = vld [vmem:[%s0 + $0x70] sm:$0xff]
    %v296 = vld [vmem:[%s0 + $0x78] sm:$0xff]
    %v297 = vmax.f32 %v281, 0.0
    %v298 = vmax.f32 %v282, 0.0
    %v299 = vmax.f32 %v283, 0.0
    %v300 = vmax.f32 %v284, 0.0
    %v301 = vmax.f32 %v285, 0.0
    %v302 = vmax.f32 %v286, 0.0
    %v303 = vmax.f32 %v287, 0.0
    %v304 = vmax.f32 %v288, 0.0
    %v305 = vmax.f32 %v289, 0.0
    %v306 = vmax.f32 %v290, 0.0
    %v307 = vmax.f32 %v291, 0.0
    %v308 = vmax.f32 %v292, 0.0
    %v309 = vmax.f32 %v293, 0.0
    %v310 = vmax.f32 %v294, 0.0
    %v311 = vmax.f32 %v295, 0.0
    %v312 = vmax.f32 %v296, 0.0
    %v313 = vpack.c.bf16 %v297, %v297
    %v314 = vpack.c.bf16 %v298, %v298
    %v315 = vpack.c.bf16 %v299, %v299
    %v316 = vpack.c.bf16 %v300, %v300
    %v317 = vpack.c.bf16 %v301, %v301
    %v318 = vpack.c.bf16 %v302, %v302
    %v319 = vpack.c.bf16 %v303, %v303
    %v320 = vpack.c.bf16 %v304, %v304
    %v321 = vpack.c.bf16 %v305, %v305
    %v322 = vpack.c.bf16 %v306, %v306
    %v323 = vpack.c.bf16 %v307, %v307
    %v324 = vpack.c.bf16 %v308, %v308
    %v325 = vpack.c.bf16 %v309, %v309
    %v326 = vpack.c.bf16 %v310, %v310
    %v327 = vpack.c.bf16 %v311, %v311
    %v328 = vpack.c.bf16 %v312, %v312
    %v345 = vunpack.c.l.b16 %v313
    %v346 = vunpack.c.l.b16 %v314
    %v347 = vunpack.c.l.b16 %v315
    %v348 = vunpack.c.l.b16 %v316
    %v349 = vunpack.c.l.b16 %v317
    %v350 = vunpack.c.l.b16 %v318
    %v351 = vunpack.c.l.b16 %v319
    %v352 = vunpack.c.l.b16 %v320
    %v353 = vunpack.c.l.b16 %v321
    %v354 = vunpack.c.l.b16 %v322
    %v355 = vunpack.c.l.b16 %v323
    %v356 = vunpack.c.l.b16 %v324
    %v357 = vunpack.c.l.b16 %v325
    %v358 = vunpack.c.l.b16 %v326
    %v359 = vunpack.c.l.b16 %v327
    %v360 = vunpack.c.l.b16 %v328
    %v361 = vpack.c.b16 %v345, %v345
    %v362 = vpack.c.b16 %v346, %v346
    %v363 = vpack.c.b16 %v347, %v347
    %v364 = vpack.c.b16 %v348, %v348
    %v365 = vpack.c.b16 %v349, %v349
    %v366 = vpack.c.b16 %v350, %v350
    %v367 = vpack.c.b16 %v351, %v351
    %v368 = vpack.c.b16 %v352, %v352
    %v369 = vpack.c.b16 %v353, %v353
    %v370 = vpack.c.b16 %v354, %v354
    %v371 = vpack.c.b16 %v355, %v355
    %v372 = vpack.c.b16 %v356, %v356
    %v373 = vpack.c.b16 %v357, %v357
    %v374 = vpack.c.b16 %v358, %v358
    %v375 = vpack.c.b16 %v359, %v359
    %v376 = vpack.c.b16 %v360, %v360
    %v378 = vshrl.u32 %v361, 16
    %v380 = vrot.slane %v378, 7
    %v381 = vshll.u32 %v361, 16
    %v383 = vor.u32 %v380, %v381
    %v384 = vrot.slane %v380, 4
    %v386 = vshrl.u32 %v362, 16
    %v388 = vrot.slane %v386, 7
    %v389 = vshll.u32 %v362, 16
    %v391 = vor.u32 %v388, %v389
    %v392 = vrot.slane %v388, 4
    %v394 = vshrl.u32 %v363, 16
    %v396 = vrot.slane %v394, 7
    %v397 = vshll.u32 %v363, 16
    %v399 = vor.u32 %v396, %v397
    %v400 = vrot.slane %v396, 4
    %v402 = vshrl.u32 %v364, 16
    %v404 = vrot.slane %v402, 7
    %v405 = vshll.u32 %v364, 16
    %v407 = vor.u32 %v404, %v405
    %v408 = vrot.slane %v404, 4
    %v410 = vshrl.u32 %v365, 16
    %v412 = vrot.slane %v410, 7
    %v413 = vshll.u32 %v365, 16
    %v415 = vor.u32 %v412, %v413
    %v416 = vrot.slane %v412, 4
    %v418 = vshrl.u32 %v366, 16
    %v420 = vrot.slane %v418, 7
    %v421 = vshll.u32 %v366, 16
    %v423 = vor.u32 %v420, %v421
    %v424 = vrot.slane %v420, 4
    %v426 = vshrl.u32 %v367, 16
    %v428 = vrot.slane %v426, 7
    %v429 = vshll.u32 %v367, 16
    %v431 = vor.u32 %v428, %v429
    %v432 = vrot.slane %v428, 4
    %v434 = vshrl.u32 %v368, 16
    %v436 = vrot.slane %v434, 7
    %v437 = vshll.u32 %v368, 16
    %v439 = vor.u32 %v436, %v437
    %v440 = vrot.slane %v436, 4
    %v442 = vshrl.u32 %v369, 16
    %v444 = vrot.slane %v442, 7
    %v445 = vshll.u32 %v369, 16
    %v447 = vor.u32 %v444, %v445
    %v448 = vrot.slane %v444, 4
    %v450 = vshrl.u32 %v370, 16
    %v452 = vrot.slane %v450, 7
    %v453 = vshll.u32 %v370, 16
    %v455 = vor.u32 %v452, %v453
    %v456 = vrot.slane %v452, 4
    %v458 = vshrl.u32 %v371, 16
    %v460 = vrot.slane %v458, 7
    %v461 = vshll.u32 %v371, 16
    %v463 = vor.u32 %v460, %v461
    %v464 = vrot.slane %v460, 4
    %v466 = vshrl.u32 %v372, 16
    %v468 = vrot.slane %v466, 7
    %v469 = vshll.u32 %v372, 16
    %v471 = vor.u32 %v468, %v469
    %v472 = vrot.slane %v468, 4
    %v474 = vshrl.u32 %v373, 16
    %v476 = vrot.slane %v474, 7
    %v477 = vshll.u32 %v373, 16
    %v479 = vor.u32 %v476, %v477
    %v480 = vrot.slane %v476, 4
    %v482 = vshrl.u32 %v374, 16
    %v484 = vrot.slane %v482, 7
    %v485 = vshll.u32 %v374, 16
    %v487 = vor.u32 %v484, %v485
    %v488 = vrot.slane %v484, 4
    %v490 = vshrl.u32 %v375, 16
    %v492 = vrot.slane %v490, 7
    %v493 = vshll.u32 %v375, 16
    %v495 = vor.u32 %v492, %v493
    %v496 = vrot.slane %v492, 4
    %v498 = vshrl.u32 %v376, 16
    %v500 = vrot.slane %v498, 7
    %v501 = vshll.u32 %v376, 16
    %v503 = vor.u32 %v500, %v501
    %v504 = vrot.slane %v500, 4
    %s537 = scalar_lea.vmem [#allocation2], 8
    %vm538 = vcmask 519168
    %vm539 = vmand %vm538, %vm90
    %v540 = vld [vmem:[%s537] sm:$0xf]
    %v541 = vsel %vm539, %v383, %v540
    %542 = vst [vmem:[%s537] sm:$0xf] %v541
    %v543 = vld [vmem:[%s537 + $0x4] sm:$0x1]
    %v544 = vsel %vm29, %v384, %v543
    %545 = vst [vmem:[%s537 + $0x4] sm:$0x1] %v544
    %v546 = vld [vmem:[%s537 + $0x8] sm:$0xf]
    %v547 = vsel %vm539, %v391, %v546
    %548 = vst [vmem:[%s537 + $0x8] sm:$0xf] %v547
    %v549 = vld [vmem:[%s537 + $0xc] sm:$0x1]
    %v550 = vsel %vm29, %v392, %v549
    %551 = vst [vmem:[%s537 + $0xc] sm:$0x1] %v550
    %v552 = vld [vmem:[%s537 + $0x10] sm:$0xf]
    %v553 = vsel %vm539, %v399, %v552
    %554 = vst [vmem:[%s537 + $0x10] sm:$0xf] %v553
    %v555 = vld [vmem:[%s537 + $0x14] sm:$0x1]
    %v556 = vsel %vm29, %v400, %v555
    %557 = vst [vmem:[%s537 + $0x14] sm:$0x1] %v556
    %v558 = vld [vmem:[%s537 + $0x18] sm:$0xf]
    %v559 = vsel %vm539, %v407, %v558
    %560 = vst [vmem:[%s537 + $0x18] sm:$0xf] %v559
    %v561 = vld [vmem:[%s537 + $0x1c] sm:$0x1]
    %v562 = vsel %vm29, %v408, %v561
    %563 = vst [vmem:[%s537 + $0x1c] sm:$0x1] %v562
    %v564 = vld [vmem:[%s537 + $0x20] sm:$0xf]
    %v565 = vsel %vm539, %v415, %v564
    %566 = vst [vmem:[%s537 + $0x20] sm:$0xf] %v565
    %v567 = vld [vmem:[%s537 + $0x24] sm:$0x1]
    %v568 = vsel %vm29, %v416, %v567
    %569 = vst [vmem:[%s537 + $0x24] sm:$0x1] %v568
    %v570 = vld [vmem:[%s537 + $0x28] sm:$0xf]
    %v571 = vsel %vm539, %v423, %v570
    %572 = vst [vmem:[%s537 + $0x28] sm:$0xf] %v571
    %v573 = vld [vmem:[%s537 + $0x2c] sm:$0x1]
    %v574 = vsel %vm29, %v424, %v573
    %575 = vst [vmem:[%s537 + $0x2c] sm:$0x1] %v574
    %v576 = vld [vmem:[%s537 + $0x30] sm:$0xf]
    %v577 = vsel %vm539, %v431, %v576
    %578 = vst [vmem:[%s537 + $0x30] sm:$0xf] %v577
    %v579 = vld [vmem:[%s537 + $0x34] sm:$0x1]
    %v580 = vsel %vm29, %v432, %v579
    %581 = vst [vmem:[%s537 + $0x34] sm:$0x1] %v580
    %v582 = vld [vmem:[%s537 + $0x38] sm:$0xf]
    %v583 = vsel %vm539, %v439, %v582
    %584 = vst [vmem:[%s537 + $0x38] sm:$0xf] %v583
    %v585 = vld [vmem:[%s537 + $0x3c] sm:$0x1]
    %v586 = vsel %vm29, %v440, %v585
    %587 = vst [vmem:[%s537 + $0x3c] sm:$0x1] %v586
    %v588 = vld [vmem:[%s537 + $0x50] sm:$0xf]
    %v589 = vsel %vm539, %v447, %v588
    %590 = vst [vmem:[%s537 + $0x50] sm:$0xf] %v589
    %v591 = vld [vmem:[%s537 + $0x54] sm:$0x1]
    %v592 = vsel %vm29, %v448, %v591
    %593 = vst [vmem:[%s537 + $0x54] sm:$0x1] %v592
    %v594 = vld [vmem:[%s537 + $0x58] sm:$0xf]
    %v595 = vsel %vm539, %v455, %v594
    %596 = vst [vmem:[%s537 + $0x58] sm:$0xf] %v595
    %v597 = vld [vmem:[%s537 + $0x5c] sm:$0x1]
    %v598 = vsel %vm29, %v456, %v597
    %599 = vst [vmem:[%s537 + $0x5c] sm:$0x1] %v598
    %v600 = vld [vmem:[%s537 + $0x60] sm:$0xf]
    %v601 = vsel %vm539, %v463, %v600
    %602 = vst [vmem:[%s537 + $0x60] sm:$0xf] %v601
    %v603 = vld [vmem:[%s537 + $0x64] sm:$0x1]
    %v604 = vsel %vm29, %v464, %v603
    %605 = vst [vmem:[%s537 + $0x64] sm:$0x1] %v604
    %v606 = vld [vmem:[%s537 + $0x68] sm:$0xf]
    %v607 = vsel %vm539, %v471, %v606
    %608 = vst [vmem:[%s537 + $0x68] sm:$0xf] %v607
    %v609 = vld [vmem:[%s537 + $0x6c] sm:$0x1]
    %v610 = vsel %vm29, %v472, %v609
    %611 = vst [vmem:[%s537 + $0x6c] sm:$0x1] %v610
    %v612 = vld [vmem:[%s537 + $0x70] sm:$0xf]
    %v613 = vsel %vm539, %v479, %v612
    %614 = vst [vmem:[%s537 + $0x70] sm:$0xf] %v613
    %v615 = vld [vmem:[%s537 + $0x74] sm:$0x1]
    %v616 = vsel %vm29, %v480, %v615
    %617 = vst [vmem:[%s537 + $0x74] sm:$0x1] %v616
    %v618 = vld [vmem:[%s537 + $0x78] sm:$0xf]
    %v619 = vsel %vm539, %v487, %v618
    %620 = vst [vmem:[%s537 + $0x78] sm:$0xf] %v619
    %v621 = vld [vmem:[%s537 + $0x7c] sm:$0x1]
    %v622 = vsel %vm29, %v488, %v621
    %623 = vst [vmem:[%s537 + $0x7c] sm:$0x1] %v622
    %v624 = vld [vmem:[%s537 + $0x80] sm:$0xf]
    %v625 = vsel %vm539, %v495, %v624
    %626 = vst [vmem:[%s537 + $0x80] sm:$0xf] %v625
    %v627 = vld [vmem:[%s537 + $0x84] sm:$0x1]
    %v628 = vsel %vm29, %v496, %v627
    %629 = vst [vmem:[%s537 + $0x84] sm:$0x1] %v628
    %v630 = vld [vmem:[%s537 + $0x88] sm:$0xf]
    %v631 = vsel %vm539, %v503, %v630
    %632 = vst [vmem:[%s537 + $0x88] sm:$0xf] %v631
    %v633 = vld [vmem:[%s537 + $0x8c] sm:$0x1]
    %v634 = vsel %vm29, %v504, %v633
    %635 = vst [vmem:[%s537 + $0x8c] sm:$0x1] %v634
    %v636 = vld [vmem:[#allocation2] sm:$0xf]
    %v637 = vld [vmem:[#allocation2 + $0x8] sm:$0xf]
    %v638 = vld [vmem:[#allocation2 + $0x10] sm:$0xf]
    %v639 = vld [vmem:[#allocation2 + $0x18] sm:$0xf]
    %v640 = vld [vmem:[#allocation2 + $0x20] sm:$0xf]
    %v641 = vld [vmem:[#allocation2 + $0x28] sm:$0xf]
    %v642 = vld [vmem:[#allocation2 + $0x30] sm:$0xf]
    %v643 = vld [vmem:[#allocation2 + $0x38] sm:$0xf]
    %v644 = vld [vmem:[#allocation2 + $0x50] sm:$0xf]
    %v645 = vld [vmem:[#allocation2 + $0x58] sm:$0xf]
    %v646 = vld [vmem:[#allocation2 + $0x60] sm:$0xf]
    %v647 = vld [vmem:[#allocation2 + $0x68] sm:$0xf]
    %v648 = vld [vmem:[#allocation2 + $0x70] sm:$0xf]
    %v649 = vld [vmem:[#allocation2 + $0x78] sm:$0xf]
    %v650 = vld [vmem:[#allocation2 + $0x80] sm:$0xf]
    %v651 = vld [vmem:[#allocation2 + $0x88] sm:$0xf]
    %v652 = vld [vmem:[#allocation2 + $0x4] sm:$0x1]
    %v653 = vld [vmem:[#allocation2 + $0xc] sm:$0x1]
    %v654 = vld [vmem:[#allocation2 + $0x14] sm:$0x1]
    %v655 = vld [vmem:[#allocation2 + $0x1c] sm:$0x1]
    %v656 = vld [vmem:[#allocation2 + $0x24] sm:$0x1]
    %v657 = vld [vmem:[#allocation2 + $0x2c] sm:$0x1]
    %v658 = vld [vmem:[#allocation2 + $0x34] sm:$0x1]
    %v659 = vld [vmem:[#allocation2 + $0x3c] sm:$0x1]
    %v660 = vld [vmem:[#allocation2 + $0x54] sm:$0x1]
    %v661 = vld [vmem:[#allocation2 + $0x5c] sm:$0x1]
    %v662 = vld [vmem:[#allocation2 + $0x64] sm:$0x1]
    %v663 = vld [vmem:[#allocation2 + $0x6c] sm:$0x1]
    %v664 = vld [vmem:[#allocation2 + $0x74] sm:$0x1]
    %v665 = vld [vmem:[#allocation2 + $0x7c] sm:$0x1]
    %v666 = vld [vmem:[#allocation2 + $0x84] sm:$0x1]
    %v667 = vld [vmem:[#allocation2 + $0x8c] sm:$0x1]
    %v668 = vld [vmem:[#allocation2] sm:$0xe]
    %v669 = vld [vmem:[#allocation2 + $0x8] sm:$0xe]
    %v670 = vld [vmem:[#allocation2 + $0x10] sm:$0xe]
    %v671 = vld [vmem:[#allocation2 + $0x18] sm:$0xe]
    %v672 = vld [vmem:[#allocation2 + $0x20] sm:$0xe]
    %v673 = vld [vmem:[#allocation2 + $0x28] sm:$0xe]
    %v674 = vld [vmem:[#allocation2 + $0x30] sm:$0xe]
    %v675 = vld [vmem:[#allocation2 + $0x38] sm:$0xe]
    %v676 = vld [vmem:[#allocation2 + $0x50] sm:$0xe]
    %v677 = vld [vmem:[#allocation2 + $0x58] sm:$0xe]
    %v678 = vld [vmem:[#allocation2 + $0x60] sm:$0xe]
    %v679 = vld [vmem:[#allocation2 + $0x68] sm:$0xe]
    %v680 = vld [vmem:[#allocation2 + $0x70] sm:$0xe]
    %v681 = vld [vmem:[#allocation2 + $0x78] sm:$0xe]
    %v682 = vld [vmem:[#allocation2 + $0x80] sm:$0xe]
    %v683 = vld [vmem:[#allocation2 + $0x88] sm:$0xe]
    %v716 = vunpack.c.l.b16 %v636
    %v717 = vunpack.c.l.b16 %v652
    %v718 = vunpack.c.l.b16 %v637
    %v719 = vunpack.c.l.b16 %v653
    %v720 = vunpack.c.l.b16 %v638
    %v721 = vunpack.c.l.b16 %v654
    %v722 = vunpack.c.l.b16 %v639
    %v723 = vunpack.c.l.b16 %v655
    %v724 = vunpack.c.l.b16 %v640
    %v725 = vunpack.c.l.b16 %v656
    %v726 = vunpack.c.l.b16 %v641
    %v727 = vunpack.c.l.b16 %v657
    %v728 = vunpack.c.l.b16 %v642
    %v729 = vunpack.c.l.b16 %v658
    %v730 = vunpack.c.l.b16 %v643
    %v731 = vunpack.c.l.b16 %v659
    %v732 = vunpack.c.l.b16 %v644
    %v733 = vunpack.c.l.b16 %v660
    %v734 = vunpack.c.l.b16 %v645
    %v735 = vunpack.c.l.b16 %v661
    %v736 = vunpack.c.l.b16 %v646
    %v737 = vunpack.c.l.b16 %v662
    %v738 = vunpack.c.l.b16 %v647
    %v739 = vunpack.c.l.b16 %v663
    %v740 = vunpack.c.l.b16 %v648
    %v741 = vunpack.c.l.b16 %v664
    %v742 = vunpack.c.l.b16 %v649
    %v743 = vunpack.c.l.b16 %v665
    %v744 = vunpack.c.l.b16 %v650
    %v745 = vunpack.c.l.b16 %v666
    %v746 = vunpack.c.l.b16 %v651
    %v747 = vunpack.c.l.b16 %v667
    %v748 = vpack.c.b16 %v717, %v716
    %v749 = vpack.c.b16 %v719, %v718
    %v750 = vpack.c.b16 %v721, %v720
    %v751 = vpack.c.b16 %v723, %v722
    %v752 = vpack.c.b16 %v725, %v724
    %v753 = vpack.c.b16 %v727, %v726
    %v754 = vpack.c.b16 %v729, %v728
    %v755 = vpack.c.b16 %v731, %v730
    %v756 = vpack.c.b16 %v733, %v732
    %v757 = vpack.c.b16 %v735, %v734
    %v758 = vpack.c.b16 %v737, %v736
    %v759 = vpack.c.b16 %v739, %v738
    %v760 = vpack.c.b16 %v741, %v740
    %v761 = vpack.c.b16 %v743, %v742
    %v762 = vpack.c.b16 %v745, %v744
    %v763 = vpack.c.b16 %v747, %v746
    %v765 = vshrl.u32 %v748, 16
    %v767 = vshll.u32 %v748, 16
    %v769 = vrot.slane %v767, 1
    %v770 = vor.u32 %v765, %v769
    %v772 = vshrl.u32 %v749, 16
    %v774 = vshll.u32 %v749, 16
    %v776 = vrot.slane %v774, 1
    %v777 = vor.u32 %v772, %v776
    %v779 = vshrl.u32 %v750, 16
    %v781 = vshll.u32 %v750, 16
    %v783 = vrot.slane %v781, 1
    %v784 = vor.u32 %v779, %v783
    %v786 = vshrl.u32 %v751, 16
    %v788 = vshll.u32 %v751, 16
    %v790 = vrot.slane %v788, 1
    %v791 = vor.u32 %v786, %v790
    %v793 = vshrl.u32 %v752, 16
    %v795 = vshll.u32 %v752, 16
    %v797 = vrot.slane %v795, 1
    %v798 = vor.u32 %v793, %v797
    %v800 = vshrl.u32 %v753, 16
    %v802 = vshll.u32 %v753, 16
    %v804 = vrot.slane %v802, 1
    %v805 = vor.u32 %v800, %v804
    %v807 = vshrl.u32 %v754, 16
    %v809 = vshll.u32 %v754, 16
    %v811 = vrot.slane %v809, 1
    %v812 = vor.u32 %v807, %v811
    %v814 = vshrl.u32 %v755, 16
    %v816 = vshll.u32 %v755, 16
    %v818 = vrot.slane %v816, 1
    %v819 = vor.u32 %v814, %v818
    %v821 = vshrl.u32 %v756, 16
    %v823 = vshll.u32 %v756, 16
    %v825 = vrot.slane %v823, 1
    %v826 = vor.u32 %v821, %v825
    %v828 = vshrl.u32 %v757, 16
    %v830 = vshll.u32 %v757, 16
    %v832 = vrot.slane %v830, 1
    %v833 = vor.u32 %v828, %v832
    %v835 = vshrl.u32 %v758, 16
    %v837 = vshll.u32 %v758, 16
    %v839 = vrot.slane %v837, 1
    %v840 = vor.u32 %v835, %v839
    %v842 = vshrl.u32 %v759, 16
    %v844 = vshll.u32 %v759, 16
    %v846 = vrot.slane %v844, 1
    %v847 = vor.u32 %v842, %v846
    %v849 = vshrl.u32 %v760, 16
    %v851 = vshll.u32 %v760, 16
    %v853 = vrot.slane %v851, 1
    %v854 = vor.u32 %v849, %v853
    %v856 = vshrl.u32 %v761, 16
    %v858 = vshll.u32 %v761, 16
    %v860 = vrot.slane %v858, 1
    %v861 = vor.u32 %v856, %v860
    %v863 = vshrl.u32 %v762, 16
    %v865 = vshll.u32 %v762, 16
    %v867 = vrot.slane %v865, 1
    %v868 = vor.u32 %v863, %v867
    %v870 = vshrl.u32 %v763, 16
    %v872 = vshll.u32 %v763, 16
    %v874 = vrot.slane %v872, 1
    %v875 = vor.u32 %v870, %v874
    %876 = vrot.lane.b32.xlu0 %v770, 64
    %v877 = vpop.permute.xlu0 %876
    %878 = vrot.lane.b32.xlu0 %v777, 64
    %v879 = vpop.permute.xlu0 %878
    %880 = vrot.lane.b32.xlu0 %v784, 64
    %v881 = vpop.permute.xlu0 %880
    %882 = vrot.lane.b32.xlu0 %v791, 64
    %v883 = vpop.permute.xlu0 %882
    %884 = vrot.lane.b32.xlu0 %v798, 64
    %v885 = vpop.permute.xlu0 %884
    %886 = vrot.lane.b32.xlu0 %v805, 64
    %v887 = vpop.permute.xlu0 %886
    %888 = vrot.lane.b32.xlu0 %v812, 64
    %v889 = vpop.permute.xlu0 %888
    %890 = vrot.lane.b32.xlu0 %v819, 64
    %v891 = vpop.permute.xlu0 %890
    %892 = vrot.lane.b32.xlu0 %v826, 64
    %v893 = vpop.permute.xlu0 %892
    %894 = vrot.lane.b32.xlu0 %v833, 64
    %v895 = vpop.permute.xlu0 %894
    %896 = vrot.lane.b32.xlu0 %v840, 64
    %v897 = vpop.permute.xlu0 %896
    %898 = vrot.lane.b32.xlu0 %v847, 64
    %v899 = vpop.permute.xlu0 %898
    %900 = vrot.lane.b32.xlu0 %v854, 64
    %v901 = vpop.permute.xlu0 %900
    %902 = vrot.lane.b32.xlu0 %v861, 64
    %v903 = vpop.permute.xlu0 %902
    %904 = vrot.lane.b32.xlu0 %v868, 64
    %v905 = vpop.permute.xlu0 %904
    %906 = vrot.lane.b32.xlu0 %v875, 64
    %v907 = vpop.permute.xlu0 %906
    %v924 = vunpack.c.l.b16 %v668
    %v925 = vunpack.c.l.b16 %v669
    %v926 = vunpack.c.l.b16 %v670
    %v927 = vunpack.c.l.b16 %v671
    %v928 = vunpack.c.l.b16 %v672
    %v929 = vunpack.c.l.b16 %v673
    %v930 = vunpack.c.l.b16 %v674
    %v931 = vunpack.c.l.b16 %v675
    %v932 = vunpack.c.l.b16 %v676
    %v933 = vunpack.c.l.b16 %v677
    %v934 = vunpack.c.l.b16 %v678
    %v935 = vunpack.c.l.b16 %v679
    %v936 = vunpack.c.l.b16 %v680
    %v937 = vunpack.c.l.b16 %v681
    %v938 = vunpack.c.l.b16 %v682
    %v939 = vunpack.c.l.b16 %v683
    %v940 = vpack.c.b16 %v717, %v924
    %v941 = vpack.c.b16 %v719, %v925
    %v942 = vpack.c.b16 %v721, %v926
    %v943 = vpack.c.b16 %v723, %v927
    %v944 = vpack.c.b16 %v725, %v928
    %v945 = vpack.c.b16 %v727, %v929
    %v946 = vpack.c.b16 %v729, %v930
    %v947 = vpack.c.b16 %v731, %v931
    %v948 = vpack.c.b16 %v733, %v932
    %v949 = vpack.c.b16 %v735, %v933
    %v950 = vpack.c.b16 %v737, %v934
    %v951 = vpack.c.b16 %v739, %v935
    %v952 = vpack.c.b16 %v741, %v936
    %v953 = vpack.c.b16 %v743, %v937
    %v954 = vpack.c.b16 %v745, %v938
    %v955 = vpack.c.b16 %v747, %v939
    %v956 = vrot.slane %v940, 1
    %v957 = vrot.slane %v941, 1
    %v958 = vrot.slane %v942, 1
    %v959 = vrot.slane %v943, 1
    %v960 = vrot.slane %v944, 1
    %v961 = vrot.slane %v945, 1
    %v962 = vrot.slane %v946, 1
    %v963 = vrot.slane %v947, 1
    %v964 = vrot.slane %v948, 1
    %v965 = vrot.slane %v949, 1
    %v966 = vrot.slane %v950, 1
    %v967 = vrot.slane %v951, 1
    %v968 = vrot.slane %v952, 1
    %v969 = vrot.slane %v953, 1
    %v970 = vrot.slane %v954, 1
    %v971 = vrot.slane %v955, 1
    %vm972 = vcmask 523264
    %v975 = vsel %vm972, %v636, %v877
    %v978 = vsel %vm972, %v637, %v879
    %v981 = vsel %vm972, %v638, %v881
    %v984 = vsel %vm972, %v639, %v883
    %v987 = vsel %vm972, %v640, %v885
    %v990 = vsel %vm972, %v641, %v887
    %v993 = vsel %vm972, %v642, %v889
    %v996 = vsel %vm972, %v643, %v891
    %v999 = vsel %vm972, %v644, %v893
    %v1002 = vsel %vm972, %v645, %v895
    %v1005 = vsel %vm972, %v646, %v897
    %v1008 = vsel %vm972, %v647, %v899
    %v1011 = vsel %vm972, %v648, %v901
    %v1014 = vsel %vm972, %v649, %v903
    %v1017 = vsel %vm972, %v650, %v905
    %v1020 = vsel %vm972, %v651, %v907
    %v1037 = vunpack.c.l.b16 %v975
    %v1038 = vunpack.c.l.b16 %v956
    %v1039 = vunpack.c.l.b16 %v978
    %v1040 = vunpack.c.l.b16 %v957
    %v1041 = vunpack.c.l.b16 %v981
    %v1042 = vunpack.c.l.b16 %v958
    %v1043 = vunpack.c.l.b16 %v984
    %v1044 = vunpack.c.l.b16 %v959
    %v1045 = vunpack.c.l.b16 %v987
    %v1046 = vunpack.c.l.b16 %v960
    %v1047 = vunpack.c.l.b16 %v990
    %v1048 = vunpack.c.l.b16 %v961
    %v1049 = vunpack.c.l.b16 %v993
    %v1050 = vunpack.c.l.b16 %v962
    %v1051 = vunpack.c.l.b16 %v996
    %v1052 = vunpack.c.l.b16 %v963
    %v1053 = vunpack.c.l.b16 %v999
    %v1054 = vunpack.c.l.b16 %v964
    %v1055 = vunpack.c.l.b16 %v1002
    %v1056 = vunpack.c.l.b16 %v965
    %v1057 = vunpack.c.l.b16 %v1005
    %v1058 = vunpack.c.l.b16 %v966
    %v1059 = vunpack.c.l.b16 %v1008
    %v1060 = vunpack.c.l.b16 %v967
    %v1061 = vunpack.c.l.b16 %v1011
    %v1062 = vunpack.c.l.b16 %v968
    %v1063 = vunpack.c.l.b16 %v1014
    %v1064 = vunpack.c.l.b16 %v969
    %v1065 = vunpack.c.l.b16 %v1017
    %v1066 = vunpack.c.l.b16 %v970
    %v1067 = vunpack.c.l.b16 %v1020
    %v1068 = vunpack.c.l.b16 %v971
    %v1069 = vld [vmem:[%s1] sm:$0xf]
    %v1070 = vld [vmem:[%s1 + $0x4] sm:$0xf]
    %v1071 = vld [vmem:[%s1 + $0x8] sm:$0xf]
    %v1072 = vld [vmem:[%s1 + $0xc] sm:$0xf]
    %v1073 = vld [vmem:[%s1 + $0x10] sm:$0xf]
    %v1074 = vld [vmem:[%s1 + $0x14] sm:$0xf]
    %v1075 = vld [vmem:[%s1 + $0x18] sm:$0xf]
    %v1076 = vld [vmem:[%s1 + $0x1c] sm:$0xf]
    %v1077 = vld [vmem:[%s1 + $0x20] sm:$0xf]
    %v1078 = vld [vmem:[%s1 + $0x24] sm:$0xf]
    %v1079 = vld [vmem:[%s1 + $0x28] sm:$0xf]
    %v1080 = vld [vmem:[%s1 + $0x2c] sm:$0xf]
    %v1081 = vld [vmem:[%s1 + $0x30] sm:$0xf]
    %v1082 = vld [vmem:[%s1 + $0x34] sm:$0xf]
    %v1083 = vld [vmem:[%s1 + $0x38] sm:$0xf]
    %v1084 = vld [vmem:[%s1 + $0x3c] sm:$0xf]
    %v1085 = vld [vmem:[%s1 + $0x40] sm:$0xf]
    %v1086 = vld [vmem:[%s1 + $0x44] sm:$0xf]
    %v1087 = vld [vmem:[%s1 + $0x48] sm:$0xf]
    %v1088 = vld [vmem:[%s1 + $0x4c] sm:$0xf]
    %v1089 = vld [vmem:[%s1 + $0x50] sm:$0xf]
    %v1090 = vld [vmem:[%s1 + $0x54] sm:$0xf]
    %v1091 = vld [vmem:[%s1 + $0x58] sm:$0xf]
    %v1092 = vld [vmem:[%s1 + $0x5c] sm:$0xf]
    %v1093 = vld [vmem:[%s537] sm:$0xf]
    %v1094 = vld [vmem:[%s537 + $0x8] sm:$0xf]
    %v1095 = vld [vmem:[%s537 + $0x10] sm:$0xf]
    %v1096 = vld [vmem:[%s537 + $0x18] sm:$0xf]
    %v1097 = vld [vmem:[%s537 + $0x20] sm:$0xf]
    %v1098 = vld [vmem:[%s537 + $0x28] sm:$0xf]
    %v1099 = vld [vmem:[%s537 + $0x30] sm:$0xf]
    %v1100 = vld [vmem:[%s537 + $0x38] sm:$0xf]
    %v1101 = vld [vmem:[%s537 + $0x50] sm:$0xf]
    %v1102 = vld [vmem:[%s537 + $0x58] sm:$0xf]
    %v1103 = vld [vmem:[%s537 + $0x60] sm:$0xf]
    %v1104 = vld [vmem:[%s537 + $0x68] sm:$0xf]
    %v1105 = vld [vmem:[%s537 + $0x70] sm:$0xf]
    %v1106 = vld [vmem:[%s537 + $0x78] sm:$0xf]
    %v1107 = vld [vmem:[%s537 + $0x80] sm:$0xf]
    %v1108 = vld [vmem:[%s537 + $0x88] sm:$0xf]
    %v1109 = vld [vmem:[%s537 + $0x4] sm:$0x1]
    %v1110 = vld [vmem:[%s537 + $0xc] sm:$0x1]
    %v1111 = vld [vmem:[%s537 + $0x14] sm:$0x1]
    %v1112 = vld [vmem:[%s537 + $0x1c] sm:$0x1]
    %v1113 = vld [vmem:[%s537 + $0x24] sm:$0x1]
    %v1114 = vld [vmem:[%s537 + $0x2c] sm:$0x1]
    %v1115 = vld [vmem:[%s537 + $0x34] sm:$0x1]
    %v1116 = vld [vmem:[%s537 + $0x3c] sm:$0x1]
    %v1117 = vld [vmem:[%s537 + $0x54] sm:$0x1]
    %v1118 = vld [vmem:[%s537 + $0x5c] sm:$0x1]
    %v1119 = vld [vmem:[%s537 + $0x64] sm:$0x1]
    %v1120 = vld [vmem:[%s537 + $0x6c] sm:$0x1]
    %v1121 = vld [vmem:[%s537 + $0x74] sm:$0x1]
    %v1122 = vld [vmem:[%s537 + $0x7c] sm:$0x1]
    %v1123 = vld [vmem:[%s537 + $0x84] sm:$0x1]
    %v1124 = vld [vmem:[%s537 + $0x8c] sm:$0x1]
    %v1125 = vld [vmem:[%s537] sm:$0xe]
    %v1126 = vld [vmem:[%s537 + $0x8] sm:$0xe]
    %v1127 = vld [vmem:[%s537 + $0x10] sm:$0xe]
    %v1128 = vld [vmem:[%s537 + $0x18] sm:$0xe]
    %v1129 = vld [vmem:[%s537 + $0x20] sm:$0xe]
    %v1130 = vld [vmem:[%s537 + $0x28] sm:$0xe]
    %v1131 = vld [vmem:[%s537 + $0x30] sm:$0xe]
    %v1132 = vld [vmem:[%s537 + $0x38] sm:$0xe]
    %v1133 = vld [vmem:[%s537 + $0x50] sm:$0xe]
    %v1134 = vld [vmem:[%s537 + $0x58] sm:$0xe]
    %v1135 = vld [vmem:[%s537 + $0x60] sm:$0xe]
    %v1136 = vld [vmem:[%s537 + $0x68] sm:$0xe]
    %v1137 = vld [vmem:[%s537 + $0x70] sm:$0xe]
    %v1138 = vld [vmem:[%s537 + $0x78] sm:$0xe]
    %v1139 = vld [vmem:[%s537 + $0x80] sm:$0xe]
    %v1140 = vld [vmem:[%s537 + $0x88] sm:$0xe]
    %v1173 = vunpack.c.l.b16 %v1093
    %v1174 = vunpack.c.l.b16 %v1109
    %v1175 = vunpack.c.l.b16 %v1094
    %v1176 = vunpack.c.l.b16 %v1110
    %v1177 = vunpack.c.l.b16 %v1095
    %v1178 = vunpack.c.l.b16 %v1111
    %v1179 = vunpack.c.l.b16 %v1096
    %v1180 = vunpack.c.l.b16 %v1112
    %v1181 = vunpack.c.l.b16 %v1097
    %v1182 = vunpack.c.l.b16 %v1113
    %v1183 = vunpack.c.l.b16 %v1098
    %v1184 = vunpack.c.l.b16 %v1114
    %v1185 = vunpack.c.l.b16 %v1099
    %v1186 = vunpack.c.l.b16 %v1115
    %v1187 = vunpack.c.l.b16 %v1100
    %v1188 = vunpack.c.l.b16 %v1116
    %v1189 = vunpack.c.l.b16 %v1101
    %v1190 = vunpack.c.l.b16 %v1117
    %v1191 = vunpack.c.l.b16 %v1102
    %v1192 = vunpack.c.l.b16 %v1118
    %v1193 = vunpack.c.l.b16 %v1103
    %v1194 = vunpack.c.l.b16 %v1119
    %v1195 = vunpack.c.l.b16 %v1104
    %v1196 = vunpack.c.l.b16 %v1120
    %v1197 = vunpack.c.l.b16 %v1105
    %v1198 = vunpack.c.l.b16 %v1121
    %v1199 = vunpack.c.l.b16 %v1106
    %v1200 = vunpack.c.l.b16 %v1122
    %v1201 = vunpack.c.l.b16 %v1107
    %v1202 = vunpack.c.l.b16 %v1123
    %v1203 = vunpack.c.l.b16 %v1108
    %v1204 = vunpack.c.l.b16 %v1124
    %v1205 = vpack.c.b16 %v1174, %v1173
    %v1206 = vpack.c.b16 %v1176, %v1175
    %v1207 = vpack.c.b16 %v1178, %v1177
    %v1208 = vpack.c.b16 %v1180, %v1179
    %v1209 = vpack.c.b16 %v1182, %v1181
    %v1210 = vpack.c.b16 %v1184, %v1183
    %v1211 = vpack.c.b16 %v1186, %v1185
    %v1212 = vpack.c.b16 %v1188, %v1187
    %v1213 = vpack.c.b16 %v1190, %v1189
    %v1214 = vpack.c.b16 %v1192, %v1191
    %v1215 = vpack.c.b16 %v1194, %v1193
    %v1216 = vpack.c.b16 %v1196, %v1195
    %v1217 = vpack.c.b16 %v1198, %v1197
    %v1218 = vpack.c.b16 %v1200, %v1199
    %v1219 = vpack.c.b16 %v1202, %v1201
    %v1220 = vpack.c.b16 %v1204, %v1203
    %v1222 = vshrl.u32 %v1205, 16
    %v1224 = vshll.u32 %v1205, 16
    %v1226 = vrot.slane %v1224, 1
    %v1227 = vor.u32 %v1222, %v1226
    %v1229 = vshrl.u32 %v1206, 16
    %v1231 = vshll.u32 %v1206, 16
    %v1233 = vrot.slane %v1231, 1
    %v1234 = vor.u32 %v1229, %v1233
    %v1236 = vshrl.u32 %v1207, 16
    %v1238 = vshll.u32 %v1207, 16
    %v1240 = vrot.slane %v1238, 1
    %v1241 = vor.u32 %v1236, %v1240
    %v1243 = vshrl.u32 %v1208, 16
    %v1245 = vshll.u32 %v1208, 16
    %v1247 = vrot.slane %v1245, 1
    %v1248 = vor.u32 %v1243, %v1247
    %v1250 = vshrl.u32 %v1209, 16
    %v1252 = vshll.u32 %v1209, 16
    %v1254 = vrot.slane %v1252, 1
    %v1255 = vor.u32 %v1250, %v1254
    %v1257 = vshrl.u32 %v1210, 16
    %v1259 = vshll.u32 %v1210, 16
    %v1261 = vrot.slane %v1259, 1
    %v1262 = vor.u32 %v1257, %v1261
    %v1264 = vshrl.u32 %v1211, 16
    %v1266 = vshll.u32 %v1211, 16
    %v1268 = vrot.slane %v1266, 1
    %v1269 = vor.u32 %v1264, %v1268
    %v1271 = vshrl.u32 %v1212, 16
    %v1273 = vshll.u32 %v1212, 16
    %v1275 = vrot.slane %v1273, 1
    %v1276 = vor.u32 %v1271, %v1275
    %v1278 = vshrl.u32 %v1213, 16
    %v1280 = vshll.u32 %v1213, 16
    %v1282 = vrot.slane %v1280, 1
    %v1283 = vor.u32 %v1278, %v1282
    %v1285 = vshrl.u32 %v1214, 16
    %v1287 = vshll.u32 %v1214, 16
    %v1289 = vrot.slane %v1287, 1
    %v1290 = vor.u32 %v1285, %v1289
    %v1292 = vshrl.u32 %v1215, 16
    %v1294 = vshll.u32 %v1215, 16
    %v1296 = vrot.slane %v1294, 1
    %v1297 = vor.u32 %v1292, %v1296
    %v1299 = vshrl.u32 %v1216, 16
    %v1301 = vshll.u32 %v1216, 16
    %v1303 = vrot.slane %v1301, 1
    %v1304 = vor.u32 %v1299, %v1303
    %v1306 = vshrl.u32 %v1217, 16
    %v1308 = vshll.u32 %v1217, 16
    %v1310 = vrot.slane %v1308, 1
    %v1311 = vor.u32 %v1306, %v1310
    %v1313 = vshrl.u32 %v1218, 16
    %v1315 = vshll.u32 %v1218, 16
    %v1317 = vrot.slane %v1315, 1
    %v1318 = vor.u32 %v1313, %v1317
    %v1320 = vshrl.u32 %v1219, 16
    %v1322 = vshll.u32 %v1219, 16
    %v1324 = vrot.slane %v1322, 1
    %v1325 = vor.u32 %v1320, %v1324
    %v1327 = vshrl.u32 %v1220, 16
    %v1329 = vshll.u32 %v1220, 16
    %v1331 = vrot.slane %v1329, 1
    %v1332 = vor.u32 %v1327, %v1331
    %1333 = vrot.lane.b32.xlu0 %v1227, 64
    %v1334 = vpop.permute.xlu0 %1333
    %1335 = vrot.lane.b32.xlu0 %v1234, 64
    %v1336 = vpop.permute.xlu0 %1335
    %1337 = vrot.lane.b32.xlu0 %v1241, 64
    %v1338 = vpop.permute.xlu0 %1337
    %1339 = vrot.lane.b32.xlu0 %v1248, 64
    %v1340 = vpop.permute.xlu0 %1339
    %1341 = vrot.lane.b32.xlu0 %v1255, 64
    %v1342 = vpop.permute.xlu0 %1341
    %1343 = vrot.lane.b32.xlu0 %v1262, 64
    %v1344 = vpop.permute.xlu0 %1343
    %1345 = vrot.lane.b32.xlu0 %v1269, 64
    %v1346 = vpop.permute.xlu0 %1345
    %1347 = vrot.lane.b32.xlu0 %v1276, 64
    %v1348 = vpop.permute.xlu0 %1347
    %1349 = vrot.lane.b32.xlu0 %v1283, 64
    %v1350 = vpop.permute.xlu0 %1349
    %1351 = vrot.lane.b32.xlu0 %v1290, 64
    %v1352 = vpop.permute.xlu0 %1351
    %1353 = vrot.lane.b32.xlu0 %v1297, 64
    %v1354 = vpop.permute.xlu0 %1353
    %1355 = vrot.lane.b32.xlu0 %v1304, 64
    %v1356 = vpop.permute.xlu0 %1355
    %1357 = vrot.lane.b32.xlu0 %v1311, 64
    %v1358 = vpop.permute.xlu0 %1357
    %1359 = vrot.lane.b32.xlu0 %v1318, 64
    %v1360 = vpop.permute.xlu0 %1359
    %1361 = vrot.lane.b32.xlu0 %v1325, 64
    %v1362 = vpop.permute.xlu0 %1361
    %1363 = vrot.lane.b32.xlu0 %v1332, 64
    %v1364 = vpop.permute.xlu0 %1363
    %v1381 = vunpack.c.l.b16 %v1125
    %v1382 = vunpack.c.l.b16 %v1126
    %v1383 = vunpack.c.l.b16 %v1127
    %v1384 = vunpack.c.l.b16 %v1128
    %v1385 = vunpack.c.l.b16 %v1129
    %v1386 = vunpack.c.l.b16 %v1130
    %v1387 = vunpack.c.l.b16 %v1131
    %v1388 = vunpack.c.l.b16 %v1132
    %v1389 = vunpack.c.l.b16 %v1133
    %v1390 = vunpack.c.l.b16 %v1134
    %v1391 = vunpack.c.l.b16 %v1135
    %v1392 = vunpack.c.l.b16 %v1136
    %v1393 = vunpack.c.l.b16 %v1137
    %v1394 = vunpack.c.l.b16 %v1138
    %v1395 = vunpack.c.l.b16 %v1139
    %v1396 = vunpack.c.l.b16 %v1140
    %v1397 = vpack.c.b16 %v1174, %v1381
    %v1398 = vpack.c.b16 %v1176, %v1382
    %v1399 = vpack.c.b16 %v1178, %v1383
    %v1400 = vpack.c.b16 %v1180, %v1384
    %v1401 = vpack.c.b16 %v1182, %v1385
    %v1402 = vpack.c.b16 %v1184, %v1386
    %v1403 = vpack.c.b16 %v1186, %v1387
    %v1404 = vpack.c.b16 %v1188, %v1388
    %v1405 = vpack.c.b16 %v1190, %v1389
    %v1406 = vpack.c.b16 %v1192, %v1390
    %v1407 = vpack.c.b16 %v1194, %v1391
    %v1408 = vpack.c.b16 %v1196, %v1392
    %v1409 = vpack.c.b16 %v1198, %v1393
    %v1410 = vpack.c.b16 %v1200, %v1394
    %v1411 = vpack.c.b16 %v1202, %v1395
    %v1412 = vpack.c.b16 %v1204, %v1396
    %v1413 = vrot.slane %v1397, 1
    %v1414 = vrot.slane %v1398, 1
    %v1415 = vrot.slane %v1399, 1
    %v1416 = vrot.slane %v1400, 1
    %v1417 = vrot.slane %v1401, 1
    %v1418 = vrot.slane %v1402, 1
    %v1419 = vrot.slane %v1403, 1
    %v1420 = vrot.slane %v1404, 1
    %v1421 = vrot.slane %v1405, 1
    %v1422 = vrot.slane %v1406, 1
    %v1423 = vrot.slane %v1407, 1
    %v1424 = vrot.slane %v1408, 1
    %v1425 = vrot.slane %v1409, 1
    %v1426 = vrot.slane %v1410, 1
    %v1427 = vrot.slane %v1411, 1
    %v1428 = vrot.slane %v1412, 1
    %v1431 = vsel %vm972, %v1093, %v1334
    %v1434 = vsel %vm972, %v1094, %v1336
    %v1437 = vsel %vm972, %v1095, %v1338
    %v1440 = vsel %vm972, %v1096, %v1340
    %v1443 = vsel %vm972, %v1097, %v1342
    %v1446 = vsel %vm972, %v1098, %v1344
    %v1449 = vsel %vm972, %v1099, %v1346
    %v1452 = vsel %vm972, %v1100, %v1348
    %v1455 = vsel %vm972, %v1101, %v1350
    %v1458 = vsel %vm972, %v1102, %v1352
    %v1461 = vsel %vm972, %v1103, %v1354
    %v1464 = vsel %vm972, %v1104, %v1356
    %v1467 = vsel %vm972, %v1105, %v1358
    %v1470 = vsel %vm972, %v1106, %v1360
    %v1473 = vsel %vm972, %v1107, %v1362
    %v1476 = vsel %vm972, %v1108, %v1364
    %v1493 = vunpack.c.l.b16 %v1431
    %v1494 = vunpack.c.l.b16 %v1413
    %v1495 = vunpack.c.l.b16 %v1434
    %v1496 = vunpack.c.l.b16 %v1414
    %v1497 = vunpack.c.l.b16 %v1437
    %v1498 = vunpack.c.l.b16 %v1415
    %v1499 = vunpack.c.l.b16 %v1440
    %v1500 = vunpack.c.l.b16 %v1416
    %v1501 = vunpack.c.l.b16 %v1443
    %v1502 = vunpack.c.l.b16 %v1417
    %v1503 = vunpack.c.l.b16 %v1446
    %v1504 = vunpack.c.l.b16 %v1418
    %v1505 = vunpack.c.l.b16 %v1449
    %v1506 = vunpack.c.l.b16 %v1419
    %v1507 = vunpack.c.l.b16 %v1452
    %v1508 = vunpack.c.l.b16 %v1420
    %v1509 = vunpack.c.l.b16 %v1455
    %v1510 = vunpack.c.l.b16 %v1421
    %v1511 = vunpack.c.l.b16 %v1458
    %v1512 = vunpack.c.l.b16 %v1422
    %v1513 = vunpack.c.l.b16 %v1461
    %v1514 = vunpack.c.l.b16 %v1423
    %v1515 = vunpack.c.l.b16 %v1464
    %v1516 = vunpack.c.l.b16 %v1424
    %v1517 = vunpack.c.l.b16 %v1467
    %v1518 = vunpack.c.l.b16 %v1425
    %v1519 = vunpack.c.l.b16 %v1470
    %v1520 = vunpack.c.l.b16 %v1426
    %v1521 = vunpack.c.l.b16 %v1473
    %v1522 = vunpack.c.l.b16 %v1427
    %v1523 = vunpack.c.l.b16 %v1476
    %v1524 = vunpack.c.l.b16 %v1428
    %s1525 = scalar_lea.vmem %s1, 96
    %v1526 = vld [vmem:[%s1525] sm:$0xf]
    %v1527 = vld [vmem:[%s1525 + $0x4] sm:$0xf]
    %v1528 = vld [vmem:[%s1525 + $0x8] sm:$0xf]
    %v1529 = vld [vmem:[%s1525 + $0xc] sm:$0xf]
    %v1530 = vld [vmem:[%s1525 + $0x10] sm:$0xf]
    %v1531 = vld [vmem:[%s1525 + $0x14] sm:$0xf]
    %v1532 = vld [vmem:[%s1525 + $0x18] sm:$0xf]
    %v1533 = vld [vmem:[%s1525 + $0x1c] sm:$0xf]
    %v1534 = vld [vmem:[%s1525 + $0x20] sm:$0xf]
    %v1535 = vld [vmem:[%s1525 + $0x24] sm:$0xf]
    %v1536 = vld [vmem:[%s1525 + $0x28] sm:$0xf]
    %v1537 = vld [vmem:[%s1525 + $0x2c] sm:$0xf]
    %v1538 = vld [vmem:[%s1525 + $0x30] sm:$0xf]
    %v1539 = vld [vmem:[%s1525 + $0x34] sm:$0xf]
    %v1540 = vld [vmem:[%s1525 + $0x38] sm:$0xf]
    %v1541 = vld [vmem:[%s1525 + $0x3c] sm:$0xf]
    %v1542 = vld [vmem:[%s1525 + $0x40] sm:$0xf]
    %v1543 = vld [vmem:[%s1525 + $0x44] sm:$0xf]
    %v1544 = vld [vmem:[%s1525 + $0x48] sm:$0xf]
    %v1545 = vld [vmem:[%s1525 + $0x4c] sm:$0xf]
    %v1546 = vld [vmem:[%s1525 + $0x50] sm:$0xf]
    %v1547 = vld [vmem:[%s1525 + $0x54] sm:$0xf]
    %v1548 = vld [vmem:[%s1525 + $0x58] sm:$0xf]
    %v1549 = vld [vmem:[%s1525 + $0x5c] sm:$0xf]
    %v1550 = vpack.c.b16 %v1495, %v1493
    %v1551 = vpack.c.b16 %v1496, %v1494
    %v1552 = vpack.c.b16 %v1499, %v1497
    %v1553 = vpack.c.b16 %v1500, %v1498
    %v1554 = vpack.c.b16 %v1503, %v1501
    %v1555 = vpack.c.b16 %v1504, %v1502
    %v1556 = vpack.c.b16 %v1507, %v1505
    %v1557 = vpack.c.b16 %v1508, %v1506
    %v1558 = vpack.c.b16 %v1511, %v1509
    %v1559 = vpack.c.b16 %v1512, %v1510
    %v1560 = vpack.c.b16 %v1515, %v1513
    %v1561 = vpack.c.b16 %v1516, %v1514
    %v1562 = vpack.c.b16 %v1519, %v1517
    %v1563 = vpack.c.b16 %v1520, %v1518
    %v1564 = vpack.c.b16 %v1523, %v1521
    %v1565 = vpack.c.b16 %v1524, %v1522
    %v1598 = vunpack.c.l.b16 %v1526
    %v1599 = vunpack.c.l.b16 %v1527
    %v1600 = vunpack.c.l.b16 %v1528
    %v1601 = vunpack.c.l.b16 %v1529
    %v1602 = vunpack.c.l.b16 %v1530
    %v1603 = vunpack.c.l.b16 %v1531
    %v1604 = vunpack.c.l.b16 %v1532
    %v1605 = vunpack.c.l.b16 %v1533
    %v1606 = vunpack.c.l.b16 %v1534
    %v1607 = vunpack.c.l.b16 %v1535
    %v1608 = vunpack.c.l.b16 %v1536
    %v1609 = vunpack.c.l.b16 %v1537
    %v1610 = vunpack.c.l.b16 %v1538
    %v1611 = vunpack.c.l.b16 %v1539
    %v1612 = vunpack.c.l.b16 %v1540
    %v1613 = vunpack.c.l.b16 %v1541
    %v1614 = vunpack.c.l.b16 %v1542
    %v1615 = vunpack.c.l.b16 %v1543
    %v1616 = vunpack.c.l.b16 %v1544
    %v1617 = vunpack.c.l.b16 %v1545
    %v1618 = vunpack.c.l.b16 %v1546
    %v1619 = vunpack.c.l.b16 %v1547
    %v1620 = vunpack.c.l.b16 %v1548
    %v1621 = vunpack.c.l.b16 %v1549
    %v1622 = vpack.c.b16 %v1599, %v1598
    %v1623 = vpack.c.b16 %v1601, %v1600
    %v1624 = vpack.c.b16 %v1603, %v1602
    %v1625 = vpack.c.b16 %v1605, %v1604
    %v1626 = vpack.c.b16 %v1607, %v1606
    %v1627 = vpack.c.b16 %v1609, %v1608
    %v1628 = vpack.c.b16 %v1611, %v1610
    %v1629 = vpack.c.b16 %v1613, %v1612
    %v1630 = vpack.c.b16 %v1615, %v1614
    %v1631 = vpack.c.b16 %v1617, %v1616
    %v1632 = vpack.c.b16 %v1619, %v1618
    %v1633 = vpack.c.b16 %v1621, %v1620
    %v1647 = vsel %vm972, %v1551, 0
    %v1650 = vsel %vm972, %v1553, 0
    %v1653 = vsel %vm972, %v1555, 0
    %v1656 = vsel %vm972, %v1557, 0
    %v1659 = vsel %vm972, %v1559, 0
    %v1662 = vsel %vm972, %v1561, 0
    %v1665 = vsel %vm972, %v1563, 0
    %v1668 = vsel %vm972, %v1565, 0
    %1670 = vmatprep.subr.bf16.mxu0 0
    %1671 = vmatpush1.bf16.msra.mxu0 %v1622
    %1672 = vmatprep.subr.bf16.mxu0 0
    %1673 = vmatpush1.bf16.msra.mxu0 %v1623
    %1674 = vmatprep.subr.bf16.mxu0 0
    %1675 = vmatpush1.bf16.msra.mxu0 %v1624
    %1676 = vmatprep.subr.bf16.mxu0 0
    %1677 = vmatpush1.bf16.msra.mxu0 %v1625
    %1678 = vmatprep.subr.bf16.mxu0 0
    %1679 = vmatpush1.bf16.msra.mxu0 %v1626
    %1680 = vmatprep.subr.bf16.mxu0 0
    %1681 = vmatpush1.bf16.msra.mxu0 %v1627
    %1682 = vmatprep.subr.bf16.mxu0 0
    %1683 = vmatpush1.bf16.msra.mxu0 %v1628
    %1684 = vmatprep.subr.bf16.mxu0 0
    %1685 = vmatpush1.bf16.msra.mxu0 %v1629
    %1686 = vmatprep.subr.bf16.mxu0 0
    %1687 = vmatpush1.bf16.msra.mxu0 %v1630
    %1688 = vmatprep.subr.bf16.mxu0 0
    %1689 = vmatpush1.bf16.msra.mxu0 %v1631
    %1690 = vmatprep.subr.bf16.mxu0 0
    %1691 = vmatpush1.bf16.msra.mxu0 %v1632
    %1692 = vmatprep.subr.bf16.mxu0 0
    %1693 = vmatpush1.bf16.msra.mxu0 %v1633
    %1694 = vmatprep.subr.bf16.mxu0 0
    %1695 = vmatpush1.bf16.msra.mxu0 0
    %1696 = vmatprep.subr.bf16.mxu0 0
    %1697 = vmatpush1.bf16.msra.mxu0 0
    %1698 = vmatprep.subr.bf16.mxu0 0
    %1699 = vmatpush1.bf16.msra.mxu0 0
    %1700 = vmatprep.subr.bf16.mxu0 0
    %1701 = vmatpush1.bf16.msra.mxu0 0
    %1702 = vmatprep.mubr.bf16.mxu0 %v1647
    %1703 = vmatmul.mubr.bf16.gmra.mrb[0].mxu0 %v1550
    %v1704 = vpop.f32.mrb[0].mxu0
    %v1705 = vadd.f32 0.0, %v1704
    %v1706 = vpop.f32.mrb[0].mxu0
    %v1707 = vpop.f32.mrb[0].mxu0
    %v1708 = vadd.f32 0.0, %v1707
    %v1709 = vpop.f32.mrb[0].mxu0
    %1710 = vmatprep.mubr.bf16.mxu0 %v1650
    %1711 = vmatmul.mubr.bf16.gmra.mrb[0].mxu0 %v1552
    %v1712 = vpop.f32.mrb[0].mxu0
    %v1713 = vadd.f32 0.0, %v1712
    %v1714 = vpop.f32.mrb[0].mxu0
    %v1715 = vpop.f32.mrb[0].mxu0
    %v1716 = vadd.f32 0.0, %v1715
    %v1717 = vpop.f32.mrb[0].mxu0
    %1718 = vmatprep.mubr.bf16.mxu0 %v1653
    %1719 = vmatmul.mubr.bf16.gmra.mrb[0].mxu0 %v1554
    %v1720 = vpop.f32.mrb[0].mxu0
    %v1721 = vadd.f32 0.0, %v1720
    %v1722 = vpop.f32.mrb[0].mxu0
    %v1723 = vpop.f32.mrb[0].mxu0
    %v1724 = vadd.f32 0.0, %v1723
    %v1725 = vpop.f32.mrb[0].mxu0
    %1726 = vmatprep.mubr.bf16.mxu0 %v1656
    %1727 = vmatmul.mubr.bf16.gmra.mrb[0].mxu0 %v1556
    %v1728 = vpop.f32.mrb[0].mxu0
    %v1729 = vadd.f32 0.0, %v1728
    %v1730 = vpop.f32.mrb[0].mxu0
    %v1731 = vpop.f32.mrb[0].mxu0
    %v1732 = vadd.f32 0.0, %v1731
    %v1733 = vpop.f32.mrb[0].mxu0
    %1734 = vmatprep.mubr.bf16.mxu0 %v1659
    %1735 = vmatmul.mubr.bf16.gmra.mrb[0].mxu0 %v1558
    %v1736 = vpop.f32.mrb[0].mxu0
    %v1737 = vadd.f32 0.0, %v1736
    %v1738 = vpop.f32.mrb[0].mxu0
    %v1739 = vpop.f32.mrb[0].mxu0
    %v1740 = vadd.f32 0.0, %v1739
    %v1741 = vpop.f32.mrb[0].mxu0
    %1742 = vmatprep.mubr.bf16.mxu0 %v1662
    %1743 = vmatmul.mubr.bf16.gmra.mrb[0].mxu0 %v1560
    %v1744 = vpop.f32.mrb[0].mxu0
    %v1745 = vadd.f32 0.0, %v1744
    %v1746 = vpop.f32.mrb[0].mxu0
    %v1747 = vpop.f32.mrb[0].mxu0
    %v1748 = vadd.f32 0.0, %v1747
    %v1749 = vpop.f32.mrb[0].mxu0
    %1750 = vmatprep.mubr.bf16.mxu0 %v1665
    %1751 = vmatmul.mubr.bf16.gmra.mrb[0].mxu0 %v1562
    %v1752 = vpop.f32.mrb[0].mxu0
    %v1753 = vadd.f32 0.0, %v1752
    %v1754 = vpop.f32.mrb[0].mxu0
    %v1755 = vpop.f32.mrb[0].mxu0
    %v1756 = vadd.f32 0.0, %v1755
    %v1757 = vpop.f32.mrb[0].mxu0
    %1758 = vmatprep.mubr.bf16.mxu0 %v1668
    %1759 = vmatmul.mubr.bf16.gmra.mrb[0].mxu0 %v1564
    %v1760 = vpop.f32.mrb[0].mxu0
    %v1761 = vadd.f32 0.0, %v1760
    %v1762 = vpop.f32.mrb[0].mxu0
    %v1763 = vpop.f32.mrb[0].mxu0
    %v1764 = vadd.f32 0.0, %v1763
    %v1765 = vpop.f32.mrb[0].mxu0
    %1766 = vdwg.mxu0
    %v1767 = vpack.c.b16 %v1039, %v1037
    %v1768 = vpack.c.b16 %v1040, %v1038
    %v1769 = vpack.c.b16 %v1043, %v1041
    %v1770 = vpack.c.b16 %v1044, %v1042
    %v1771 = vpack.c.b16 %v1047, %v1045
    %v1772 = vpack.c.b16 %v1048, %v1046
    %v1773 = vpack.c.b16 %v1051, %v1049
    %v1774 = vpack.c.b16 %v1052, %v1050
    %v1775 = vpack.c.b16 %v1055, %v1053
    %v1776 = vpack.c.b16 %v1056, %v1054
    %v1777 = vpack.c.b16 %v1059, %v1057
    %v1778 = vpack.c.b16 %v1060, %v1058
    %v1779 = vpack.c.b16 %v1063, %v1061
    %v1780 = vpack.c.b16 %v1064, %v1062
    %v1781 = vpack.c.b16 %v1067, %v1065
    %v1782 = vpack.c.b16 %v1068, %v1066
    %v1815 = vunpack.c.l.b16 %v1069
    %v1816 = vunpack.c.l.b16 %v1070
    %v1817 = vunpack.c.l.b16 %v1071
    %v1818 = vunpack.c.l.b16 %v1072
    %v1819 = vunpack.c.l.b16 %v1073
    %v1820 = vunpack.c.l.b16 %v1074
    %v1821 = vunpack.c.l.b16 %v1075
    %v1822 = vunpack.c.l.b16 %v1076
    %v1823 = vunpack.c.l.b16 %v1077
    %v1824 = vunpack.c.l.b16 %v1078
    %v1825 = vunpack.c.l.b16 %v1079
    %v1826 = vunpack.c.l.b16 %v1080
    %v1827 = vunpack.c.l.b16 %v1081
    %v1828 = vunpack.c.l.b16 %v1082
    %v1829 = vunpack.c.l.b16 %v1083
    %v1830 = vunpack.c.l.b16 %v1084
    %v1831 = vunpack.c.l.b16 %v1085
    %v1832 = vunpack.c.l.b16 %v1086
    %v1833 = vunpack.c.l.b16 %v1087
    %v1834 = vunpack.c.l.b16 %v1088
    %v1835 = vunpack.c.l.b16 %v1089
    %v1836 = vunpack.c.l.b16 %v1090
    %v1837 = vunpack.c.l.b16 %v1091
    %v1838 = vunpack.c.l.b16 %v1092
    %v1839 = vpack.c.b16 %v1816, %v1815
    %v1840 = vpack.c.b16 %v1818, %v1817
    %v1841 = vpack.c.b16 %v1820, %v1819
    %v1842 = vpack.c.b16 %v1822, %v1821
    %v1843 = vpack.c.b16 %v1824, %v1823
    %v1844 = vpack.c.b16 %v1826, %v1825
    %v1845 = vpack.c.b16 %v1828, %v1827
    %v1846 = vpack.c.b16 %v1830, %v1829
    %v1847 = vpack.c.b16 %v1832, %v1831
    %v1848 = vpack.c.b16 %v1834, %v1833
    %v1849 = vpack.c.b16 %v1836, %v1835
    %v1850 = vpack.c.b16 %v1838, %v1837
    %v1864 = vsel %vm972, %v1768, 0
    %v1867 = vsel %vm972, %v1770, 0
    %v1870 = vsel %vm972, %v1772, 0
    %v1873 = vsel %vm972, %v1774, 0
    %v1876 = vsel %vm972, %v1776, 0
    %v1879 = vsel %vm972, %v1778, 0
    %v1882 = vsel %vm972, %v1780, 0
    %v1885 = vsel %vm972, %v1782, 0
    %1887 = vmatprep.subr.bf16.mxu0 0
    %1888 = vmatpush1.bf16.msra.mxu0 %v1839
    %1889 = vmatprep.subr.bf16.mxu0 0
    %1890 = vmatpush1.bf16.msra.mxu0 %v1840
    %1891 = vmatprep.subr.bf16.mxu0 0
    %1892 = vmatpush1.bf16.msra.mxu0 %v1841
    %1893 = vmatprep.subr.bf16.mxu0 0
    %1894 = vmatpush1.bf16.msra.mxu0 %v1842
    %1895 = vmatprep.subr.bf16.mxu0 0
    %1896 = vmatpush1.bf16.msra.mxu0 %v1843
    %1897 = vmatprep.subr.bf16.mxu0 0
    %1898 = vmatpush1.bf16.msra.mxu0 %v1844
    %1899 = vmatprep.subr.bf16.mxu0 0
    %1900 = vmatpush1.bf16.msra.mxu0 %v1845
    %1901 = vmatprep.subr.bf16.mxu0 0
    %1902 = vmatpush1.bf16.msra.mxu0 %v1846
    %1903 = vmatprep.subr.bf16.mxu0 0
    %1904 = vmatpush1.bf16.msra.mxu0 %v1847
    %1905 = vmatprep.subr.bf16.mxu0 0
    %1906 = vmatpush1.bf16.msra.mxu0 %v1848
    %1907 = vmatprep.subr.bf16.mxu0 0
    %1908 = vmatpush1.bf16.msra.mxu0 %v1849
    %1909 = vmatprep.subr.bf16.mxu0 0
    %1910 = vmatpush1.bf16.msra.mxu0 %v1850
    %1911 = vmatprep.subr.bf16.mxu0 0
    %1912 = vmatpush1.bf16.msra.mxu0 0
    %1913 = vmatprep.subr.bf16.mxu0 0
    %1914 = vmatpush1.bf16.msra.mxu0 0
    %1915 = vmatprep.subr.bf16.mxu0 0
    %1916 = vmatpush1.bf16.msra.mxu0 0
    %1917 = vmatprep.subr.bf16.mxu0 0
    %1918 = vmatpush1.bf16.msra.mxu0 0
    %1919 = vmatprep.mubr.bf16.mxu0 %v1864
    %1920 = vmatmul.mubr.bf16.gmra.mrb[0].mxu0 %v1767
    %v1921 = vpop.f32.mrb[0].mxu0
    %v1922 = vadd.f32 %v1705, %v1921
    %v1923 = vpop.f32.mrb[0].mxu0
    %v1924 = vpop.f32.mrb[0].mxu0
    %v1925 = vadd.f32 %v1708, %v1924
    %v1926 = vpop.f32.mrb[0].mxu0
    %1927 = vmatprep.mubr.bf16.mxu0 %v1867
    %1928 = vmatmul.mubr.bf16.gmra.mrb[0].mxu0 %v1769
    %v1929 = vpop.f32.mrb[0].mxu0
    %v1930 = vadd.f32 %v1713, %v1929
    %v1931 = vpop.f32.mrb[0].mxu0
    %v1932 = vpop.f32.mrb[0].mxu0
    %v1933 = vadd.f32 %v1716, %v1932
    %v1934 = vpop.f32.mrb[0].mxu0
    %1935 = vmatprep.mubr.bf16.mxu0 %v1870
    %1936 = vmatmul.mubr.bf16.gmra.mrb[0].mxu0 %v1771
    %v1937 = vpop.f32.mrb[0].mxu0
    %v1938 = vadd.f32 %v1721, %v1937
    %v1939 = vpop.f32.mrb[0].mxu0
    %v1940 = vpop.f32.mrb[0].mxu0
    %v1941 = vadd.f32 %v1724, %v1940
    %v1942 = vpop.f32.mrb[0].mxu0
    %1943 = vmatprep.mubr.bf16.mxu0 %v1873
    %1944 = vmatmul.mubr.bf16.gmra.mrb[0].mxu0 %v1773
    %v1945 = vpop.f32.mrb[0].mxu0
    %v1946 = vadd.f32 %v1729, %v1945
    %v1947 = vpop.f32.mrb[0].mxu0
    %v1948 = vpop.f32.mrb[0].mxu0
    %v1949 = vadd.f32 %v1732, %v1948
    %v1950 = vpop.f32.mrb[0].mxu0
    %1951 = vmatprep.mubr.bf16.mxu0 %v1876
    %1952 = vmatmul.mubr.bf16.gmra.mrb[0].mxu0 %v1775
    %v1953 = vpop.f32.mrb[0].mxu0
    %v1954 = vadd.f32 %v1737, %v1953
    %v1955 = vpop.f32.mrb[0].mxu0
    %v1956 = vpop.f32.mrb[0].mxu0
    %v1957 = vadd.f32 %v1740, %v1956
    %v1958 = vpop.f32.mrb[0].mxu0
    %1959 = vmatprep.mubr.bf16.mxu0 %v1879
    %1960 = vmatmul.mubr.bf16.gmra.mrb[0].mxu0 %v1777
    %v1961 = vpop.f32.mrb[0].mxu0
    %v1962 = vadd.f32 %v1745, %v1961
    %v1963 = vpop.f32.mrb[0].mxu0
    %v1964 = vpop.f32.mrb[0].mxu0
    %v1965 = vadd.f32 %v1748, %v1964
    %v1966 = vpop.f32.mrb[0].mxu0
    %1967 = vmatprep.mubr.bf16.mxu0 %v1882
    %1968 = vmatmul.mubr.bf16.gmra.mrb[0].mxu0 %v1779
    %v1969 = vpop.f32.mrb[0].mxu0
    %v1970 = vadd.f32 %v1753, %v1969
    %v1971 = vpop.f32.mrb[0].mxu0
    %v1972 = vpop.f32.mrb[0].mxu0
    %v1973 = vadd.f32 %v1756, %v1972
    %v1974 = vpop.f32.mrb[0].mxu0
    %1975 = vmatprep.mubr.bf16.mxu0 %v1885
    %1976 = vmatmul.mubr.bf16.gmra.mrb[0].mxu0 %v1781
    %v1977 = vpop.f32.mrb[0].mxu0
    %v1978 = vadd.f32 %v1761, %v1977
    %v1979 = vpop.f32.mrb[0].mxu0
    %v1980 = vpop.f32.mrb[0].mxu0
    %v1981 = vadd.f32 %v1764, %v1980
    %v1982 = vpop.f32.mrb[0].mxu0
    %1983 = vdwg.mxu0
    %s1984 = scalar_lea.vmem [#allocation2], 16
    %v1985 = vld [vmem:[%s1984] sm:$0xf]
    %v1986 = vld [vmem:[%s1984 + $0x8] sm:$0xf]
    %v1987 = vld [vmem:[%s1984 + $0x10] sm:$0xf]
    %v1988 = vld [vmem:[%s1984 + $0x18] sm:$0xf]
    %v1989 = vld [vmem:[%s1984 + $0x20] sm:$0xf]
    %v1990 = vld [vmem:[%s1984 + $0x28] sm:$0xf]
    %v1991 = vld [vmem:[%s1984 + $0x30] sm:$0xf]
    %v1992 = vld [vmem:[%s1984 + $0x38] sm:$0xf]
    %v1993 = vld [vmem:[%s1984 + $0x50] sm:$0xf]
    %v1994 = vld [vmem:[%s1984 + $0x58] sm:$0xf]
    %v1995 = vld [vmem:[%s1984 + $0x60] sm:$0xf]
    %v1996 = vld [vmem:[%s1984 + $0x68] sm:$0xf]
    %v1997 = vld [vmem:[%s1984 + $0x70] sm:$0xf]
    %v1998 = vld [vmem:[%s1984 + $0x78] sm:$0xf]
    %v1999 = vld [vmem:[%s1984 + $0x80] sm:$0xf]
    %v2000 = vld [vmem:[%s1984 + $0x88] sm:$0xf]
    %v2001 = vld [vmem:[%s1984 + $0x4] sm:$0x1]
    %v2002 = vld [vmem:[%s1984 + $0xc] sm:$0x1]
    %v2003 = vld [vmem:[%s1984 + $0x14] sm:$0x1]
    %v2004 = vld [vmem:[%s1984 + $0x1c] sm:$0x1]
    %v2005 = vld [vmem:[%s1984 + $0x24] sm:$0x1]
    %v2006 = vld [vmem:[%s1984 + $0x2c] sm:$0x1]
    %v2007 = vld [vmem:[%s1984 + $0x34] sm:$0x1]
    %v2008 = vld [vmem:[%s1984 + $0x3c] sm:$0x1]
    %v2009 = vld [vmem:[%s1984 + $0x54] sm:$0x1]
    %v2010 = vld [vmem:[%s1984 + $0x5c] sm:$0x1]
    %v2011 = vld [vmem:[%s1984 + $0x64] sm:$0x1]
    %v2012 = vld [vmem:[%s1984 + $0x6c] sm:$0x1]
    %v2013 = vld [vmem:[%s1984 + $0x74] sm:$0x1]
    %v2014 = vld [vmem:[%s1984 + $0x7c] sm:$0x1]
    %v2015 = vld [vmem:[%s1984 + $0x84] sm:$0x1]
    %v2016 = vld [vmem:[%s1984 + $0x8c] sm:$0x1]
    %v2017 = vld [vmem:[%s1984] sm:$0xe]
    %v2018 = vld [vmem:[%s1984 + $0x8] sm:$0xe]
    %v2019 = vld [vmem:[%s1984 + $0x10] sm:$0xe]
    %v2020 = vld [vmem:[%s1984 + $0x18] sm:$0xe]
    %v2021 = vld [vmem:[%s1984 + $0x20] sm:$0xe]
    %v2022 = vld [vmem:[%s1984 + $0x28] sm:$0xe]
    %v2023 = vld [vmem:[%s1984 + $0x30] sm:$0xe]
    %v2024 = vld [vmem:[%s1984 + $0x38] sm:$0xe]
    %v2025 = vld [vmem:[%s1984 + $0x50] sm:$0xe]
    %v2026 = vld [vmem:[%s1984 + $0x58] sm:$0xe]
    %v2027 = vld [vmem:[%s1984 + $0x60] sm:$0xe]
    %v2028 = vld [vmem:[%s1984 + $0x68] sm:$0xe]
    %v2029 = vld [vmem:[%s1984 + $0x70] sm:$0xe]
    %v2030 = vld [vmem:[%s1984 + $0x78] sm:$0xe]
    %v2031 = vld [vmem:[%s1984 + $0x80] sm:$0xe]
    %v2032 = vld [vmem:[%s1984 + $0x88] sm:$0xe]
    %v2065 = vunpack.c.l.b16 %v1985
    %v2066 = vunpack.c.l.b16 %v2001
    %v2067 = vunpack.c.l.b16 %v1986
    %v2068 = vunpack.c.l.b16 %v2002
    %v2069 = vunpack.c.l.b16 %v1987
    %v2070 = vunpack.c.l.b16 %v2003
    %v2071 = vunpack.c.l.b16 %v1988
    %v2072 = vunpack.c.l.b16 %v2004
    %v2073 = vunpack.c.l.b16 %v1989
    %v2074 = vunpack.c.l.b16 %v2005
    %v2075 = vunpack.c.l.b16 %v1990
    %v2076 = vunpack.c.l.b16 %v2006
    %v2077 = vunpack.c.l.b16 %v1991
    %v2078 = vunpack.c.l.b16 %v2007
    %v2079 = vunpack.c.l.b16 %v1992
    %v2080 = vunpack.c.l.b16 %v2008
    %v2081 = vunpack.c.l.b16 %v1993
    %v2082 = vunpack.c.l.b16 %v2009
    %v2083 = vunpack.c.l.b16 %v1994
    %v2084 = vunpack.c.l.b16 %v2010
    %v2085 = vunpack.c.l.b16 %v1995
    %v2086 = vunpack.c.l.b16 %v2011
    %v2087 = vunpack.c.l.b16 %v1996
    %v2088 = vunpack.c.l.b16 %v2012
    %v2089 = vunpack.c.l.b16 %v1997
    %v2090 = vunpack.c.l.b16 %v2013
    %v2091 = vunpack.c.l.b16 %v1998
    %v2092 = vunpack.c.l.b16 %v2014
    %v2093 = vunpack.c.l.b16 %v1999
    %v2094 = vunpack.c.l.b16 %v2015
    %v2095 = vunpack.c.l.b16 %v2000
    %v2096 = vunpack.c.l.b16 %v2016
    %v2097 = vpack.c.b16 %v2066, %v2065
    %v2098 = vpack.c.b16 %v2068, %v2067
    %v2099 = vpack.c.b16 %v2070, %v2069
    %v2100 = vpack.c.b16 %v2072, %v2071
    %v2101 = vpack.c.b16 %v2074, %v2073
    %v2102 = vpack.c.b16 %v2076, %v2075
    %v2103 = vpack.c.b16 %v2078, %v2077
    %v2104 = vpack.c.b16 %v2080, %v2079
    %v2105 = vpack.c.b16 %v2082, %v2081
    %v2106 = vpack.c.b16 %v2084, %v2083
    %v2107 = vpack.c.b16 %v2086, %v2085
    %v2108 = vpack.c.b16 %v2088, %v2087
    %v2109 = vpack.c.b16 %v2090, %v2089
    %v2110 = vpack.c.b16 %v2092, %v2091
    %v2111 = vpack.c.b16 %v2094, %v2093
    %v2112 = vpack.c.b16 %v2096, %v2095
    %v2114 = vshrl.u32 %v2097, 16
    %v2116 = vshll.u32 %v2097, 16
    %v2118 = vrot.slane %v2116, 1
    %v2119 = vor.u32 %v2114, %v2118
    %v2121 = vshrl.u32 %v2098, 16
    %v2123 = vshll.u32 %v2098, 16
    %v2125 = vrot.slane %v2123, 1
    %v2126 = vor.u32 %v2121, %v2125
    %v2128 = vshrl.u32 %v2099, 16
    %v2130 = vshll.u32 %v2099, 16
    %v2132 = vrot.slane %v2130, 1
    %v2133 = vor.u32 %v2128, %v2132
    %v2135 = vshrl.u32 %v2100, 16
    %v2137 = vshll.u32 %v2100, 16
    %v2139 = vrot.slane %v2137, 1
    %v2140 = vor.u32 %v2135, %v2139
    %v2142 = vshrl.u32 %v2101, 16
    %v2144 = vshll.u32 %v2101, 16
    %v2146 = vrot.slane %v2144, 1
    %v2147 = vor.u32 %v2142, %v2146
    %v2149 = vshrl.u32 %v2102, 16
    %v2151 = vshll.u32 %v2102, 16
    %v2153 = vrot.slane %v2151, 1
    %v2154 = vor.u32 %v2149, %v2153
    %v2156 = vshrl.u32 %v2103, 16
    %v2158 = vshll.u32 %v2103, 16
    %v2160 = vrot.slane %v2158, 1
    %v2161 = vor.u32 %v2156, %v2160
    %v2163 = vshrl.u32 %v2104, 16
    %v2165 = vshll.u32 %v2104, 16
    %v2167 = vrot.slane %v2165, 1
    %v2168 = vor.u32 %v2163, %v2167
    %v2170 = vshrl.u32 %v2105, 16
    %v2172 = vshll.u32 %v2105, 16
    %v2174 = vrot.slane %v2172, 1
    %v2175 = vor.u32 %v2170, %v2174
    %v2177 = vshrl.u32 %v2106, 16
    %v2179 = vshll.u32 %v2106, 16
    %v2181 = vrot.slane %v2179, 1
    %v2182 = vor.u32 %v2177, %v2181
    %v2184 = vshrl.u32 %v2107, 16
    %v2186 = vshll.u32 %v2107, 16
    %v2188 = vrot.slane %v2186, 1
    %v2189 = vor.u32 %v2184, %v2188
    %v2191 = vshrl.u32 %v2108, 16
    %v2193 = vshll.u32 %v2108, 16
    %v2195 = vrot.slane %v2193, 1
    %v2196 = vor.u32 %v2191, %v2195
    %v2198 = vshrl.u32 %v2109, 16
    %v2200 = vshll.u32 %v2109, 16
    %v2202 = vrot.slane %v2200, 1
    %v2203 = vor.u32 %v2198, %v2202
    %v2205 = vshrl.u32 %v2110, 16
    %v2207 = vshll.u32 %v2110, 16
    %v2209 = vrot.slane %v2207, 1
    %v2210 = vor.u32 %v2205, %v2209
    %v2212 = vshrl.u32 %v2111, 16
    %v2214 = vshll.u32 %v2111, 16
    %v2216 = vrot.slane %v2214, 1
    %v2217 = vor.u32 %v2212, %v2216
    %v2219 = vshrl.u32 %v2112, 16
    %v2221 = vshll.u32 %v2112, 16
    %v2223 = vrot.slane %v2221, 1
    %v2224 = vor.u32 %v2219, %v2223
    %2225 = vrot.lane.b32.xlu0 %v2119, 64
    %v2226 = vpop.permute.xlu0 %2225
    %2227 = vrot.lane.b32.xlu0 %v2126, 64
    %v2228 = vpop.permute.xlu0 %2227
    %2229 = vrot.lane.b32.xlu0 %v2133, 64
    %v2230 = vpop.permute.xlu0 %2229
    %2231 = vrot.lane.b32.xlu0 %v2140, 64
    %v2232 = vpop.permute.xlu0 %2231
    %2233 = vrot.lane.b32.xlu0 %v2147, 64
    %v2234 = vpop.permute.xlu0 %2233
    %2235 = vrot.lane.b32.xlu0 %v2154, 64
    %v2236 = vpop.permute.xlu0 %2235
    %2237 = vrot.lane.b32.xlu0 %v2161, 64
    %v2238 = vpop.permute.xlu0 %2237
    %2239 = vrot.lane.b32.xlu0 %v2168, 64
    %v2240 = vpop.permute.xlu0 %2239
    %2241 = vrot.lane.b32.xlu0 %v2175, 64
    %v2242 = vpop.permute.xlu0 %2241
    %2243 = vrot.lane.b32.xlu0 %v2182, 64
    %v2244 = vpop.permute.xlu0 %2243
    %2245 = vrot.lane.b32.xlu0 %v2189, 64
    %v2246 = vpop.permute.xlu0 %2245
    %2247 = vrot.lane.b32.xlu0 %v2196, 64
    %v2248 = vpop.permute.xlu0 %2247
    %2249 = vrot.lane.b32.xlu0 %v2203, 64
    %v2250 = vpop.permute.xlu0 %2249
    %2251 = vrot.lane.b32.xlu0 %v2210, 64
    %v2252 = vpop.permute.xlu0 %2251
    %2253 = vrot.lane.b32.xlu0 %v2217, 64
    %v2254 = vpop.permute.xlu0 %2253
    %2255 = vrot.lane.b32.xlu0 %v2224, 64
    %v2256 = vpop.permute.xlu0 %2255
    %v2273 = vunpack.c.l.b16 %v2017
    %v2274 = vunpack.c.l.b16 %v2018
    %v2275 = vunpack.c.l.b16 %v2019
    %v2276 = vunpack.c.l.b16 %v2020
    %v2277 = vunpack.c.l.b16 %v2021
    %v2278 = vunpack.c.l.b16 %v2022
    %v2279 = vunpack.c.l.b16 %v2023
    %v2280 = vunpack.c.l.b16 %v2024
    %v2281 = vunpack.c.l.b16 %v2025
    %v2282 = vunpack.c.l.b16 %v2026
    %v2283 = vunpack.c.l.b16 %v2027
    %v2284 = vunpack.c.l.b16 %v2028
    %v2285 = vunpack.c.l.b16 %v2029
    %v2286 = vunpack.c.l.b16 %v2030
    %v2287 = vunpack.c.l.b16 %v2031
    %v2288 = vunpack.c.l.b16 %v2032
    %v2289 = vpack.c.b16 %v2066, %v2273
    %v2290 = vpack.c.b16 %v2068, %v2274
    %v2291 = vpack.c.b16 %v2070, %v2275
    %v2292 = vpack.c.b16 %v2072, %v2276
    %v2293 = vpack.c.b16 %v2074, %v2277
    %v2294 = vpack.c.b16 %v2076, %v2278
    %v2295 = vpack.c.b16 %v2078, %v2279
    %v2296 = vpack.c.b16 %v2080, %v2280
    %v2297 = vpack.c.b16 %v2082, %v2281
    %v2298 = vpack.c.b16 %v2084, %v2282
    %v2299 = vpack.c.b16 %v2086, %v2283
    %v2300 = vpack.c.b16 %v2088, %v2284
    %v2301 = vpack.c.b16 %v2090, %v2285
    %v2302 = vpack.c.b16 %v2092, %v2286
    %v2303 = vpack.c.b16 %v2094, %v2287
    %v2304 = vpack.c.b16 %v2096, %v2288
    %v2305 = vrot.slane %v2289, 1
    %v2306 = vrot.slane %v2290, 1
    %v2307 = vrot.slane %v2291, 1
    %v2308 = vrot.slane %v2292, 1
    %v2309 = vrot.slane %v2293, 1
    %v2310 = vrot.slane %v2294, 1
    %v2311 = vrot.slane %v2295, 1
    %v2312 = vrot.slane %v2296, 1
    %v2313 = vrot.slane %v2297, 1
    %v2314 = vrot.slane %v2298, 1
    %v2315 = vrot.slane %v2299, 1
    %v2316 = vrot.slane %v2300, 1
    %v2317 = vrot.slane %v2301, 1
    %v2318 = vrot.slane %v2302, 1
    %v2319 = vrot.slane %v2303, 1
    %v2320 = vrot.slane %v2304, 1
    %v2323 = vsel %vm972, %v1985, %v2226
    %v2326 = vsel %vm972, %v1986, %v2228
    %v2329 = vsel %vm972, %v1987, %v2230
    %v2332 = vsel %vm972, %v1988, %v2232
    %v2335 = vsel %vm972, %v1989, %v2234
    %v2338 = vsel %vm972, %v1990, %v2236
    %v2341 = vsel %vm972, %v1991, %v2238
    %v2344 = vsel %vm972, %v1992, %v2240
    %v2347 = vsel %vm972, %v1993, %v2242
    %v2350 = vsel %vm972, %v1994, %v2244
    %v2353 = vsel %vm972, %v1995, %v2246
    %v2356 = vsel %vm972, %v1996, %v2248
    %v2359 = vsel %vm972, %v1997, %v2250
    %v2362 = vsel %vm972, %v1998, %v2252
    %v2365 = vsel %vm972, %v1999, %v2254
    %v2368 = vsel %vm972, %v2000, %v2256
    %v2385 = vunpack.c.l.b16 %v2323
    %v2386 = vunpack.c.l.b16 %v2305
    %v2387 = vunpack.c.l.b16 %v2326
    %v2388 = vunpack.c.l.b16 %v2306
    %v2389 = vunpack.c.l.b16 %v2329
    %v2390 = vunpack.c.l.b16 %v2307
    %v2391 = vunpack.c.l.b16 %v2332
    %v2392 = vunpack.c.l.b16 %v2308
    %v2393 = vunpack.c.l.b16 %v2335
    %v2394 = vunpack.c.l.b16 %v2309
    %v2395 = vunpack.c.l.b16 %v2338
    %v2396 = vunpack.c.l.b16 %v2310
    %v2397 = vunpack.c.l.b16 %v2341
    %v2398 = vunpack.c.l.b16 %v2311
    %v2399 = vunpack.c.l.b16 %v2344
    %v2400 = vunpack.c.l.b16 %v2312
    %v2401 = vunpack.c.l.b16 %v2347
    %v2402 = vunpack.c.l.b16 %v2313
    %v2403 = vunpack.c.l.b16 %v2350
    %v2404 = vunpack.c.l.b16 %v2314
    %v2405 = vunpack.c.l.b16 %v2353
    %v2406 = vunpack.c.l.b16 %v2315
    %v2407 = vunpack.c.l.b16 %v2356
    %v2408 = vunpack.c.l.b16 %v2316
    %v2409 = vunpack.c.l.b16 %v2359
    %v2410 = vunpack.c.l.b16 %v2317
    %v2411 = vunpack.c.l.b16 %v2362
    %v2412 = vunpack.c.l.b16 %v2318
    %v2413 = vunpack.c.l.b16 %v2365
    %v2414 = vunpack.c.l.b16 %v2319
    %v2415 = vunpack.c.l.b16 %v2368
    %v2416 = vunpack.c.l.b16 %v2320
    %s2417 = scalar_lea.vmem %s1, 192
    %v2418 = vld [vmem:[%s2417] sm:$0xf]
    %v2419 = vld [vmem:[%s2417 + $0x4] sm:$0xf]
    %v2420 = vld [vmem:[%s2417 + $0x8] sm:$0xf]
    %v2421 = vld [vmem:[%s2417 + $0xc] sm:$0xf]
    %v2422 = vld [vmem:[%s2417 + $0x10] sm:$0xf]
    %v2423 = vld [vmem:[%s2417 + $0x14] sm:$0xf]
    %v2424 = vld [vmem:[%s2417 + $0x18] sm:$0xf]
    %v2425 = vld [vmem:[%s2417 + $0x1c] sm:$0xf]
    %v2426 = vld [vmem:[%s2417 + $0x20] sm:$0xf]
    %v2427 = vld [vmem:[%s2417 + $0x24] sm:$0xf]
    %v2428 = vld [vmem:[%s2417 + $0x28] sm:$0xf]
    %v2429 = vld [vmem:[%s2417 + $0x2c] sm:$0xf]
    %v2430 = vld [vmem:[%s2417 + $0x30] sm:$0xf]
    %v2431 = vld [vmem:[%s2417 + $0x34] sm:$0xf]
    %v2432 = vld [vmem:[%s2417 + $0x38] sm:$0xf]
    %v2433 = vld [vmem:[%s2417 + $0x3c] sm:$0xf]
    %v2434 = vld [vmem:[%s2417 + $0x40] sm:$0xf]
    %v2435 = vld [vmem:[%s2417 + $0x44] sm:$0xf]
    %v2436 = vld [vmem:[%s2417 + $0x48] sm:$0xf]
    %v2437 = vld [vmem:[%s2417 + $0x4c] sm:$0xf]
    %v2438 = vld [vmem:[%s2417 + $0x50] sm:$0xf]
    %v2439 = vld [vmem:[%s2417 + $0x54] sm:$0xf]
    %v2440 = vld [vmem:[%s2417 + $0x58] sm:$0xf]
    %v2441 = vld [vmem:[%s2417 + $0x5c] sm:$0xf]
    %v2442 = vpack.c.b16 %v2387, %v2385
    %v2443 = vpack.c.b16 %v2388, %v2386
    %v2444 = vpack.c.b16 %v2391, %v2389
    %v2445 = vpack.c.b16 %v2392, %v2390
    %v2446 = vpack.c.b16 %v2395, %v2393
    %v2447 = vpack.c.b16 %v2396, %v2394
    %v2448 = vpack.c.b16 %v2399, %v2397
    %v2449 = vpack.c.b16 %v2400, %v2398
    %v2450 = vpack.c.b16 %v2403, %v2401
    %v2451 = vpack.c.b16 %v2404, %v2402
    %v2452 = vpack.c.b16 %v2407, %v2405
    %v2453 = vpack.c.b16 %v2408, %v2406
    %v2454 = vpack.c.b16 %v2411, %v2409
    %v2455 = vpack.c.b16 %v2412, %v2410
    %v2456 = vpack.c.b16 %v2415, %v2413
    %v2457 = vpack.c.b16 %v2416, %v2414
    %v2490 = vunpack.c.l.b16 %v2418
    %v2491 = vunpack.c.l.b16 %v2419
    %v2492 = vunpack.c.l.b16 %v2420
    %v2493 = vunpack.c.l.b16 %v2421
    %v2494 = vunpack.c.l.b16 %v2422
    %v2495 = vunpack.c.l.b16 %v2423
    %v2496 = vunpack.c.l.b16 %v2424
    %v2497 = vunpack.c.l.b16 %v2425
    %v2498 = vunpack.c.l.b16 %v2426
    %v2499 = vunpack.c.l.b16 %v2427
    %v2500 = vunpack.c.l.b16 %v2428
    %v2501 = vunpack.c.l.b16 %v2429
    %v2502 = vunpack.c.l.b16 %v2430
    %v2503 = vunpack.c.l.b16 %v2431
    %v2504 = vunpack.c.l.b16 %v2432
    %v2505 = vunpack.c.l.b16 %v2433
    %v2506 = vunpack.c.l.b16 %v2434
    %v2507 = vunpack.c.l.b16 %v2435
    %v2508 = vunpack.c.l.b16 %v2436
    %v2509 = vunpack.c.l.b16 %v2437
    %v2510 = vunpack.c.l.b16 %v2438
    %v2511 = vunpack.c.l.b16 %v2439
    %v2512 = vunpack.c.l.b16 %v2440
    %v2513 = vunpack.c.l.b16 %v2441
    %v2514 = vpack.c.b16 %v2491, %v2490
    %v2515 = vpack.c.b16 %v2493, %v2492
    %v2516 = vpack.c.b16 %v2495, %v2494
    %v2517 = vpack.c.b16 %v2497, %v2496
    %v2518 = vpack.c.b16 %v2499, %v2498
    %v2519 = vpack.c.b16 %v2501, %v2500
    %v2520 = vpack.c.b16 %v2503, %v2502
    %v2521 = vpack.c.b16 %v2505, %v2504
    %v2522 = vpack.c.b16 %v2507, %v2506
    %v2523 = vpack.c.b16 %v2509, %v2508
    %v2524 = vpack.c.b16 %v2511, %v2510
    %v2525 = vpack.c.b16 %v2513, %v2512
    %v2539 = vsel %vm972, %v2443, 0
    %v2542 = vsel %vm972, %v2445, 0
    %v2545 = vsel %vm972, %v2447, 0
    %v2548 = vsel %vm972, %v2449, 0
    %v2551 = vsel %vm972, %v2451, 0
    %v2554 = vsel %vm972, %v2453, 0
    %v2557 = vsel %vm972, %v2455, 0
    %v2560 = vsel %vm972, %v2457, 0
    %2562 = vmatprep.subr.bf16.mxu0 0
    %2563 = vmatpush1.bf16.msra.mxu0 %v2514
    %2564 = vmatprep.subr.bf16.mxu0 0
    %2565 = vmatpush1.bf16.msra.mxu0 %v2515
    %2566 = vmatprep.subr.bf16.mxu0 0
    %2567 = vmatpush1.bf16.msra.mxu0 %v2516
    %2568 = vmatprep.subr.bf16.mxu0 0
    %2569 = vmatpush1.bf16.msra.mxu0 %v2517
    %2570 = vmatprep.subr.bf16.mxu0 0
    %2571 = vmatpush1.bf16.msra.mxu0 %v2518
    %2572 = vmatprep.subr.bf16.mxu0 0
    %2573 = vmatpush1.bf16.msra.mxu0 %v2519
    %2574 = vmatprep.subr.bf16.mxu0 0
    %2575 = vmatpush1.bf16.msra.mxu0 %v2520
    %2576 = vmatprep.subr.bf16.mxu0 0
    %2577 = vmatpush1.bf16.msra.mxu0 %v2521
    %2578 = vmatprep.subr.bf16.mxu0 0
    %2579 = vmatpush1.bf16.msra.mxu0 %v2522
    %2580 = vmatprep.subr.bf16.mxu0 0
    %2581 = vmatpush1.bf16.msra.mxu0 %v2523
    %2582 = vmatprep.subr.bf16.mxu0 0
    %2583 = vmatpush1.bf16.msra.mxu0 %v2524
    %2584 = vmatprep.subr.bf16.mxu0 0
    %2585 = vmatpush1.bf16.msra.mxu0 %v2525
    %2586 = vmatprep.subr.bf16.mxu0 0
    %2587 = vmatpush1.bf16.msra.mxu0 0
    %2588 = vmatprep.subr.bf16.mxu0 0
    %2589 = vmatpush1.bf16.msra.mxu0 0
    %2590 = vmatprep.subr.bf16.mxu0 0
    %2591 = vmatpush1.bf16.msra.mxu0 0
    %2592 = vmatprep.subr.bf16.mxu0 0
    %2593 = vmatpush1.bf16.msra.mxu0 0
    %2594 = vmatprep.mubr.bf16.mxu0 %v2539
    %2595 = vmatmul.mubr.bf16.gmra.mrb[0].mxu0 %v2442
    %v2596 = vpop.f32.mrb[0].mxu0
    %v2597 = vadd.f32 0.0, %v2596
    %v2598 = vpop.f32.mrb[0].mxu0
    %v2599 = vpop.f32.mrb[0].mxu0
    %v2600 = vadd.f32 0.0, %v2599
    %v2601 = vpop.f32.mrb[0].mxu0
    %2602 = vmatprep.mubr.bf16.mxu0 %v2542
    %2603 = vmatmul.mubr.bf16.gmra.mrb[0].mxu0 %v2444
    %v2604 = vpop.f32.mrb[0].mxu0
    %v2605 = vadd.f32 0.0, %v2604
    %v2606 = vpop.f32.mrb[0].mxu0
    %v2607 = vpop.f32.mrb[0].mxu0
    %v2608 = vadd.f32 0.0, %v2607
    %v2609 = vpop.f32.mrb[0].mxu0
    %2610 = vmatprep.mubr.bf16.mxu0 %v2545
    %2611 = vmatmul.mubr.bf16.gmra.mrb[0].mxu0 %v2446
    %v2612 = vpop.f32.mrb[0].mxu0
    %v2613 = vadd.f32 0.0, %v2612
    %v2614 = vpop.f32.mrb[0].mxu0
    %v2615 = vpop.f32.mrb[0].mxu0
    %v2616 = vadd.f32 0.0, %v2615
    %v2617 = vpop.f32.mrb[0].mxu0
    %2618 = vmatprep.mubr.bf16.mxu0 %v2548
    %2619 = vmatmul.mubr.bf16.gmra.mrb[0].mxu0 %v2448
    %v2620 = vpop.f32.mrb[0].mxu0
    %v2621 = vadd.f32 0.0, %v2620
    %v2622 = vpop.f32.mrb[0].mxu0
    %v2623 = vpop.f32.mrb[0].mxu0
    %v2624 = vadd.f32 0.0, %v2623
    %v2625 = vpop.f32.mrb[0].mxu0
    %2626 = vmatprep.mubr.bf16.mxu0 %v2551
    %2627 = vmatmul.mubr.bf16.gmra.mrb[0].mxu0 %v2450
    %v2628 = vpop.f32.mrb[0].mxu0
    %v2629 = vadd.f32 0.0, %v2628
    %v2630 = vpop.f32.mrb[0].mxu0
    %v2631 = vpop.f32.mrb[0].mxu0
    %v2632 = vadd.f32 0.0, %v2631
    %v2633 = vpop.f32.mrb[0].mxu0
    %2634 = vmatprep.mubr.bf16.mxu0 %v2554
    %2635 = vmatmul.mubr.bf16.gmra.mrb[0].mxu0 %v2452
    %v2636 = vpop.f32.mrb[0].mxu0
    %v2637 = vadd.f32 0.0, %v2636
    %v2638 = vpop.f32.mrb[0].mxu0
    %v2639 = vpop.f32.mrb[0].mxu0
    %v2640 = vadd.f32 0.0, %v2639
    %v2641 = vpop.f32.mrb[0].mxu0
    %2642 = vmatprep.mubr.bf16.mxu0 %v2557
    %2643 = vmatmul.mubr.bf16.gmra.mrb[0].mxu0 %v2454
    %v2644 = vpop.f32.mrb[0].mxu0
    %v2645 = vadd.f32 0.0, %v2644
    %v2646 = vpop.f32.mrb[0].mxu0
    %v2647 = vpop.f32.mrb[0].mxu0
    %v2648 = vadd.f32 0.0, %v2647
    %v2649 = vpop.f32.mrb[0].mxu0
    %2650 = vmatprep.mubr.bf16.mxu0 %v2560
    %2651 = vmatmul.mubr.bf16.gmra.mrb[0].mxu0 %v2456
    %v2652 = vpop.f32.mrb[0].mxu0
    %v2653 = vadd.f32 0.0, %v2652
    %v2654 = vpop.f32.mrb[0].mxu0
    %v2655 = vpop.f32.mrb[0].mxu0
    %v2656 = vadd.f32 0.0, %v2655
    %v2657 = vpop.f32.mrb[0].mxu0
    %2658 = vdwg.mxu0
    %v2659 = vadd.f32 %v1922, %v2597
    %v2660 = vadd.f32 %v1925, %v2600
    %v2661 = vadd.f32 %v1930, %v2605
    %v2662 = vadd.f32 %v1933, %v2608
    %v2663 = vadd.f32 %v1938, %v2613
    %v2664 = vadd.f32 %v1941, %v2616
    %v2665 = vadd.f32 %v1946, %v2621
    %v2666 = vadd.f32 %v1949, %v2624
    %v2667 = vadd.f32 %v1954, %v2629
    %v2668 = vadd.f32 %v1957, %v2632
    %v2669 = vadd.f32 %v1962, %v2637
    %v2670 = vadd.f32 %v1965, %v2640
    %v2671 = vadd.f32 %v1970, %v2645
    %v2672 = vadd.f32 %v1973, %v2648
    %v2673 = vadd.f32 %v1978, %v2653
    %v2674 = vadd.f32 %v1981, %v2656
    %v2675 = vld [vmem:[%s2] sm:$0x1]
    %v2677 = vlaneseq
    %v2678 = vshrl.u32 %v2677, 7
    %v2679 = vsub.s32 0, %v2678
    %v2680 = vrot.slane %v2675, %v2679
    %v2682 = vadd.f32 %v2659, %v2680
    %v2683 = vadd.f32 %v2660, %v2680
    %v2684 = vadd.f32 %v2661, %v2680
    %v2685 = vadd.f32 %v2662, %v2680
    %v2686 = vadd.f32 %v2663, %v2680
    %v2687 = vadd.f32 %v2664, %v2680
    %v2688 = vadd.f32 %v2665, %v2680
    %v2689 = vadd.f32 %v2666, %v2680
    %v2690 = vadd.f32 %v2667, %v2680
    %v2691 = vadd.f32 %v2668, %v2680
    %v2692 = vadd.f32 %v2669, %v2680
    %v2693 = vadd.f32 %v2670, %v2680
    %v2694 = vadd.f32 %v2671, %v2680
    %v2695 = vadd.f32 %v2672, %v2680
    %v2696 = vadd.f32 %v2673, %v2680
    %v2697 = vadd.f32 %v2674, %v2680
    %v2698 = vmax.f32 %v2682, 0.0
    %v2699 = vmax.f32 %v2683, 0.0
    %v2700 = vmax.f32 %v2684, 0.0
    %v2701 = vmax.f32 %v2685, 0.0
    %v2702 = vmax.f32 %v2686, 0.0
    %v2703 = vmax.f32 %v2687, 0.0
    %v2704 = vmax.f32 %v2688, 0.0
    %v2705 = vmax.f32 %v2689, 0.0
    %v2706 = vmax.f32 %v2690, 0.0
    %v2707 = vmax.f32 %v2691, 0.0
    %v2708 = vmax.f32 %v2692, 0.0
    %v2709 = vmax.f32 %v2693, 0.0
    %v2710 = vmax.f32 %v2694, 0.0
    %v2711 = vmax.f32 %v2695, 0.0
    %v2712 = vmax.f32 %v2696, 0.0
    %v2713 = vmax.f32 %v2697, 0.0
    %v2714 = vpack.c.bf16 %v2698, %v2698
    %v2715 = vpack.c.bf16 %v2699, %v2699
    %v2716 = vpack.c.bf16 %v2700, %v2700
    %v2717 = vpack.c.bf16 %v2701, %v2701
    %v2718 = vpack.c.bf16 %v2702, %v2702
    %v2719 = vpack.c.bf16 %v2703, %v2703
    %v2720 = vpack.c.bf16 %v2704, %v2704
    %v2721 = vpack.c.bf16 %v2705, %v2705
    %v2722 = vpack.c.bf16 %v2706, %v2706
    %v2723 = vpack.c.bf16 %v2707, %v2707
    %v2724 = vpack.c.bf16 %v2708, %v2708
    %v2725 = vpack.c.bf16 %v2709, %v2709
    %v2726 = vpack.c.bf16 %v2710, %v2710
    %v2727 = vpack.c.bf16 %v2711, %v2711
    %v2728 = vpack.c.bf16 %v2712, %v2712
    %v2729 = vpack.c.bf16 %v2713, %v2713
    %v2746 = vunpack.c.l.b16 %v2714
    %v2747 = vunpack.c.l.b16 %v2715
    %v2748 = vunpack.c.l.b16 %v2716
    %v2749 = vunpack.c.l.b16 %v2717
    %v2750 = vunpack.c.l.b16 %v2718
    %v2751 = vunpack.c.l.b16 %v2719
    %v2752 = vunpack.c.l.b16 %v2720
    %v2753 = vunpack.c.l.b16 %v2721
    %v2754 = vunpack.c.l.b16 %v2722
    %v2755 = vunpack.c.l.b16 %v2723
    %v2756 = vunpack.c.l.b16 %v2724
    %v2757 = vunpack.c.l.b16 %v2725
    %v2758 = vunpack.c.l.b16 %v2726
    %v2759 = vunpack.c.l.b16 %v2727
    %v2760 = vunpack.c.l.b16 %v2728
    %v2761 = vunpack.c.l.b16 %v2729
    %v2762 = vpack.c.b16 %v2746, %v2746
    %v2763 = vpack.c.b16 %v2747, %v2747
    %v2764 = vpack.c.b16 %v2748, %v2748
    %v2765 = vpack.c.b16 %v2749, %v2749
    %v2766 = vpack.c.b16 %v2750, %v2750
    %v2767 = vpack.c.b16 %v2751, %v2751
    %v2768 = vpack.c.b16 %v2752, %v2752
    %v2769 = vpack.c.b16 %v2753, %v2753
    %v2770 = vpack.c.b16 %v2754, %v2754
    %v2771 = vpack.c.b16 %v2755, %v2755
    %v2772 = vpack.c.b16 %v2756, %v2756
    %v2773 = vpack.c.b16 %v2757, %v2757
    %v2774 = vpack.c.b16 %v2758, %v2758
    %v2775 = vpack.c.b16 %v2759, %v2759
    %v2776 = vpack.c.b16 %v2760, %v2760
    %v2777 = vpack.c.b16 %v2761, %v2761
    %v2779 = vshrl.u32 %v2762, 16
    %v2781 = vrot.slane %v2779, 7
    %v2782 = vshll.u32 %v2762, 16
    %v2784 = vor.u32 %v2781, %v2782
    %v2785 = vrot.slane %v2781, 4
    %v2787 = vshrl.u32 %v2763, 16
    %v2789 = vrot.slane %v2787, 7
    %v2790 = vshll.u32 %v2763, 16
    %v2792 = vor.u32 %v2789, %v2790
    %v2793 = vrot.slane %v2789, 4
    %v2795 = vshrl.u32 %v2764, 16
    %v2797 = vrot.slane %v2795, 7
    %v2798 = vshll.u32 %v2764, 16
    %v2800 = vor.u32 %v2797, %v2798
    %v2801 = vrot.slane %v2797, 4
    %v2803 = vshrl.u32 %v2765, 16
    %v2805 = vrot.slane %v2803, 7
    %v2806 = vshll.u32 %v2765, 16
    %v2808 = vor.u32 %v2805, %v2806
    %v2809 = vrot.slane %v2805, 4
    %v2811 = vshrl.u32 %v2766, 16
    %v2813 = vrot.slane %v2811, 7
    %v2814 = vshll.u32 %v2766, 16
    %v2816 = vor.u32 %v2813, %v2814
    %v2817 = vrot.slane %v2813, 4
    %v2819 = vshrl.u32 %v2767, 16
    %v2821 = vrot.slane %v2819, 7
    %v2822 = vshll.u32 %v2767, 16
    %v2824 = vor.u32 %v2821, %v2822
    %v2825 = vrot.slane %v2821, 4
    %v2827 = vshrl.u32 %v2768, 16
    %v2829 = vrot.slane %v2827, 7
    %v2830 = vshll.u32 %v2768, 16
    %v2832 = vor.u32 %v2829, %v2830
    %v2833 = vrot.slane %v2829, 4
    %v2835 = vshrl.u32 %v2769, 16
    %v2837 = vrot.slane %v2835, 7
    %v2838 = vshll.u32 %v2769, 16
    %v2840 = vor.u32 %v2837, %v2838
    %v2841 = vrot.slane %v2837, 4
    %v2843 = vshrl.u32 %v2770, 16
    %v2845 = vrot.slane %v2843, 7
    %v2846 = vshll.u32 %v2770, 16
    %v2848 = vor.u32 %v2845, %v2846
    %v2849 = vrot.slane %v2845, 4
    %v2851 = vshrl.u32 %v2771, 16
    %v2853 = vrot.slane %v2851, 7
    %v2854 = vshll.u32 %v2771, 16
    %v2856 = vor.u32 %v2853, %v2854
    %v2857 = vrot.slane %v2853, 4
    %v2859 = vshrl.u32 %v2772, 16
    %v2861 = vrot.slane %v2859, 7
    %v2862 = vshll.u32 %v2772, 16
    %v2864 = vor.u32 %v2861, %v2862
    %v2865 = vrot.slane %v2861, 4
    %v2867 = vshrl.u32 %v2773, 16
    %v2869 = vrot.slane %v2867, 7
    %v2870 = vshll.u32 %v2773, 16
    %v2872 = vor.u32 %v2869, %v2870
    %v2873 = vrot.slane %v2869, 4
    %v2875 = vshrl.u32 %v2774, 16
    %v2877 = vrot.slane %v2875, 7
    %v2878 = vshll.u32 %v2774, 16
    %v2880 = vor.u32 %v2877, %v2878
    %v2881 = vrot.slane %v2877, 4
    %v2883 = vshrl.u32 %v2775, 16
    %v2885 = vrot.slane %v2883, 7
    %v2886 = vshll.u32 %v2775, 16
    %v2888 = vor.u32 %v2885, %v2886
    %v2889 = vrot.slane %v2885, 4
    %v2891 = vshrl.u32 %v2776, 16
    %v2893 = vrot.slane %v2891, 7
    %v2894 = vshll.u32 %v2776, 16
    %v2896 = vor.u32 %v2893, %v2894
    %v2897 = vrot.slane %v2893, 4
    %v2899 = vshrl.u32 %v2777, 16
    %v2901 = vrot.slane %v2899, 7
    %v2902 = vshll.u32 %v2777, 16
    %v2904 = vor.u32 %v2901, %v2902
    %v2905 = vrot.slane %v2901, 4
    %s2938 = scalar_lea.vmem [#allocation3], 8
    %v2939 = vld [vmem:[%s2938] sm:$0xf]
    %v2940 = vsel %vm539, %v2784, %v2939
    %2941 = vst [vmem:[%s2938] sm:$0xf] %v2940
    %v2942 = vld [vmem:[%s2938 + $0x4] sm:$0x1]
    %v2943 = vsel %vm29, %v2785, %v2942
    %2944 = vst [vmem:[%s2938 + $0x4] sm:$0x1] %v2943
    %v2945 = vld [vmem:[%s2938 + $0x8] sm:$0xf]
    %v2946 = vsel %vm539, %v2792, %v2945
    %2947 = vst [vmem:[%s2938 + $0x8] sm:$0xf] %v2946
    %v2948 = vld [vmem:[%s2938 + $0xc] sm:$0x1]
    %v2949 = vsel %vm29, %v2793, %v2948
    %2950 = vst [vmem:[%s2938 + $0xc] sm:$0x1] %v2949
    %v2951 = vld [vmem:[%s2938 + $0x10] sm:$0xf]
    %v2952 = vsel %vm539, %v2800, %v2951
    %2953 = vst [vmem:[%s2938 + $0x10] sm:$0xf] %v2952
    %v2954 = vld [vmem:[%s2938 + $0x14] sm:$0x1]
    %v2955 = vsel %vm29, %v2801, %v2954
    %2956 = vst [vmem:[%s2938 + $0x14] sm:$0x1] %v2955
    %v2957 = vld [vmem:[%s2938 + $0x18] sm:$0xf]
    %v2958 = vsel %vm539, %v2808, %v2957
    %2959 = vst [vmem:[%s2938 + $0x18] sm:$0xf] %v2958
    %v2960 = vld [vmem:[%s2938 + $0x1c] sm:$0x1]
    %v2961 = vsel %vm29, %v2809, %v2960
    %2962 = vst [vmem:[%s2938 + $0x1c] sm:$0x1] %v2961
    %v2963 = vld [vmem:[%s2938 + $0x20] sm:$0xf]
    %v2964 = vsel %vm539, %v2816, %v2963
    %2965 = vst [vmem:[%s2938 + $0x20] sm:$0xf] %v2964
    %v2966 = vld [vmem:[%s2938 + $0x24] sm:$0x1]
    %v2967 = vsel %vm29, %v2817, %v2966
    %2968 = vst [vmem:[%s2938 + $0x24] sm:$0x1] %v2967
    %v2969 = vld [vmem:[%s2938 + $0x28] sm:$0xf]
    %v2970 = vsel %vm539, %v2824, %v2969
    %2971 = vst [vmem:[%s2938 + $0x28] sm:$0xf] %v2970
    %v2972 = vld [vmem:[%s2938 + $0x2c] sm:$0x1]
    %v2973 = vsel %vm29, %v2825, %v2972
    %2974 = vst [vmem:[%s2938 + $0x2c] sm:$0x1] %v2973
    %v2975 = vld [vmem:[%s2938 + $0x30] sm:$0xf]
    %v2976 = vsel %vm539, %v2832, %v2975
    %2977 = vst [vmem:[%s2938 + $0x30] sm:$0xf] %v2976
    %v2978 = vld [vmem:[%s2938 + $0x34] sm:$0x1]
    %v2979 = vsel %vm29, %v2833, %v2978
    %2980 = vst [vmem:[%s2938 + $0x34] sm:$0x1] %v2979
    %v2981 = vld [vmem:[%s2938 + $0x38] sm:$0xf]
    %v2982 = vsel %vm539, %v2840, %v2981
    %2983 = vst [vmem:[%s2938 + $0x38] sm:$0xf] %v2982
    %v2984 = vld [vmem:[%s2938 + $0x3c] sm:$0x1]
    %v2985 = vsel %vm29, %v2841, %v2984
    %2986 = vst [vmem:[%s2938 + $0x3c] sm:$0x1] %v2985
    %v2987 = vld [vmem:[%s2938 + $0x50] sm:$0xf]
    %v2988 = vsel %vm539, %v2848, %v2987
    %2989 = vst [vmem:[%s2938 + $0x50] sm:$0xf] %v2988
    %v2990 = vld [vmem:[%s2938 + $0x54] sm:$0x1]
    %v2991 = vsel %vm29, %v2849, %v2990
    %2992 = vst [vmem:[%s2938 + $0x54] sm:$0x1] %v2991
    %v2993 = vld [vmem:[%s2938 + $0x58] sm:$0xf]
    %v2994 = vsel %vm539, %v2856, %v2993
    %2995 = vst [vmem:[%s2938 + $0x58] sm:$0xf] %v2994
    %v2996 = vld [vmem:[%s2938 + $0x5c] sm:$0x1]
    %v2997 = vsel %vm29, %v2857, %v2996
    %2998 = vst [vmem:[%s2938 + $0x5c] sm:$0x1] %v2997
    %v2999 = vld [vmem:[%s2938 + $0x60] sm:$0xf]
    %v3000 = vsel %vm539, %v2864, %v2999
    %3001 = vst [vmem:[%s2938 + $0x60] sm:$0xf] %v3000
    %v3002 = vld [vmem:[%s2938 + $0x64] sm:$0x1]
    %v3003 = vsel %vm29, %v2865, %v3002
    %3004 = vst [vmem:[%s2938 + $0x64] sm:$0x1] %v3003
    %v3005 = vld [vmem:[%s2938 + $0x68] sm:$0xf]
    %v3006 = vsel %vm539, %v2872, %v3005
    %3007 = vst [vmem:[%s2938 + $0x68] sm:$0xf] %v3006
    %v3008 = vld [vmem:[%s2938 + $0x6c] sm:$0x1]
    %v3009 = vsel %vm29, %v2873, %v3008
    %3010 = vst [vmem:[%s2938 + $0x6c] sm:$0x1] %v3009
    %v3011 = vld [vmem:[%s2938 + $0x70] sm:$0xf]
    %v3012 = vsel %vm539, %v2880, %v3011
    %3013 = vst [vmem:[%s2938 + $0x70] sm:$0xf] %v3012
    %v3014 = vld [vmem:[%s2938 + $0x74] sm:$0x1]
    %v3015 = vsel %vm29, %v2881, %v3014
    %3016 = vst [vmem:[%s2938 + $0x74] sm:$0x1] %v3015
    %v3017 = vld [vmem:[%s2938 + $0x78] sm:$0xf]
    %v3018 = vsel %vm539, %v2888, %v3017
    %3019 = vst [vmem:[%s2938 + $0x78] sm:$0xf] %v3018
    %v3020 = vld [vmem:[%s2938 + $0x7c] sm:$0x1]
    %v3021 = vsel %vm29, %v2889, %v3020
    %3022 = vst [vmem:[%s2938 + $0x7c] sm:$0x1] %v3021
    %v3023 = vld [vmem:[%s2938 + $0x80] sm:$0xf]
    %v3024 = vsel %vm539, %v2896, %v3023
    %3025 = vst [vmem:[%s2938 + $0x80] sm:$0xf] %v3024
    %v3026 = vld [vmem:[%s2938 + $0x84] sm:$0x1]
    %v3027 = vsel %vm29, %v2897, %v3026
    %3028 = vst [vmem:[%s2938 + $0x84] sm:$0x1] %v3027
    %v3029 = vld [vmem:[%s2938 + $0x88] sm:$0xf]
    %v3030 = vsel %vm539, %v2904, %v3029
    %3031 = vst [vmem:[%s2938 + $0x88] sm:$0xf] %v3030
    %v3032 = vld [vmem:[%s2938 + $0x8c] sm:$0x1]
    %v3033 = vsel %vm29, %v2905, %v3032
    %3034 = vst [vmem:[%s2938 + $0x8c] sm:$0x1] %v3033
    %v3035 = vld [vmem:[#allocation3] sm:$0xf]
    %v3036 = vld [vmem:[#allocation3 + $0x8] sm:$0xf]
    %v3037 = vld [vmem:[#allocation3 + $0x10] sm:$0xf]
    %v3038 = vld [vmem:[#allocation3 + $0x18] sm:$0xf]
    %v3039 = vld [vmem:[#allocation3 + $0x20] sm:$0xf]
    %v3040 = vld [vmem:[#allocation3 + $0x28] sm:$0xf]
    %v3041 = vld [vmem:[#allocation3 + $0x30] sm:$0xf]
    %v3042 = vld [vmem:[#allocation3 + $0x38] sm:$0xf]
    %v3043 = vld [vmem:[#allocation3 + $0x50] sm:$0xf]
    %v3044 = vld [vmem:[#allocation3 + $0x58] sm:$0xf]
    %v3045 = vld [vmem:[#allocation3 + $0x60] sm:$0xf]
    %v3046 = vld [vmem:[#allocation3 + $0x68] sm:$0xf]
    %v3047 = vld [vmem:[#allocation3 + $0x70] sm:$0xf]
    %v3048 = vld [vmem:[#allocation3 + $0x78] sm:$0xf]
    %v3049 = vld [vmem:[#allocation3 + $0x80] sm:$0xf]
    %v3050 = vld [vmem:[#allocation3 + $0x88] sm:$0xf]
    %v3051 = vld [vmem:[#allocation3 + $0x4] sm:$0x1]
    %v3052 = vld [vmem:[#allocation3 + $0xc] sm:$0x1]
    %v3053 = vld [vmem:[#allocation3 + $0x14] sm:$0x1]
    %v3054 = vld [vmem:[#allocation3 + $0x1c] sm:$0x1]
    %v3055 = vld [vmem:[#allocation3 + $0x24] sm:$0x1]
    %v3056 = vld [vmem:[#allocation3 + $0x2c] sm:$0x1]
    %v3057 = vld [vmem:[#allocation3 + $0x34] sm:$0x1]
    %v3058 = vld [vmem:[#allocation3 + $0x3c] sm:$0x1]
    %v3059 = vld [vmem:[#allocation3 + $0x54] sm:$0x1]
    %v3060 = vld [vmem:[#allocation3 + $0x5c] sm:$0x1]
    %v3061 = vld [vmem:[#allocation3 + $0x64] sm:$0x1]
    %v3062 = vld [vmem:[#allocation3 + $0x6c] sm:$0x1]
    %v3063 = vld [vmem:[#allocation3 + $0x74] sm:$0x1]
    %v3064 = vld [vmem:[#allocation3 + $0x7c] sm:$0x1]
    %v3065 = vld [vmem:[#allocation3 + $0x84] sm:$0x1]
    %v3066 = vld [vmem:[#allocation3 + $0x8c] sm:$0x1]
    %v3067 = vld [vmem:[#allocation3] sm:$0xe]
    %v3068 = vld [vmem:[#allocation3 + $0x8] sm:$0xe]
    %v3069 = vld [vmem:[#allocation3 + $0x10] sm:$0xe]
    %v3070 = vld [vmem:[#allocation3 + $0x18] sm:$0xe]
    %v3071 = vld [vmem:[#allocation3 + $0x20] sm:$0xe]
    %v3072 = vld [vmem:[#allocation3 + $0x28] sm:$0xe]
    %v3073 = vld [vmem:[#allocation3 + $0x30] sm:$0xe]
    %v3074 = vld [vmem:[#allocation3 + $0x38] sm:$0xe]
    %v3075 = vld [vmem:[#allocation3 + $0x50] sm:$0xe]
    %v3076 = vld [vmem:[#allocation3 + $0x58] sm:$0xe]
    %v3077 = vld [vmem:[#allocation3 + $0x60] sm:$0xe]
    %v3078 = vld [vmem:[#allocation3 + $0x68] sm:$0xe]
    %v3079 = vld [vmem:[#allocation3 + $0x70] sm:$0xe]
    %v3080 = vld [vmem:[#allocation3 + $0x78] sm:$0xe]
    %v3081 = vld [vmem:[#allocation3 + $0x80] sm:$0xe]
    %v3082 = vld [vmem:[#allocation3 + $0x88] sm:$0xe]
    %v3115 = vunpack.c.l.b16 %v3035
    %v3116 = vunpack.c.l.b16 %v3051
    %v3117 = vunpack.c.l.b16 %v3036
    %v3118 = vunpack.c.l.b16 %v3052
    %v3119 = vunpack.c.l.b16 %v3037
    %v3120 = vunpack.c.l.b16 %v3053
    %v3121 = vunpack.c.l.b16 %v3038
    %v3122 = vunpack.c.l.b16 %v3054
    %v3123 = vunpack.c.l.b16 %v3039
    %v3124 = vunpack.c.l.b16 %v3055
    %v3125 = vunpack.c.l.b16 %v3040
    %v3126 = vunpack.c.l.b16 %v3056
    %v3127 = vunpack.c.l.b16 %v3041
    %v3128 = vunpack.c.l.b16 %v3057
    %v3129 = vunpack.c.l.b16 %v3042
    %v3130 = vunpack.c.l.b16 %v3058
    %v3131 = vunpack.c.l.b16 %v3043
    %v3132 = vunpack.c.l.b16 %v3059
    %v3133 = vunpack.c.l.b16 %v3044
    %v3134 = vunpack.c.l.b16 %v3060
    %v3135 = vunpack.c.l.b16 %v3045
    %v3136 = vunpack.c.l.b16 %v3061
    %v3137 = vunpack.c.l.b16 %v3046
    %v3138 = vunpack.c.l.b16 %v3062
    %v3139 = vunpack.c.l.b16 %v3047
    %v3140 = vunpack.c.l.b16 %v3063
    %v3141 = vunpack.c.l.b16 %v3048
    %v3142 = vunpack.c.l.b16 %v3064
    %v3143 = vunpack.c.l.b16 %v3049
    %v3144 = vunpack.c.l.b16 %v3065
    %v3145 = vunpack.c.l.b16 %v3050
    %v3146 = vunpack.c.l.b16 %v3066
    %v3147 = vpack.c.b16 %v3116, %v3115
    %v3148 = vpack.c.b16 %v3118, %v3117
    %v3149 = vpack.c.b16 %v3120, %v3119
    %v3150 = vpack.c.b16 %v3122, %v3121
    %v3151 = vpack.c.b16 %v3124, %v3123
    %v3152 = vpack.c.b16 %v3126, %v3125
    %v3153 = vpack.c.b16 %v3128, %v3127
    %v3154 = vpack.c.b16 %v3130, %v3129
    %v3155 = vpack.c.b16 %v3132, %v3131
    %v3156 = vpack.c.b16 %v3134, %v3133
    %v3157 = vpack.c.b16 %v3136, %v3135
    %v3158 = vpack.c.b16 %v3138, %v3137
    %v3159 = vpack.c.b16 %v3140, %v3139
    %v3160 = vpack.c.b16 %v3142, %v3141
    %v3161 = vpack.c.b16 %v3144, %v3143
    %v3162 = vpack.c.b16 %v3146, %v3145
    %v3164 = vshrl.u32 %v3147, 16
    %v3166 = vshll.u32 %v3147, 16
    %v3168 = vrot.slane %v3166, 1
    %v3169 = vor.u32 %v3164, %v3168
    %v3171 = vshrl.u32 %v3148, 16
    %v3173 = vshll.u32 %v3148, 16
    %v3175 = vrot.slane %v3173, 1
    %v3176 = vor.u32 %v3171, %v3175
    %v3178 = vshrl.u32 %v3149, 16
    %v3180 = vshll.u32 %v3149, 16
    %v3182 = vrot.slane %v3180, 1
    %v3183 = vor.u32 %v3178, %v3182
    %v3185 = vshrl.u32 %v3150, 16
    %v3187 = vshll.u32 %v3150, 16
    %v3189 = vrot.slane %v3187, 1
    %v3190 = vor.u32 %v3185, %v3189
    %v3192 = vshrl.u32 %v3151, 16
    %v3194 = vshll.u32 %v3151, 16
    %v3196 = vrot.slane %v3194, 1
    %v3197 = vor.u32 %v3192, %v3196
    %v3199 = vshrl.u32 %v3152, 16
    %v3201 = vshll.u32 %v3152, 16
    %v3203 = vrot.slane %v3201, 1
    %v3204 = vor.u32 %v3199, %v3203
    %v3206 = vshrl.u32 %v3153, 16
    %v3208 = vshll.u32 %v3153, 16
    %v3210 = vrot.slane %v3208, 1
    %v3211 = vor.u32 %v3206, %v3210
    %v3213 = vshrl.u32 %v3154, 16
    %v3215 = vshll.u32 %v3154, 16
    %v3217 = vrot.slane %v3215, 1
    %v3218 = vor.u32 %v3213, %v3217
    %v3220 = vshrl.u32 %v3155, 16
    %v3222 = vshll.u32 %v3155, 16
    %v3224 = vrot.slane %v3222, 1
    %v3225 = vor.u32 %v3220, %v3224
    %v3227 = vshrl.u32 %v3156, 16
    %v3229 = vshll.u32 %v3156, 16
    %v3231 = vrot.slane %v3229, 1
    %v3232 = vor.u32 %v3227, %v3231
    %v3234 = vshrl.u32 %v3157, 16
    %v3236 = vshll.u32 %v3157, 16
    %v3238 = vrot.slane %v3236, 1
    %v3239 = vor.u32 %v3234, %v3238
    %v3241 = vshrl.u32 %v3158, 16
    %v3243 = vshll.u32 %v3158, 16
    %v3245 = vrot.slane %v3243, 1
    %v3246 = vor.u32 %v3241, %v3245
    %v3248 = vshrl.u32 %v3159, 16
    %v3250 = vshll.u32 %v3159, 16
    %v3252 = vrot.slane %v3250, 1
    %v3253 = vor.u32 %v3248, %v3252
    %v3255 = vshrl.u32 %v3160, 16
    %v3257 = vshll.u32 %v3160, 16
    %v3259 = vrot.slane %v3257, 1
    %v3260 = vor.u32 %v3255, %v3259
    %v3262 = vshrl.u32 %v3161, 16
    %v3264 = vshll.u32 %v3161, 16
    %v3266 = vrot.slane %v3264, 1
    %v3267 = vor.u32 %v3262, %v3266
    %v3269 = vshrl.u32 %v3162, 16
    %v3271 = vshll.u32 %v3162, 16
    %v3273 = vrot.slane %v3271, 1
    %v3274 = vor.u32 %v3269, %v3273
    %3275 = vrot.lane.b32.xlu0 %v3169, 64
    %v3276 = vpop.permute.xlu0 %3275
    %3277 = vrot.lane.b32.xlu0 %v3176, 64
    %v3278 = vpop.permute.xlu0 %3277
    %3279 = vrot.lane.b32.xlu0 %v3183, 64
    %v3280 = vpop.permute.xlu0 %3279
    %3281 = vrot.lane.b32.xlu0 %v3190, 64
    %v3282 = vpop.permute.xlu0 %3281
    %3283 = vrot.lane.b32.xlu0 %v3197, 64
    %v3284 = vpop.permute.xlu0 %3283
    %3285 = vrot.lane.b32.xlu0 %v3204, 64
    %v3286 = vpop.permute.xlu0 %3285
    %3287 = vrot.lane.b32.xlu0 %v3211, 64
    %v3288 = vpop.permute.xlu0 %3287
    %3289 = vrot.lane.b32.xlu0 %v3218, 64
    %v3290 = vpop.permute.xlu0 %3289
    %3291 = vrot.lane.b32.xlu0 %v3225, 64
    %v3292 = vpop.permute.xlu0 %3291
    %3293 = vrot.lane.b32.xlu0 %v3232, 64
    %v3294 = vpop.permute.xlu0 %3293
    %3295 = vrot.lane.b32.xlu0 %v3239, 64
    %v3296 = vpop.permute.xlu0 %3295
    %3297 = vrot.lane.b32.xlu0 %v3246, 64
    %v3298 = vpop.permute.xlu0 %3297
    %3299 = vrot.lane.b32.xlu0 %v3253, 64
    %v3300 = vpop.permute.xlu0 %3299
    %3301 = vrot.lane.b32.xlu0 %v3260, 64
    %v3302 = vpop.permute.xlu0 %3301
    %3303 = vrot.lane.b32.xlu0 %v3267, 64
    %v3304 = vpop.permute.xlu0 %3303
    %3305 = vrot.lane.b32.xlu0 %v3274, 64
    %v3306 = vpop.permute.xlu0 %3305
    %v3323 = vunpack.c.l.b16 %v3067
    %v3324 = vunpack.c.l.b16 %v3068
    %v3325 = vunpack.c.l.b16 %v3069
    %v3326 = vunpack.c.l.b16 %v3070
    %v3327 = vunpack.c.l.b16 %v3071
    %v3328 = vunpack.c.l.b16 %v3072
    %v3329 = vunpack.c.l.b16 %v3073
    %v3330 = vunpack.c.l.b16 %v3074
    %v3331 = vunpack.c.l.b16 %v3075
    %v3332 = vunpack.c.l.b16 %v3076
    %v3333 = vunpack.c.l.b16 %v3077
    %v3334 = vunpack.c.l.b16 %v3078
    %v3335 = vunpack.c.l.b16 %v3079
    %v3336 = vunpack.c.l.b16 %v3080
    %v3337 = vunpack.c.l.b16 %v3081
    %v3338 = vunpack.c.l.b16 %v3082
    %v3339 = vpack.c.b16 %v3116, %v3323
    %v3340 = vpack.c.b16 %v3118, %v3324
    %v3341 = vpack.c.b16 %v3120, %v3325
    %v3342 = vpack.c.b16 %v3122, %v3326
    %v3343 = vpack.c.b16 %v3124, %v3327
    %v3344 = vpack.c.b16 %v3126, %v3328
    %v3345 = vpack.c.b16 %v3128, %v3329
    %v3346 = vpack.c.b16 %v3130, %v3330
    %v3347 = vpack.c.b16 %v3132, %v3331
    %v3348 = vpack.c.b16 %v3134, %v3332
    %v3349 = vpack.c.b16 %v3136, %v3333
    %v3350 = vpack.c.b16 %v3138, %v3334
    %v3351 = vpack.c.b16 %v3140, %v3335
    %v3352 = vpack.c.b16 %v3142, %v3336
    %v3353 = vpack.c.b16 %v3144, %v3337
    %v3354 = vpack.c.b16 %v3146, %v3338
    %v3355 = vrot.slane %v3339, 1
    %v3356 = vrot.slane %v3340, 1
    %v3357 = vrot.slane %v3341, 1
    %v3358 = vrot.slane %v3342, 1
    %v3359 = vrot.slane %v3343, 1
    %v3360 = vrot.slane %v3344, 1
    %v3361 = vrot.slane %v3345, 1
    %v3362 = vrot.slane %v3346, 1
    %v3363 = vrot.slane %v3347, 1
    %v3364 = vrot.slane %v3348, 1
    %v3365 = vrot.slane %v3349, 1
    %v3366 = vrot.slane %v3350, 1
    %v3367 = vrot.slane %v3351, 1
    %v3368 = vrot.slane %v3352, 1
    %v3369 = vrot.slane %v3353, 1
    %v3370 = vrot.slane %v3354, 1
    %v3373 = vsel %vm972, %v3035, %v3276
    %v3376 = vsel %vm972, %v3036, %v3278
    %v3379 = vsel %vm972, %v3037, %v3280
    %v3382 = vsel %vm972, %v3038, %v3282
    %v3385 = vsel %vm972, %v3039, %v3284
    %v3388 = vsel %vm972, %v3040, %v3286
    %v3391 = vsel %vm972, %v3041, %v3288
    %v3394 = vsel %vm972, %v3042, %v3290
    %v3397 = vsel %vm972, %v3043, %v3292
    %v3400 = vsel %vm972, %v3044, %v3294
    %v3403 = vsel %vm972, %v3045, %v3296
    %v3406 = vsel %vm972, %v3046, %v3298
    %v3409 = vsel %vm972, %v3047, %v3300
    %v3412 = vsel %vm972, %v3048, %v3302
    %v3415 = vsel %vm972, %v3049, %v3304
    %v3418 = vsel %vm972, %v3050, %v3306
    %v3435 = vunpack.c.l.b16 %v3373
    %v3436 = vunpack.c.l.b16 %v3355
    %v3437 = vunpack.c.l.b16 %v3376
    %v3438 = vunpack.c.l.b16 %v3356
    %v3439 = vunpack.c.l.b16 %v3379
    %v3440 = vunpack.c.l.b16 %v3357
    %v3441 = vunpack.c.l.b16 %v3382
    %v3442 = vunpack.c.l.b16 %v3358
    %v3443 = vunpack.c.l.b16 %v3385
    %v3444 = vunpack.c.l.b16 %v3359
    %v3445 = vunpack.c.l.b16 %v3388
    %v3446 = vunpack.c.l.b16 %v3360
    %v3447 = vunpack.c.l.b16 %v3391
    %v3448 = vunpack.c.l.b16 %v3361
    %v3449 = vunpack.c.l.b16 %v3394
    %v3450 = vunpack.c.l.b16 %v3362
    %v3451 = vunpack.c.l.b16 %v3397
    %v3452 = vunpack.c.l.b16 %v3363
    %v3453 = vunpack.c.l.b16 %v3400
    %v3454 = vunpack.c.l.b16 %v3364
    %v3455 = vunpack.c.l.b16 %v3403
    %v3456 = vunpack.c.l.b16 %v3365
    %v3457 = vunpack.c.l.b16 %v3406
    %v3458 = vunpack.c.l.b16 %v3366
    %v3459 = vunpack.c.l.b16 %v3409
    %v3460 = vunpack.c.l.b16 %v3367
    %v3461 = vunpack.c.l.b16 %v3412
    %v3462 = vunpack.c.l.b16 %v3368
    %v3463 = vunpack.c.l.b16 %v3415
    %v3464 = vunpack.c.l.b16 %v3369
    %v3465 = vunpack.c.l.b16 %v3418
    %v3466 = vunpack.c.l.b16 %v3370
    %s3467 = scalar_lea.vmem %s1, 288
    %v3468 = vld [vmem:[%s3467] sm:$0xf]
    %v3469 = vld [vmem:[%s3467 + $0x4] sm:$0xf]
    %v3470 = vld [vmem:[%s3467 + $0x8] sm:$0xf]
    %v3471 = vld [vmem:[%s3467 + $0xc] sm:$0xf]
    %v3472 = vld [vmem:[%s3467 + $0x10] sm:$0xf]
    %v3473 = vld [vmem:[%s3467 + $0x14] sm:$0xf]
    %v3474 = vld [vmem:[%s3467 + $0x18] sm:$0xf]
    %v3475 = vld [vmem:[%s3467 + $0x1c] sm:$0xf]
    %v3476 = vld [vmem:[%s3467 + $0x20] sm:$0xf]
    %v3477 = vld [vmem:[%s3467 + $0x24] sm:$0xf]
    %v3478 = vld [vmem:[%s3467 + $0x28] sm:$0xf]
    %v3479 = vld [vmem:[%s3467 + $0x2c] sm:$0xf]
    %v3480 = vld [vmem:[%s3467 + $0x30] sm:$0xf]
    %v3481 = vld [vmem:[%s3467 + $0x34] sm:$0xf]
    %v3482 = vld [vmem:[%s3467 + $0x38] sm:$0xf]
    %v3483 = vld [vmem:[%s3467 + $0x3c] sm:$0xf]
    %v3484 = vld [vmem:[%s3467 + $0x40] sm:$0xf]
    %v3485 = vld [vmem:[%s3467 + $0x44] sm:$0xf]
    %v3486 = vld [vmem:[%s3467 + $0x48] sm:$0xf]
    %v3487 = vld [vmem:[%s3467 + $0x4c] sm:$0xf]
    %v3488 = vld [vmem:[%s3467 + $0x50] sm:$0xf]
    %v3489 = vld [vmem:[%s3467 + $0x54] sm:$0xf]
    %v3490 = vld [vmem:[%s3467 + $0x58] sm:$0xf]
    %v3491 = vld [vmem:[%s3467 + $0x5c] sm:$0xf]
    %v3492 = vld [vmem:[%s2938] sm:$0xf]
    %v3493 = vld [vmem:[%s2938 + $0x8] sm:$0xf]
    %v3494 = vld [vmem:[%s2938 + $0x10] sm:$0xf]
    %v3495 = vld [vmem:[%s2938 + $0x18] sm:$0xf]
    %v3496 = vld [vmem:[%s2938 + $0x20] sm:$0xf]
    %v3497 = vld [vmem:[%s2938 + $0x28] sm:$0xf]
    %v3498 = vld [vmem:[%s2938 + $0x30] sm:$0xf]
    %v3499 = vld [vmem:[%s2938 + $0x38] sm:$0xf]
    %v3500 = vld [vmem:[%s2938 + $0x50] sm:$0xf]
    %v3501 = vld [vmem:[%s2938 + $0x58] sm:$0xf]
    %v3502 = vld [vmem:[%s2938 + $0x60] sm:$0xf]
    %v3503 = vld [vmem:[%s2938 + $0x68] sm:$0xf]
    %v3504 = vld [vmem:[%s2938 + $0x70] sm:$0xf]
    %v3505 = vld [vmem:[%s2938 + $0x78] sm:$0xf]
    %v3506 = vld [vmem:[%s2938 + $0x80] sm:$0xf]
    %v3507 = vld [vmem:[%s2938 + $0x88] sm:$0xf]
    %v3508 = vld [vmem:[%s2938 + $0x4] sm:$0x1]
    %v3509 = vld [vmem:[%s2938 + $0xc] sm:$0x1]
    %v3510 = vld [vmem:[%s2938 + $0x14] sm:$0x1]
    %v3511 = vld [vmem:[%s2938 + $0x1c] sm:$0x1]
    %v3512 = vld [vmem:[%s2938 + $0x24] sm:$0x1]
    %v3513 = vld [vmem:[%s2938 + $0x2c] sm:$0x1]
    %v3514 = vld [vmem:[%s2938 + $0x34] sm:$0x1]
    %v3515 = vld [vmem:[%s2938 + $0x3c] sm:$0x1]
    %v3516 = vld [vmem:[%s2938 + $0x54] sm:$0x1]
    %v3517 = vld [vmem:[%s2938 + $0x5c] sm:$0x1]
    %v3518 = vld [vmem:[%s2938 + $0x64] sm:$0x1]
    %v3519 = vld [vmem:[%s2938 + $0x6c] sm:$0x1]
    %v3520 = vld [vmem:[%s2938 + $0x74] sm:$0x1]
    %v3521 = vld [vmem:[%s2938 + $0x7c] sm:$0x1]
    %v3522 = vld [vmem:[%s2938 + $0x84] sm:$0x1]
    %v3523 = vld [vmem:[%s2938 + $0x8c] sm:$0x1]
    %v3524 = vld [vmem:[%s2938] sm:$0xe]
    %v3525 = vld [vmem:[%s2938 + $0x8] sm:$0xe]
    %v3526 = vld [vmem:[%s2938 + $0x10] sm:$0xe]
    %v3527 = vld [vmem:[%s2938 + $0x18] sm:$0xe]
    %v3528 = vld [vmem:[%s2938 + $0x20] sm:$0xe]
    %v3529 = vld [vmem:[%s2938 + $0x28] sm:$0xe]
    %v3530 = vld [vmem:[%s2938 + $0x30] sm:$0xe]
    %v3531 = vld [vmem:[%s2938 + $0x38] sm:$0xe]
    %v3532 = vld [vmem:[%s2938 + $0x50] sm:$0xe]
    %v3533 = vld [vmem:[%s2938 + $0x58] sm:$0xe]
    %v3534 = vld [vmem:[%s2938 + $0x60] sm:$0xe]
    %v3535 = vld [vmem:[%s2938 + $0x68] sm:$0xe]
    %v3536 = vld [vmem:[%s2938 + $0x70] sm:$0xe]
    %v3537 = vld [vmem:[%s2938 + $0x78] sm:$0xe]
    %v3538 = vld [vmem:[%s2938 + $0x80] sm:$0xe]
    %v3539 = vld [vmem:[%s2938 + $0x88] sm:$0xe]
    %v3572 = vunpack.c.l.b16 %v3492
    %v3573 = vunpack.c.l.b16 %v3508
    %v3574 = vunpack.c.l.b16 %v3493
    %v3575 = vunpack.c.l.b16 %v3509
    %v3576 = vunpack.c.l.b16 %v3494
    %v3577 = vunpack.c.l.b16 %v3510
    %v3578 = vunpack.c.l.b16 %v3495
    %v3579 = vunpack.c.l.b16 %v3511
    %v3580 = vunpack.c.l.b16 %v3496
    %v3581 = vunpack.c.l.b16 %v3512
    %v3582 = vunpack.c.l.b16 %v3497
    %v3583 = vunpack.c.l.b16 %v3513
    %v3584 = vunpack.c.l.b16 %v3498
    %v3585 = vunpack.c.l.b16 %v3514
    %v3586 = vunpack.c.l.b16 %v3499
    %v3587 = vunpack.c.l.b16 %v3515
    %v3588 = vunpack.c.l.b16 %v3500
    %v3589 = vunpack.c.l.b16 %v3516
    %v3590 = vunpack.c.l.b16 %v3501
    %v3591 = vunpack.c.l.b16 %v3517
    %v3592 = vunpack.c.l.b16 %v3502
    %v3593 = vunpack.c.l.b16 %v3518
    %v3594 = vunpack.c.l.b16 %v3503
    %v3595 = vunpack.c.l.b16 %v3519
    %v3596 = vunpack.c.l.b16 %v3504
    %v3597 = vunpack.c.l.b16 %v3520
    %v3598 = vunpack.c.l.b16 %v3505
    %v3599 = vunpack.c.l.b16 %v3521
    %v3600 = vunpack.c.l.b16 %v3506
    %v3601 = vunpack.c.l.b16 %v3522
    %v3602 = vunpack.c.l.b16 %v3507
    %v3603 = vunpack.c.l.b16 %v3523
    %v3604 = vpack.c.b16 %v3573, %v3572
    %v3605 = vpack.c.b16 %v3575, %v3574
    %v3606 = vpack.c.b16 %v3577, %v3576
    %v3607 = vpack.c.b16 %v3579, %v3578
    %v3608 = vpack.c.b16 %v3581, %v3580
    %v3609 = vpack.c.b16 %v3583, %v3582
    %v3610 = vpack.c.b16 %v3585, %v3584
    %v3611 = vpack.c.b16 %v3587, %v3586
    %v3612 = vpack.c.b16 %v3589, %v3588
    %v3613 = vpack.c.b16 %v3591, %v3590
    %v3614 = vpack.c.b16 %v3593, %v3592
    %v3615 = vpack.c.b16 %v3595, %v3594
    %v3616 = vpack.c.b16 %v3597, %v3596
    %v3617 = vpack.c.b16 %v3599, %v3598
    %v3618 = vpack.c.b16 %v3601, %v3600
    %v3619 = vpack.c.b16 %v3603, %v3602
    %v3621 = vshrl.u32 %v3604, 16
    %v3623 = vshll.u32 %v3604, 16
    %v3625 = vrot.slane %v3623, 1
    %v3626 = vor.u32 %v3621, %v3625
    %v3628 = vshrl.u32 %v3605, 16
    %v3630 = vshll.u32 %v3605, 16
    %v3632 = vrot.slane %v3630, 1
    %v3633 = vor.u32 %v3628, %v3632
    %v3635 = vshrl.u32 %v3606, 16
    %v3637 = vshll.u32 %v3606, 16
    %v3639 = vrot.slane %v3637, 1
    %v3640 = vor.u32 %v3635, %v3639
    %v3642 = vshrl.u32 %v3607, 16
    %v3644 = vshll.u32 %v3607, 16
    %v3646 = vrot.slane %v3644, 1
    %v3647 = vor.u32 %v3642, %v3646
    %v3649 = vshrl.u32 %v3608, 16
    %v3651 = vshll.u32 %v3608, 16
    %v3653 = vrot.slane %v3651, 1
    %v3654 = vor.u32 %v3649, %v3653
    %v3656 = vshrl.u32 %v3609, 16
    %v3658 = vshll.u32 %v3609, 16
    %v3660 = vrot.slane %v3658, 1
    %v3661 = vor.u32 %v3656, %v3660
    %v3663 = vshrl.u32 %v3610, 16
    %v3665 = vshll.u32 %v3610, 16
    %v3667 = vrot.slane %v3665, 1
    %v3668 = vor.u32 %v3663, %v3667
    %v3670 = vshrl.u32 %v3611, 16
    %v3672 = vshll.u32 %v3611, 16
    %v3674 = vrot.slane %v3672, 1
    %v3675 = vor.u32 %v3670, %v3674
    %v3677 = vshrl.u32 %v3612, 16
    %v3679 = vshll.u32 %v3612, 16
    %v3681 = vrot.slane %v3679, 1
    %v3682 = vor.u32 %v3677, %v3681
    %v3684 = vshrl.u32 %v3613, 16
    %v3686 = vshll.u32 %v3613, 16
    %v3688 = vrot.slane %v3686, 1
    %v3689 = vor.u32 %v3684, %v3688
    %v3691 = vshrl.u32 %v3614, 16
    %v3693 = vshll.u32 %v3614, 16
    %v3695 = vrot.slane %v3693, 1
    %v3696 = vor.u32 %v3691, %v3695
    %v3698 = vshrl.u32 %v3615, 16
    %v3700 = vshll.u32 %v3615, 16
    %v3702 = vrot.slane %v3700, 1
    %v3703 = vor.u32 %v3698, %v3702
    %v3705 = vshrl.u32 %v3616, 16
    %v3707 = vshll.u32 %v3616, 16
    %v3709 = vrot.slane %v3707, 1
    %v3710 = vor.u32 %v3705, %v3709
    %v3712 = vshrl.u32 %v3617, 16
    %v3714 = vshll.u32 %v3617, 16
    %v3716 = vrot.slane %v3714, 1
    %v3717 = vor.u32 %v3712, %v3716
    %v3719 = vshrl.u32 %v3618, 16
    %v3721 = vshll.u32 %v3618, 16
    %v3723 = vrot.slane %v3721, 1
    %v3724 = vor.u32 %v3719, %v3723
    %v3726 = vshrl.u32 %v3619, 16
    %v3728 = vshll.u32 %v3619, 16
    %v3730 = vrot.slane %v3728, 1
    %v3731 = vor.u32 %v3726, %v3730
    %3732 = vrot.lane.b32.xlu0 %v3626, 64
    %v3733 = vpop.permute.xlu0 %3732
    %3734 = vrot.lane.b32.xlu0 %v3633, 64
    %v3735 = vpop.permute.xlu0 %3734
    %3736 = vrot.lane.b32.xlu0 %v3640, 64
    %v3737 = vpop.permute.xlu0 %3736
    %3738 = vrot.lane.b32.xlu0 %v3647, 64
    %v3739 = vpop.permute.xlu0 %3738
    %3740 = vrot.lane.b32.xlu0 %v3654, 64
    %v3741 = vpop.permute.xlu0 %3740
    %3742 = vrot.lane.b32.xlu0 %v3661, 64
    %v3743 = vpop.permute.xlu0 %3742
    %3744 = vrot.lane.b32.xlu0 %v3668, 64
    %v3745 = vpop.permute.xlu0 %3744
    %3746 = vrot.lane.b32.xlu0 %v3675, 64
    %v3747 = vpop.permute.xlu0 %3746
    %3748 = vrot.lane.b32.xlu0 %v3682, 64
    %v3749 = vpop.permute.xlu0 %3748
    %3750 = vrot.lane.b32.xlu0 %v3689, 64
    %v3751 = vpop.permute.xlu0 %3750
    %3752 = vrot.lane.b32.xlu0 %v3696, 64
    %v3753 = vpop.permute.xlu0 %3752
    %3754 = vrot.lane.b32.xlu0 %v3703, 64
    %v3755 = vpop.permute.xlu0 %3754
    %3756 = vrot.lane.b32.xlu0 %v3710, 64
    %v3757 = vpop.permute.xlu0 %3756
    %3758 = vrot.lane.b32.xlu0 %v3717, 64
    %v3759 = vpop.permute.xlu0 %3758
    %3760 = vrot.lane.b32.xlu0 %v3724, 64
    %v3761 = vpop.permute.xlu0 %3760
    %3762 = vrot.lane.b32.xlu0 %v3731, 64
    %v3763 = vpop.permute.xlu0 %3762
    %v3780 = vunpack.c.l.b16 %v3524
    %v3781 = vunpack.c.l.b16 %v3525
    %v3782 = vunpack.c.l.b16 %v3526
    %v3783 = vunpack.c.l.b16 %v3527
    %v3784 = vunpack.c.l.b16 %v3528
    %v3785 = vunpack.c.l.b16 %v3529
    %v3786 = vunpack.c.l.b16 %v3530
    %v3787 = vunpack.c.l.b16 %v3531
    %v3788 = vunpack.c.l.b16 %v3532
    %v3789 = vunpack.c.l.b16 %v3533
    %v3790 = vunpack.c.l.b16 %v3534
    %v3791 = vunpack.c.l.b16 %v3535
    %v3792 = vunpack.c.l.b16 %v3536
    %v3793 = vunpack.c.l.b16 %v3537
    %v3794 = vunpack.c.l.b16 %v3538
    %v3795 = vunpack.c.l.b16 %v3539
    %v3796 = vpack.c.b16 %v3573, %v3780
    %v3797 = vpack.c.b16 %v3575, %v3781
    %v3798 = vpack.c.b16 %v3577, %v3782
    %v3799 = vpack.c.b16 %v3579, %v3783
    %v3800 = vpack.c.b16 %v3581, %v3784
    %v3801 = vpack.c.b16 %v3583, %v3785
    %v3802 = vpack.c.b16 %v3585, %v3786
    %v3803 = vpack.c.b16 %v3587, %v3787
    %v3804 = vpack.c.b16 %v3589, %v3788
    %v3805 = vpack.c.b16 %v3591, %v3789
    %v3806 = vpack.c.b16 %v3593, %v3790
    %v3807 = vpack.c.b16 %v3595, %v3791
    %v3808 = vpack.c.b16 %v3597, %v3792
    %v3809 = vpack.c.b16 %v3599, %v3793
    %v3810 = vpack.c.b16 %v3601, %v3794
    %v3811 = vpack.c.b16 %v3603, %v3795
    %v3812 = vrot.slane %v3796, 1
    %v3813 = vrot.slane %v3797, 1
    %v3814 = vrot.slane %v3798, 1
    %v3815 = vrot.slane %v3799, 1
    %v3816 = vrot.slane %v3800, 1
    %v3817 = vrot.slane %v3801, 1
    %v3818 = vrot.slane %v3802, 1
    %v3819 = vrot.slane %v3803, 1
    %v3820 = vrot.slane %v3804, 1
    %v3821 = vrot.slane %v3805, 1
    %v3822 = vrot.slane %v3806, 1
    %v3823 = vrot.slane %v3807, 1
    %v3824 = vrot.slane %v3808, 1
    %v3825 = vrot.slane %v3809, 1
    %v3826 = vrot.slane %v3810, 1
    %v3827 = vrot.slane %v3811, 1
    %v3830 = vsel %vm972, %v3492, %v3733
    %v3833 = vsel %vm972, %v3493, %v3735
    %v3836 = vsel %vm972, %v3494, %v3737
    %v3839 = vsel %vm972, %v3495, %v3739
    %v3842 = vsel %vm972, %v3496, %v3741
    %v3845 = vsel %vm972, %v3497, %v3743
    %v3848 = vsel %vm972, %v3498, %v3745
    %v3851 = vsel %vm972, %v3499, %v3747
    %v3854 = vsel %vm972, %v3500, %v3749
    %v3857 = vsel %vm972, %v3501, %v3751
    %v3860 = vsel %vm972, %v3502, %v3753
    %v3863 = vsel %vm972, %v3503, %v3755
    %v3866 = vsel %vm972, %v3504, %v3757
    %v3869 = vsel %vm972, %v3505, %v3759
    %v3872 = vsel %vm972, %v3506, %v3761
    %v3875 = vsel %vm972, %v3507, %v3763
    %v3892 = vunpack.c.l.b16 %v3830
    %v3893 = vunpack.c.l.b16 %v3812
    %v3894 = vunpack.c.l.b16 %v3833
    %v3895 = vunpack.c.l.b16 %v3813
    %v3896 = vunpack.c.l.b16 %v3836
    %v3897 = vunpack.c.l.b16 %v3814
    %v3898 = vunpack.c.l.b16 %v3839
    %v3899 = vunpack.c.l.b16 %v3815
    %v3900 = vunpack.c.l.b16 %v3842
    %v3901 = vunpack.c.l.b16 %v3816
    %v3902 = vunpack.c.l.b16 %v3845
    %v3903 = vunpack.c.l.b16 %v3817
    %v3904 = vunpack.c.l.b16 %v3848
    %v3905 = vunpack.c.l.b16 %v3818
    %v3906 = vunpack.c.l.b16 %v3851
    %v3907 = vunpack.c.l.b16 %v3819
    %v3908 = vunpack.c.l.b16 %v3854
    %v3909 = vunpack.c.l.b16 %v3820
    %v3910 = vunpack.c.l.b16 %v3857
    %v3911 = vunpack.c.l.b16 %v3821
    %v3912 = vunpack.c.l.b16 %v3860
    %v3913 = vunpack.c.l.b16 %v3822
    %v3914 = vunpack.c.l.b16 %v3863
    %v3915 = vunpack.c.l.b16 %v3823
    %v3916 = vunpack.c.l.b16 %v3866
    %v3917 = vunpack.c.l.b16 %v3824
    %v3918 = vunpack.c.l.b16 %v3869
    %v3919 = vunpack.c.l.b16 %v3825
    %v3920 = vunpack.c.l.b16 %v3872
    %v3921 = vunpack.c.l.b16 %v3826
    %v3922 = vunpack.c.l.b16 %v3875
    %v3923 = vunpack.c.l.b16 %v3827
    %s3924 = scalar_lea.vmem %s1, 384
    %v3925 = vld [vmem:[%s3924] sm:$0xf]
    %v3926 = vld [vmem:[%s3924 + $0x4] sm:$0xf]
    %v3927 = vld [vmem:[%s3924 + $0x8] sm:$0xf]
    %v3928 = vld [vmem:[%s3924 + $0xc] sm:$0xf]
    %v3929 = vld [vmem:[%s3924 + $0x10] sm:$0xf]
    %v3930 = vld [vmem:[%s3924 + $0x14] sm:$0xf]
    %v3931 = vld [vmem:[%s3924 + $0x18] sm:$0xf]
    %v3932 = vld [vmem:[%s3924 + $0x1c] sm:$0xf]
    %v3933 = vld [vmem:[%s3924 + $0x20] sm:$0xf]
    %v3934 = vld [vmem:[%s3924 + $0x24] sm:$0xf]
    %v3935 = vld [vmem:[%s3924 + $0x28] sm:$0xf]
    %v3936 = vld [vmem:[%s3924 + $0x2c] sm:$0xf]
    %v3937 = vld [vmem:[%s3924 + $0x30] sm:$0xf]
    %v3938 = vld [vmem:[%s3924 + $0x34] sm:$0xf]
    %v3939 = vld [vmem:[%s3924 + $0x38] sm:$0xf]
    %v3940 = vld [vmem:[%s3924 + $0x3c] sm:$0xf]
    %v3941 = vld [vmem:[%s3924 + $0x40] sm:$0xf]
    %v3942 = vld [vmem:[%s3924 + $0x44] sm:$0xf]
    %v3943 = vld [vmem:[%s3924 + $0x48] sm:$0xf]
    %v3944 = vld [vmem:[%s3924 + $0x4c] sm:$0xf]
    %v3945 = vld [vmem:[%s3924 + $0x50] sm:$0xf]
    %v3946 = vld [vmem:[%s3924 + $0x54] sm:$0xf]
    %v3947 = vld [vmem:[%s3924 + $0x58] sm:$0xf]
    %v3948 = vld [vmem:[%s3924 + $0x5c] sm:$0xf]
    %v3949 = vpack.c.b16 %v3894, %v3892
    %v3950 = vpack.c.b16 %v3895, %v3893
    %v3951 = vpack.c.b16 %v3898, %v3896
    %v3952 = vpack.c.b16 %v3899, %v3897
    %v3953 = vpack.c.b16 %v3902, %v3900
    %v3954 = vpack.c.b16 %v3903, %v3901
    %v3955 = vpack.c.b16 %v3906, %v3904
    %v3956 = vpack.c.b16 %v3907, %v3905
    %v3957 = vpack.c.b16 %v3910, %v3908
    %v3958 = vpack.c.b16 %v3911, %v3909
    %v3959 = vpack.c.b16 %v3914, %v3912
    %v3960 = vpack.c.b16 %v3915, %v3913
    %v3961 = vpack.c.b16 %v3918, %v3916
    %v3962 = vpack.c.b16 %v3919, %v3917
    %v3963 = vpack.c.b16 %v3922, %v3920
    %v3964 = vpack.c.b16 %v3923, %v3921
    %v3997 = vunpack.c.l.b16 %v3925
    %v3998 = vunpack.c.l.b16 %v3926
    %v3999 = vunpack.c.l.b16 %v3927
    %v4000 = vunpack.c.l.b16 %v3928
    %v4001 = vunpack.c.l.b16 %v3929
    %v4002 = vunpack.c.l.b16 %v3930
    %v4003 = vunpack.c.l.b16 %v3931
    %v4004 = vunpack.c.l.b16 %v3932
    %v4005 = vunpack.c.l.b16 %v3933
    %v4006 = vunpack.c.l.b16 %v3934
    %v4007 = vunpack.c.l.b16 %v3935
    %v4008 = vunpack.c.l.b16 %v3936
    %v4009 = vunpack.c.l.b16 %v3937
    %v4010 = vunpack.c.l.b16 %v3938
    %v4011 = vunpack.c.l.b16 %v3939
    %v4012 = vunpack.c.l.b16 %v3940
    %v4013 = vunpack.c.l.b16 %v3941
    %v4014 = vunpack.c.l.b16 %v3942
    %v4015 = vunpack.c.l.b16 %v3943
    %v4016 = vunpack.c.l.b16 %v3944
    %v4017 = vunpack.c.l.b16 %v3945
    %v4018 = vunpack.c.l.b16 %v3946
    %v4019 = vunpack.c.l.b16 %v3947
    %v4020 = vunpack.c.l.b16 %v3948
    %v4021 = vpack.c.b16 %v3998, %v3997
    %v4022 = vpack.c.b16 %v4000, %v3999
    %v4023 = vpack.c.b16 %v4002, %v4001
    %v4024 = vpack.c.b16 %v4004, %v4003
    %v4025 = vpack.c.b16 %v4006, %v4005
    %v4026 = vpack.c.b16 %v4008, %v4007
    %v4027 = vpack.c.b16 %v4010, %v4009
    %v4028 = vpack.c.b16 %v4012, %v4011
    %v4029 = vpack.c.b16 %v4014, %v4013
    %v4030 = vpack.c.b16 %v4016, %v4015
    %v4031 = vpack.c.b16 %v4018, %v4017
    %v4032 = vpack.c.b16 %v4020, %v4019
    %v4046 = vsel %vm972, %v3950, 0
    %v4049 = vsel %vm972, %v3952, 0
    %v4052 = vsel %vm972, %v3954, 0
    %v4055 = vsel %vm972, %v3956, 0
    %v4058 = vsel %vm972, %v3958, 0
    %v4061 = vsel %vm972, %v3960, 0
    %v4064 = vsel %vm972, %v3962, 0
    %v4067 = vsel %vm972, %v3964, 0
    %4069 = vmatprep.subr.bf16.mxu0 0
    %4070 = vmatpush1.bf16.msra.mxu0 %v4021
    %4071 = vmatprep.subr.bf16.mxu0 0
    %4072 = vmatpush1.bf16.msra.mxu0 %v4022
    %4073 = vmatprep.subr.bf16.mxu0 0
    %4074 = vmatpush1.bf16.msra.mxu0 %v4023
    %4075 = vmatprep.subr.bf16.mxu0 0
    %4076 = vmatpush1.bf16.msra.mxu0 %v4024
    %4077 = vmatprep.subr.bf16.mxu0 0
    %4078 = vmatpush1.bf16.msra.mxu0 %v4025
    %4079 = vmatprep.subr.bf16.mxu0 0
    %4080 = vmatpush1.bf16.msra.mxu0 %v4026
    %4081 = vmatprep.subr.bf16.mxu0 0
    %4082 = vmatpush1.bf16.msra.mxu0 %v4027
    %4083 = vmatprep.subr.bf16.mxu0 0
    %4084 = vmatpush1.bf16.msra.mxu0 %v4028
    %4085 = vmatprep.subr.bf16.mxu0 0
    %4086 = vmatpush1.bf16.msra.mxu0 %v4029
    %4087 = vmatprep.subr.bf16.mxu0 0
    %4088 = vmatpush1.bf16.msra.mxu0 %v4030
    %4089 = vmatprep.subr.bf16.mxu0 0
    %4090 = vmatpush1.bf16.msra.mxu0 %v4031
    %4091 = vmatprep.subr.bf16.mxu0 0
    %4092 = vmatpush1.bf16.msra.mxu0 %v4032
    %4093 = vmatprep.subr.bf16.mxu0 0
    %4094 = vmatpush1.bf16.msra.mxu0 0
    %4095 = vmatprep.subr.bf16.mxu0 0
    %4096 = vmatpush1.bf16.msra.mxu0 0
    %4097 = vmatprep.subr.bf16.mxu0 0
    %4098 = vmatpush1.bf16.msra.mxu0 0
    %4099 = vmatprep.subr.bf16.mxu0 0
    %4100 = vmatpush1.bf16.msra.mxu0 0
    %4101 = vmatprep.mubr.bf16.mxu0 %v4046
    %4102 = vmatmul.mubr.bf16.gmra.mrb[0].mxu0 %v3949
    %v4103 = vpop.f32.mrb[0].mxu0
    %v4104 = vadd.f32 0.0, %v4103
    %v4105 = vpop.f32.mrb[0].mxu0
    %v4106 = vpop.f32.mrb[0].mxu0
    %v4107 = vadd.f32 0.0, %v4106
    %v4108 = vpop.f32.mrb[0].mxu0
    %4109 = vmatprep.mubr.bf16.mxu0 %v4049
    %4110 = vmatmul.mubr.bf16.gmra.mrb[0].mxu0 %v3951
    %v4111 = vpop.f32.mrb[0].mxu0
    %v4112 = vadd.f32 0.0, %v4111
    %v4113 = vpop.f32.mrb[0].mxu0
    %v4114 = vpop.f32.mrb[0].mxu0
    %v4115 = vadd.f32 0.0, %v4114
    %v4116 = vpop.f32.mrb[0].mxu0
    %4117 = vmatprep.mubr.bf16.mxu0 %v4052
    %4118 = vmatmul.mubr.bf16.gmra.mrb[0].mxu0 %v3953
    %v4119 = vpop.f32.mrb[0].mxu0
    %v4120 = vadd.f32 0.0, %v4119
    %v4121 = vpop.f32.mrb[0].mxu0
    %v4122 = vpop.f32.mrb[0].mxu0
    %v4123 = vadd.f32 0.0, %v4122
    %v4124 = vpop.f32.mrb[0].mxu0
    %4125 = vmatprep.mubr.bf16.mxu0 %v4055
    %4126 = vmatmul.mubr.bf16.gmra.mrb[0].mxu0 %v3955
    %v4127 = vpop.f32.mrb[0].mxu0
    %v4128 = vadd.f32 0.0, %v4127
    %v4129 = vpop.f32.mrb[0].mxu0
    %v4130 = vpop.f32.mrb[0].mxu0
    %v4131 = vadd.f32 0.0, %v4130
    %v4132 = vpop.f32.mrb[0].mxu0
    %4133 = vmatprep.mubr.bf16.mxu0 %v4058
    %4134 = vmatmul.mubr.bf16.gmra.mrb[0].mxu0 %v3957
    %v4135 = vpop.f32.mrb[0].mxu0
    %v4136 = vadd.f32 0.0, %v4135
    %v4137 = vpop.f32.mrb[0].mxu0
    %v4138 = vpop.f32.mrb[0].mxu0
    %v4139 = vadd.f32 0.0, %v4138
    %v4140 = vpop.f32.mrb[0].mxu0
    %4141 = vmatprep.mubr.bf16.mxu0 %v4061
    %4142 = vmatmul.mubr.bf16.gmra.mrb[0].mxu0 %v3959
    %v4143 = vpop.f32.mrb[0].mxu0
    %v4144 = vadd.f32 0.0, %v4143
    %v4145 = vpop.f32.mrb[0].mxu0
    %v4146 = vpop.f32.mrb[0].mxu0
    %v4147 = vadd.f32 0.0, %v4146
    %v4148 = vpop.f32.mrb[0].mxu0
    %4149 = vmatprep.mubr.bf16.mxu0 %v4064
    %4150 = vmatmul.mubr.bf16.gmra.mrb[0].mxu0 %v3961
    %v4151 = vpop.f32.mrb[0].mxu0
    %v4152 = vadd.f32 0.0, %v4151
    %v4153 = vpop.f32.mrb[0].mxu0
    %v4154 = vpop.f32.mrb[0].mxu0
    %v4155 = vadd.f32 0.0, %v4154
    %v4156 = vpop.f32.mrb[0].mxu0
    %4157 = vmatprep.mubr.bf16.mxu0 %v4067
    %4158 = vmatmul.mubr.bf16.gmra.mrb[0].mxu0 %v3963
    %v4159 = vpop.f32.mrb[0].mxu0
    %v4160 = vadd.f32 0.0, %v4159
    %v4161 = vpop.f32.mrb[0].mxu0
    %v4162 = vpop.f32.mrb[0].mxu0
    %v4163 = vadd.f32 0.0, %v4162
    %v4164 = vpop.f32.mrb[0].mxu0
    %4165 = vdwg.mxu0
    %v4166 = vpack.c.b16 %v3437, %v3435
    %v4167 = vpack.c.b16 %v3438, %v3436
    %v4168 = vpack.c.b16 %v3441, %v3439
    %v4169 = vpack.c.b16 %v3442, %v3440
    %v4170 = vpack.c.b16 %v3445, %v3443
    %v4171 = vpack.c.b16 %v3446, %v3444
    %v4172 = vpack.c.b16 %v3449, %v3447
    %v4173 = vpack.c.b16 %v3450, %v3448
    %v4174 = vpack.c.b16 %v3453, %v3451
    %v4175 = vpack.c.b16 %v3454, %v3452
    %v4176 = vpack.c.b16 %v3457, %v3455
    %v4177 = vpack.c.b16 %v3458, %v3456
    %v4178 = vpack.c.b16 %v3461, %v3459
    %v4179 = vpack.c.b16 %v3462, %v3460
    %v4180 = vpack.c.b16 %v3465, %v3463
    %v4181 = vpack.c.b16 %v3466, %v3464
    %v4214 = vunpack.c.l.b16 %v3468
    %v4215 = vunpack.c.l.b16 %v3469
    %v4216 = vunpack.c.l.b16 %v3470
    %v4217 = vunpack.c.l.b16 %v3471
    %v4218 = vunpack.c.l.b16 %v3472
    %v4219 = vunpack.c.l.b16 %v3473
    %v4220 = vunpack.c.l.b16 %v3474
    %v4221 = vunpack.c.l.b16 %v3475
    %v4222 = vunpack.c.l.b16 %v3476
    %v4223 = vunpack.c.l.b16 %v3477
    %v4224 = vunpack.c.l.b16 %v3478
    %v4225 = vunpack.c.l.b16 %v3479
    %v4226 = vunpack.c.l.b16 %v3480
    %v4227 = vunpack.c.l.b16 %v3481
    %v4228 = vunpack.c.l.b16 %v3482
    %v4229 = vunpack.c.l.b16 %v3483
    %v4230 = vunpack.c.l.b16 %v3484
    %v4231 = vunpack.c.l.b16 %v3485
    %v4232 = vunpack.c.l.b16 %v3486
    %v4233 = vunpack.c.l.b16 %v3487
    %v4234 = vunpack.c.l.b16 %v3488
    %v4235 = vunpack.c.l.b16 %v3489
    %v4236 = vunpack.c.l.b16 %v3490
    %v4237 = vunpack.c.l.b16 %v3491
    %v4238 = vpack.c.b16 %v4215, %v4214
    %v4239 = vpack.c.b16 %v4217, %v4216
    %v4240 = vpack.c.b16 %v4219, %v4218
    %v4241 = vpack.c.b16 %v4221, %v4220
    %v4242 = vpack.c.b16 %v4223, %v4222
    %v4243 = vpack.c.b16 %v4225, %v4224
    %v4244 = vpack.c.b16 %v4227, %v4226
    %v4245 = vpack.c.b16 %v4229, %v4228
    %v4246 = vpack.c.b16 %v4231, %v4230
    %v4247 = vpack.c.b16 %v4233, %v4232
    %v4248 = vpack.c.b16 %v4235, %v4234
    %v4249 = vpack.c.b16 %v4237, %v4236
    %v4263 = vsel %vm972, %v4167, 0
    %v4266 = vsel %vm972, %v4169, 0
    %v4269 = vsel %vm972, %v4171, 0
    %v4272 = vsel %vm972, %v4173, 0
    %v4275 = vsel %vm972, %v4175, 0
    %v4278 = vsel %vm972, %v4177, 0
    %v4281 = vsel %vm972, %v4179, 0
    %v4284 = vsel %vm972, %v4181, 0
    %4286 = vmatprep.subr.bf16.mxu0 0
    %4287 = vmatpush1.bf16.msra.mxu0 %v4238
    %4288 = vmatprep.subr.bf16.mxu0 0
    %4289 = vmatpush1.bf16.msra.mxu0 %v4239
    %4290 = vmatprep.subr.bf16.mxu0 0
    %4291 = vmatpush1.bf16.msra.mxu0 %v4240
    %4292 = vmatprep.subr.bf16.mxu0 0
    %4293 = vmatpush1.bf16.msra.mxu0 %v4241
    %4294 = vmatprep.subr.bf16.mxu0 0
    %4295 = vmatpush1.bf16.msra.mxu0 %v4242
    %4296 = vmatprep.subr.bf16.mxu0 0
    %4297 = vmatpush1.bf16.msra.mxu0 %v4243
    %4298 = vmatprep.subr.bf16.mxu0 0
    %4299 = vmatpush1.bf16.msra.mxu0 %v4244
    %4300 = vmatprep.subr.bf16.mxu0 0
    %4301 = vmatpush1.bf16.msra.mxu0 %v4245
    %4302 = vmatprep.subr.bf16.mxu0 0
    %4303 = vmatpush1.bf16.msra.mxu0 %v4246
    %4304 = vmatprep.subr.bf16.mxu0 0
    %4305 = vmatpush1.bf16.msra.mxu0 %v4247
    %4306 = vmatprep.subr.bf16.mxu0 0
    %4307 = vmatpush1.bf16.msra.mxu0 %v4248
    %4308 = vmatprep.subr.bf16.mxu0 0
    %4309 = vmatpush1.bf16.msra.mxu0 %v4249
    %4310 = vmatprep.subr.bf16.mxu0 0
    %4311 = vmatpush1.bf16.msra.mxu0 0
    %4312 = vmatprep.subr.bf16.mxu0 0
    %4313 = vmatpush1.bf16.msra.mxu0 0
    %4314 = vmatprep.subr.bf16.mxu0 0
    %4315 = vmatpush1.bf16.msra.mxu0 0
    %4316 = vmatprep.subr.bf16.mxu0 0
    %4317 = vmatpush1.bf16.msra.mxu0 0
    %4318 = vmatprep.mubr.bf16.mxu0 %v4263
    %4319 = vmatmul.mubr.bf16.gmra.mrb[0].mxu0 %v4166
    %v4320 = vpop.f32.mrb[0].mxu0
    %v4321 = vadd.f32 %v4104, %v4320
    %v4322 = vpop.f32.mrb[0].mxu0
    %v4323 = vpop.f32.mrb[0].mxu0
    %v4324 = vadd.f32 %v4107, %v4323
    %v4325 = vpop.f32.mrb[0].mxu0
    %4326 = vmatprep.mubr.bf16.mxu0 %v4266
    %4327 = vmatmul.mubr.bf16.gmra.mrb[0].mxu0 %v4168
    %v4328 = vpop.f32.mrb[0].mxu0
    %v4329 = vadd.f32 %v4112, %v4328
    %v4330 = vpop.f32.mrb[0].mxu0
    %v4331 = vpop.f32.mrb[0].mxu0
    %v4332 = vadd.f32 %v4115, %v4331
    %v4333 = vpop.f32.mrb[0].mxu0
    %4334 = vmatprep.mubr.bf16.mxu0 %v4269
    %4335 = vmatmul.mubr.bf16.gmra.mrb[0].mxu0 %v4170
    %v4336 = vpop.f32.mrb[0].mxu0
    %v4337 = vadd.f32 %v4120, %v4336
    %v4338 = vpop.f32.mrb[0].mxu0
    %v4339 = vpop.f32.mrb[0].mxu0
    %v4340 = vadd.f32 %v4123, %v4339
    %v4341 = vpop.f32.mrb[0].mxu0
    %4342 = vmatprep.mubr.bf16.mxu0 %v4272
    %4343 = vmatmul.mubr.bf16.gmra.mrb[0].mxu0 %v4172
    %v4344 = vpop.f32.mrb[0].mxu0
    %v4345 = vadd.f32 %v4128, %v4344
    %v4346 = vpop.f32.mrb[0].mxu0
    %v4347 = vpop.f32.mrb[0].mxu0
    %v4348 = vadd.f32 %v4131, %v4347
    %v4349 = vpop.f32.mrb[0].mxu0
    %4350 = vmatprep.mubr.bf16.mxu0 %v4275
    %4351 = vmatmul.mubr.bf16.gmra.mrb[0].mxu0 %v4174
    %v4352 = vpop.f32.mrb[0].mxu0
    %v4353 = vadd.f32 %v4136, %v4352
    %v4354 = vpop.f32.mrb[0].mxu0
    %v4355 = vpop.f32.mrb[0].mxu0
    %v4356 = vadd.f32 %v4139, %v4355
    %v4357 = vpop.f32.mrb[0].mxu0
    %4358 = vmatprep.mubr.bf16.mxu0 %v4278
    %4359 = vmatmul.mubr.bf16.gmra.mrb[0].mxu0 %v4176
    %v4360 = vpop.f32.mrb[0].mxu0
    %v4361 = vadd.f32 %v4144, %v4360
    %v4362 = vpop.f32.mrb[0].mxu0
    %v4363 = vpop.f32.mrb[0].mxu0
    %v4364 = vadd.f32 %v4147, %v4363
    %v4365 = vpop.f32.mrb[0].mxu0
    %4366 = vmatprep.mubr.bf16.mxu0 %v4281
    %4367 = vmatmul.mubr.bf16.gmra.mrb[0].mxu0 %v4178
    %v4368 = vpop.f32.mrb[0].mxu0
    %v4369 = vadd.f32 %v4152, %v4368
    %v4370 = vpop.f32.mrb[0].mxu0
    %v4371 = vpop.f32.mrb[0].mxu0
    %v4372 = vadd.f32 %v4155, %v4371
    %v4373 = vpop.f32.mrb[0].mxu0
    %4374 = vmatprep.mubr.bf16.mxu0 %v4284
    %4375 = vmatmul.mubr.bf16.gmra.mrb[0].mxu0 %v4180
    %v4376 = vpop.f32.mrb[0].mxu0
    %v4377 = vadd.f32 %v4160, %v4376
    %v4378 = vpop.f32.mrb[0].mxu0
    %v4379 = vpop.f32.mrb[0].mxu0
    %v4380 = vadd.f32 %v4163, %v4379
    %v4381 = vpop.f32.mrb[0].mxu0
    %4382 = vdwg.mxu0
    %s4383 = scalar_lea.vmem [#allocation3], 16
    %v4384 = vld [vmem:[%s4383] sm:$0xf]
    %v4385 = vld [vmem:[%s4383 + $0x8] sm:$0xf]
    %v4386 = vld [vmem:[%s4383 + $0x10] sm:$0xf]
    %v4387 = vld [vmem:[%s4383 + $0x18] sm:$0xf]
    %v4388 = vld [vmem:[%s4383 + $0x20] sm:$0xf]
    %v4389 = vld [vmem:[%s4383 + $0x28] sm:$0xf]
    %v4390 = vld [vmem:[%s4383 + $0x30] sm:$0xf]
    %v4391 = vld [vmem:[%s4383 + $0x38] sm:$0xf]
    %v4392 = vld [vmem:[%s4383 + $0x50] sm:$0xf]
    %v4393 = vld [vmem:[%s4383 + $0x58] sm:$0xf]
    %v4394 = vld [vmem:[%s4383 + $0x60] sm:$0xf]
    %v4395 = vld [vmem:[%s4383 + $0x68] sm:$0xf]
    %v4396 = vld [vmem:[%s4383 + $0x70] sm:$0xf]
    %v4397 = vld [vmem:[%s4383 + $0x78] sm:$0xf]
    %v4398 = vld [vmem:[%s4383 + $0x80] sm:$0xf]
    %v4399 = vld [vmem:[%s4383 + $0x88] sm:$0xf]
    %v4400 = vld [vmem:[%s4383 + $0x4] sm:$0x1]
    %v4401 = vld [vmem:[%s4383 + $0xc] sm:$0x1]
    %v4402 = vld [vmem:[%s4383 + $0x14] sm:$0x1]
    %v4403 = vld [vmem:[%s4383 + $0x1c] sm:$0x1]
    %v4404 = vld [vmem:[%s4383 + $0x24] sm:$0x1]
    %v4405 = vld [vmem:[%s4383 + $0x2c] sm:$0x1]
    %v4406 = vld [vmem:[%s4383 + $0x34] sm:$0x1]
    %v4407 = vld [vmem:[%s4383 + $0x3c] sm:$0x1]
    %v4408 = vld [vmem:[%s4383 + $0x54] sm:$0x1]
    %v4409 = vld [vmem:[%s4383 + $0x5c] sm:$0x1]
    %v4410 = vld [vmem:[%s4383 + $0x64] sm:$0x1]
    %v4411 = vld [vmem:[%s4383 + $0x6c] sm:$0x1]
    %v4412 = vld [vmem:[%s4383 + $0x74] sm:$0x1]
    %v4413 = vld [vmem:[%s4383 + $0x7c] sm:$0x1]
    %v4414 = vld [vmem:[%s4383 + $0x84] sm:$0x1]
    %v4415 = vld [vmem:[%s4383 + $0x8c] sm:$0x1]
    %v4416 = vld [vmem:[%s4383] sm:$0xe]
    %v4417 = vld [vmem:[%s4383 + $0x8] sm:$0xe]
    %v4418 = vld [vmem:[%s4383 + $0x10] sm:$0xe]
    %v4419 = vld [vmem:[%s4383 + $0x18] sm:$0xe]
    %v4420 = vld [vmem:[%s4383 + $0x20] sm:$0xe]
    %v4421 = vld [vmem:[%s4383 + $0x28] sm:$0xe]
    %v4422 = vld [vmem:[%s4383 + $0x30] sm:$0xe]
    %v4423 = vld [vmem:[%s4383 + $0x38] sm:$0xe]
    %v4424 = vld [vmem:[%s4383 + $0x50] sm:$0xe]
    %v4425 = vld [vmem:[%s4383 + $0x58] sm:$0xe]
    %v4426 = vld [vmem:[%s4383 + $0x60] sm:$0xe]
    %v4427 = vld [vmem:[%s4383 + $0x68] sm:$0xe]
    %v4428 = vld [vmem:[%s4383 + $0x70] sm:$0xe]
    %v4429 = vld [vmem:[%s4383 + $0x78] sm:$0xe]
    %v4430 = vld [vmem:[%s4383 + $0x80] sm:$0xe]
    %v4431 = vld [vmem:[%s4383 + $0x88] sm:$0xe]
    %v4464 = vunpack.c.l.b16 %v4384
    %v4465 = vunpack.c.l.b16 %v4400
    %v4466 = vunpack.c.l.b16 %v4385
    %v4467 = vunpack.c.l.b16 %v4401
    %v4468 = vunpack.c.l.b16 %v4386
    %v4469 = vunpack.c.l.b16 %v4402
    %v4470 = vunpack.c.l.b16 %v4387
    %v4471 = vunpack.c.l.b16 %v4403
    %v4472 = vunpack.c.l.b16 %v4388
    %v4473 = vunpack.c.l.b16 %v4404
    %v4474 = vunpack.c.l.b16 %v4389
    %v4475 = vunpack.c.l.b16 %v4405
    %v4476 = vunpack.c.l.b16 %v4390
    %v4477 = vunpack.c.l.b16 %v4406
    %v4478 = vunpack.c.l.b16 %v4391
    %v4479 = vunpack.c.l.b16 %v4407
    %v4480 = vunpack.c.l.b16 %v4392
    %v4481 = vunpack.c.l.b16 %v4408
    %v4482 = vunpack.c.l.b16 %v4393
    %v4483 = vunpack.c.l.b16 %v4409
    %v4484 = vunpack.c.l.b16 %v4394
    %v4485 = vunpack.c.l.b16 %v4410
    %v4486 = vunpack.c.l.b16 %v4395
    %v4487 = vunpack.c.l.b16 %v4411
    %v4488 = vunpack.c.l.b16 %v4396
    %v4489 = vunpack.c.l.b16 %v4412
    %v4490 = vunpack.c.l.b16 %v4397
    %v4491 = vunpack.c.l.b16 %v4413
    %v4492 = vunpack.c.l.b16 %v4398
    %v4493 = vunpack.c.l.b16 %v4414
    %v4494 = vunpack.c.l.b16 %v4399
    %v4495 = vunpack.c.l.b16 %v4415
    %v4496 = vpack.c.b16 %v4465, %v4464
    %v4497 = vpack.c.b16 %v4467, %v4466
    %v4498 = vpack.c.b16 %v4469, %v4468
    %v4499 = vpack.c.b16 %v4471, %v4470
    %v4500 = vpack.c.b16 %v4473, %v4472
    %v4501 = vpack.c.b16 %v4475, %v4474
    %v4502 = vpack.c.b16 %v4477, %v4476
    %v4503 = vpack.c.b16 %v4479, %v4478
    %v4504 = vpack.c.b16 %v4481, %v4480
    %v4505 = vpack.c.b16 %v4483, %v4482
    %v4506 = vpack.c.b16 %v4485, %v4484
    %v4507 = vpack.c.b16 %v4487, %v4486
    %v4508 = vpack.c.b16 %v4489, %v4488
    %v4509 = vpack.c.b16 %v4491, %v4490
    %v4510 = vpack.c.b16 %v4493, %v4492
    %v4511 = vpack.c.b16 %v4495, %v4494
    %v4513 = vshrl.u32 %v4496, 16
    %v4515 = vshll.u32 %v4496, 16
    %v4517 = vrot.slane %v4515, 1
    %v4518 = vor.u32 %v4513, %v4517
    %v4520 = vshrl.u32 %v4497, 16
    %v4522 = vshll.u32 %v4497, 16
    %v4524 = vrot.slane %v4522, 1
    %v4525 = vor.u32 %v4520, %v4524
    %v4527 = vshrl.u32 %v4498, 16
    %v4529 = vshll.u32 %v4498, 16
    %v4531 = vrot.slane %v4529, 1
    %v4532 = vor.u32 %v4527, %v4531
    %v4534 = vshrl.u32 %v4499, 16
    %v4536 = vshll.u32 %v4499, 16
    %v4538 = vrot.slane %v4536, 1
    %v4539 = vor.u32 %v4534, %v4538
    %v4541 = vshrl.u32 %v4500, 16
    %v4543 = vshll.u32 %v4500, 16
    %v4545 = vrot.slane %v4543, 1
    %v4546 = vor.u32 %v4541, %v4545
    %v4548 = vshrl.u32 %v4501, 16
    %v4550 = vshll.u32 %v4501, 16
    %v4552 = vrot.slane %v4550, 1
    %v4553 = vor.u32 %v4548, %v4552
    %v4555 = vshrl.u32 %v4502, 16
    %v4557 = vshll.u32 %v4502, 16
    %v4559 = vrot.slane %v4557, 1
    %v4560 = vor.u32 %v4555, %v4559
    %v4562 = vshrl.u32 %v4503, 16
    %v4564 = vshll.u32 %v4503, 16
    %v4566 = vrot.slane %v4564, 1
    %v4567 = vor.u32 %v4562, %v4566
    %v4569 = vshrl.u32 %v4504, 16
    %v4571 = vshll.u32 %v4504, 16
    %v4573 = vrot.slane %v4571, 1
    %v4574 = vor.u32 %v4569, %v4573
    %v4576 = vshrl.u32 %v4505, 16
    %v4578 = vshll.u32 %v4505, 16
    %v4580 = vrot.slane %v4578, 1
    %v4581 = vor.u32 %v4576, %v4580
    %v4583 = vshrl.u32 %v4506, 16
    %v4585 = vshll.u32 %v4506, 16
    %v4587 = vrot.slane %v4585, 1
    %v4588 = vor.u32 %v4583, %v4587
    %v4590 = vshrl.u32 %v4507, 16
    %v4592 = vshll.u32 %v4507, 16
    %v4594 = vrot.slane %v4592, 1
    %v4595 = vor.u32 %v4590, %v4594
    %v4597 = vshrl.u32 %v4508, 16
    %v4599 = vshll.u32 %v4508, 16
    %v4601 = vrot.slane %v4599, 1
    %v4602 = vor.u32 %v4597, %v4601
    %v4604 = vshrl.u32 %v4509, 16
    %v4606 = vshll.u32 %v4509, 16
    %v4608 = vrot.slane %v4606, 1
    %v4609 = vor.u32 %v4604, %v4608
    %v4611 = vshrl.u32 %v4510, 16
    %v4613 = vshll.u32 %v4510, 16
    %v4615 = vrot.slane %v4613, 1
    %v4616 = vor.u32 %v4611, %v4615
    %v4618 = vshrl.u32 %v4511, 16
    %v4620 = vshll.u32 %v4511, 16
    %v4622 = vrot.slane %v4620, 1
    %v4623 = vor.u32 %v4618, %v4622
    %4624 = vrot.lane.b32.xlu0 %v4518, 64
    %v4625 = vpop.permute.xlu0 %4624
    %4626 = vrot.lane.b32.xlu0 %v4525, 64
    %v4627 = vpop.permute.xlu0 %4626
    %4628 = vrot.lane.b32.xlu0 %v4532, 64
    %v4629 = vpop.permute.xlu0 %4628
    %4630 = vrot.lane.b32.xlu0 %v4539, 64
    %v4631 = vpop.permute.xlu0 %4630
    %4632 = vrot.lane.b32.xlu0 %v4546, 64
    %v4633 = vpop.permute.xlu0 %4632
    %4634 = vrot.lane.b32.xlu0 %v4553, 64
    %v4635 = vpop.permute.xlu0 %4634
    %4636 = vrot.lane.b32.xlu0 %v4560, 64
    %v4637 = vpop.permute.xlu0 %4636
    %4638 = vrot.lane.b32.xlu0 %v4567, 64
    %v4639 = vpop.permute.xlu0 %4638
    %4640 = vrot.lane.b32.xlu0 %v4574, 64
    %v4641 = vpop.permute.xlu0 %4640
    %4642 = vrot.lane.b32.xlu0 %v4581, 64
    %v4643 = vpop.permute.xlu0 %4642
    %4644 = vrot.lane.b32.xlu0 %v4588, 64
    %v4645 = vpop.permute.xlu0 %4644
    %4646 = vrot.lane.b32.xlu0 %v4595, 64
    %v4647 = vpop.permute.xlu0 %4646
    %4648 = vrot.lane.b32.xlu0 %v4602, 64
    %v4649 = vpop.permute.xlu0 %4648
    %4650 = vrot.lane.b32.xlu0 %v4609, 64
    %v4651 = vpop.permute.xlu0 %4650
    %4652 = vrot.lane.b32.xlu0 %v4616, 64
    %v4653 = vpop.permute.xlu0 %4652
    %4654 = vrot.lane.b32.xlu0 %v4623, 64
    %v4655 = vpop.permute.xlu0 %4654
    %v4672 = vunpack.c.l.b16 %v4416
    %v4673 = vunpack.c.l.b16 %v4417
    %v4674 = vunpack.c.l.b16 %v4418
    %v4675 = vunpack.c.l.b16 %v4419
    %v4676 = vunpack.c.l.b16 %v4420
    %v4677 = vunpack.c.l.b16 %v4421
    %v4678 = vunpack.c.l.b16 %v4422
    %v4679 = vunpack.c.l.b16 %v4423
    %v4680 = vunpack.c.l.b16 %v4424
    %v4681 = vunpack.c.l.b16 %v4425
    %v4682 = vunpack.c.l.b16 %v4426
    %v4683 = vunpack.c.l.b16 %v4427
    %v4684 = vunpack.c.l.b16 %v4428
    %v4685 = vunpack.c.l.b16 %v4429
    %v4686 = vunpack.c.l.b16 %v4430
    %v4687 = vunpack.c.l.b16 %v4431
    %v4688 = vpack.c.b16 %v4465, %v4672
    %v4689 = vpack.c.b16 %v4467, %v4673
    %v4690 = vpack.c.b16 %v4469, %v4674
    %v4691 = vpack.c.b16 %v4471, %v4675
    %v4692 = vpack.c.b16 %v4473, %v4676
    %v4693 = vpack.c.b16 %v4475, %v4677
    %v4694 = vpack.c.b16 %v4477, %v4678
    %v4695 = vpack.c.b16 %v4479, %v4679
    %v4696 = vpack.c.b16 %v4481, %v4680
    %v4697 = vpack.c.b16 %v4483, %v4681
    %v4698 = vpack.c.b16 %v4485, %v4682
    %v4699 = vpack.c.b16 %v4487, %v4683
    %v4700 = vpack.c.b16 %v4489, %v4684
    %v4701 = vpack.c.b16 %v4491, %v4685
    %v4702 = vpack.c.b16 %v4493, %v4686
    %v4703 = vpack.c.b16 %v4495, %v4687
    %v4704 = vrot.slane %v4688, 1
    %v4705 = vrot.slane %v4689, 1
    %v4706 = vrot.slane %v4690, 1
    %v4707 = vrot.slane %v4691, 1
    %v4708 = vrot.slane %v4692, 1
    %v4709 = vrot.slane %v4693, 1
    %v4710 = vrot.slane %v4694, 1
    %v4711 = vrot.slane %v4695, 1
    %v4712 = vrot.slane %v4696, 1
    %v4713 = vrot.slane %v4697, 1
    %v4714 = vrot.slane %v4698, 1
    %v4715 = vrot.slane %v4699, 1
    %v4716 = vrot.slane %v4700, 1
    %v4717 = vrot.slane %v4701, 1
    %v4718 = vrot.slane %v4702, 1
    %v4719 = vrot.slane %v4703, 1
    %v4722 = vsel %vm972, %v4384, %v4625
    %v4725 = vsel %vm972, %v4385, %v4627
    %v4728 = vsel %vm972, %v4386, %v4629
    %v4731 = vsel %vm972, %v4387, %v4631
    %v4734 = vsel %vm972, %v4388, %v4633
    %v4737 = vsel %vm972, %v4389, %v4635
    %v4740 = vsel %vm972, %v4390, %v4637
    %v4743 = vsel %vm972, %v4391, %v4639
    %v4746 = vsel %vm972, %v4392, %v4641
    %v4749 = vsel %vm972, %v4393, %v4643
    %v4752 = vsel %vm972, %v4394, %v4645
    %v4755 = vsel %vm972, %v4395, %v4647
    %v4758 = vsel %vm972, %v4396, %v4649
    %v4761 = vsel %vm972, %v4397, %v4651
    %v4764 = vsel %vm972, %v4398, %v4653
    %v4767 = vsel %vm972, %v4399, %v4655
    %v4784 = vunpack.c.l.b16 %v4722
    %v4785 = vunpack.c.l.b16 %v4704
    %v4786 = vunpack.c.l.b16 %v4725
    %v4787 = vunpack.c.l.b16 %v4705
    %v4788 = vunpack.c.l.b16 %v4728
    %v4789 = vunpack.c.l.b16 %v4706
    %v4790 = vunpack.c.l.b16 %v4731
    %v4791 = vunpack.c.l.b16 %v4707
    %v4792 = vunpack.c.l.b16 %v4734
    %v4793 = vunpack.c.l.b16 %v4708
    %v4794 = vunpack.c.l.b16 %v4737
    %v4795 = vunpack.c.l.b16 %v4709
    %v4796 = vunpack.c.l.b16 %v4740
    %v4797 = vunpack.c.l.b16 %v4710
    %v4798 = vunpack.c.l.b16 %v4743
    %v4799 = vunpack.c.l.b16 %v4711
    %v4800 = vunpack.c.l.b16 %v4746
    %v4801 = vunpack.c.l.b16 %v4712
    %v4802 = vunpack.c.l.b16 %v4749
    %v4803 = vunpack.c.l.b16 %v4713
    %v4804 = vunpack.c.l.b16 %v4752
    %v4805 = vunpack.c.l.b16 %v4714
    %v4806 = vunpack.c.l.b16 %v4755
    %v4807 = vunpack.c.l.b16 %v4715
    %v4808 = vunpack.c.l.b16 %v4758
    %v4809 = vunpack.c.l.b16 %v4716
    %v4810 = vunpack.c.l.b16 %v4761
    %v4811 = vunpack.c.l.b16 %v4717
    %v4812 = vunpack.c.l.b16 %v4764
    %v4813 = vunpack.c.l.b16 %v4718
    %v4814 = vunpack.c.l.b16 %v4767
    %v4815 = vunpack.c.l.b16 %v4719
    %s4816 = scalar_lea.vmem %s1, 480
    %v4817 = vld [vmem:[%s4816] sm:$0xf]
    %v4818 = vld [vmem:[%s4816 + $0x4] sm:$0xf]
    %v4819 = vld [vmem:[%s4816 + $0x8] sm:$0xf]
    %v4820 = vld [vmem:[%s4816 + $0xc] sm:$0xf]
    %v4821 = vld [vmem:[%s4816 + $0x10] sm:$0xf]
    %v4822 = vld [vmem:[%s4816 + $0x14] sm:$0xf]
    %v4823 = vld [vmem:[%s4816 + $0x18] sm:$0xf]
    %v4824 = vld [vmem:[%s4816 + $0x1c] sm:$0xf]
    %v4825 = vld [vmem:[%s4816 + $0x20] sm:$0xf]
    %v4826 = vld [vmem:[%s4816 + $0x24] sm:$0xf]
    %v4827 = vld [vmem:[%s4816 + $0x28] sm:$0xf]
    %v4828 = vld [vmem:[%s4816 + $0x2c] sm:$0xf]
    %v4829 = vld [vmem:[%s4816 + $0x30] sm:$0xf]
    %v4830 = vld [vmem:[%s4816 + $0x34] sm:$0xf]
    %v4831 = vld [vmem:[%s4816 + $0x38] sm:$0xf]
    %v4832 = vld [vmem:[%s4816 + $0x3c] sm:$0xf]
    %v4833 = vld [vmem:[%s4816 + $0x40] sm:$0xf]
    %v4834 = vld [vmem:[%s4816 + $0x44] sm:$0xf]
    %v4835 = vld [vmem:[%s4816 + $0x48] sm:$0xf]
    %v4836 = vld [vmem:[%s4816 + $0x4c] sm:$0xf]
    %v4837 = vld [vmem:[%s4816 + $0x50] sm:$0xf]
    %v4838 = vld [vmem:[%s4816 + $0x54] sm:$0xf]
    %v4839 = vld [vmem:[%s4816 + $0x58] sm:$0xf]
    %v4840 = vld [vmem:[%s4816 + $0x5c] sm:$0xf]
    %v4841 = vpack.c.b16 %v4786, %v4784
    %v4842 = vpack.c.b16 %v4787, %v4785
    %v4843 = vpack.c.b16 %v4790, %v4788
    %v4844 = vpack.c.b16 %v4791, %v4789
    %v4845 = vpack.c.b16 %v4794, %v4792
    %v4846 = vpack.c.b16 %v4795, %v4793
    %v4847 = vpack.c.b16 %v4798, %v4796
    %v4848 = vpack.c.b16 %v4799, %v4797
    %v4849 = vpack.c.b16 %v4802, %v4800
    %v4850 = vpack.c.b16 %v4803, %v4801
    %v4851 = vpack.c.b16 %v4806, %v4804
    %v4852 = vpack.c.b16 %v4807, %v4805
    %v4853 = vpack.c.b16 %v4810, %v4808
    %v4854 = vpack.c.b16 %v4811, %v4809
    %v4855 = vpack.c.b16 %v4814, %v4812
    %v4856 = vpack.c.b16 %v4815, %v4813
    %v4889 = vunpack.c.l.b16 %v4817
    %v4890 = vunpack.c.l.b16 %v4818
    %v4891 = vunpack.c.l.b16 %v4819
    %v4892 = vunpack.c.l.b16 %v4820
    %v4893 = vunpack.c.l.b16 %v4821
    %v4894 = vunpack.c.l.b16 %v4822
    %v4895 = vunpack.c.l.b16 %v4823
    %v4896 = vunpack.c.l.b16 %v4824
    %v4897 = vunpack.c.l.b16 %v4825
    %v4898 = vunpack.c.l.b16 %v4826
    %v4899 = vunpack.c.l.b16 %v4827
    %v4900 = vunpack.c.l.b16 %v4828
    %v4901 = vunpack.c.l.b16 %v4829
    %v4902 = vunpack.c.l.b16 %v4830
    %v4903 = vunpack.c.l.b16 %v4831
    %v4904 = vunpack.c.l.b16 %v4832
    %v4905 = vunpack.c.l.b16 %v4833
    %v4906 = vunpack.c.l.b16 %v4834
    %v4907 = vunpack.c.l.b16 %v4835
    %v4908 = vunpack.c.l.b16 %v4836
    %v4909 = vunpack.c.l.b16 %v4837
    %v4910 = vunpack.c.l.b16 %v4838
    %v4911 = vunpack.c.l.b16 %v4839
    %v4912 = vunpack.c.l.b16 %v4840
    %v4913 = vpack.c.b16 %v4890, %v4889
    %v4914 = vpack.c.b16 %v4892, %v4891
    %v4915 = vpack.c.b16 %v4894, %v4893
    %v4916 = vpack.c.b16 %v4896, %v4895
    %v4917 = vpack.c.b16 %v4898, %v4897
    %v4918 = vpack.c.b16 %v4900, %v4899
    %v4919 = vpack.c.b16 %v4902, %v4901
    %v4920 = vpack.c.b16 %v4904, %v4903
    %v4921 = vpack.c.b16 %v4906, %v4905
    %v4922 = vpack.c.b16 %v4908, %v4907
    %v4923 = vpack.c.b16 %v4910, %v4909
    %v4924 = vpack.c.b16 %v4912, %v4911
    %v4938 = vsel %vm972, %v4842, 0
    %v4941 = vsel %vm972, %v4844, 0
    %v4944 = vsel %vm972, %v4846, 0
    %v4947 = vsel %vm972, %v4848, 0
    %v4950 = vsel %vm972, %v4850, 0
    %v4953 = vsel %vm972, %v4852, 0
    %v4956 = vsel %vm972, %v4854, 0
    %v4959 = vsel %vm972, %v4856, 0
    %4961 = vmatprep.subr.bf16.mxu0 0
    %4962 = vmatpush1.bf16.msra.mxu0 %v4913
    %4963 = vmatprep.subr.bf16.mxu0 0
    %4964 = vmatpush1.bf16.msra.mxu0 %v4914
    %4965 = vmatprep.subr.bf16.mxu0 0
    %4966 = vmatpush1.bf16.msra.mxu0 %v4915
    %4967 = vmatprep.subr.bf16.mxu0 0
    %4968 = vmatpush1.bf16.msra.mxu0 %v4916
    %4969 = vmatprep.subr.bf16.mxu0 0
    %4970 = vmatpush1.bf16.msra.mxu0 %v4917
    %4971 = vmatprep.subr.bf16.mxu0 0
    %4972 = vmatpush1.bf16.msra.mxu0 %v4918
    %4973 = vmatprep.subr.bf16.mxu0 0
    %4974 = vmatpush1.bf16.msra.mxu0 %v4919
    %4975 = vmatprep.subr.bf16.mxu0 0
    %4976 = vmatpush1.bf16.msra.mxu0 %v4920
    %4977 = vmatprep.subr.bf16.mxu0 0
    %4978 = vmatpush1.bf16.msra.mxu0 %v4921
    %4979 = vmatprep.subr.bf16.mxu0 0
    %4980 = vmatpush1.bf16.msra.mxu0 %v4922
    %4981 = vmatprep.subr.bf16.mxu0 0
    %4982 = vmatpush1.bf16.msra.mxu0 %v4923
    %4983 = vmatprep.subr.bf16.mxu0 0
    %4984 = vmatpush1.bf16.msra.mxu0 %v4924
    %4985 = vmatprep.subr.bf16.mxu0 0
    %4986 = vmatpush1.bf16.msra.mxu0 0
    %4987 = vmatprep.subr.bf16.mxu0 0
    %4988 = vmatpush1.bf16.msra.mxu0 0
    %4989 = vmatprep.subr.bf16.mxu0 0
    %4990 = vmatpush1.bf16.msra.mxu0 0
    %4991 = vmatprep.subr.bf16.mxu0 0
    %4992 = vmatpush1.bf16.msra.mxu0 0
    %4993 = vmatprep.mubr.bf16.mxu0 %v4938
    %4994 = vmatmul.mubr.bf16.gmra.mrb[0].mxu0 %v4841
    %v4995 = vpop.f32.mrb[0].mxu0
    %v4996 = vadd.f32 0.0, %v4995
    %v4997 = vpop.f32.mrb[0].mxu0
    %v4998 = vpop.f32.mrb[0].mxu0
    %v4999 = vadd.f32 0.0, %v4998
    %v5000 = vpop.f32.mrb[0].mxu0
    %5001 = vmatprep.mubr.bf16.mxu0 %v4941
    %5002 = vmatmul.mubr.bf16.gmra.mrb[0].mxu0 %v4843
    %v5003 = vpop.f32.mrb[0].mxu0
    %v5004 = vadd.f32 0.0, %v5003
    %v5005 = vpop.f32.mrb[0].mxu0
    %v5006 = vpop.f32.mrb[0].mxu0
    %v5007 = vadd.f32 0.0, %v5006
    %v5008 = vpop.f32.mrb[0].mxu0
    %5009 = vmatprep.mubr.bf16.mxu0 %v4944
    %5010 = vmatmul.mubr.bf16.gmra.mrb[0].mxu0 %v4845
    %v5011 = vpop.f32.mrb[0].mxu0
    %v5012 = vadd.f32 0.0, %v5011
    %v5013 = vpop.f32.mrb[0].mxu0
    %v5014 = vpop.f32.mrb[0].mxu0
    %v5015 = vadd.f32 0.0, %v5014
    %v5016 = vpop.f32.mrb[0].mxu0
    %5017 = vmatprep.mubr.bf16.mxu0 %v4947
    %5018 = vmatmul.mubr.bf16.gmra.mrb[0].mxu0 %v4847
    %v5019 = vpop.f32.mrb[0].mxu0
    %v5020 = vadd.f32 0.0, %v5019
    %v5021 = vpop.f32.mrb[0].mxu0
    %v5022 = vpop.f32.mrb[0].mxu0
    %v5023 = vadd.f32 0.0, %v5022
    %v5024 = vpop.f32.mrb[0].mxu0
    %5025 = vmatprep.mubr.bf16.mxu0 %v4950
    %5026 = vmatmul.mubr.bf16.gmra.mrb[0].mxu0 %v4849
    %v5027 = vpop.f32.mrb[0].mxu0
    %v5028 = vadd.f32 0.0, %v5027
    %v5029 = vpop.f32.mrb[0].mxu0
    %v5030 = vpop.f32.mrb[0].mxu0
    %v5031 = vadd.f32 0.0, %v5030
    %v5032 = vpop.f32.mrb[0].mxu0
    %5033 = vmatprep.mubr.bf16.mxu0 %v4953
    %5034 = vmatmul.mubr.bf16.gmra.mrb[0].mxu0 %v4851
    %v5035 = vpop.f32.mrb[0].mxu0
    %v5036 = vadd.f32 0.0, %v5035
    %v5037 = vpop.f32.mrb[0].mxu0
    %v5038 = vpop.f32.mrb[0].mxu0
    %v5039 = vadd.f32 0.0, %v5038
    %v5040 = vpop.f32.mrb[0].mxu0
    %5041 = vmatprep.mubr.bf16.mxu0 %v4956
    %5042 = vmatmul.mubr.bf16.gmra.mrb[0].mxu0 %v4853
    %v5043 = vpop.f32.mrb[0].mxu0
    %v5044 = vadd.f32 0.0, %v5043
    %v5045 = vpop.f32.mrb[0].mxu0
    %v5046 = vpop.f32.mrb[0].mxu0
    %v5047 = vadd.f32 0.0, %v5046
    %v5048 = vpop.f32.mrb[0].mxu0
    %5049 = vmatprep.mubr.bf16.mxu0 %v4959
    %5050 = vmatmul.mubr.bf16.gmra.mrb[0].mxu0 %v4855
    %v5051 = vpop.f32.mrb[0].mxu0
    %v5052 = vadd.f32 0.0, %v5051
    %v5053 = vpop.f32.mrb[0].mxu0
    %v5054 = vpop.f32.mrb[0].mxu0
    %v5055 = vadd.f32 0.0, %v5054
    %v5056 = vpop.f32.mrb[0].mxu0
    %5057 = vdwg.mxu0
    %v5058 = vadd.f32 %v4321, %v4996
    %v5059 = vadd.f32 %v4324, %v4999
    %v5060 = vadd.f32 %v4329, %v5004
    %v5061 = vadd.f32 %v4332, %v5007
    %v5062 = vadd.f32 %v4337, %v5012
    %v5063 = vadd.f32 %v4340, %v5015
    %v5064 = vadd.f32 %v4345, %v5020
    %v5065 = vadd.f32 %v4348, %v5023
    %v5066 = vadd.f32 %v4353, %v5028
    %v5067 = vadd.f32 %v4356, %v5031
    %v5068 = vadd.f32 %v4361, %v5036
    %v5069 = vadd.f32 %v4364, %v5039
    %v5070 = vadd.f32 %v4369, %v5044
    %v5071 = vadd.f32 %v4372, %v5047
    %v5072 = vadd.f32 %v4377, %v5052
    %v5073 = vadd.f32 %v4380, %v5055
    %s5074 = scalar_lea.vmem %s2, 1
    %v5075 = vld [vmem:[%s5074] sm:$0x1]
    %v5077 = vlaneseq
    %v5078 = vshrl.u32 %v5077, 7
    %v5079 = vsub.s32 0, %v5078
    %v5080 = vrot.slane %v5075, %v5079
    %v5082 = vadd.f32 %v5058, %v5080
    %v5083 = vadd.f32 %v5059, %v5080
    %v5084 = vadd.f32 %v5060, %v5080
    %v5085 = vadd.f32 %v5061, %v5080
    %v5086 = vadd.f32 %v5062, %v5080
    %v5087 = vadd.f32 %v5063, %v5080
    %v5088 = vadd.f32 %v5064, %v5080
    %v5089 = vadd.f32 %v5065, %v5080
    %v5090 = vadd.f32 %v5066, %v5080
    %v5091 = vadd.f32 %v5067, %v5080
    %v5092 = vadd.f32 %v5068, %v5080
    %v5093 = vadd.f32 %v5069, %v5080
    %v5094 = vadd.f32 %v5070, %v5080
    %v5095 = vadd.f32 %v5071, %v5080
    %v5096 = vadd.f32 %v5072, %v5080
    %v5097 = vadd.f32 %v5073, %v5080
    %v5098 = vmax.f32 %v5082, 0.0
    %v5099 = vmax.f32 %v5083, 0.0
    %v5100 = vmax.f32 %v5084, 0.0
    %v5101 = vmax.f32 %v5085, 0.0
    %v5102 = vmax.f32 %v5086, 0.0
    %v5103 = vmax.f32 %v5087, 0.0
    %v5104 = vmax.f32 %v5088, 0.0
    %v5105 = vmax.f32 %v5089, 0.0
    %v5106 = vmax.f32 %v5090, 0.0
    %v5107 = vmax.f32 %v5091, 0.0
    %v5108 = vmax.f32 %v5092, 0.0
    %v5109 = vmax.f32 %v5093, 0.0
    %v5110 = vmax.f32 %v5094, 0.0
    %v5111 = vmax.f32 %v5095, 0.0
    %v5112 = vmax.f32 %v5096, 0.0
    %v5113 = vmax.f32 %v5097, 0.0
    %v5114 = vpack.c.bf16 %v5098, %v5098
    %v5115 = vpack.c.bf16 %v5099, %v5099
    %v5116 = vpack.c.bf16 %v5100, %v5100
    %v5117 = vpack.c.bf16 %v5101, %v5101
    %v5118 = vpack.c.bf16 %v5102, %v5102
    %v5119 = vpack.c.bf16 %v5103, %v5103
    %v5120 = vpack.c.bf16 %v5104, %v5104
    %v5121 = vpack.c.bf16 %v5105, %v5105
    %v5122 = vpack.c.bf16 %v5106, %v5106
    %v5123 = vpack.c.bf16 %v5107, %v5107
    %v5124 = vpack.c.bf16 %v5108, %v5108
    %v5125 = vpack.c.bf16 %v5109, %v5109
    %v5126 = vpack.c.bf16 %v5110, %v5110
    %v5127 = vpack.c.bf16 %v5111, %v5111
    %v5128 = vpack.c.bf16 %v5112, %v5112
    %v5129 = vpack.c.bf16 %v5113, %v5113
    %v5146 = vunpack.c.l.b16 %v5114
    %v5147 = vunpack.c.l.b16 %v5115
    %v5148 = vunpack.c.l.b16 %v5116
    %v5149 = vunpack.c.l.b16 %v5117
    %v5150 = vunpack.c.l.b16 %v5118
    %v5151 = vunpack.c.l.b16 %v5119
    %v5152 = vunpack.c.l.b16 %v5120
    %v5153 = vunpack.c.l.b16 %v5121
    %v5154 = vunpack.c.l.b16 %v5122
    %v5155 = vunpack.c.l.b16 %v5123
    %v5156 = vunpack.c.l.b16 %v5124
    %v5157 = vunpack.c.l.b16 %v5125
    %v5158 = vunpack.c.l.b16 %v5126
    %v5159 = vunpack.c.l.b16 %v5127
    %v5160 = vunpack.c.l.b16 %v5128
    %v5161 = vunpack.c.l.b16 %v5129
    %v5162 = vpack.c.b16 %v5146, %v5146
    %v5163 = vpack.c.b16 %v5147, %v5147
    %v5164 = vpack.c.b16 %v5148, %v5148
    %v5165 = vpack.c.b16 %v5149, %v5149
    %v5166 = vpack.c.b16 %v5150, %v5150
    %v5167 = vpack.c.b16 %v5151, %v5151
    %v5168 = vpack.c.b16 %v5152, %v5152
    %v5169 = vpack.c.b16 %v5153, %v5153
    %v5170 = vpack.c.b16 %v5154, %v5154
    %v5171 = vpack.c.b16 %v5155, %v5155
    %v5172 = vpack.c.b16 %v5156, %v5156
    %v5173 = vpack.c.b16 %v5157, %v5157
    %v5174 = vpack.c.b16 %v5158, %v5158
    %v5175 = vpack.c.b16 %v5159, %v5159
    %v5176 = vpack.c.b16 %v5160, %v5160
    %v5177 = vpack.c.b16 %v5161, %v5161
    %v5179 = vshrl.u32 %v5162, 16
    %v5181 = vrot.slane %v5179, 7
    %v5182 = vshll.u32 %v5162, 16
    %v5184 = vor.u32 %v5181, %v5182
    %v5185 = vrot.slane %v5181, 4
    %v5187 = vshrl.u32 %v5163, 16
    %v5189 = vrot.slane %v5187, 7
    %v5190 = vshll.u32 %v5163, 16
    %v5192 = vor.u32 %v5189, %v5190
    %v5193 = vrot.slane %v5189, 4
    %v5195 = vshrl.u32 %v5164, 16
    %v5197 = vrot.slane %v5195, 7
    %v5198 = vshll.u32 %v5164, 16
    %v5200 = vor.u32 %v5197, %v5198
    %v5201 = vrot.slane %v5197, 4
    %v5203 = vshrl.u32 %v5165, 16
    %v5205 = vrot.slane %v5203, 7
    %v5206 = vshll.u32 %v5165, 16
    %v5208 = vor.u32 %v5205, %v5206
    %v5209 = vrot.slane %v5205, 4
    %v5211 = vshrl.u32 %v5166, 16
    %v5213 = vrot.slane %v5211, 7
    %v5214 = vshll.u32 %v5166, 16
    %v5216 = vor.u32 %v5213, %v5214
    %v5217 = vrot.slane %v5213, 4
    %v5219 = vshrl.u32 %v5167, 16
    %v5221 = vrot.slane %v5219, 7
    %v5222 = vshll.u32 %v5167, 16
    %v5224 = vor.u32 %v5221, %v5222
    %v5225 = vrot.slane %v5221, 4
    %v5227 = vshrl.u32 %v5168, 16
    %v5229 = vrot.slane %v5227, 7
    %v5230 = vshll.u32 %v5168, 16
    %v5232 = vor.u32 %v5229, %v5230
    %v5233 = vrot.slane %v5229, 4
    %v5235 = vshrl.u32 %v5169, 16
    %v5237 = vrot.slane %v5235, 7
    %v5238 = vshll.u32 %v5169, 16
    %v5240 = vor.u32 %v5237, %v5238
    %v5241 = vrot.slane %v5237, 4
    %v5243 = vshrl.u32 %v5170, 16
    %v5245 = vrot.slane %v5243, 7
    %v5246 = vshll.u32 %v5170, 16
    %v5248 = vor.u32 %v5245, %v5246
    %v5249 = vrot.slane %v5245, 4
    %v5251 = vshrl.u32 %v5171, 16
    %v5253 = vrot.slane %v5251, 7
    %v5254 = vshll.u32 %v5171, 16
    %v5256 = vor.u32 %v5253, %v5254
    %v5257 = vrot.slane %v5253, 4
    %v5259 = vshrl.u32 %v5172, 16
    %v5261 = vrot.slane %v5259, 7
    %v5262 = vshll.u32 %v5172, 16
    %v5264 = vor.u32 %v5261, %v5262
    %v5265 = vrot.slane %v5261, 4
    %v5267 = vshrl.u32 %v5173, 16
    %v5269 = vrot.slane %v5267, 7
    %v5270 = vshll.u32 %v5173, 16
    %v5272 = vor.u32 %v5269, %v5270
    %v5273 = vrot.slane %v5269, 4
    %v5275 = vshrl.u32 %v5174, 16
    %v5277 = vrot.slane %v5275, 7
    %v5278 = vshll.u32 %v5174, 16
    %v5280 = vor.u32 %v5277, %v5278
    %v5281 = vrot.slane %v5277, 4
    %v5283 = vshrl.u32 %v5175, 16
    %v5285 = vrot.slane %v5283, 7
    %v5286 = vshll.u32 %v5175, 16
    %v5288 = vor.u32 %v5285, %v5286
    %v5289 = vrot.slane %v5285, 4
    %v5291 = vshrl.u32 %v5176, 16
    %v5293 = vrot.slane %v5291, 7
    %v5294 = vshll.u32 %v5176, 16
    %v5296 = vor.u32 %v5293, %v5294
    %v5297 = vrot.slane %v5293, 4
    %v5299 = vshrl.u32 %v5177, 16
    %v5301 = vrot.slane %v5299, 7
    %v5302 = vshll.u32 %v5177, 16
    %v5304 = vor.u32 %v5301, %v5302
    %v5305 = vrot.slane %v5301, 4
    %v5338 = vld [vmem:[%s537] sm:$0xf]
    %v5339 = vsel %vm539, %v5184, %v5338
    %5340 = vst [vmem:[%s537] sm:$0xf] %v5339
    %v5341 = vld [vmem:[%s537 + $0x4] sm:$0x1]
    %v5342 = vsel %vm29, %v5185, %v5341
    %5343 = vst [vmem:[%s537 + $0x4] sm:$0x1] %v5342
    %v5344 = vld [vmem:[%s537 + $0x8] sm:$0xf]
    %v5345 = vsel %vm539, %v5192, %v5344
    %5346 = vst [vmem:[%s537 + $0x8] sm:$0xf] %v5345
    %v5347 = vld [vmem:[%s537 + $0xc] sm:$0x1]
    %v5348 = vsel %vm29, %v5193, %v5347
    %5349 = vst [vmem:[%s537 + $0xc] sm:$0x1] %v5348
    %v5350 = vld [vmem:[%s537 + $0x10] sm:$0xf]
    %v5351 = vsel %vm539, %v5200, %v5350
    %5352 = vst [vmem:[%s537 + $0x10] sm:$0xf] %v5351
    %v5353 = vld [vmem:[%s537 + $0x14] sm:$0x1]
    %v5354 = vsel %vm29, %v5201, %v5353
    %5355 = vst [vmem:[%s537 + $0x14] sm:$0x1] %v5354
    %v5356 = vld [vmem:[%s537 + $0x18] sm:$0xf]
    %v5357 = vsel %vm539, %v5208, %v5356
    %5358 = vst [vmem:[%s537 + $0x18] sm:$0xf] %v5357
    %v5359 = vld [vmem:[%s537 + $0x1c] sm:$0x1]
    %v5360 = vsel %vm29, %v5209, %v5359
    %5361 = vst [vmem:[%s537 + $0x1c] sm:$0x1] %v5360
    %v5362 = vld [vmem:[%s537 + $0x20] sm:$0xf]
    %v5363 = vsel %vm539, %v5216, %v5362
    %5364 = vst [vmem:[%s537 + $0x20] sm:$0xf] %v5363
    %v5365 = vld [vmem:[%s537 + $0x24] sm:$0x1]
    %v5366 = vsel %vm29, %v5217, %v5365
    %5367 = vst [vmem:[%s537 + $0x24] sm:$0x1] %v5366
    %v5368 = vld [vmem:[%s537 + $0x28] sm:$0xf]
    %v5369 = vsel %vm539, %v5224, %v5368
    %5370 = vst [vmem:[%s537 + $0x28] sm:$0xf] %v5369
    %v5371 = vld [vmem:[%s537 + $0x2c] sm:$0x1]
    %v5372 = vsel %vm29, %v5225, %v5371
    %5373 = vst [vmem:[%s537 + $0x2c] sm:$0x1] %v5372
    %v5374 = vld [vmem:[%s537 + $0x30] sm:$0xf]
    %v5375 = vsel %vm539, %v5232, %v5374
    %5376 = vst [vmem:[%s537 + $0x30] sm:$0xf] %v5375
    %v5377 = vld [vmem:[%s537 + $0x34] sm:$0x1]
    %v5378 = vsel %vm29, %v5233, %v5377
    %5379 = vst [vmem:[%s537 + $0x34] sm:$0x1] %v5378
    %v5380 = vld [vmem:[%s537 + $0x38] sm:$0xf]
    %v5381 = vsel %vm539, %v5240, %v5380
    %5382 = vst [vmem:[%s537 + $0x38] sm:$0xf] %v5381
    %v5383 = vld [vmem:[%s537 + $0x3c] sm:$0x1]
    %v5384 = vsel %vm29, %v5241, %v5383
    %5385 = vst [vmem:[%s537 + $0x3c] sm:$0x1] %v5384
    %v5386 = vld [vmem:[%s537 + $0x50] sm:$0xf]
    %v5387 = vsel %vm539, %v5248, %v5386
    %5388 = vst [vmem:[%s537 + $0x50] sm:$0xf] %v5387
    %v5389 = vld [vmem:[%s537 + $0x54] sm:$0x1]
    %v5390 = vsel %vm29, %v5249, %v5389
    %5391 = vst [vmem:[%s537 + $0x54] sm:$0x1] %v5390
    %v5392 = vld [vmem:[%s537 + $0x58] sm:$0xf]
    %v5393 = vsel %vm539, %v5256, %v5392
    %5394 = vst [vmem:[%s537 + $0x58] sm:$0xf] %v5393
    %v5395 = vld [vmem:[%s537 + $0x5c] sm:$0x1]
    %v5396 = vsel %vm29, %v5257, %v5395
    %5397 = vst [vmem:[%s537 + $0x5c] sm:$0x1] %v5396
    %v5398 = vld [vmem:[%s537 + $0x60] sm:$0xf]
    %v5399 = vsel %vm539, %v5264, %v5398
    %5400 = vst [vmem:[%s537 + $0x60] sm:$0xf] %v5399
    %v5401 = vld [vmem:[%s537 + $0x64] sm:$0x1]
    %v5402 = vsel %vm29, %v5265, %v5401
    %5403 = vst [vmem:[%s537 + $0x64] sm:$0x1] %v5402
    %v5404 = vld [vmem:[%s537 + $0x68] sm:$0xf]
    %v5405 = vsel %vm539, %v5272, %v5404
    %5406 = vst [vmem:[%s537 + $0x68] sm:$0xf] %v5405
    %v5407 = vld [vmem:[%s537 + $0x6c] sm:$0x1]
    %v5408 = vsel %vm29, %v5273, %v5407
    %5409 = vst [vmem:[%s537 + $0x6c] sm:$0x1] %v5408
    %v5410 = vld [vmem:[%s537 + $0x70] sm:$0xf]
    %v5411 = vsel %vm539, %v5280, %v5410
    %5412 = vst [vmem:[%s537 + $0x70] sm:$0xf] %v5411
    %v5413 = vld [vmem:[%s537 + $0x74] sm:$0x1]
    %v5414 = vsel %vm29, %v5281, %v5413
    %5415 = vst [vmem:[%s537 + $0x74] sm:$0x1] %v5414
    %v5416 = vld [vmem:[%s537 + $0x78] sm:$0xf]
    %v5417 = vsel %vm539, %v5288, %v5416
    %5418 = vst [vmem:[%s537 + $0x78] sm:$0xf] %v5417
    %v5419 = vld [vmem:[%s537 + $0x7c] sm:$0x1]
    %v5420 = vsel %vm29, %v5289, %v5419
    %5421 = vst [vmem:[%s537 + $0x7c] sm:$0x1] %v5420
    %v5422 = vld [vmem:[%s537 + $0x80] sm:$0xf]
    %v5423 = vsel %vm539, %v5296, %v5422
    %5424 = vst [vmem:[%s537 + $0x80] sm:$0xf] %v5423
    %v5425 = vld [vmem:[%s537 + $0x84] sm:$0x1]
    %v5426 = vsel %vm29, %v5297, %v5425
    %5427 = vst [vmem:[%s537 + $0x84] sm:$0x1] %v5426
    %v5428 = vld [vmem:[%s537 + $0x88] sm:$0xf]
    %v5429 = vsel %vm539, %v5304, %v5428
    %5430 = vst [vmem:[%s537 + $0x88] sm:$0xf] %v5429
    %v5431 = vld [vmem:[%s537 + $0x8c] sm:$0x1]
    %v5432 = vsel %vm29, %v5305, %v5431
    %5433 = vst [vmem:[%s537 + $0x8c] sm:$0x1] %v5432
    %v5434 = vld [vmem:[#allocation2] sm:$0xf]
    %v5435 = vld [vmem:[#allocation2 + $0x8] sm:$0xf]
    %v5436 = vld [vmem:[#allocation2 + $0x10] sm:$0xf]
    %v5437 = vld [vmem:[#allocation2 + $0x18] sm:$0xf]
    %v5438 = vld [vmem:[#allocation2 + $0x20] sm:$0xf]
    %v5439 = vld [vmem:[#allocation2 + $0x28] sm:$0xf]
    %v5440 = vld [vmem:[#allocation2 + $0x30] sm:$0xf]
    %v5441 = vld [vmem:[#allocation2 + $0x38] sm:$0xf]
    %v5442 = vld [vmem:[#allocation2 + $0x50] sm:$0xf]
    %v5443 = vld [vmem:[#allocation2 + $0x58] sm:$0xf]
    %v5444 = vld [vmem:[#allocation2 + $0x60] sm:$0xf]
    %v5445 = vld [vmem:[#allocation2 + $0x68] sm:$0xf]
    %v5446 = vld [vmem:[#allocation2 + $0x70] sm:$0xf]
    %v5447 = vld [vmem:[#allocation2 + $0x78] sm:$0xf]
    %v5448 = vld [vmem:[#allocation2 + $0x80] sm:$0xf]
    %v5449 = vld [vmem:[#allocation2 + $0x88] sm:$0xf]
    %v5450 = vld [vmem:[#allocation2 + $0x4] sm:$0x1]
    %v5451 = vld [vmem:[#allocation2 + $0xc] sm:$0x1]
    %v5452 = vld [vmem:[#allocation2 + $0x14] sm:$0x1]
    %v5453 = vld [vmem:[#allocation2 + $0x1c] sm:$0x1]
    %v5454 = vld [vmem:[#allocation2 + $0x24] sm:$0x1]
    %v5455 = vld [vmem:[#allocation2 + $0x2c] sm:$0x1]
    %v5456 = vld [vmem:[#allocation2 + $0x34] sm:$0x1]
    %v5457 = vld [vmem:[#allocation2 + $0x3c] sm:$0x1]
    %v5458 = vld [vmem:[#allocation2 + $0x54] sm:$0x1]
    %v5459 = vld [vmem:[#allocation2 + $0x5c] sm:$0x1]
    %v5460 = vld [vmem:[#allocation2 + $0x64] sm:$0x1]
    %v5461 = vld [vmem:[#allocation2 + $0x6c] sm:$0x1]
    %v5462 = vld [vmem:[#allocation2 + $0x74] sm:$0x1]
    %v5463 = vld [vmem:[#allocation2 + $0x7c] sm:$0x1]
    %v5464 = vld [vmem:[#allocation2 + $0x84] sm:$0x1]
    %v5465 = vld [vmem:[#allocation2 + $0x8c] sm:$0x1]
    %v5466 = vld [vmem:[#allocation2] sm:$0xe]
    %v5467 = vld [vmem:[#allocation2 + $0x8] sm:$0xe]
    %v5468 = vld [vmem:[#allocation2 + $0x10] sm:$0xe]
    %v5469 = vld [vmem:[#allocation2 + $0x18] sm:$0xe]
    %v5470 = vld [vmem:[#allocation2 + $0x20] sm:$0xe]
    %v5471 = vld [vmem:[#allocation2 + $0x28] sm:$0xe]
    %v5472 = vld [vmem:[#allocation2 + $0x30] sm:$0xe]
    %v5473 = vld [vmem:[#allocation2 + $0x38] sm:$0xe]
    %v5474 = vld [vmem:[#allocation2 + $0x50] sm:$0xe]
    %v5475 = vld [vmem:[#allocation2 + $0x58] sm:$0xe]
    %v5476 = vld [vmem:[#allocation2 + $0x60] sm:$0xe]
    %v5477 = vld [vmem:[#allocation2 + $0x68] sm:$0xe]
    %v5478 = vld [vmem:[#allocation2 + $0x70] sm:$0xe]
    %v5479 = vld [vmem:[#allocation2 + $0x78] sm:$0xe]
    %v5480 = vld [vmem:[#allocation2 + $0x80] sm:$0xe]
    %v5481 = vld [vmem:[#allocation2 + $0x88] sm:$0xe]
    %v5514 = vunpack.c.l.b16 %v5434
    %v5515 = vunpack.c.l.b16 %v5450
    %v5516 = vunpack.c.l.b16 %v5435
    %v5517 = vunpack.c.l.b16 %v5451
    %v5518 = vunpack.c.l.b16 %v5436
    %v5519 = vunpack.c.l.b16 %v5452
    %v5520 = vunpack.c.l.b16 %v5437
    %v5521 = vunpack.c.l.b16 %v5453
    %v5522 = vunpack.c.l.b16 %v5438
    %v5523 = vunpack.c.l.b16 %v5454
    %v5524 = vunpack.c.l.b16 %v5439
    %v5525 = vunpack.c.l.b16 %v5455
    %v5526 = vunpack.c.l.b16 %v5440
    %v5527 = vunpack.c.l.b16 %v5456
    %v5528 = vunpack.c.l.b16 %v5441
    %v5529 = vunpack.c.l.b16 %v5457
    %v5530 = vunpack.c.l.b16 %v5442
    %v5531 = vunpack.c.l.b16 %v5458
    %v5532 = vunpack.c.l.b16 %v5443
    %v5533 = vunpack.c.l.b16 %v5459
    %v5534 = vunpack.c.l.b16 %v5444
    %v5535 = vunpack.c.l.b16 %v5460
    %v5536 = vunpack.c.l.b16 %v5445
    %v5537 = vunpack.c.l.b16 %v5461
    %v5538 = vunpack.c.l.b16 %v5446
    %v5539 = vunpack.c.l.b16 %v5462
    %v5540 = vunpack.c.l.b16 %v5447
    %v5541 = vunpack.c.l.b16 %v5463
    %v5542 = vunpack.c.l.b16 %v5448
    %v5543 = vunpack.c.l.b16 %v5464
    %v5544 = vunpack.c.l.b16 %v5449
    %v5545 = vunpack.c.l.b16 %v5465
    %v5546 = vpack.c.b16 %v5515, %v5514
    %v5547 = vpack.c.b16 %v5517, %v5516
    %v5548 = vpack.c.b16 %v5519, %v5518
    %v5549 = vpack.c.b16 %v5521, %v5520
    %v5550 = vpack.c.b16 %v5523, %v5522
    %v5551 = vpack.c.b16 %v5525, %v5524
    %v5552 = vpack.c.b16 %v5527, %v5526
    %v5553 = vpack.c.b16 %v5529, %v5528
    %v5554 = vpack.c.b16 %v5531, %v5530
    %v5555 = vpack.c.b16 %v5533, %v5532
    %v5556 = vpack.c.b16 %v5535, %v5534
    %v5557 = vpack.c.b16 %v5537, %v5536
    %v5558 = vpack.c.b16 %v5539, %v5538
    %v5559 = vpack.c.b16 %v5541, %v5540
    %v5560 = vpack.c.b16 %v5543, %v5542
    %v5561 = vpack.c.b16 %v5545, %v5544
    %v5563 = vshrl.u32 %v5546, 16
    %v5565 = vshll.u32 %v5546, 16
    %v5567 = vrot.slane %v5565, 1
    %v5568 = vor.u32 %v5563, %v5567
    %v5570 = vshrl.u32 %v5547, 16
    %v5572 = vshll.u32 %v5547, 16
    %v5574 = vrot.slane %v5572, 1
    %v5575 = vor.u32 %v5570, %v5574
    %v5577 = vshrl.u32 %v5548, 16
    %v5579 = vshll.u32 %v5548, 16
    %v5581 = vrot.slane %v5579, 1
    %v5582 = vor.u32 %v5577, %v5581
    %v5584 = vshrl.u32 %v5549, 16
    %v5586 = vshll.u32 %v5549, 16
    %v5588 = vrot.slane %v5586, 1
    %v5589 = vor.u32 %v5584, %v5588
    %v5591 = vshrl.u32 %v5550, 16
    %v5593 = vshll.u32 %v5550, 16
    %v5595 = vrot.slane %v5593, 1
    %v5596 = vor.u32 %v5591, %v5595
    %v5598 = vshrl.u32 %v5551, 16
    %v5600 = vshll.u32 %v5551, 16
    %v5602 = vrot.slane %v5600, 1
    %v5603 = vor.u32 %v5598, %v5602
    %v5605 = vshrl.u32 %v5552, 16
    %v5607 = vshll.u32 %v5552, 16
    %v5609 = vrot.slane %v5607, 1
    %v5610 = vor.u32 %v5605, %v5609
    %v5612 = vshrl.u32 %v5553, 16
    %v5614 = vshll.u32 %v5553, 16
    %v5616 = vrot.slane %v5614, 1
    %v5617 = vor.u32 %v5612, %v5616
    %v5619 = vshrl.u32 %v5554, 16
    %v5621 = vshll.u32 %v5554, 16
    %v5623 = vrot.slane %v5621, 1
    %v5624 = vor.u32 %v5619, %v5623
    %v5626 = vshrl.u32 %v5555, 16
    %v5628 = vshll.u32 %v5555, 16
    %v5630 = vrot.slane %v5628, 1
    %v5631 = vor.u32 %v5626, %v5630
    %v5633 = vshrl.u32 %v5556, 16
    %v5635 = vshll.u32 %v5556, 16
    %v5637 = vrot.slane %v5635, 1
    %v5638 = vor.u32 %v5633, %v5637
    %v5640 = vshrl.u32 %v5557, 16
    %v5642 = vshll.u32 %v5557, 16
    %v5644 = vrot.slane %v5642, 1
    %v5645 = vor.u32 %v5640, %v5644
    %v5647 = vshrl.u32 %v5558, 16
    %v5649 = vshll.u32 %v5558, 16
    %v5651 = vrot.slane %v5649, 1
    %v5652 = vor.u32 %v5647, %v5651
    %v5654 = vshrl.u32 %v5559, 16
    %v5656 = vshll.u32 %v5559, 16
    %v5658 = vrot.slane %v5656, 1
    %v5659 = vor.u32 %v5654, %v5658
    %v5661 = vshrl.u32 %v5560, 16
    %v5663 = vshll.u32 %v5560, 16
    %v5665 = vrot.slane %v5663, 1
    %v5666 = vor.u32 %v5661, %v5665
    %v5668 = vshrl.u32 %v5561, 16
    %v5670 = vshll.u32 %v5561, 16
    %v5672 = vrot.slane %v5670, 1
    %v5673 = vor.u32 %v5668, %v5672
    %5674 = vrot.lane.b32.xlu0 %v5568, 64
    %v5675 = vpop.permute.xlu0 %5674
    %5676 = vrot.lane.b32.xlu0 %v5575, 64
    %v5677 = vpop.permute.xlu0 %5676
    %5678 = vrot.lane.b32.xlu0 %v5582, 64
    %v5679 = vpop.permute.xlu0 %5678
    %5680 = vrot.lane.b32.xlu0 %v5589, 64
    %v5681 = vpop.permute.xlu0 %5680
    %5682 = vrot.lane.b32.xlu0 %v5596, 64
    %v5683 = vpop.permute.xlu0 %5682
    %5684 = vrot.lane.b32.xlu0 %v5603, 64
    %v5685 = vpop.permute.xlu0 %5684
    %5686 = vrot.lane.b32.xlu0 %v5610, 64
    %v5687 = vpop.permute.xlu0 %5686
    %5688 = vrot.lane.b32.xlu0 %v5617, 64
    %v5689 = vpop.permute.xlu0 %5688
    %5690 = vrot.lane.b32.xlu0 %v5624, 64
    %v5691 = vpop.permute.xlu0 %5690
    %5692 = vrot.lane.b32.xlu0 %v5631, 64
    %v5693 = vpop.permute.xlu0 %5692
    %5694 = vrot.lane.b32.xlu0 %v5638, 64
    %v5695 = vpop.permute.xlu0 %5694
    %5696 = vrot.lane.b32.xlu0 %v5645, 64
    %v5697 = vpop.permute.xlu0 %5696
    %5698 = vrot.lane.b32.xlu0 %v5652, 64
    %v5699 = vpop.permute.xlu0 %5698
    %5700 = vrot.lane.b32.xlu0 %v5659, 64
    %v5701 = vpop.permute.xlu0 %5700
    %5702 = vrot.lane.b32.xlu0 %v5666, 64
    %v5703 = vpop.permute.xlu0 %5702
    %5704 = vrot.lane.b32.xlu0 %v5673, 64
    %v5705 = vpop.permute.xlu0 %5704
    %v5722 = vunpack.c.l.b16 %v5466
    %v5723 = vunpack.c.l.b16 %v5467
    %v5724 = vunpack.c.l.b16 %v5468
    %v5725 = vunpack.c.l.b16 %v5469
    %v5726 = vunpack.c.l.b16 %v5470
    %v5727 = vunpack.c.l.b16 %v5471
    %v5728 = vunpack.c.l.b16 %v5472
    %v5729 = vunpack.c.l.b16 %v5473
    %v5730 = vunpack.c.l.b16 %v5474
    %v5731 = vunpack.c.l.b16 %v5475
    %v5732 = vunpack.c.l.b16 %v5476
    %v5733 = vunpack.c.l.b16 %v5477
    %v5734 = vunpack.c.l.b16 %v5478
    %v5735 = vunpack.c.l.b16 %v5479
    %v5736 = vunpack.c.l.b16 %v5480
    %v5737 = vunpack.c.l.b16 %v5481
    %v5738 = vpack.c.b16 %v5515, %v5722
    %v5739 = vpack.c.b16 %v5517, %v5723
    %v5740 = vpack.c.b16 %v5519, %v5724
    %v5741 = vpack.c.b16 %v5521, %v5725
    %v5742 = vpack.c.b16 %v5523, %v5726
    %v5743 = vpack.c.b16 %v5525, %v5727
    %v5744 = vpack.c.b16 %v5527, %v5728
    %v5745 = vpack.c.b16 %v5529, %v5729
    %v5746 = vpack.c.b16 %v5531, %v5730
    %v5747 = vpack.c.b16 %v5533, %v5731
    %v5748 = vpack.c.b16 %v5535, %v5732
    %v5749 = vpack.c.b16 %v5537, %v5733
    %v5750 = vpack.c.b16 %v5539, %v5734
    %v5751 = vpack.c.b16 %v5541, %v5735
    %v5752 = vpack.c.b16 %v5543, %v5736
    %v5753 = vpack.c.b16 %v5545, %v5737
    %v5754 = vrot.slane %v5738, 1
    %v5755 = vrot.slane %v5739, 1
    %v5756 = vrot.slane %v5740, 1
    %v5757 = vrot.slane %v5741, 1
    %v5758 = vrot.slane %v5742, 1
    %v5759 = vrot.slane %v5743, 1
    %v5760 = vrot.slane %v5744, 1
    %v5761 = vrot.slane %v5745, 1
    %v5762 = vrot.slane %v5746, 1
    %v5763 = vrot.slane %v5747, 1
    %v5764 = vrot.slane %v5748, 1
    %v5765 = vrot.slane %v5749, 1
    %v5766 = vrot.slane %v5750, 1
    %v5767 = vrot.slane %v5751, 1
    %v5768 = vrot.slane %v5752, 1
    %v5769 = vrot.slane %v5753, 1
    %v5772 = vsel %vm972, %v5434, %v5675
    %v5775 = vsel %vm972, %v5435, %v5677
    %v5778 = vsel %vm972, %v5436, %v5679
    %v5781 = vsel %vm972, %v5437, %v5681
    %v5784 = vsel %vm972, %v5438, %v5683
    %v5787 = vsel %vm972, %v5439, %v5685
    %v5790 = vsel %vm972, %v5440, %v5687
    %v5793 = vsel %vm972, %v5441, %v5689
    %v5796 = vsel %vm972, %v5442, %v5691
    %v5799 = vsel %vm972, %v5443, %v5693
    %v5802 = vsel %vm972, %v5444, %v5695
    %v5805 = vsel %vm972, %v5445, %v5697
    %v5808 = vsel %vm972, %v5446, %v5699
    %v5811 = vsel %vm972, %v5447, %v5701
    %v5814 = vsel %vm972, %v5448, %v5703
    %v5817 = vsel %vm972, %v5449, %v5705
    %v5834 = vunpack.c.l.b16 %v5772
    %v5835 = vunpack.c.l.b16 %v5754
    %v5836 = vunpack.c.l.b16 %v5775
    %v5837 = vunpack.c.l.b16 %v5755
    %v5838 = vunpack.c.l.b16 %v5778
    %v5839 = vunpack.c.l.b16 %v5756
    %v5840 = vunpack.c.l.b16 %v5781
    %v5841 = vunpack.c.l.b16 %v5757
    %v5842 = vunpack.c.l.b16 %v5784
    %v5843 = vunpack.c.l.b16 %v5758
    %v5844 = vunpack.c.l.b16 %v5787
    %v5845 = vunpack.c.l.b16 %v5759
    %v5846 = vunpack.c.l.b16 %v5790
    %v5847 = vunpack.c.l.b16 %v5760
    %v5848 = vunpack.c.l.b16 %v5793
    %v5849 = vunpack.c.l.b16 %v5761
    %v5850 = vunpack.c.l.b16 %v5796
    %v5851 = vunpack.c.l.b16 %v5762
    %v5852 = vunpack.c.l.b16 %v5799
    %v5853 = vunpack.c.l.b16 %v5763
    %v5854 = vunpack.c.l.b16 %v5802
    %v5855 = vunpack.c.l.b16 %v5764
    %v5856 = vunpack.c.l.b16 %v5805
    %v5857 = vunpack.c.l.b16 %v5765
    %v5858 = vunpack.c.l.b16 %v5808
    %v5859 = vunpack.c.l.b16 %v5766
    %v5860 = vunpack.c.l.b16 %v5811
    %v5861 = vunpack.c.l.b16 %v5767
    %v5862 = vunpack.c.l.b16 %v5814
    %v5863 = vunpack.c.l.b16 %v5768
    %v5864 = vunpack.c.l.b16 %v5817
    %v5865 = vunpack.c.l.b16 %v5769
    %s5866 = scalar_lea.vmem %s1, 576
    %v5867 = vld [vmem:[%s5866] sm:$0xf]
    %v5868 = vld [vmem:[%s5866 + $0x4] sm:$0xf]
    %v5869 = vld [vmem:[%s5866 + $0x8] sm:$0xf]
    %v5870 = vld [vmem:[%s5866 + $0xc] sm:$0xf]
    %v5871 = vld [vmem:[%s5866 + $0x10] sm:$0xf]
    %v5872 = vld [vmem:[%s5866 + $0x14] sm:$0xf]
    %v5873 = vld [vmem:[%s5866 + $0x18] sm:$0xf]
    %v5874 = vld [vmem:[%s5866 + $0x1c] sm:$0xf]
    %v5875 = vld [vmem:[%s5866 + $0x20] sm:$0xf]
    %v5876 = vld [vmem:[%s5866 + $0x24] sm:$0xf]
    %v5877 = vld [vmem:[%s5866 + $0x28] sm:$0xf]
    %v5878 = vld [vmem:[%s5866 + $0x2c] sm:$0xf]
    %v5879 = vld [vmem:[%s5866 + $0x30] sm:$0xf]
    %v5880 = vld [vmem:[%s5866 + $0x34] sm:$0xf]
    %v5881 = vld [vmem:[%s5866 + $0x38] sm:$0xf]
    %v5882 = vld [vmem:[%s5866 + $0x3c] sm:$0xf]
    %v5883 = vld [vmem:[%s5866 + $0x40] sm:$0xf]
    %v5884 = vld [vmem:[%s5866 + $0x44] sm:$0xf]
    %v5885 = vld [vmem:[%s5866 + $0x48] sm:$0xf]
    %v5886 = vld [vmem:[%s5866 + $0x4c] sm:$0xf]
    %v5887 = vld [vmem:[%s5866 + $0x50] sm:$0xf]
    %v5888 = vld [vmem:[%s5866 + $0x54] sm:$0xf]
    %v5889 = vld [vmem:[%s5866 + $0x58] sm:$0xf]
    %v5890 = vld [vmem:[%s5866 + $0x5c] sm:$0xf]
    %v5891 = vld [vmem:[%s537] sm:$0xf]
    %v5892 = vld [vmem:[%s537 + $0x8] sm:$0xf]
    %v5893 = vld [vmem:[%s537 + $0x10] sm:$0xf]
    %v5894 = vld [vmem:[%s537 + $0x18] sm:$0xf]
    %v5895 = vld [vmem:[%s537 + $0x20] sm:$0xf]
    %v5896 = vld [vmem:[%s537 + $0x28] sm:$0xf]
    %v5897 = vld [vmem:[%s537 + $0x30] sm:$0xf]
    %v5898 = vld [vmem:[%s537 + $0x38] sm:$0xf]
    %v5899 = vld [vmem:[%s537 + $0x50] sm:$0xf]
    %v5900 = vld [vmem:[%s537 + $0x58] sm:$0xf]
    %v5901 = vld [vmem:[%s537 + $0x60] sm:$0xf]
    %v5902 = vld [vmem:[%s537 + $0x68] sm:$0xf]
    %v5903 = vld [vmem:[%s537 + $0x70] sm:$0xf]
    %v5904 = vld [vmem:[%s537 + $0x78] sm:$0xf]
    %v5905 = vld [vmem:[%s537 + $0x80] sm:$0xf]
    %v5906 = vld [vmem:[%s537 + $0x88] sm:$0xf]
    %v5907 = vld [vmem:[%s537 + $0x4] sm:$0x1]
    %v5908 = vld [vmem:[%s537 + $0xc] sm:$0x1]
    %v5909 = vld [vmem:[%s537 + $0x14] sm:$0x1]
    %v5910 = vld [vmem:[%s537 + $0x1c] sm:$0x1]
    %v5911 = vld [vmem:[%s537 + $0x24] sm:$0x1]
    %v5912 = vld [vmem:[%s537 + $0x2c] sm:$0x1]
    %v5913 = vld [vmem:[%s537 + $0x34] sm:$0x1]
    %v5914 = vld [vmem:[%s537 + $0x3c] sm:$0x1]
    %v5915 = vld [vmem:[%s537 + $0x54] sm:$0x1]
    %v5916 = vld [vmem:[%s537 + $0x5c] sm:$0x1]
    %v5917 = vld [vmem:[%s537 + $0x64] sm:$0x1]
    %v5918 = vld [vmem:[%s537 + $0x6c] sm:$0x1]
    %v5919 = vld [vmem:[%s537 + $0x74] sm:$0x1]
    %v5920 = vld [vmem:[%s537 + $0x7c] sm:$0x1]
    %v5921 = vld [vmem:[%s537 + $0x84] sm:$0x1]
    %v5922 = vld [vmem:[%s537 + $0x8c] sm:$0x1]
    %v5923 = vld [vmem:[%s537] sm:$0xe]
    %v5924 = vld [vmem:[%s537 + $0x8] sm:$0xe]
    %v5925 = vld [vmem:[%s537 + $0x10] sm:$0xe]
    %v5926 = vld [vmem:[%s537 + $0x18] sm:$0xe]
    %v5927 = vld [vmem:[%s537 + $0x20] sm:$0xe]
    %v5928 = vld [vmem:[%s537 + $0x28] sm:$0xe]
    %v5929 = vld [vmem:[%s537 + $0x30] sm:$0xe]
    %v5930 = vld [vmem:[%s537 + $0x38] sm:$0xe]
    %v5931 = vld [vmem:[%s537 + $0x50] sm:$0xe]
    %v5932 = vld [vmem:[%s537 + $0x58] sm:$0xe]
    %v5933 = vld [vmem:[%s537 + $0x60] sm:$0xe]
    %v5934 = vld [vmem:[%s537 + $0x68] sm:$0xe]
    %v5935 = vld [vmem:[%s537 + $0x70] sm:$0xe]
    %v5936 = vld [vmem:[%s537 + $0x78] sm:$0xe]
    %v5937 = vld [vmem:[%s537 + $0x80] sm:$0xe]
    %v5938 = vld [vmem:[%s537 + $0x88] sm:$0xe]
    %v5971 = vunpack.c.l.b16 %v5891
    %v5972 = vunpack.c.l.b16 %v5907
    %v5973 = vunpack.c.l.b16 %v5892
    %v5974 = vunpack.c.l.b16 %v5908
    %v5975 = vunpack.c.l.b16 %v5893
    %v5976 = vunpack.c.l.b16 %v5909
    %v5977 = vunpack.c.l.b16 %v5894
    %v5978 = vunpack.c.l.b16 %v5910
    %v5979 = vunpack.c.l.b16 %v5895
    %v5980 = vunpack.c.l.b16 %v5911
    %v5981 = vunpack.c.l.b16 %v5896
    %v5982 = vunpack.c.l.b16 %v5912
    %v5983 = vunpack.c.l.b16 %v5897
    %v5984 = vunpack.c.l.b16 %v5913
    %v5985 = vunpack.c.l.b16 %v5898
    %v5986 = vunpack.c.l.b16 %v5914
    %v5987 = vunpack.c.l.b16 %v5899
    %v5988 = vunpack.c.l.b16 %v5915
    %v5989 = vunpack.c.l.b16 %v5900
    %v5990 = vunpack.c.l.b16 %v5916
    %v5991 = vunpack.c.l.b16 %v5901
    %v5992 = vunpack.c.l.b16 %v5917
    %v5993 = vunpack.c.l.b16 %v5902
    %v5994 = vunpack.c.l.b16 %v5918
    %v5995 = vunpack.c.l.b16 %v5903
    %v5996 = vunpack.c.l.b16 %v5919
    %v5997 = vunpack.c.l.b16 %v5904
    %v5998 = vunpack.c.l.b16 %v5920
    %v5999 = vunpack.c.l.b16 %v5905
    %v6000 = vunpack.c.l.b16 %v5921
    %v6001 = vunpack.c.l.b16 %v5906
    %v6002 = vunpack.c.l.b16 %v5922
    %v6003 = vpack.c.b16 %v5972, %v5971
    %v6004 = vpack.c.b16 %v5974, %v5973
    %v6005 = vpack.c.b16 %v5976, %v5975
    %v6006 = vpack.c.b16 %v5978, %v5977
    %v6007 = vpack.c.b16 %v5980, %v5979
    %v6008 = vpack.c.b16 %v5982, %v5981
    %v6009 = vpack.c.b16 %v5984, %v5983
    %v6010 = vpack.c.b16 %v5986, %v5985
    %v6011 = vpack.c.b16 %v5988, %v5987
    %v6012 = vpack.c.b16 %v5990, %v5989
    %v6013 = vpack.c.b16 %v5992, %v5991
    %v6014 = vpack.c.b16 %v5994, %v5993
    %v6015 = vpack.c.b16 %v5996, %v5995
    %v6016 = vpack.c.b16 %v5998, %v5997
    %v6017 = vpack.c.b16 %v6000, %v5999
    %v6018 = vpack.c.b16 %v6002, %v6001
    %v6020 = vshrl.u32 %v6003, 16
    %v6022 = vshll.u32 %v6003, 16
    %v6024 = vrot.slane %v6022, 1
    %v6025 = vor.u32 %v6020, %v6024
    %v6027 = vshrl.u32 %v6004, 16
    %v6029 = vshll.u32 %v6004, 16
    %v6031 = vrot.slane %v6029, 1
    %v6032 = vor.u32 %v6027, %v6031
    %v6034 = vshrl.u32 %v6005, 16
    %v6036 = vshll.u32 %v6005, 16
    %v6038 = vrot.slane %v6036, 1
    %v6039 = vor.u32 %v6034, %v6038
    %v6041 = vshrl.u32 %v6006, 16
    %v6043 = vshll.u32 %v6006, 16
    %v6045 = vrot.slane %v6043, 1
    %v6046 = vor.u32 %v6041, %v6045
    %v6048 = vshrl.u32 %v6007, 16
    %v6050 = vshll.u32 %v6007, 16
    %v6052 = vrot.slane %v6050, 1
    %v6053 = vor.u32 %v6048, %v6052
    %v6055 = vshrl.u32 %v6008, 16
    %v6057 = vshll.u32 %v6008, 16
    %v6059 = vrot.slane %v6057, 1
    %v6060 = vor.u32 %v6055, %v6059
    %v6062 = vshrl.u32 %v6009, 16
    %v6064 = vshll.u32 %v6009, 16
    %v6066 = vrot.slane %v6064, 1
    %v6067 = vor.u32 %v6062, %v6066
    %v6069 = vshrl.u32 %v6010, 16
    %v6071 = vshll.u32 %v6010, 16
    %v6073 = vrot.slane %v6071, 1
    %v6074 = vor.u32 %v6069, %v6073
    %v6076 = vshrl.u32 %v6011, 16
    %v6078 = vshll.u32 %v6011, 16
    %v6080 = vrot.slane %v6078, 1
    %v6081 = vor.u32 %v6076, %v6080
    %v6083 = vshrl.u32 %v6012, 16
    %v6085 = vshll.u32 %v6012, 16
    %v6087 = vrot.slane %v6085, 1
    %v6088 = vor.u32 %v6083, %v6087
    %v6090 = vshrl.u32 %v6013, 16
    %v6092 = vshll.u32 %v6013, 16
    %v6094 = vrot.slane %v6092, 1
    %v6095 = vor.u32 %v6090, %v6094
    %v6097 = vshrl.u32 %v6014, 16
    %v6099 = vshll.u32 %v6014, 16
    %v6101 = vrot.slane %v6099, 1
    %v6102 = vor.u32 %v6097, %v6101
    %v6104 = vshrl.u32 %v6015, 16
    %v6106 = vshll.u32 %v6015, 16
    %v6108 = vrot.slane %v6106, 1
    %v6109 = vor.u32 %v6104, %v6108
    %v6111 = vshrl.u32 %v6016, 16
    %v6113 = vshll.u32 %v6016, 16
    %v6115 = vrot.slane %v6113, 1
    %v6116 = vor.u32 %v6111, %v6115
    %v6118 = vshrl.u32 %v6017, 16
    %v6120 = vshll.u32 %v6017, 16
    %v6122 = vrot.slane %v6120, 1
    %v6123 = vor.u32 %v6118, %v6122
    %v6125 = vshrl.u32 %v6018, 16
    %v6127 = vshll.u32 %v6018, 16
    %v6129 = vrot.slane %v6127, 1
    %v6130 = vor.u32 %v6125, %v6129
    %6131 = vrot.lane.b32.xlu0 %v6025, 64
    %v6132 = vpop.permute.xlu0 %6131
    %6133 = vrot.lane.b32.xlu0 %v6032, 64
    %v6134 = vpop.permute.xlu0 %6133
    %6135 = vrot.lane.b32.xlu0 %v6039, 64
    %v6136 = vpop.permute.xlu0 %6135
    %6137 = vrot.lane.b32.xlu0 %v6046, 64
    %v6138 = vpop.permute.xlu0 %6137
    %6139 = vrot.lane.b32.xlu0 %v6053, 64
    %v6140 = vpop.permute.xlu0 %6139
    %6141 = vrot.lane.b32.xlu0 %v6060, 64
    %v6142 = vpop.permute.xlu0 %6141
    %6143 = vrot.lane.b32.xlu0 %v6067, 64
    %v6144 = vpop.permute.xlu0 %6143
    %6145 = vrot.lane.b32.xlu0 %v6074, 64
    %v6146 = vpop.permute.xlu0 %6145
    %6147 = vrot.lane.b32.xlu0 %v6081, 64
    %v6148 = vpop.permute.xlu0 %6147
    %6149 = vrot.lane.b32.xlu0 %v6088, 64
    %v6150 = vpop.permute.xlu0 %6149
    %6151 = vrot.lane.b32.xlu0 %v6095, 64
    %v6152 = vpop.permute.xlu0 %6151
    %6153 = vrot.lane.b32.xlu0 %v6102, 64
    %v6154 = vpop.permute.xlu0 %6153
    %6155 = vrot.lane.b32.xlu0 %v6109, 64
    %v6156 = vpop.permute.xlu0 %6155
    %6157 = vrot.lane.b32.xlu0 %v6116, 64
    %v6158 = vpop.permute.xlu0 %6157
    %6159 = vrot.lane.b32.xlu0 %v6123, 64
    %v6160 = vpop.permute.xlu0 %6159
    %6161 = vrot.lane.b32.xlu0 %v6130, 64
    %v6162 = vpop.permute.xlu0 %6161
    %v6179 = vunpack.c.l.b16 %v5923
    %v6180 = vunpack.c.l.b16 %v5924
    %v6181 = vunpack.c.l.b16 %v5925
    %v6182 = vunpack.c.l.b16 %v5926
    %v6183 = vunpack.c.l.b16 %v5927
    %v6184 = vunpack.c.l.b16 %v5928
    %v6185 = vunpack.c.l.b16 %v5929
    %v6186 = vunpack.c.l.b16 %v5930
    %v6187 = vunpack.c.l.b16 %v5931
    %v6188 = vunpack.c.l.b16 %v5932
    %v6189 = vunpack.c.l.b16 %v5933
    %v6190 = vunpack.c.l.b16 %v5934
    %v6191 = vunpack.c.l.b16 %v5935
    %v6192 = vunpack.c.l.b16 %v5936
    %v6193 = vunpack.c.l.b16 %v5937
    %v6194 = vunpack.c.l.b16 %v5938
    %v6195 = vpack.c.b16 %v5972, %v6179
    %v6196 = vpack.c.b16 %v5974, %v6180
    %v6197 = vpack.c.b16 %v5976, %v6181
    %v6198 = vpack.c.b16 %v5978, %v6182
    %v6199 = vpack.c.b16 %v5980, %v6183
    %v6200 = vpack.c.b16 %v5982, %v6184
    %v6201 = vpack.c.b16 %v5984, %v6185
    %v6202 = vpack.c.b16 %v5986, %v6186
    %v6203 = vpack.c.b16 %v5988, %v6187
    %v6204 = vpack.c.b16 %v5990, %v6188
    %v6205 = vpack.c.b16 %v5992, %v6189
    %v6206 = vpack.c.b16 %v5994, %v6190
    %v6207 = vpack.c.b16 %v5996, %v6191
    %v6208 = vpack.c.b16 %v5998, %v6192
    %v6209 = vpack.c.b16 %v6000, %v6193
    %v6210 = vpack.c.b16 %v6002, %v6194
    %v6211 = vrot.slane %v6195, 1
    %v6212 = vrot.slane %v6196, 1
    %v6213 = vrot.slane %v6197, 1
    %v6214 = vrot.slane %v6198, 1
    %v6215 = vrot.slane %v6199, 1
    %v6216 = vrot.slane %v6200, 1
    %v6217 = vrot.slane %v6201, 1
    %v6218 = vrot.slane %v6202, 1
    %v6219 = vrot.slane %v6203, 1
    %v6220 = vrot.slane %v6204, 1
    %v6221 = vrot.slane %v6205, 1
    %v6222 = vrot.slane %v6206, 1
    %v6223 = vrot.slane %v6207, 1
    %v6224 = vrot.slane %v6208, 1
    %v6225 = vrot.slane %v6209, 1
    %v6226 = vrot.slane %v6210, 1
    %v6229 = vsel %vm972, %v5891, %v6132
    %v6232 = vsel %vm972, %v5892, %v6134
    %v6235 = vsel %vm972, %v5893, %v6136
    %v6238 = vsel %vm972, %v5894, %v6138
    %v6241 = vsel %vm972, %v5895, %v6140
    %v6244 = vsel %vm972, %v5896, %v6142
    %v6247 = vsel %vm972, %v5897, %v6144
    %v6250 = vsel %vm972, %v5898, %v6146
    %v6253 = vsel %vm972, %v5899, %v6148
    %v6256 = vsel %vm972, %v5900, %v6150
    %v6259 = vsel %vm972, %v5901, %v6152
    %v6262 = vsel %vm972, %v5902, %v6154
    %v6265 = vsel %vm972, %v5903, %v6156
    %v6268 = vsel %vm972, %v5904, %v6158
    %v6271 = vsel %vm972, %v5905, %v6160
    %v6274 = vsel %vm972, %v5906, %v6162
    %v6291 = vunpack.c.l.b16 %v6229
    %v6292 = vunpack.c.l.b16 %v6211
    %v6293 = vunpack.c.l.b16 %v6232
    %v6294 = vunpack.c.l.b16 %v6212
    %v6295 = vunpack.c.l.b16 %v6235
    %v6296 = vunpack.c.l.b16 %v6213
    %v6297 = vunpack.c.l.b16 %v6238
    %v6298 = vunpack.c.l.b16 %v6214
    %v6299 = vunpack.c.l.b16 %v6241
    %v6300 = vunpack.c.l.b16 %v6215
    %v6301 = vunpack.c.l.b16 %v6244
    %v6302 = vunpack.c.l.b16 %v6216
    %v6303 = vunpack.c.l.b16 %v6247
    %v6304 = vunpack.c.l.b16 %v6217
    %v6305 = vunpack.c.l.b16 %v6250
    %v6306 = vunpack.c.l.b16 %v6218
    %v6307 = vunpack.c.l.b16 %v6253
    %v6308 = vunpack.c.l.b16 %v6219
    %v6309 = vunpack.c.l.b16 %v6256
    %v6310 = vunpack.c.l.b16 %v6220
    %v6311 = vunpack.c.l.b16 %v6259
    %v6312 = vunpack.c.l.b16 %v6221
    %v6313 = vunpack.c.l.b16 %v6262
    %v6314 = vunpack.c.l.b16 %v6222
    %v6315 = vunpack.c.l.b16 %v6265
    %v6316 = vunpack.c.l.b16 %v6223
    %v6317 = vunpack.c.l.b16 %v6268
    %v6318 = vunpack.c.l.b16 %v6224
    %v6319 = vunpack.c.l.b16 %v6271
    %v6320 = vunpack.c.l.b16 %v6225
    %v6321 = vunpack.c.l.b16 %v6274
    %v6322 = vunpack.c.l.b16 %v6226
    %s6323 = scalar_lea.vmem %s1, 672
    %v6324 = vld [vmem:[%s6323] sm:$0xf]
    %v6325 = vld [vmem:[%s6323 + $0x4] sm:$0xf]
    %v6326 = vld [vmem:[%s6323 + $0x8] sm:$0xf]
    %v6327 = vld [vmem:[%s6323 + $0xc] sm:$0xf]
    %v6328 = vld [vmem:[%s6323 + $0x10] sm:$0xf]
    %v6329 = vld [vmem:[%s6323 + $0x14] sm:$0xf]
    %v6330 = vld [vmem:[%s6323 + $0x18] sm:$0xf]
    %v6331 = vld [vmem:[%s6323 + $0x1c] sm:$0xf]
    %v6332 = vld [vmem:[%s6323 + $0x20] sm:$0xf]
    %v6333 = vld [vmem:[%s6323 + $0x24] sm:$0xf]
    %v6334 = vld [vmem:[%s6323 + $0x28] sm:$0xf]
    %v6335 = vld [vmem:[%s6323 + $0x2c] sm:$0xf]
    %v6336 = vld [vmem:[%s6323 + $0x30] sm:$0xf]
    %v6337 = vld [vmem:[%s6323 + $0x34] sm:$0xf]
    %v6338 = vld [vmem:[%s6323 + $0x38] sm:$0xf]
    %v6339 = vld [vmem:[%s6323 + $0x3c] sm:$0xf]
    %v6340 = vld [vmem:[%s6323 + $0x40] sm:$0xf]
    %v6341 = vld [vmem:[%s6323 + $0x44] sm:$0xf]
    %v6342 = vld [vmem:[%s6323 + $0x48] sm:$0xf]
    %v6343 = vld [vmem:[%s6323 + $0x4c] sm:$0xf]
    %v6344 = vld [vmem:[%s6323 + $0x50] sm:$0xf]
    %v6345 = vld [vmem:[%s6323 + $0x54] sm:$0xf]
    %v6346 = vld [vmem:[%s6323 + $0x58] sm:$0xf]
    %v6347 = vld [vmem:[%s6323 + $0x5c] sm:$0xf]
    %v6348 = vpack.c.b16 %v6293, %v6291
    %v6349 = vpack.c.b16 %v6294, %v6292
    %v6350 = vpack.c.b16 %v6297, %v6295
    %v6351 = vpack.c.b16 %v6298, %v6296
    %v6352 = vpack.c.b16 %v6301, %v6299
    %v6353 = vpack.c.b16 %v6302, %v6300
    %v6354 = vpack.c.b16 %v6305, %v6303
    %v6355 = vpack.c.b16 %v6306, %v6304
    %v6356 = vpack.c.b16 %v6309, %v6307
    %v6357 = vpack.c.b16 %v6310, %v6308
    %v6358 = vpack.c.b16 %v6313, %v6311
    %v6359 = vpack.c.b16 %v6314, %v6312
    %v6360 = vpack.c.b16 %v6317, %v6315
    %v6361 = vpack.c.b16 %v6318, %v6316
    %v6362 = vpack.c.b16 %v6321, %v6319
    %v6363 = vpack.c.b16 %v6322, %v6320
    %v6396 = vunpack.c.l.b16 %v6324
    %v6397 = vunpack.c.l.b16 %v6325
    %v6398 = vunpack.c.l.b16 %v6326
    %v6399 = vunpack.c.l.b16 %v6327
    %v6400 = vunpack.c.l.b16 %v6328
    %v6401 = vunpack.c.l.b16 %v6329
    %v6402 = vunpack.c.l.b16 %v6330
    %v6403 = vunpack.c.l.b16 %v6331
    %v6404 = vunpack.c.l.b16 %v6332
    %v6405 = vunpack.c.l.b16 %v6333
    %v6406 = vunpack.c.l.b16 %v6334
    %v6407 = vunpack.c.l.b16 %v6335
    %v6408 = vunpack.c.l.b16 %v6336
    %v6409 = vunpack.c.l.b16 %v6337
    %v6410 = vunpack.c.l.b16 %v6338
    %v6411 = vunpack.c.l.b16 %v6339
    %v6412 = vunpack.c.l.b16 %v6340
    %v6413 = vunpack.c.l.b16 %v6341
    %v6414 = vunpack.c.l.b16 %v6342
    %v6415 = vunpack.c.l.b16 %v6343
    %v6416 = vunpack.c.l.b16 %v6344
    %v6417 = vunpack.c.l.b16 %v6345
    %v6418 = vunpack.c.l.b16 %v6346
    %v6419 = vunpack.c.l.b16 %v6347
    %v6420 = vpack.c.b16 %v6397, %v6396
    %v6421 = vpack.c.b16 %v6399, %v6398
    %v6422 = vpack.c.b16 %v6401, %v6400
    %v6423 = vpack.c.b16 %v6403, %v6402
    %v6424 = vpack.c.b16 %v6405, %v6404
    %v6425 = vpack.c.b16 %v6407, %v6406
    %v6426 = vpack.c.b16 %v6409, %v6408
    %v6427 = vpack.c.b16 %v6411, %v6410
    %v6428 = vpack.c.b16 %v6413, %v6412
    %v6429 = vpack.c.b16 %v6415, %v6414
    %v6430 = vpack.c.b16 %v6417, %v6416
    %v6431 = vpack.c.b16 %v6419, %v6418
    %v6445 = vsel %vm972, %v6349, 0
    %v6448 = vsel %vm972, %v6351, 0
    %v6451 = vsel %vm972, %v6353, 0
    %v6454 = vsel %vm972, %v6355, 0
    %v6457 = vsel %vm972, %v6357, 0
    %v6460 = vsel %vm972, %v6359, 0
    %v6463 = vsel %vm972, %v6361, 0
    %v6466 = vsel %vm972, %v6363, 0
    %6468 = vmatprep.subr.bf16.mxu0 0
    %6469 = vmatpush1.bf16.msra.mxu0 %v6420
    %6470 = vmatprep.subr.bf16.mxu0 0
    %6471 = vmatpush1.bf16.msra.mxu0 %v6421
    %6472 = vmatprep.subr.bf16.mxu0 0
    %6473 = vmatpush1.bf16.msra.mxu0 %v6422
    %6474 = vmatprep.subr.bf16.mxu0 0
    %6475 = vmatpush1.bf16.msra.mxu0 %v6423
    %6476 = vmatprep.subr.bf16.mxu0 0
    %6477 = vmatpush1.bf16.msra.mxu0 %v6424
    %6478 = vmatprep.subr.bf16.mxu0 0
    %6479 = vmatpush1.bf16.msra.mxu0 %v6425
    %6480 = vmatprep.subr.bf16.mxu0 0
    %6481 = vmatpush1.bf16.msra.mxu0 %v6426
    %6482 = vmatprep.subr.bf16.mxu0 0
    %6483 = vmatpush1.bf16.msra.mxu0 %v6427
    %6484 = vmatprep.subr.bf16.mxu0 0
    %6485 = vmatpush1.bf16.msra.mxu0 %v6428
    %6486 = vmatprep.subr.bf16.mxu0 0
    %6487 = vmatpush1.bf16.msra.mxu0 %v6429
    %6488 = vmatprep.subr.bf16.mxu0 0
    %6489 = vmatpush1.bf16.msra.mxu0 %v6430
    %6490 = vmatprep.subr.bf16.mxu0 0
    %6491 = vmatpush1.bf16.msra.mxu0 %v6431
    %6492 = vmatprep.subr.bf16.mxu0 0
    %6493 = vmatpush1.bf16.msra.mxu0 0
    %6494 = vmatprep.subr.bf16.mxu0 0
    %6495 = vmatpush1.bf16.msra.mxu0 0
    %6496 = vmatprep.subr.bf16.mxu0 0
    %6497 = vmatpush1.bf16.msra.mxu0 0
    %6498 = vmatprep.subr.bf16.mxu0 0
    %6499 = vmatpush1.bf16.msra.mxu0 0
    %6500 = vmatprep.mubr.bf16.mxu0 %v6445
    %6501 = vmatmul.mubr.bf16.gmra.mrb[0].mxu0 %v6348
    %v6502 = vpop.f32.mrb[0].mxu0
    %v6503 = vadd.f32 0.0, %v6502
    %v6504 = vpop.f32.mrb[0].mxu0
    %v6505 = vpop.f32.mrb[0].mxu0
    %v6506 = vadd.f32 0.0, %v6505
    %v6507 = vpop.f32.mrb[0].mxu0
    %6508 = vmatprep.mubr.bf16.mxu0 %v6448
    %6509 = vmatmul.mubr.bf16.gmra.mrb[0].mxu0 %v6350
    %v6510 = vpop.f32.mrb[0].mxu0
    %v6511 = vadd.f32 0.0, %v6510
    %v6512 = vpop.f32.mrb[0].mxu0
    %v6513 = vpop.f32.mrb[0].mxu0
    %v6514 = vadd.f32 0.0, %v6513
    %v6515 = vpop.f32.mrb[0].mxu0
    %6516 = vmatprep.mubr.bf16.mxu0 %v6451
    %6517 = vmatmul.mubr.bf16.gmra.mrb[0].mxu0 %v6352
    %v6518 = vpop.f32.mrb[0].mxu0
    %v6519 = vadd.f32 0.0, %v6518
    %v6520 = vpop.f32.mrb[0].mxu0
    %v6521 = vpop.f32.mrb[0].mxu0
    %v6522 = vadd.f32 0.0, %v6521
    %v6523 = vpop.f32.mrb[0].mxu0
    %6524 = vmatprep.mubr.bf16.mxu0 %v6454
    %6525 = vmatmul.mubr.bf16.gmra.mrb[0].mxu0 %v6354
    %v6526 = vpop.f32.mrb[0].mxu0
    %v6527 = vadd.f32 0.0, %v6526
    %v6528 = vpop.f32.mrb[0].mxu0
    %v6529 = vpop.f32.mrb[0].mxu0
    %v6530 = vadd.f32 0.0, %v6529
    %v6531 = vpop.f32.mrb[0].mxu0
    %6532 = vmatprep.mubr.bf16.mxu0 %v6457
    %6533 = vmatmul.mubr.bf16.gmra.mrb[0].mxu0 %v6356
    %v6534 = vpop.f32.mrb[0].mxu0
    %v6535 = vadd.f32 0.0, %v6534
    %v6536 = vpop.f32.mrb[0].mxu0
    %v6537 = vpop.f32.mrb[0].mxu0
    %v6538 = vadd.f32 0.0, %v6537
    %v6539 = vpop.f32.mrb[0].mxu0
    %6540 = vmatprep.mubr.bf16.mxu0 %v6460
    %6541 = vmatmul.mubr.bf16.gmra.mrb[0].mxu0 %v6358
    %v6542 = vpop.f32.mrb[0].mxu0
    %v6543 = vadd.f32 0.0, %v6542
    %v6544 = vpop.f32.mrb[0].mxu0
    %v6545 = vpop.f32.mrb[0].mxu0
    %v6546 = vadd.f32 0.0, %v6545
    %v6547 = vpop.f32.mrb[0].mxu0
    %6548 = vmatprep.mubr.bf16.mxu0 %v6463
    %6549 = vmatmul.mubr.bf16.gmra.mrb[0].mxu0 %v6360
    %v6550 = vpop.f32.mrb[0].mxu0
    %v6551 = vadd.f32 0.0, %v6550
    %v6552 = vpop.f32.mrb[0].mxu0
    %v6553 = vpop.f32.mrb[0].mxu0
    %v6554 = vadd.f32 0.0, %v6553
    %v6555 = vpop.f32.mrb[0].mxu0
    %6556 = vmatprep.mubr.bf16.mxu0 %v6466
    %6557 = vmatmul.mubr.bf16.gmra.mrb[0].mxu0 %v6362
    %v6558 = vpop.f32.mrb[0].mxu0
    %v6559 = vadd.f32 0.0, %v6558
    %v6560 = vpop.f32.mrb[0].mxu0
    %v6561 = vpop.f32.mrb[0].mxu0
    %v6562 = vadd.f32 0.0, %v6561
    %v6563 = vpop.f32.mrb[0].mxu0
    %6564 = vdwg.mxu0
    %v6565 = vpack.c.b16 %v5836, %v5834
    %v6566 = vpack.c.b16 %v5837, %v5835
    %v6567 = vpack.c.b16 %v5840, %v5838
    %v6568 = vpack.c.b16 %v5841, %v5839
    %v6569 = vpack.c.b16 %v5844, %v5842
    %v6570 = vpack.c.b16 %v5845, %v5843
    %v6571 = vpack.c.b16 %v5848, %v5846
    %v6572 = vpack.c.b16 %v5849, %v5847
    %v6573 = vpack.c.b16 %v5852, %v5850
    %v6574 = vpack.c.b16 %v5853, %v5851
    %v6575 = vpack.c.b16 %v5856, %v5854
    %v6576 = vpack.c.b16 %v5857, %v5855
    %v6577 = vpack.c.b16 %v5860, %v5858
    %v6578 = vpack.c.b16 %v5861, %v5859
    %v6579 = vpack.c.b16 %v5864, %v5862
    %v6580 = vpack.c.b16 %v5865, %v5863
    %v6613 = vunpack.c.l.b16 %v5867
    %v6614 = vunpack.c.l.b16 %v5868
    %v6615 = vunpack.c.l.b16 %v5869
    %v6616 = vunpack.c.l.b16 %v5870
    %v6617 = vunpack.c.l.b16 %v5871
    %v6618 = vunpack.c.l.b16 %v5872
    %v6619 = vunpack.c.l.b16 %v5873
    %v6620 = vunpack.c.l.b16 %v5874
    %v6621 = vunpack.c.l.b16 %v5875
    %v6622 = vunpack.c.l.b16 %v5876
    %v6623 = vunpack.c.l.b16 %v5877
    %v6624 = vunpack.c.l.b16 %v5878
    %v6625 = vunpack.c.l.b16 %v5879
    %v6626 = vunpack.c.l.b16 %v5880
    %v6627 = vunpack.c.l.b16 %v5881
    %v6628 = vunpack.c.l.b16 %v5882
    %v6629 = vunpack.c.l.b16 %v5883
    %v6630 = vunpack.c.l.b16 %v5884
    %v6631 = vunpack.c.l.b16 %v5885
    %v6632 = vunpack.c.l.b16 %v5886
    %v6633 = vunpack.c.l.b16 %v5887
    %v6634 = vunpack.c.l.b16 %v5888
    %v6635 = vunpack.c.l.b16 %v5889
    %v6636 = vunpack.c.l.b16 %v5890
    %v6637 = vpack.c.b16 %v6614, %v6613
    %v6638 = vpack.c.b16 %v6616, %v6615
    %v6639 = vpack.c.b16 %v6618, %v6617
    %v6640 = vpack.c.b16 %v6620, %v6619
    %v6641 = vpack.c.b16 %v6622, %v6621
    %v6642 = vpack.c.b16 %v6624, %v6623
    %v6643 = vpack.c.b16 %v6626, %v6625
    %v6644 = vpack.c.b16 %v6628, %v6627
    %v6645 = vpack.c.b16 %v6630, %v6629
    %v6646 = vpack.c.b16 %v6632, %v6631
    %v6647 = vpack.c.b16 %v6634, %v6633
    %v6648 = vpack.c.b16 %v6636, %v6635
    %v6662 = vsel %vm972, %v6566, 0
    %v6665 = vsel %vm972, %v6568, 0
    %v6668 = vsel %vm972, %v6570, 0
    %v6671 = vsel %vm972, %v6572, 0
    %v6674 = vsel %vm972, %v6574, 0
    %v6677 = vsel %vm972, %v6576, 0
    %v6680 = vsel %vm972, %v6578, 0
    %v6683 = vsel %vm972, %v6580, 0
    %6685 = vmatprep.subr.bf16.mxu0 0
    %6686 = vmatpush1.bf16.msra.mxu0 %v6637
    %6687 = vmatprep.subr.bf16.mxu0 0
    %6688 = vmatpush1.bf16.msra.mxu0 %v6638
    %6689 = vmatprep.subr.bf16.mxu0 0
    %6690 = vmatpush1.bf16.msra.mxu0 %v6639
    %6691 = vmatprep.subr.bf16.mxu0 0
    %6692 = vmatpush1.bf16.msra.mxu0 %v6640
    %6693 = vmatprep.subr.bf16.mxu0 0
    %6694 = vmatpush1.bf16.msra.mxu0 %v6641
    %6695 = vmatprep.subr.bf16.mxu0 0
    %6696 = vmatpush1.bf16.msra.mxu0 %v6642
    %6697 = vmatprep.subr.bf16.mxu0 0
    %6698 = vmatpush1.bf16.msra.mxu0 %v6643
    %6699 = vmatprep.subr.bf16.mxu0 0
    %6700 = vmatpush1.bf16.msra.mxu0 %v6644
    %6701 = vmatprep.subr.bf16.mxu0 0
    %6702 = vmatpush1.bf16.msra.mxu0 %v6645
    %6703 = vmatprep.subr.bf16.mxu0 0
    %6704 = vmatpush1.bf16.msra.mxu0 %v6646
    %6705 = vmatprep.subr.bf16.mxu0 0
    %6706 = vmatpush1.bf16.msra.mxu0 %v6647
    %6707 = vmatprep.subr.bf16.mxu0 0
    %6708 = vmatpush1.bf16.msra.mxu0 %v6648
    %6709 = vmatprep.subr.bf16.mxu0 0
    %6710 = vmatpush1.bf16.msra.mxu0 0
    %6711 = vmatprep.subr.bf16.mxu0 0
    %6712 = vmatpush1.bf16.msra.mxu0 0
    %6713 = vmatprep.subr.bf16.mxu0 0
    %6714 = vmatpush1.bf16.msra.mxu0 0
    %6715 = vmatprep.subr.bf16.mxu0 0
    %6716 = vmatpush1.bf16.msra.mxu0 0
    %6717 = vmatprep.mubr.bf16.mxu0 %v6662
    %6718 = vmatmul.mubr.bf16.gmra.mrb[0].mxu0 %v6565
    %v6719 = vpop.f32.mrb[0].mxu0
    %v6720 = vadd.f32 %v6503, %v6719
    %v6721 = vpop.f32.mrb[0].mxu0
    %v6722 = vpop.f32.mrb[0].mxu0
    %v6723 = vadd.f32 %v6506, %v6722
    %v6724 = vpop.f32.mrb[0].mxu0
    %6725 = vmatprep.mubr.bf16.mxu0 %v6665
    %6726 = vmatmul.mubr.bf16.gmra.mrb[0].mxu0 %v6567
    %v6727 = vpop.f32.mrb[0].mxu0
    %v6728 = vadd.f32 %v6511, %v6727
    %v6729 = vpop.f32.mrb[0].mxu0
    %v6730 = vpop.f32.mrb[0].mxu0
    %v6731 = vadd.f32 %v6514, %v6730
    %v6732 = vpop.f32.mrb[0].mxu0
    %6733 = vmatprep.mubr.bf16.mxu0 %v6668
    %6734 = vmatmul.mubr.bf16.gmra.mrb[0].mxu0 %v6569
    %v6735 = vpop.f32.mrb[0].mxu0
    %v6736 = vadd.f32 %v6519, %v6735
    %v6737 = vpop.f32.mrb[0].mxu0
    %v6738 = vpop.f32.mrb[0].mxu0
    %v6739 = vadd.f32 %v6522, %v6738
    %v6740 = vpop.f32.mrb[0].mxu0
    %6741 = vmatprep.mubr.bf16.mxu0 %v6671
    %6742 = vmatmul.mubr.bf16.gmra.mrb[0].mxu0 %v6571
    %v6743 = vpop.f32.mrb[0].mxu0
    %v6744 = vadd.f32 %v6527, %v6743
    %v6745 = vpop.f32.mrb[0].mxu0
    %v6746 = vpop.f32.mrb[0].mxu0
    %v6747 = vadd.f32 %v6530, %v6746
    %v6748 = vpop.f32.mrb[0].mxu0
    %6749 = vmatprep.mubr.bf16.mxu0 %v6674
    %6750 = vmatmul.mubr.bf16.gmra.mrb[0].mxu0 %v6573
    %v6751 = vpop.f32.mrb[0].mxu0
    %v6752 = vadd.f32 %v6535, %v6751
    %v6753 = vpop.f32.mrb[0].mxu0
    %v6754 = vpop.f32.mrb[0].mxu0
    %v6755 = vadd.f32 %v6538, %v6754
    %v6756 = vpop.f32.mrb[0].mxu0
    %6757 = vmatprep.mubr.bf16.mxu0 %v6677
    %6758 = vmatmul.mubr.bf16.gmra.mrb[0].mxu0 %v6575
    %v6759 = vpop.f32.mrb[0].mxu0
    %v6760 = vadd.f32 %v6543, %v6759
    %v6761 = vpop.f32.mrb[0].mxu0
    %v6762 = vpop.f32.mrb[0].mxu0
    %v6763 = vadd.f32 %v6546, %v6762
    %v6764 = vpop.f32.mrb[0].mxu0
    %6765 = vmatprep.mubr.bf16.mxu0 %v6680
    %6766 = vmatmul.mubr.bf16.gmra.mrb[0].mxu0 %v6577
    %v6767 = vpop.f32.mrb[0].mxu0
    %v6768 = vadd.f32 %v6551, %v6767
    %v6769 = vpop.f32.mrb[0].mxu0
    %v6770 = vpop.f32.mrb[0].mxu0
    %v6771 = vadd.f32 %v6554, %v6770
    %v6772 = vpop.f32.mrb[0].mxu0
    %6773 = vmatprep.mubr.bf16.mxu0 %v6683
    %6774 = vmatmul.mubr.bf16.gmra.mrb[0].mxu0 %v6579
    %v6775 = vpop.f32.mrb[0].mxu0
    %v6776 = vadd.f32 %v6559, %v6775
    %v6777 = vpop.f32.mrb[0].mxu0
    %v6778 = vpop.f32.mrb[0].mxu0
    %v6779 = vadd.f32 %v6562, %v6778
    %v6780 = vpop.f32.mrb[0].mxu0
    %6781 = vdwg.mxu0
    %v6782 = vld [vmem:[%s1984] sm:$0xf]
    %v6783 = vld [vmem:[%s1984 + $0x8] sm:$0xf]
    %v6784 = vld [vmem:[%s1984 + $0x10] sm:$0xf]
    %v6785 = vld [vmem:[%s1984 + $0x18] sm:$0xf]
    %v6786 = vld [vmem:[%s1984 + $0x20] sm:$0xf]
    %v6787 = vld [vmem:[%s1984 + $0x28] sm:$0xf]
    %v6788 = vld [vmem:[%s1984 + $0x30] sm:$0xf]
    %v6789 = vld [vmem:[%s1984 + $0x38] sm:$0xf]
    %v6790 = vld [vmem:[%s1984 + $0x50] sm:$0xf]
    %v6791 = vld [vmem:[%s1984 + $0x58] sm:$0xf]
    %v6792 = vld [vmem:[%s1984 + $0x60] sm:$0xf]
    %v6793 = vld [vmem:[%s1984 + $0x68] sm:$0xf]
    %v6794 = vld [vmem:[%s1984 + $0x70] sm:$0xf]
    %v6795 = vld [vmem:[%s1984 + $0x78] sm:$0xf]
    %v6796 = vld [vmem:[%s1984 + $0x80] sm:$0xf]
    %v6797 = vld [vmem:[%s1984 + $0x88] sm:$0xf]
    %v6798 = vld [vmem:[%s1984 + $0x4] sm:$0x1]
    %v6799 = vld [vmem:[%s1984 + $0xc] sm:$0x1]
    %v6800 = vld [vmem:[%s1984 + $0x14] sm:$0x1]
    %v6801 = vld [vmem:[%s1984 + $0x1c] sm:$0x1]
    %v6802 = vld [vmem:[%s1984 + $0x24] sm:$0x1]
    %v6803 = vld [vmem:[%s1984 + $0x2c] sm:$0x1]
    %v6804 = vld [vmem:[%s1984 + $0x34] sm:$0x1]
    %v6805 = vld [vmem:[%s1984 + $0x3c] sm:$0x1]
    %v6806 = vld [vmem:[%s1984 + $0x54] sm:$0x1]
    %v6807 = vld [vmem:[%s1984 + $0x5c] sm:$0x1]
    %v6808 = vld [vmem:[%s1984 + $0x64] sm:$0x1]
    %v6809 = vld [vmem:[%s1984 + $0x6c] sm:$0x1]
    %v6810 = vld [vmem:[%s1984 + $0x74] sm:$0x1]
    %v6811 = vld [vmem:[%s1984 + $0x7c] sm:$0x1]
    %v6812 = vld [vmem:[%s1984 + $0x84] sm:$0x1]
    %v6813 = vld [vmem:[%s1984 + $0x8c] sm:$0x1]
    %v6814 = vld [vmem:[%s1984] sm:$0xe]
    %v6815 = vld [vmem:[%s1984 + $0x8] sm:$0xe]
    %v6816 = vld [vmem:[%s1984 + $0x10] sm:$0xe]
    %v6817 = vld [vmem:[%s1984 + $0x18] sm:$0xe]
    %v6818 = vld [vmem:[%s1984 + $0x20] sm:$0xe]
    %v6819 = vld [vmem:[%s1984 + $0x28] sm:$0xe]
    %v6820 = vld [vmem:[%s1984 + $0x30] sm:$0xe]
    %v6821 = vld [vmem:[%s1984 + $0x38] sm:$0xe]
    %v6822 = vld [vmem:[%s1984 + $0x50] sm:$0xe]
    %v6823 = vld [vmem:[%s1984 + $0x58] sm:$0xe]
    %v6824 = vld [vmem:[%s1984 + $0x60] sm:$0xe]
    %v6825 = vld [vmem:[%s1984 + $0x68] sm:$0xe]
    %v6826 = vld [vmem:[%s1984 + $0x70] sm:$0xe]
    %v6827 = vld [vmem:[%s1984 + $0x78] sm:$0xe]
    %v6828 = vld [vmem:[%s1984 + $0x80] sm:$0xe]
    %v6829 = vld [vmem:[%s1984 + $0x88] sm:$0xe]
    %v6862 = vunpack.c.l.b16 %v6782
    %v6863 = vunpack.c.l.b16 %v6798
    %v6864 = vunpack.c.l.b16 %v6783
    %v6865 = vunpack.c.l.b16 %v6799
    %v6866 = vunpack.c.l.b16 %v6784
    %v6867 = vunpack.c.l.b16 %v6800
    %v6868 = vunpack.c.l.b16 %v6785
    %v6869 = vunpack.c.l.b16 %v6801
    %v6870 = vunpack.c.l.b16 %v6786
    %v6871 = vunpack.c.l.b16 %v6802
    %v6872 = vunpack.c.l.b16 %v6787
    %v6873 = vunpack.c.l.b16 %v6803
    %v6874 = vunpack.c.l.b16 %v6788
    %v6875 = vunpack.c.l.b16 %v6804
    %v6876 = vunpack.c.l.b16 %v6789
    %v6877 = vunpack.c.l.b16 %v6805
    %v6878 = vunpack.c.l.b16 %v6790
    %v6879 = vunpack.c.l.b16 %v6806
    %v6880 = vunpack.c.l.b16 %v6791
    %v6881 = vunpack.c.l.b16 %v6807
    %v6882 = vunpack.c.l.b16 %v6792
    %v6883 = vunpack.c.l.b16 %v6808
    %v6884 = vunpack.c.l.b16 %v6793
    %v6885 = vunpack.c.l.b16 %v6809
    %v6886 = vunpack.c.l.b16 %v6794
    %v6887 = vunpack.c.l.b16 %v6810
    %v6888 = vunpack.c.l.b16 %v6795
    %v6889 = vunpack.c.l.b16 %v6811
    %v6890 = vunpack.c.l.b16 %v6796
    %v6891 = vunpack.c.l.b16 %v6812
    %v6892 = vunpack.c.l.b16 %v6797
    %v6893 = vunpack.c.l.b16 %v6813
    %v6894 = vpack.c.b16 %v6863, %v6862
    %v6895 = vpack.c.b16 %v6865, %v6864
    %v6896 = vpack.c.b16 %v6867, %v6866
    %v6897 = vpack.c.b16 %v6869, %v6868
    %v6898 = vpack.c.b16 %v6871, %v6870
    %v6899 = vpack.c.b16 %v6873, %v6872
    %v6900 = vpack.c.b16 %v6875, %v6874
    %v6901 = vpack.c.b16 %v6877, %v6876
    %v6902 = vpack.c.b16 %v6879, %v6878
    %v6903 = vpack.c.b16 %v6881, %v6880
    %v6904 = vpack.c.b16 %v6883, %v6882
    %v6905 = vpack.c.b16 %v6885, %v6884
    %v6906 = vpack.c.b16 %v6887, %v6886
    %v6907 = vpack.c.b16 %v6889, %v6888
    %v6908 = vpack.c.b16 %v6891, %v6890
    %v6909 = vpack.c.b16 %v6893, %v6892
    %v6911 = vshrl.u32 %v6894, 16
    %v6913 = vshll.u32 %v6894, 16
    %v6915 = vrot.slane %v6913, 1
    %v6916 = vor.u32 %v6911, %v6915
    %v6918 = vshrl.u32 %v6895, 16
    %v6920 = vshll.u32 %v6895, 16
    %v6922 = vrot.slane %v6920, 1
    %v6923 = vor.u32 %v6918, %v6922
    %v6925 = vshrl.u32 %v6896, 16
    %v6927 = vshll.u32 %v6896, 16
    %v6929 = vrot.slane %v6927, 1
    %v6930 = vor.u32 %v6925, %v6929
    %v6932 = vshrl.u32 %v6897, 16
    %v6934 = vshll.u32 %v6897, 16
    %v6936 = vrot.slane %v6934, 1
    %v6937 = vor.u32 %v6932, %v6936
    %v6939 = vshrl.u32 %v6898, 16
    %v6941 = vshll.u32 %v6898, 16
    %v6943 = vrot.slane %v6941, 1
    %v6944 = vor.u32 %v6939, %v6943
    %v6946 = vshrl.u32 %v6899, 16
    %v6948 = vshll.u32 %v6899, 16
    %v6950 = vrot.slane %v6948, 1
    %v6951 = vor.u32 %v6946, %v6950
    %v6953 = vshrl.u32 %v6900, 16
    %v6955 = vshll.u32 %v6900, 16
    %v6957 = vrot.slane %v6955, 1
    %v6958 = vor.u32 %v6953, %v6957
    %v6960 = vshrl.u32 %v6901, 16
    %v6962 = vshll.u32 %v6901, 16
    %v6964 = vrot.slane %v6962, 1
    %v6965 = vor.u32 %v6960, %v6964
    %v6967 = vshrl.u32 %v6902, 16
    %v6969 = vshll.u32 %v6902, 16
    %v6971 = vrot.slane %v6969, 1
    %v6972 = vor.u32 %v6967, %v6971
    %v6974 = vshrl.u32 %v6903, 16
    %v6976 = vshll.u32 %v6903, 16
    %v6978 = vrot.slane %v6976, 1
    %v6979 = vor.u32 %v6974, %v6978
    %v6981 = vshrl.u32 %v6904, 16
    %v6983 = vshll.u32 %v6904, 16
    %v6985 = vrot.slane %v6983, 1
    %v6986 = vor.u32 %v6981, %v6985
    %v6988 = vshrl.u32 %v6905, 16
    %v6990 = vshll.u32 %v6905, 16
    %v6992 = vrot.slane %v6990, 1
    %v6993 = vor.u32 %v6988, %v6992
    %v6995 = vshrl.u32 %v6906, 16
    %v6997 = vshll.u32 %v6906, 16
    %v6999 = vrot.slane %v6997, 1
    %v7000 = vor.u32 %v6995, %v6999
    %v7002 = vshrl.u32 %v6907, 16
    %v7004 = vshll.u32 %v6907, 16
    %v7006 = vrot.slane %v7004, 1
    %v7007 = vor.u32 %v7002, %v7006
    %v7009 = vshrl.u32 %v6908, 16
    %v7011 = vshll.u32 %v6908, 16
    %v7013 = vrot.slane %v7011, 1
    %v7014 = vor.u32 %v7009, %v7013
    %v7016 = vshrl.u32 %v6909, 16
    %v7018 = vshll.u32 %v6909, 16
    %v7020 = vrot.slane %v7018, 1
    %v7021 = vor.u32 %v7016, %v7020
    %7022 = vrot.lane.b32.xlu0 %v6916, 64
    %v7023 = vpop.permute.xlu0 %7022
    %7024 = vrot.lane.b32.xlu0 %v6923, 64
    %v7025 = vpop.permute.xlu0 %7024
    %7026 = vrot.lane.b32.xlu0 %v6930, 64
    %v7027 = vpop.permute.xlu0 %7026
    %7028 = vrot.lane.b32.xlu0 %v6937, 64
    %v7029 = vpop.permute.xlu0 %7028
    %7030 = vrot.lane.b32.xlu0 %v6944, 64
    %v7031 = vpop.permute.xlu0 %7030
    %7032 = vrot.lane.b32.xlu0 %v6951, 64
    %v7033 = vpop.permute.xlu0 %7032
    %7034 = vrot.lane.b32.xlu0 %v6958, 64
    %v7035 = vpop.permute.xlu0 %7034
    %7036 = vrot.lane.b32.xlu0 %v6965, 64
    %v7037 = vpop.permute.xlu0 %7036
    %7038 = vrot.lane.b32.xlu0 %v6972, 64
    %v7039 = vpop.permute.xlu0 %7038
    %7040 = vrot.lane.b32.xlu0 %v6979, 64
    %v7041 = vpop.permute.xlu0 %7040
    %7042 = vrot.lane.b32.xlu0 %v6986, 64
    %v7043 = vpop.permute.xlu0 %7042
    %7044 = vrot.lane.b32.xlu0 %v6993, 64
    %v7045 = vpop.permute.xlu0 %7044
    %7046 = vrot.lane.b32.xlu0 %v7000, 64
    %v7047 = vpop.permute.xlu0 %7046
    %7048 = vrot.lane.b32.xlu0 %v7007, 64
    %v7049 = vpop.permute.xlu0 %7048
    %7050 = vrot.lane.b32.xlu0 %v7014, 64
    %v7051 = vpop.permute.xlu0 %7050
    %7052 = vrot.lane.b32.xlu0 %v7021, 64
    %v7053 = vpop.permute.xlu0 %7052
    %v7070 = vunpack.c.l.b16 %v6814
    %v7071 = vunpack.c.l.b16 %v6815
    %v7072 = vunpack.c.l.b16 %v6816
    %v7073 = vunpack.c.l.b16 %v6817
    %v7074 = vunpack.c.l.b16 %v6818
    %v7075 = vunpack.c.l.b16 %v6819
    %v7076 = vunpack.c.l.b16 %v6820
    %v7077 = vunpack.c.l.b16 %v6821
    %v7078 = vunpack.c.l.b16 %v6822
    %v7079 = vunpack.c.l.b16 %v6823
    %v7080 = vunpack.c.l.b16 %v6824
    %v7081 = vunpack.c.l.b16 %v6825
    %v7082 = vunpack.c.l.b16 %v6826
    %v7083 = vunpack.c.l.b16 %v6827
    %v7084 = vunpack.c.l.b16 %v6828
    %v7085 = vunpack.c.l.b16 %v6829
    %v7086 = vpack.c.b16 %v6863, %v7070
    %v7087 = vpack.c.b16 %v6865, %v7071
    %v7088 = vpack.c.b16 %v6867, %v7072
    %v7089 = vpack.c.b16 %v6869, %v7073
    %v7090 = vpack.c.b16 %v6871, %v7074
    %v7091 = vpack.c.b16 %v6873, %v7075
    %v7092 = vpack.c.b16 %v6875, %v7076
    %v7093 = vpack.c.b16 %v6877, %v7077
    %v7094 = vpack.c.b16 %v6879, %v7078
    %v7095 = vpack.c.b16 %v6881, %v7079
    %v7096 = vpack.c.b16 %v6883, %v7080
    %v7097 = vpack.c.b16 %v6885, %v7081
    %v7098 = vpack.c.b16 %v6887, %v7082
    %v7099 = vpack.c.b16 %v6889, %v7083
    %v7100 = vpack.c.b16 %v6891, %v7084
    %v7101 = vpack.c.b16 %v6893, %v7085
    %v7102 = vrot.slane %v7086, 1
    %v7103 = vrot.slane %v7087, 1
    %v7104 = vrot.slane %v7088, 1
    %v7105 = vrot.slane %v7089, 1
    %v7106 = vrot.slane %v7090, 1
    %v7107 = vrot.slane %v7091, 1
    %v7108 = vrot.slane %v7092, 1
    %v7109 = vrot.slane %v7093, 1
    %v7110 = vrot.slane %v7094, 1
    %v7111 = vrot.slane %v7095, 1
    %v7112 = vrot.slane %v7096, 1
    %v7113 = vrot.slane %v7097, 1
    %v7114 = vrot.slane %v7098, 1
    %v7115 = vrot.slane %v7099, 1
    %v7116 = vrot.slane %v7100, 1
    %v7117 = vrot.slane %v7101, 1
    %v7120 = vsel %vm972, %v6782, %v7023
    %v7123 = vsel %vm972, %v6783, %v7025
    %v7126 = vsel %vm972, %v6784, %v7027
    %v7129 = vsel %vm972, %v6785, %v7029
    %v7132 = vsel %vm972, %v6786, %v7031
    %v7135 = vsel %vm972, %v6787, %v7033
    %v7138 = vsel %vm972, %v6788, %v7035
    %v7141 = vsel %vm972, %v6789, %v7037
    %v7144 = vsel %vm972, %v6790, %v7039
    %v7147 = vsel %vm972, %v6791, %v7041
    %v7150 = vsel %vm972, %v6792, %v7043
    %v7153 = vsel %vm972, %v6793, %v7045
    %v7156 = vsel %vm972, %v6794, %v7047
    %v7159 = vsel %vm972, %v6795, %v7049
    %v7162 = vsel %vm972, %v6796, %v7051
    %v7165 = vsel %vm972, %v6797, %v7053
    %v7182 = vunpack.c.l.b16 %v7120
    %v7183 = vunpack.c.l.b16 %v7102
    %v7184 = vunpack.c.l.b16 %v7123
    %v7185 = vunpack.c.l.b16 %v7103
    %v7186 = vunpack.c.l.b16 %v7126
    %v7187 = vunpack.c.l.b16 %v7104
    %v7188 = vunpack.c.l.b16 %v7129
    %v7189 = vunpack.c.l.b16 %v7105
    %v7190 = vunpack.c.l.b16 %v7132
    %v7191 = vunpack.c.l.b16 %v7106
    %v7192 = vunpack.c.l.b16 %v7135
    %v7193 = vunpack.c.l.b16 %v7107
    %v7194 = vunpack.c.l.b16 %v7138
    %v7195 = vunpack.c.l.b16 %v7108
    %v7196 = vunpack.c.l.b16 %v7141
    %v7197 = vunpack.c.l.b16 %v7109
    %v7198 = vunpack.c.l.b16 %v7144
    %v7199 = vunpack.c.l.b16 %v7110
    %v7200 = vunpack.c.l.b16 %v7147
    %v7201 = vunpack.c.l.b16 %v7111
    %v7202 = vunpack.c.l.b16 %v7150
    %v7203 = vunpack.c.l.b16 %v7112
    %v7204 = vunpack.c.l.b16 %v7153
    %v7205 = vunpack.c.l.b16 %v7113
    %v7206 = vunpack.c.l.b16 %v7156
    %v7207 = vunpack.c.l.b16 %v7114
    %v7208 = vunpack.c.l.b16 %v7159
    %v7209 = vunpack.c.l.b16 %v7115
    %v7210 = vunpack.c.l.b16 %v7162
    %v7211 = vunpack.c.l.b16 %v7116
    %v7212 = vunpack.c.l.b16 %v7165
    %v7213 = vunpack.c.l.b16 %v7117
    %s7214 = scalar_lea.vmem %s1, 768
    %v7215 = vld [vmem:[%s7214] sm:$0xf]
    %v7216 = vld [vmem:[%s7214 + $0x4] sm:$0xf]
    %v7217 = vld [vmem:[%s7214 + $0x8] sm:$0xf]
    %v7218 = vld [vmem:[%s7214 + $0xc] sm:$0xf]
    %v7219 = vld [vmem:[%s7214 + $0x10] sm:$0xf]
    %v7220 = vld [vmem:[%s7214 + $0x14] sm:$0xf]
    %v7221 = vld [vmem:[%s7214 + $0x18] sm:$0xf]
    %v7222 = vld [vmem:[%s7214 + $0x1c] sm:$0xf]
    %v7223 = vld [vmem:[%s7214 + $0x20] sm:$0xf]
    %v7224 = vld [vmem:[%s7214 + $0x24] sm:$0xf]
    %v7225 = vld [vmem:[%s7214 + $0x28] sm:$0xf]
    %v7226 = vld [vmem:[%s7214 + $0x2c] sm:$0xf]
    %v7227 = vld [vmem:[%s7214 + $0x30] sm:$0xf]
    %v7228 = vld [vmem:[%s7214 + $0x34] sm:$0xf]
    %v7229 = vld [vmem:[%s7214 + $0x38] sm:$0xf]
    %v7230 = vld [vmem:[%s7214 + $0x3c] sm:$0xf]
    %v7231 = vld [vmem:[%s7214 + $0x40] sm:$0xf]
    %v7232 = vld [vmem:[%s7214 + $0x44] sm:$0xf]
    %v7233 = vld [vmem:[%s7214 + $0x48] sm:$0xf]
    %v7234 = vld [vmem:[%s7214 + $0x4c] sm:$0xf]
    %v7235 = vld [vmem:[%s7214 + $0x50] sm:$0xf]
    %v7236 = vld [vmem:[%s7214 + $0x54] sm:$0xf]
    %v7237 = vld [vmem:[%s7214 + $0x58] sm:$0xf]
    %v7238 = vld [vmem:[%s7214 + $0x5c] sm:$0xf]
    %v7239 = vpack.c.b16 %v7184, %v7182
    %v7240 = vpack.c.b16 %v7185, %v7183
    %v7241 = vpack.c.b16 %v7188, %v7186
    %v7242 = vpack.c.b16 %v7189, %v7187
    %v7243 = vpack.c.b16 %v7192, %v7190
    %v7244 = vpack.c.b16 %v7193, %v7191
    %v7245 = vpack.c.b16 %v7196, %v7194
    %v7246 = vpack.c.b16 %v7197, %v7195
    %v7247 = vpack.c.b16 %v7200, %v7198
    %v7248 = vpack.c.b16 %v7201, %v7199
    %v7249 = vpack.c.b16 %v7204, %v7202
    %v7250 = vpack.c.b16 %v7205, %v7203
    %v7251 = vpack.c.b16 %v7208, %v7206
    %v7252 = vpack.c.b16 %v7209, %v7207
    %v7253 = vpack.c.b16 %v7212, %v7210
    %v7254 = vpack.c.b16 %v7213, %v7211
    %v7287 = vunpack.c.l.b16 %v7215
    %v7288 = vunpack.c.l.b16 %v7216
    %v7289 = vunpack.c.l.b16 %v7217
    %v7290 = vunpack.c.l.b16 %v7218
    %v7291 = vunpack.c.l.b16 %v7219
    %v7292 = vunpack.c.l.b16 %v7220
    %v7293 = vunpack.c.l.b16 %v7221
    %v7294 = vunpack.c.l.b16 %v7222
    %v7295 = vunpack.c.l.b16 %v7223
    %v7296 = vunpack.c.l.b16 %v7224
    %v7297 = vunpack.c.l.b16 %v7225
    %v7298 = vunpack.c.l.b16 %v7226
    %v7299 = vunpack.c.l.b16 %v7227
    %v7300 = vunpack.c.l.b16 %v7228
    %v7301 = vunpack.c.l.b16 %v7229
    %v7302 = vunpack.c.l.b16 %v7230
    %v7303 = vunpack.c.l.b16 %v7231
    %v7304 = vunpack.c.l.b16 %v7232
    %v7305 = vunpack.c.l.b16 %v7233
    %v7306 = vunpack.c.l.b16 %v7234
    %v7307 = vunpack.c.l.b16 %v7235
    %v7308 = vunpack.c.l.b16 %v7236
    %v7309 = vunpack.c.l.b16 %v7237
    %v7310 = vunpack.c.l.b16 %v7238
    %v7311 = vpack.c.b16 %v7288, %v7287
    %v7312 = vpack.c.b16 %v7290, %v7289
    %v7313 = vpack.c.b16 %v7292, %v7291
    %v7314 = vpack.c.b16 %v7294, %v7293
    %v7315 = vpack.c.b16 %v7296, %v7295
    %v7316 = vpack.c.b16 %v7298, %v7297
    %v7317 = vpack.c.b16 %v7300, %v7299
    %v7318 = vpack.c.b16 %v7302, %v7301
    %v7319 = vpack.c.b16 %v7304, %v7303
    %v7320 = vpack.c.b16 %v7306, %v7305
    %v7321 = vpack.c.b16 %v7308, %v7307
    %v7322 = vpack.c.b16 %v7310, %v7309
    %v7336 = vsel %vm972, %v7240, 0
    %v7339 = vsel %vm972, %v7242, 0
    %v7342 = vsel %vm972, %v7244, 0
    %v7345 = vsel %vm972, %v7246, 0
    %v7348 = vsel %vm972, %v7248, 0
    %v7351 = vsel %vm972, %v7250, 0
    %v7354 = vsel %vm972, %v7252, 0
    %v7357 = vsel %vm972, %v7254, 0
    %7359 = vmatprep.subr.bf16.mxu0 0
    %7360 = vmatpush1.bf16.msra.mxu0 %v7311
    %7361 = vmatprep.subr.bf16.mxu0 0
    %7362 = vmatpush1.bf16.msra.mxu0 %v7312
    %7363 = vmatprep.subr.bf16.mxu0 0
    %7364 = vmatpush1.bf16.msra.mxu0 %v7313
    %7365 = vmatprep.subr.bf16.mxu0 0
    %7366 = vmatpush1.bf16.msra.mxu0 %v7314
    %7367 = vmatprep.subr.bf16.mxu0 0
    %7368 = vmatpush1.bf16.msra.mxu0 %v7315
    %7369 = vmatprep.subr.bf16.mxu0 0
    %7370 = vmatpush1.bf16.msra.mxu0 %v7316
    %7371 = vmatprep.subr.bf16.mxu0 0
    %7372 = vmatpush1.bf16.msra.mxu0 %v7317
    %7373 = vmatprep.subr.bf16.mxu0 0
    %7374 = vmatpush1.bf16.msra.mxu0 %v7318
    %7375 = vmatprep.subr.bf16.mxu0 0
    %7376 = vmatpush1.bf16.msra.mxu0 %v7319
    %7377 = vmatprep.subr.bf16.mxu0 0
    %7378 = vmatpush1.bf16.msra.mxu0 %v7320
    %7379 = vmatprep.subr.bf16.mxu0 0
    %7380 = vmatpush1.bf16.msra.mxu0 %v7321
    %7381 = vmatprep.subr.bf16.mxu0 0
    %7382 = vmatpush1.bf16.msra.mxu0 %v7322
    %7383 = vmatprep.subr.bf16.mxu0 0
    %7384 = vmatpush1.bf16.msra.mxu0 0
    %7385 = vmatprep.subr.bf16.mxu0 0
    %7386 = vmatpush1.bf16.msra.mxu0 0
    %7387 = vmatprep.subr.bf16.mxu0 0
    %7388 = vmatpush1.bf16.msra.mxu0 0
    %7389 = vmatprep.subr.bf16.mxu0 0
    %7390 = vmatpush1.bf16.msra.mxu0 0
    %7391 = vmatprep.mubr.bf16.mxu0 %v7336
    %7392 = vmatmul.mubr.bf16.gmra.mrb[0].mxu0 %v7239
    %v7393 = vpop.f32.mrb[0].mxu0
    %v7394 = vadd.f32 0.0, %v7393
    %v7395 = vpop.f32.mrb[0].mxu0
    %v7396 = vpop.f32.mrb[0].mxu0
    %v7397 = vadd.f32 0.0, %v7396
    %v7398 = vpop.f32.mrb[0].mxu0
    %7399 = vmatprep.mubr.bf16.mxu0 %v7339
    %7400 = vmatmul.mubr.bf16.gmra.mrb[0].mxu0 %v7241
    %v7401 = vpop.f32.mrb[0].mxu0
    %v7402 = vadd.f32 0.0, %v7401
    %v7403 = vpop.f32.mrb[0].mxu0
    %v7404 = vpop.f32.mrb[0].mxu0
    %v7405 = vadd.f32 0.0, %v7404
    %v7406 = vpop.f32.mrb[0].mxu0
    %7407 = vmatprep.mubr.bf16.mxu0 %v7342
    %7408 = vmatmul.mubr.bf16.gmra.mrb[0].mxu0 %v7243
    %v7409 = vpop.f32.mrb[0].mxu0
    %v7410 = vadd.f32 0.0, %v7409
    %v7411 = vpop.f32.mrb[0].mxu0
    %v7412 = vpop.f32.mrb[0].mxu0
    %v7413 = vadd.f32 0.0, %v7412
    %v7414 = vpop.f32.mrb[0].mxu0
    %7415 = vmatprep.mubr.bf16.mxu0 %v7345
    %7416 = vmatmul.mubr.bf16.gmra.mrb[0].mxu0 %v7245
    %v7417 = vpop.f32.mrb[0].mxu0
    %v7418 = vadd.f32 0.0, %v7417
    %v7419 = vpop.f32.mrb[0].mxu0
    %v7420 = vpop.f32.mrb[0].mxu0
    %v7421 = vadd.f32 0.0, %v7420
    %v7422 = vpop.f32.mrb[0].mxu0
    %7423 = vmatprep.mubr.bf16.mxu0 %v7348
    %7424 = vmatmul.mubr.bf16.gmra.mrb[0].mxu0 %v7247
    %v7425 = vpop.f32.mrb[0].mxu0
    %v7426 = vadd.f32 0.0, %v7425
    %v7427 = vpop.f32.mrb[0].mxu0
    %v7428 = vpop.f32.mrb[0].mxu0
    %v7429 = vadd.f32 0.0, %v7428
    %v7430 = vpop.f32.mrb[0].mxu0
    %7431 = vmatprep.mubr.bf16.mxu0 %v7351
    %7432 = vmatmul.mubr.bf16.gmra.mrb[0].mxu0 %v7249
    %v7433 = vpop.f32.mrb[0].mxu0
    %v7434 = vadd.f32 0.0, %v7433
    %v7435 = vpop.f32.mrb[0].mxu0
    %v7436 = vpop.f32.mrb[0].mxu0
    %v7437 = vadd.f32 0.0, %v7436
    %v7438 = vpop.f32.mrb[0].mxu0
    %7439 = vmatprep.mubr.bf16.mxu0 %v7354
    %7440 = vmatmul.mubr.bf16.gmra.mrb[0].mxu0 %v7251
    %v7441 = vpop.f32.mrb[0].mxu0
    %v7442 = vadd.f32 0.0, %v7441
    %v7443 = vpop.f32.mrb[0].mxu0
    %v7444 = vpop.f32.mrb[0].mxu0
    %v7445 = vadd.f32 0.0, %v7444
    %v7446 = vpop.f32.mrb[0].mxu0
    %7447 = vmatprep.mubr.bf16.mxu0 %v7357
    %7448 = vmatmul.mubr.bf16.gmra.mrb[0].mxu0 %v7253
    %v7449 = vpop.f32.mrb[0].mxu0
    %v7450 = vadd.f32 0.0, %v7449
    %v7451 = vpop.f32.mrb[0].mxu0
    %v7452 = vpop.f32.mrb[0].mxu0
    %v7453 = vadd.f32 0.0, %v7452
    %v7454 = vpop.f32.mrb[0].mxu0
    %7455 = vdwg.mxu0
    %v7456 = vadd.f32 %v6720, %v7394
    %v7457 = vadd.f32 %v6723, %v7397
    %v7458 = vadd.f32 %v6728, %v7402
    %v7459 = vadd.f32 %v6731, %v7405
    %v7460 = vadd.f32 %v6736, %v7410
    %v7461 = vadd.f32 %v6739, %v7413
    %v7462 = vadd.f32 %v6744, %v7418
    %v7463 = vadd.f32 %v6747, %v7421
    %v7464 = vadd.f32 %v6752, %v7426
    %v7465 = vadd.f32 %v6755, %v7429
    %v7466 = vadd.f32 %v6760, %v7434
    %v7467 = vadd.f32 %v6763, %v7437
    %v7468 = vadd.f32 %v6768, %v7442
    %v7469 = vadd.f32 %v6771, %v7445
    %v7470 = vadd.f32 %v6776, %v7450
    %v7471 = vadd.f32 %v6779, %v7453
    %s7472 = scalar_lea.vmem %s2, 2
    %v7473 = vld [vmem:[%s7472] sm:$0x1]
    %v7475 = vlaneseq
    %v7476 = vshrl.u32 %v7475, 7
    %v7477 = vsub.s32 0, %v7476
    %v7478 = vrot.slane %v7473, %v7477
    %v7480 = vadd.f32 %v7456, %v7478
    %v7481 = vadd.f32 %v7457, %v7478
    %v7482 = vadd.f32 %v7458, %v7478
    %v7483 = vadd.f32 %v7459, %v7478
    %v7484 = vadd.f32 %v7460, %v7478
    %v7485 = vadd.f32 %v7461, %v7478
    %v7486 = vadd.f32 %v7462, %v7478
    %v7487 = vadd.f32 %v7463, %v7478
    %v7488 = vadd.f32 %v7464, %v7478
    %v7489 = vadd.f32 %v7465, %v7478
    %v7490 = vadd.f32 %v7466, %v7478
    %v7491 = vadd.f32 %v7467, %v7478
    %v7492 = vadd.f32 %v7468, %v7478
    %v7493 = vadd.f32 %v7469, %v7478
    %v7494 = vadd.f32 %v7470, %v7478
    %v7495 = vadd.f32 %v7471, %v7478
    %v7496 = vmax.f32 %v7480, 0.0
    %v7497 = vmax.f32 %v7481, 0.0
    %v7498 = vmax.f32 %v7482, 0.0
    %v7499 = vmax.f32 %v7483, 0.0
    %v7500 = vmax.f32 %v7484, 0.0
    %v7501 = vmax.f32 %v7485, 0.0
    %v7502 = vmax.f32 %v7486, 0.0
    %v7503 = vmax.f32 %v7487, 0.0
    %v7504 = vmax.f32 %v7488, 0.0
    %v7505 = vmax.f32 %v7489, 0.0
    %v7506 = vmax.f32 %v7490, 0.0
    %v7507 = vmax.f32 %v7491, 0.0
    %v7508 = vmax.f32 %v7492, 0.0
    %v7509 = vmax.f32 %v7493, 0.0
    %v7510 = vmax.f32 %v7494, 0.0
    %v7511 = vmax.f32 %v7495, 0.0
    %v7512 = vpack.c.bf16 %v7496, %v7496
    %v7513 = vpack.c.bf16 %v7497, %v7497
    %v7514 = vpack.c.bf16 %v7498, %v7498
    %v7515 = vpack.c.bf16 %v7499, %v7499
    %v7516 = vpack.c.bf16 %v7500, %v7500
    %v7517 = vpack.c.bf16 %v7501, %v7501
    %v7518 = vpack.c.bf16 %v7502, %v7502
    %v7519 = vpack.c.bf16 %v7503, %v7503
    %v7520 = vpack.c.bf16 %v7504, %v7504
    %v7521 = vpack.c.bf16 %v7505, %v7505
    %v7522 = vpack.c.bf16 %v7506, %v7506
    %v7523 = vpack.c.bf16 %v7507, %v7507
    %v7524 = vpack.c.bf16 %v7508, %v7508
    %v7525 = vpack.c.bf16 %v7509, %v7509
    %v7526 = vpack.c.bf16 %v7510, %v7510
    %v7527 = vpack.c.bf16 %v7511, %v7511
    %v7544 = vunpack.c.l.b16 %v7512
    %v7545 = vunpack.c.l.b16 %v7513
    %v7546 = vunpack.c.l.b16 %v7514
    %v7547 = vunpack.c.l.b16 %v7515
    %v7548 = vunpack.c.l.b16 %v7516
    %v7549 = vunpack.c.l.b16 %v7517
    %v7550 = vunpack.c.l.b16 %v7518
    %v7551 = vunpack.c.l.b16 %v7519
    %v7552 = vunpack.c.l.b16 %v7520
    %v7553 = vunpack.c.l.b16 %v7521
    %v7554 = vunpack.c.l.b16 %v7522
    %v7555 = vunpack.c.l.b16 %v7523
    %v7556 = vunpack.c.l.b16 %v7524
    %v7557 = vunpack.c.l.b16 %v7525
    %v7558 = vunpack.c.l.b16 %v7526
    %v7559 = vunpack.c.l.b16 %v7527
    %v7560 = vpack.c.b16 %v7544, %v7544
    %v7561 = vpack.c.b16 %v7545, %v7545
    %v7562 = vpack.c.b16 %v7546, %v7546
    %v7563 = vpack.c.b16 %v7547, %v7547
    %v7564 = vpack.c.b16 %v7548, %v7548
    %v7565 = vpack.c.b16 %v7549, %v7549
    %v7566 = vpack.c.b16 %v7550, %v7550
    %v7567 = vpack.c.b16 %v7551, %v7551
    %v7568 = vpack.c.b16 %v7552, %v7552
    %v7569 = vpack.c.b16 %v7553, %v7553
    %v7570 = vpack.c.b16 %v7554, %v7554
    %v7571 = vpack.c.b16 %v7555, %v7555
    %v7572 = vpack.c.b16 %v7556, %v7556
    %v7573 = vpack.c.b16 %v7557, %v7557
    %v7574 = vpack.c.b16 %v7558, %v7558
    %v7575 = vpack.c.b16 %v7559, %v7559
    %v7577 = vshrl.u32 %v7560, 16
    %v7579 = vrot.slane %v7577, 7
    %v7580 = vshll.u32 %v7560, 16
    %v7582 = vor.u32 %v7579, %v7580
    %v7583 = vrot.slane %v7579, 4
    %v7585 = vshrl.u32 %v7561, 16
    %v7587 = vrot.slane %v7585, 7
    %v7588 = vshll.u32 %v7561, 16
    %v7590 = vor.u32 %v7587, %v7588
    %v7591 = vrot.slane %v7587, 4
    %v7593 = vshrl.u32 %v7562, 16
    %v7595 = vrot.slane %v7593, 7
    %v7596 = vshll.u32 %v7562, 16
    %v7598 = vor.u32 %v7595, %v7596
    %v7599 = vrot.slane %v7595, 4
    %v7601 = vshrl.u32 %v7563, 16
    %v7603 = vrot.slane %v7601, 7
    %v7604 = vshll.u32 %v7563, 16
    %v7606 = vor.u32 %v7603, %v7604
    %v7607 = vrot.slane %v7603, 4
    %v7609 = vshrl.u32 %v7564, 16
    %v7611 = vrot.slane %v7609, 7
    %v7612 = vshll.u32 %v7564, 16
    %v7614 = vor.u32 %v7611, %v7612
    %v7615 = vrot.slane %v7611, 4
    %v7617 = vshrl.u32 %v7565, 16
    %v7619 = vrot.slane %v7617, 7
    %v7620 = vshll.u32 %v7565, 16
    %v7622 = vor.u32 %v7619, %v7620
    %v7623 = vrot.slane %v7619, 4
    %v7625 = vshrl.u32 %v7566, 16
    %v7627 = vrot.slane %v7625, 7
    %v7628 = vshll.u32 %v7566, 16
    %v7630 = vor.u32 %v7627, %v7628
    %v7631 = vrot.slane %v7627, 4
    %v7633 = vshrl.u32 %v7567, 16
    %v7635 = vrot.slane %v7633, 7
    %v7636 = vshll.u32 %v7567, 16
    %v7638 = vor.u32 %v7635, %v7636
    %v7639 = vrot.slane %v7635, 4
    %v7641 = vshrl.u32 %v7568, 16
    %v7643 = vrot.slane %v7641, 7
    %v7644 = vshll.u32 %v7568, 16
    %v7646 = vor.u32 %v7643, %v7644
    %v7647 = vrot.slane %v7643, 4
    %v7649 = vshrl.u32 %v7569, 16
    %v7651 = vrot.slane %v7649, 7
    %v7652 = vshll.u32 %v7569, 16
    %v7654 = vor.u32 %v7651, %v7652
    %v7655 = vrot.slane %v7651, 4
    %v7657 = vshrl.u32 %v7570, 16
    %v7659 = vrot.slane %v7657, 7
    %v7660 = vshll.u32 %v7570, 16
    %v7662 = vor.u32 %v7659, %v7660
    %v7663 = vrot.slane %v7659, 4
    %v7665 = vshrl.u32 %v7571, 16
    %v7667 = vrot.slane %v7665, 7
    %v7668 = vshll.u32 %v7571, 16
    %v7670 = vor.u32 %v7667, %v7668
    %v7671 = vrot.slane %v7667, 4
    %v7673 = vshrl.u32 %v7572, 16
    %v7675 = vrot.slane %v7673, 7
    %v7676 = vshll.u32 %v7572, 16
    %v7678 = vor.u32 %v7675, %v7676
    %v7679 = vrot.slane %v7675, 4
    %v7681 = vshrl.u32 %v7573, 16
    %v7683 = vrot.slane %v7681, 7
    %v7684 = vshll.u32 %v7573, 16
    %v7686 = vor.u32 %v7683, %v7684
    %v7687 = vrot.slane %v7683, 4
    %v7689 = vshrl.u32 %v7574, 16
    %v7691 = vrot.slane %v7689, 7
    %v7692 = vshll.u32 %v7574, 16
    %v7694 = vor.u32 %v7691, %v7692
    %v7695 = vrot.slane %v7691, 4
    %v7697 = vshrl.u32 %v7575, 16
    %v7699 = vrot.slane %v7697, 7
    %v7700 = vshll.u32 %v7575, 16
    %v7702 = vor.u32 %v7699, %v7700
    %v7703 = vrot.slane %v7699, 4
    %v7736 = vld [vmem:[%s2938] sm:$0xf]
    %v7737 = vsel %vm539, %v7582, %v7736
    %7738 = vst [vmem:[%s2938] sm:$0xf] %v7737
    %v7739 = vld [vmem:[%s2938 + $0x4] sm:$0x1]
    %v7740 = vsel %vm29, %v7583, %v7739
    %7741 = vst [vmem:[%s2938 + $0x4] sm:$0x1] %v7740
    %v7742 = vld [vmem:[%s2938 + $0x8] sm:$0xf]
    %v7743 = vsel %vm539, %v7590, %v7742
    %7744 = vst [vmem:[%s2938 + $0x8] sm:$0xf] %v7743
    %v7745 = vld [vmem:[%s2938 + $0xc] sm:$0x1]
    %v7746 = vsel %vm29, %v7591, %v7745
    %7747 = vst [vmem:[%s2938 + $0xc] sm:$0x1] %v7746
    %v7748 = vld [vmem:[%s2938 + $0x10] sm:$0xf]
    %v7749 = vsel %vm539, %v7598, %v7748
    %7750 = vst [vmem:[%s2938 + $0x10] sm:$0xf] %v7749
    %v7751 = vld [vmem:[%s2938 + $0x14] sm:$0x1]
    %v7752 = vsel %vm29, %v7599, %v7751
    %7753 = vst [vmem:[%s2938 + $0x14] sm:$0x1] %v7752
    %v7754 = vld [vmem:[%s2938 + $0x18] sm:$0xf]
    %v7755 = vsel %vm539, %v7606, %v7754
    %7756 = vst [vmem:[%s2938 + $0x18] sm:$0xf] %v7755
    %v7757 = vld [vmem:[%s2938 + $0x1c] sm:$0x1]
    %v7758 = vsel %vm29, %v7607, %v7757
    %7759 = vst [vmem:[%s2938 + $0x1c] sm:$0x1] %v7758
    %v7760 = vld [vmem:[%s2938 + $0x20] sm:$0xf]
    %v7761 = vsel %vm539, %v7614, %v7760
    %7762 = vst [vmem:[%s2938 + $0x20] sm:$0xf] %v7761
    %v7763 = vld [vmem:[%s2938 + $0x24] sm:$0x1]
    %v7764 = vsel %vm29, %v7615, %v7763
    %7765 = vst [vmem:[%s2938 + $0x24] sm:$0x1] %v7764
    %v7766 = vld [vmem:[%s2938 + $0x28] sm:$0xf]
    %v7767 = vsel %vm539, %v7622, %v7766
    %7768 = vst [vmem:[%s2938 + $0x28] sm:$0xf] %v7767
    %v7769 = vld [vmem:[%s2938 + $0x2c] sm:$0x1]
    %v7770 = vsel %vm29, %v7623, %v7769
    %7771 = vst [vmem:[%s2938 + $0x2c] sm:$0x1] %v7770
    %v7772 = vld [vmem:[%s2938 + $0x30] sm:$0xf]
    %v7773 = vsel %vm539, %v7630, %v7772
    %7774 = vst [vmem:[%s2938 + $0x30] sm:$0xf] %v7773
    %v7775 = vld [vmem:[%s2938 + $0x34] sm:$0x1]
    %v7776 = vsel %vm29, %v7631, %v7775
    %7777 = vst [vmem:[%s2938 + $0x34] sm:$0x1] %v7776
    %v7778 = vld [vmem:[%s2938 + $0x38] sm:$0xf]
    %v7779 = vsel %vm539, %v7638, %v7778
    %7780 = vst [vmem:[%s2938 + $0x38] sm:$0xf] %v7779
    %v7781 = vld [vmem:[%s2938 + $0x3c] sm:$0x1]
    %v7782 = vsel %vm29, %v7639, %v7781
    %7783 = vst [vmem:[%s2938 + $0x3c] sm:$0x1] %v7782
    %v7784 = vld [vmem:[%s2938 + $0x50] sm:$0xf]
    %v7785 = vsel %vm539, %v7646, %v7784
    %7786 = vst [vmem:[%s2938 + $0x50] sm:$0xf] %v7785
    %v7787 = vld [vmem:[%s2938 + $0x54] sm:$0x1]
    %v7788 = vsel %vm29, %v7647, %v7787
    %7789 = vst [vmem:[%s2938 + $0x54] sm:$0x1] %v7788
    %v7790 = vld [vmem:[%s2938 + $0x58] sm:$0xf]
    %v7791 = vsel %vm539, %v7654, %v7790
    %7792 = vst [vmem:[%s2938 + $0x58] sm:$0xf] %v7791
    %v7793 = vld [vmem:[%s2938 + $0x5c] sm:$0x1]
    %v7794 = vsel %vm29, %v7655, %v7793
    %7795 = vst [vmem:[%s2938 + $0x5c] sm:$0x1] %v7794
    %v7796 = vld [vmem:[%s2938 + $0x60] sm:$0xf]
    %v7797 = vsel %vm539, %v7662, %v7796
    %7798 = vst [vmem:[%s2938 + $0x60] sm:$0xf] %v7797
    %v7799 = vld [vmem:[%s2938 + $0x64] sm:$0x1]
    %v7800 = vsel %vm29, %v7663, %v7799
    %7801 = vst [vmem:[%s2938 + $0x64] sm:$0x1] %v7800
    %v7802 = vld [vmem:[%s2938 + $0x68] sm:$0xf]
    %v7803 = vsel %vm539, %v7670, %v7802
    %7804 = vst [vmem:[%s2938 + $0x68] sm:$0xf] %v7803
    %v7805 = vld [vmem:[%s2938 + $0x6c] sm:$0x1]
    %v7806 = vsel %vm29, %v7671, %v7805
    %7807 = vst [vmem:[%s2938 + $0x6c] sm:$0x1] %v7806
    %v7808 = vld [vmem:[%s2938 + $0x70] sm:$0xf]
    %v7809 = vsel %vm539, %v7678, %v7808
    %7810 = vst [vmem:[%s2938 + $0x70] sm:$0xf] %v7809
    %v7811 = vld [vmem:[%s2938 + $0x74] sm:$0x1]
    %v7812 = vsel %vm29, %v7679, %v7811
    %7813 = vst [vmem:[%s2938 + $0x74] sm:$0x1] %v7812
    %v7814 = vld [vmem:[%s2938 + $0x78] sm:$0xf]
    %v7815 = vsel %vm539, %v7686, %v7814
    %7816 = vst [vmem:[%s2938 + $0x78] sm:$0xf] %v7815
    %v7817 = vld [vmem:[%s2938 + $0x7c] sm:$0x1]
    %v7818 = vsel %vm29, %v7687, %v7817
    %7819 = vst [vmem:[%s2938 + $0x7c] sm:$0x1] %v7818
    %v7820 = vld [vmem:[%s2938 + $0x80] sm:$0xf]
    %v7821 = vsel %vm539, %v7694, %v7820
    %7822 = vst [vmem:[%s2938 + $0x80] sm:$0xf] %v7821
    %v7823 = vld [vmem:[%s2938 + $0x84] sm:$0x1]
    %v7824 = vsel %vm29, %v7695, %v7823
    %7825 = vst [vmem:[%s2938 + $0x84] sm:$0x1] %v7824
    %v7826 = vld [vmem:[%s2938 + $0x88] sm:$0xf]
    %v7827 = vsel %vm539, %v7702, %v7826
    %7828 = vst [vmem:[%s2938 + $0x88] sm:$0xf] %v7827
    %v7829 = vld [vmem:[%s2938 + $0x8c] sm:$0x1]
    %v7830 = vsel %vm29, %v7703, %v7829
    %7831 = vst [vmem:[%s2938 + $0x8c] sm:$0x1] %v7830
    %v7832 = vld [vmem:[#allocation3] sm:$0xf]
    %v7833 = vld [vmem:[#allocation3 + $0x8] sm:$0xf]
    %v7834 = vld [vmem:[#allocation3 + $0x10] sm:$0xf]
    %v7835 = vld [vmem:[#allocation3 + $0x18] sm:$0xf]
    %v7836 = vld [vmem:[#allocation3 + $0x20] sm:$0xf]
    %v7837 = vld [vmem:[#allocation3 + $0x28] sm:$0xf]
    %v7838 = vld [vmem:[#allocation3 + $0x30] sm:$0xf]
    %v7839 = vld [vmem:[#allocation3 + $0x38] sm:$0xf]
    %v7840 = vld [vmem:[#allocation3 + $0x50] sm:$0xf]
    %v7841 = vld [vmem:[#allocation3 + $0x58] sm:$0xf]
    %v7842 = vld [vmem:[#allocation3 + $0x60] sm:$0xf]
    %v7843 = vld [vmem:[#allocation3 + $0x68] sm:$0xf]
    %v7844 = vld [vmem:[#allocation3 + $0x70] sm:$0xf]
    %v7845 = vld [vmem:[#allocation3 + $0x78] sm:$0xf]
    %v7846 = vld [vmem:[#allocation3 + $0x80] sm:$0xf]
    %v7847 = vld [vmem:[#allocation3 + $0x88] sm:$0xf]
    %v7848 = vld [vmem:[#allocation3 + $0x4] sm:$0x1]
    %v7849 = vld [vmem:[#allocation3 + $0xc] sm:$0x1]
    %v7850 = vld [vmem:[#allocation3 + $0x14] sm:$0x1]
    %v7851 = vld [vmem:[#allocation3 + $0x1c] sm:$0x1]
    %v7852 = vld [vmem:[#allocation3 + $0x24] sm:$0x1]
    %v7853 = vld [vmem:[#allocation3 + $0x2c] sm:$0x1]
    %v7854 = vld [vmem:[#allocation3 + $0x34] sm:$0x1]
    %v7855 = vld [vmem:[#allocation3 + $0x3c] sm:$0x1]
    %v7856 = vld [vmem:[#allocation3 + $0x54] sm:$0x1]
    %v7857 = vld [vmem:[#allocation3 + $0x5c] sm:$0x1]
    %v7858 = vld [vmem:[#allocation3 + $0x64] sm:$0x1]
    %v7859 = vld [vmem:[#allocation3 + $0x6c] sm:$0x1]
    %v7860 = vld [vmem:[#allocation3 + $0x74] sm:$0x1]
    %v7861 = vld [vmem:[#allocation3 + $0x7c] sm:$0x1]
    %v7862 = vld [vmem:[#allocation3 + $0x84] sm:$0x1]
    %v7863 = vld [vmem:[#allocation3 + $0x8c] sm:$0x1]
    %v7864 = vld [vmem:[#allocation3] sm:$0xe]
    %v7865 = vld [vmem:[#allocation3 + $0x8] sm:$0xe]
    %v7866 = vld [vmem:[#allocation3 + $0x10] sm:$0xe]
    %v7867 = vld [vmem:[#allocation3 + $0x18] sm:$0xe]
    %v7868 = vld [vmem:[#allocation3 + $0x20] sm:$0xe]
    %v7869 = vld [vmem:[#allocation3 + $0x28] sm:$0xe]
    %v7870 = vld [vmem:[#allocation3 + $0x30] sm:$0xe]
    %v7871 = vld [vmem:[#allocation3 + $0x38] sm:$0xe]
    %v7872 = vld [vmem:[#allocation3 + $0x50] sm:$0xe]
    %v7873 = vld [vmem:[#allocation3 + $0x58] sm:$0xe]
    %v7874 = vld [vmem:[#allocation3 + $0x60] sm:$0xe]
    %v7875 = vld [vmem:[#allocation3 + $0x68] sm:$0xe]
    %v7876 = vld [vmem:[#allocation3 + $0x70] sm:$0xe]
    %v7877 = vld [vmem:[#allocation3 + $0x78] sm:$0xe]
    %v7878 = vld [vmem:[#allocation3 + $0x80] sm:$0xe]
    %v7879 = vld [vmem:[#allocation3 + $0x88] sm:$0xe]
    %v7912 = vunpack.c.l.b16 %v7832
    %v7913 = vunpack.c.l.b16 %v7848
    %v7914 = vunpack.c.l.b16 %v7833
    %v7915 = vunpack.c.l.b16 %v7849
    %v7916 = vunpack.c.l.b16 %v7834
    %v7917 = vunpack.c.l.b16 %v7850
    %v7918 = vunpack.c.l.b16 %v7835
    %v7919 = vunpack.c.l.b16 %v7851
    %v7920 = vunpack.c.l.b16 %v7836
    %v7921 = vunpack.c.l.b16 %v7852
    %v7922 = vunpack.c.l.b16 %v7837
    %v7923 = vunpack.c.l.b16 %v7853
    %v7924 = vunpack.c.l.b16 %v7838
    %v7925 = vunpack.c.l.b16 %v7854
    %v7926 = vunpack.c.l.b16 %v7839
    %v7927 = vunpack.c.l.b16 %v7855
    %v7928 = vunpack.c.l.b16 %v7840
    %v7929 = vunpack.c.l.b16 %v7856
    %v7930 = vunpack.c.l.b16 %v7841
    %v7931 = vunpack.c.l.b16 %v7857
    %v7932 = vunpack.c.l.b16 %v7842
    %v7933 = vunpack.c.l.b16 %v7858
    %v7934 = vunpack.c.l.b16 %v7843
    %v7935 = vunpack.c.l.b16 %v7859
    %v7936 = vunpack.c.l.b16 %v7844
    %v7937 = vunpack.c.l.b16 %v7860
    %v7938 = vunpack.c.l.b16 %v7845
    %v7939 = vunpack.c.l.b16 %v7861
    %v7940 = vunpack.c.l.b16 %v7846
    %v7941 = vunpack.c.l.b16 %v7862
    %v7942 = vunpack.c.l.b16 %v7847
    %v7943 = vunpack.c.l.b16 %v7863
    %v7944 = vpack.c.b16 %v7913, %v7912
    %v7945 = vpack.c.b16 %v7915, %v7914
    %v7946 = vpack.c.b16 %v7917, %v7916
    %v7947 = vpack.c.b16 %v7919, %v7918
    %v7948 = vpack.c.b16 %v7921, %v7920
    %v7949 = vpack.c.b16 %v7923, %v7922
    %v7950 = vpack.c.b16 %v7925, %v7924
    %v7951 = vpack.c.b16 %v7927, %v7926
    %v7952 = vpack.c.b16 %v7929, %v7928
    %v7953 = vpack.c.b16 %v7931, %v7930
    %v7954 = vpack.c.b16 %v7933, %v7932
    %v7955 = vpack.c.b16 %v7935, %v7934
    %v7956 = vpack.c.b16 %v7937, %v7936
    %v7957 = vpack.c.b16 %v7939, %v7938
    %v7958 = vpack.c.b16 %v7941, %v7940
    %v7959 = vpack.c.b16 %v7943, %v7942
    %v7961 = vshrl.u32 %v7944, 16
    %v7963 = vshll.u32 %v7944, 16
    %v7965 = vrot.slane %v7963, 1
    %v7966 = vor.u32 %v7961, %v7965
    %v7968 = vshrl.u32 %v7945, 16
    %v7970 = vshll.u32 %v7945, 16
    %v7972 = vrot.slane %v7970, 1
    %v7973 = vor.u32 %v7968, %v7972
    %v7975 = vshrl.u32 %v7946, 16
    %v7977 = vshll.u32 %v7946, 16
    %v7979 = vrot.slane %v7977, 1
    %v7980 = vor.u32 %v7975, %v7979
    %v7982 = vshrl.u32 %v7947, 16
    %v7984 = vshll.u32 %v7947, 16
    %v7986 = vrot.slane %v7984, 1
    %v7987 = vor.u32 %v7982, %v7986
    %v7989 = vshrl.u32 %v7948, 16
    %v7991 = vshll.u32 %v7948, 16
    %v7993 = vrot.slane %v7991, 1
    %v7994 = vor.u32 %v7989, %v7993
    %v7996 = vshrl.u32 %v7949, 16
    %v7998 = vshll.u32 %v7949, 16
    %v8000 = vrot.slane %v7998, 1
    %v8001 = vor.u32 %v7996, %v8000
    %v8003 = vshrl.u32 %v7950, 16
    %v8005 = vshll.u32 %v7950, 16
    %v8007 = vrot.slane %v8005, 1
    %v8008 = vor.u32 %v8003, %v8007
    %v8010 = vshrl.u32 %v7951, 16
    %v8012 = vshll.u32 %v7951, 16
    %v8014 = vrot.slane %v8012, 1
    %v8015 = vor.u32 %v8010, %v8014
    %v8017 = vshrl.u32 %v7952, 16
    %v8019 = vshll.u32 %v7952, 16
    %v8021 = vrot.slane %v8019, 1
    %v8022 = vor.u32 %v8017, %v8021
    %v8024 = vshrl.u32 %v7953, 16
    %v8026 = vshll.u32 %v7953, 16
    %v8028 = vrot.slane %v8026, 1
    %v8029 = vor.u32 %v8024, %v8028
    %v8031 = vshrl.u32 %v7954, 16
    %v8033 = vshll.u32 %v7954, 16
    %v8035 = vrot.slane %v8033, 1
    %v8036 = vor.u32 %v8031, %v8035
    %v8038 = vshrl.u32 %v7955, 16
    %v8040 = vshll.u32 %v7955, 16
    %v8042 = vrot.slane %v8040, 1
    %v8043 = vor.u32 %v8038, %v8042
    %v8045 = vshrl.u32 %v7956, 16
    %v8047 = vshll.u32 %v7956, 16
    %v8049 = vrot.slane %v8047, 1
    %v8050 = vor.u32 %v8045, %v8049
    %v8052 = vshrl.u32 %v7957, 16
    %v8054 = vshll.u32 %v7957, 16
    %v8056 = vrot.slane %v8054, 1
    %v8057 = vor.u32 %v8052, %v8056
    %v8059 = vshrl.u32 %v7958, 16
    %v8061 = vshll.u32 %v7958, 16
    %v8063 = vrot.slane %v8061, 1
    %v8064 = vor.u32 %v8059, %v8063
    %v8066 = vshrl.u32 %v7959, 16
    %v8068 = vshll.u32 %v7959, 16
    %v8070 = vrot.slane %v8068, 1
    %v8071 = vor.u32 %v8066, %v8070
    %8072 = vrot.lane.b32.xlu0 %v7966, 64
    %v8073 = vpop.permute.xlu0 %8072
    %8074 = vrot.lane.b32.xlu0 %v7973, 64
    %v8075 = vpop.permute.xlu0 %8074
    %8076 = vrot.lane.b32.xlu0 %v7980, 64
    %v8077 = vpop.permute.xlu0 %8076
    %8078 = vrot.lane.b32.xlu0 %v7987, 64
    %v8079 = vpop.permute.xlu0 %8078
    %8080 = vrot.lane.b32.xlu0 %v7994, 64
    %v8081 = vpop.permute.xlu0 %8080
    %8082 = vrot.lane.b32.xlu0 %v8001, 64
    %v8083 = vpop.permute.xlu0 %8082
    %8084 = vrot.lane.b32.xlu0 %v8008, 64
    %v8085 = vpop.permute.xlu0 %8084
    %8086 = vrot.lane.b32.xlu0 %v8015, 64
    %v8087 = vpop.permute.xlu0 %8086
    %8088 = vrot.lane.b32.xlu0 %v8022, 64
    %v8089 = vpop.permute.xlu0 %8088
    %8090 = vrot.lane.b32.xlu0 %v8029, 64
    %v8091 = vpop.permute.xlu0 %8090
    %8092 = vrot.lane.b32.xlu0 %v8036, 64
    %v8093 = vpop.permute.xlu0 %8092
    %8094 = vrot.lane.b32.xlu0 %v8043, 64
    %v8095 = vpop.permute.xlu0 %8094
    %8096 = vrot.lane.b32.xlu0 %v8050, 64
    %v8097 = vpop.permute.xlu0 %8096
    %8098 = vrot.lane.b32.xlu0 %v8057, 64
    %v8099 = vpop.permute.xlu0 %8098
    %8100 = vrot.lane.b32.xlu0 %v8064, 64
    %v8101 = vpop.permute.xlu0 %8100
    %8102 = vrot.lane.b32.xlu0 %v8071, 64
    %v8103 = vpop.permute.xlu0 %8102
    %v8120 = vunpack.c.l.b16 %v7864
    %v8121 = vunpack.c.l.b16 %v7865
    %v8122 = vunpack.c.l.b16 %v7866
    %v8123 = vunpack.c.l.b16 %v7867
    %v8124 = vunpack.c.l.b16 %v7868
    %v8125 = vunpack.c.l.b16 %v7869
    %v8126 = vunpack.c.l.b16 %v7870
    %v8127 = vunpack.c.l.b16 %v7871
    %v8128 = vunpack.c.l.b16 %v7872
    %v8129 = vunpack.c.l.b16 %v7873
    %v8130 = vunpack.c.l.b16 %v7874
    %v8131 = vunpack.c.l.b16 %v7875
    %v8132 = vunpack.c.l.b16 %v7876
    %v8133 = vunpack.c.l.b16 %v7877
    %v8134 = vunpack.c.l.b16 %v7878
    %v8135 = vunpack.c.l.b16 %v7879
    %v8136 = vpack.c.b16 %v7913, %v8120
    %v8137 = vpack.c.b16 %v7915, %v8121
    %v8138 = vpack.c.b16 %v7917, %v8122
    %v8139 = vpack.c.b16 %v7919, %v8123
    %v8140 = vpack.c.b16 %v7921, %v8124
    %v8141 = vpack.c.b16 %v7923, %v8125
    %v8142 = vpack.c.b16 %v7925, %v8126
    %v8143 = vpack.c.b16 %v7927, %v8127
    %v8144 = vpack.c.b16 %v7929, %v8128
    %v8145 = vpack.c.b16 %v7931, %v8129
    %v8146 = vpack.c.b16 %v7933, %v8130
    %v8147 = vpack.c.b16 %v7935, %v8131
    %v8148 = vpack.c.b16 %v7937, %v8132
    %v8149 = vpack.c.b16 %v7939, %v8133
    %v8150 = vpack.c.b16 %v7941, %v8134
    %v8151 = vpack.c.b16 %v7943, %v8135
    %v8152 = vrot.slane %v8136, 1
    %v8153 = vrot.slane %v8137, 1
    %v8154 = vrot.slane %v8138, 1
    %v8155 = vrot.slane %v8139, 1
    %v8156 = vrot.slane %v8140, 1
    %v8157 = vrot.slane %v8141, 1
    %v8158 = vrot.slane %v8142, 1
    %v8159 = vrot.slane %v8143, 1
    %v8160 = vrot.slane %v8144, 1
    %v8161 = vrot.slane %v8145, 1
    %v8162 = vrot.slane %v8146, 1
    %v8163 = vrot.slane %v8147, 1
    %v8164 = vrot.slane %v8148, 1
    %v8165 = vrot.slane %v8149, 1
    %v8166 = vrot.slane %v8150, 1
    %v8167 = vrot.slane %v8151, 1
    %v8170 = vsel %vm972, %v7832, %v8073
    %v8173 = vsel %vm972, %v7833, %v8075
    %v8176 = vsel %vm972, %v7834, %v8077
    %v8179 = vsel %vm972, %v7835, %v8079
    %v8182 = vsel %vm972, %v7836, %v8081
    %v8185 = vsel %vm972, %v7837, %v8083
    %v8188 = vsel %vm972, %v7838, %v8085
    %v8191 = vsel %vm972, %v7839, %v8087
    %v8194 = vsel %vm972, %v7840, %v8089
    %v8197 = vsel %vm972, %v7841, %v8091
    %v8200 = vsel %vm972, %v7842, %v8093
    %v8203 = vsel %vm972, %v7843, %v8095
    %v8206 = vsel %vm972, %v7844, %v8097
    %v8209 = vsel %vm972, %v7845, %v8099
    %v8212 = vsel %vm972, %v7846, %v8101
    %v8215 = vsel %vm972, %v7847, %v8103
    %v8232 = vunpack.c.l.b16 %v8170
    %v8233 = vunpack.c.l.b16 %v8152
    %v8234 = vunpack.c.l.b16 %v8173
    %v8235 = vunpack.c.l.b16 %v8153
    %v8236 = vunpack.c.l.b16 %v8176
    %v8237 = vunpack.c.l.b16 %v8154
    %v8238 = vunpack.c.l.b16 %v8179
    %v8239 = vunpack.c.l.b16 %v8155
    %v8240 = vunpack.c.l.b16 %v8182
    %v8241 = vunpack.c.l.b16 %v8156
    %v8242 = vunpack.c.l.b16 %v8185
    %v8243 = vunpack.c.l.b16 %v8157
    %v8244 = vunpack.c.l.b16 %v8188
    %v8245 = vunpack.c.l.b16 %v8158
    %v8246 = vunpack.c.l.b16 %v8191
    %v8247 = vunpack.c.l.b16 %v8159
    %v8248 = vunpack.c.l.b16 %v8194
    %v8249 = vunpack.c.l.b16 %v8160
    %v8250 = vunpack.c.l.b16 %v8197
    %v8251 = vunpack.c.l.b16 %v8161
    %v8252 = vunpack.c.l.b16 %v8200
    %v8253 = vunpack.c.l.b16 %v8162
    %v8254 = vunpack.c.l.b16 %v8203
    %v8255 = vunpack.c.l.b16 %v8163
    %v8256 = vunpack.c.l.b16 %v8206
    %v8257 = vunpack.c.l.b16 %v8164
    %v8258 = vunpack.c.l.b16 %v8209
    %v8259 = vunpack.c.l.b16 %v8165
    %v8260 = vunpack.c.l.b16 %v8212
    %v8261 = vunpack.c.l.b16 %v8166
    %v8262 = vunpack.c.l.b16 %v8215
    %v8263 = vunpack.c.l.b16 %v8167
    %s8264 = scalar_lea.vmem %s1, 864
    %v8265 = vld [vmem:[%s8264] sm:$0xf]
    %v8266 = vld [vmem:[%s8264 + $0x4] sm:$0xf]
    %v8267 = vld [vmem:[%s8264 + $0x8] sm:$0xf]
    %v8268 = vld [vmem:[%s8264 + $0xc] sm:$0xf]
    %v8269 = vld [vmem:[%s8264 + $0x10] sm:$0xf]
    %v8270 = vld [vmem:[%s8264 + $0x14] sm:$0xf]
    %v8271 = vld [vmem:[%s8264 + $0x18] sm:$0xf]
    %v8272 = vld [vmem:[%s8264 + $0x1c] sm:$0xf]
    %v8273 = vld [vmem:[%s8264 + $0x20] sm:$0xf]
    %v8274 = vld [vmem:[%s8264 + $0x24] sm:$0xf]
    %v8275 = vld [vmem:[%s8264 + $0x28] sm:$0xf]
    %v8276 = vld [vmem:[%s8264 + $0x2c] sm:$0xf]
    %v8277 = vld [vmem:[%s8264 + $0x30] sm:$0xf]
    %v8278 = vld [vmem:[%s8264 + $0x34] sm:$0xf]
    %v8279 = vld [vmem:[%s8264 + $0x38] sm:$0xf]
    %v8280 = vld [vmem:[%s8264 + $0x3c] sm:$0xf]
    %v8281 = vld [vmem:[%s8264 + $0x40] sm:$0xf]
    %v8282 = vld [vmem:[%s8264 + $0x44] sm:$0xf]
    %v8283 = vld [vmem:[%s8264 + $0x48] sm:$0xf]
    %v8284 = vld [vmem:[%s8264 + $0x4c] sm:$0xf]
    %v8285 = vld [vmem:[%s8264 + $0x50] sm:$0xf]
    %v8286 = vld [vmem:[%s8264 + $0x54] sm:$0xf]
    %v8287 = vld [vmem:[%s8264 + $0x58] sm:$0xf]
    %v8288 = vld [vmem:[%s8264 + $0x5c] sm:$0xf]
    %v8289 = vld [vmem:[%s2938] sm:$0xf]
    %v8290 = vld [vmem:[%s2938 + $0x8] sm:$0xf]
    %v8291 = vld [vmem:[%s2938 + $0x10] sm:$0xf]
    %v8292 = vld [vmem:[%s2938 + $0x18] sm:$0xf]
    %v8293 = vld [vmem:[%s2938 + $0x20] sm:$0xf]
    %v8294 = vld [vmem:[%s2938 + $0x28] sm:$0xf]
    %v8295 = vld [vmem:[%s2938 + $0x30] sm:$0xf]
    %v8296 = vld [vmem:[%s2938 + $0x38] sm:$0xf]
    %v8297 = vld [vmem:[%s2938 + $0x50] sm:$0xf]
    %v8298 = vld [vmem:[%s2938 + $0x58] sm:$0xf]
    %v8299 = vld [vmem:[%s2938 + $0x60] sm:$0xf]
    %v8300 = vld [vmem:[%s2938 + $0x68] sm:$0xf]
    %v8301 = vld [vmem:[%s2938 + $0x70] sm:$0xf]
    %v8302 = vld [vmem:[%s2938 + $0x78] sm:$0xf]
    %v8303 = vld [vmem:[%s2938 + $0x80] sm:$0xf]
    %v8304 = vld [vmem:[%s2938 + $0x88] sm:$0xf]
    %v8305 = vld [vmem:[%s2938 + $0x4] sm:$0x1]
    %v8306 = vld [vmem:[%s2938 + $0xc] sm:$0x1]
    %v8307 = vld [vmem:[%s2938 + $0x14] sm:$0x1]
    %v8308 = vld [vmem:[%s2938 + $0x1c] sm:$0x1]
    %v8309 = vld [vmem:[%s2938 + $0x24] sm:$0x1]
    %v8310 = vld [vmem:[%s2938 + $0x2c] sm:$0x1]
    %v8311 = vld [vmem:[%s2938 + $0x34] sm:$0x1]
    %v8312 = vld [vmem:[%s2938 + $0x3c] sm:$0x1]
    %v8313 = vld [vmem:[%s2938 + $0x54] sm:$0x1]
    %v8314 = vld [vmem:[%s2938 + $0x5c] sm:$0x1]
    %v8315 = vld [vmem:[%s2938 + $0x64] sm:$0x1]
    %v8316 = vld [vmem:[%s2938 + $0x6c] sm:$0x1]
    %v8317 = vld [vmem:[%s2938 + $0x74] sm:$0x1]
    %v8318 = vld [vmem:[%s2938 + $0x7c] sm:$0x1]
    %v8319 = vld [vmem:[%s2938 + $0x84] sm:$0x1]
    %v8320 = vld [vmem:[%s2938 + $0x8c] sm:$0x1]
    %v8321 = vld [vmem:[%s2938] sm:$0xe]
    %v8322 = vld [vmem:[%s2938 + $0x8] sm:$0xe]
    %v8323 = vld [vmem:[%s2938 + $0x10] sm:$0xe]
    %v8324 = vld [vmem:[%s2938 + $0x18] sm:$0xe]
    %v8325 = vld [vmem:[%s2938 + $0x20] sm:$0xe]
    %v8326 = vld [vmem:[%s2938 + $0x28] sm:$0xe]
    %v8327 = vld [vmem:[%s2938 + $0x30] sm:$0xe]
    %v8328 = vld [vmem:[%s2938 + $0x38] sm:$0xe]
    %v8329 = vld [vmem:[%s2938 + $0x50] sm:$0xe]
    %v8330 = vld [vmem:[%s2938 + $0x58] sm:$0xe]
    %v8331 = vld [vmem:[%s2938 + $0x60] sm:$0xe]
    %v8332 = vld [vmem:[%s2938 + $0x68] sm:$0xe]
    %v8333 = vld [vmem:[%s2938 + $0x70] sm:$0xe]
    %v8334 = vld [vmem:[%s2938 + $0x78] sm:$0xe]
    %v8335 = vld [vmem:[%s2938 + $0x80] sm:$0xe]
    %v8336 = vld [vmem:[%s2938 + $0x88] sm:$0xe]
    %v8369 = vunpack.c.l.b16 %v8289
    %v8370 = vunpack.c.l.b16 %v8305
    %v8371 = vunpack.c.l.b16 %v8290
    %v8372 = vunpack.c.l.b16 %v8306
    %v8373 = vunpack.c.l.b16 %v8291
    %v8374 = vunpack.c.l.b16 %v8307
    %v8375 = vunpack.c.l.b16 %v8292
    %v8376 = vunpack.c.l.b16 %v8308
    %v8377 = vunpack.c.l.b16 %v8293
    %v8378 = vunpack.c.l.b16 %v8309
    %v8379 = vunpack.c.l.b16 %v8294
    %v8380 = vunpack.c.l.b16 %v8310
    %v8381 = vunpack.c.l.b16 %v8295
    %v8382 = vunpack.c.l.b16 %v8311
    %v8383 = vunpack.c.l.b16 %v8296
    %v8384 = vunpack.c.l.b16 %v8312
    %v8385 = vunpack.c.l.b16 %v8297
    %v8386 = vunpack.c.l.b16 %v8313
    %v8387 = vunpack.c.l.b16 %v8298
    %v8388 = vunpack.c.l.b16 %v8314
    %v8389 = vunpack.c.l.b16 %v8299
    %v8390 = vunpack.c.l.b16 %v8315
    %v8391 = vunpack.c.l.b16 %v8300
    %v8392 = vunpack.c.l.b16 %v8316
    %v8393 = vunpack.c.l.b16 %v8301
    %v8394 = vunpack.c.l.b16 %v8317
    %v8395 = vunpack.c.l.b16 %v8302
    %v8396 = vunpack.c.l.b16 %v8318
    %v8397 = vunpack.c.l.b16 %v8303
    %v8398 = vunpack.c.l.b16 %v8319
    %v8399 = vunpack.c.l.b16 %v8304
    %v8400 = vunpack.c.l.b16 %v8320
    %v8401 = vpack.c.b16 %v8370, %v8369
    %v8402 = vpack.c.b16 %v8372, %v8371
    %v8403 = vpack.c.b16 %v8374, %v8373
    %v8404 = vpack.c.b16 %v8376, %v8375
    %v8405 = vpack.c.b16 %v8378, %v8377
    %v8406 = vpack.c.b16 %v8380, %v8379
    %v8407 = vpack.c.b16 %v8382, %v8381
    %v8408 = vpack.c.b16 %v8384, %v8383
    %v8409 = vpack.c.b16 %v8386, %v8385
    %v8410 = vpack.c.b16 %v8388, %v8387
    %v8411 = vpack.c.b16 %v8390, %v8389
    %v8412 = vpack.c.b16 %v8392, %v8391
    %v8413 = vpack.c.b16 %v8394, %v8393
    %v8414 = vpack.c.b16 %v8396, %v8395
    %v8415 = vpack.c.b16 %v8398, %v8397
    %v8416 = vpack.c.b16 %v8400, %v8399
    %v8418 = vshrl.u32 %v8401, 16
    %v8420 = vshll.u32 %v8401, 16
    %v8422 = vrot.slane %v8420, 1
    %v8423 = vor.u32 %v8418, %v8422
    %v8425 = vshrl.u32 %v8402, 16
    %v8427 = vshll.u32 %v8402, 16
    %v8429 = vrot.slane %v8427, 1
    %v8430 = vor.u32 %v8425, %v8429
    %v8432 = vshrl.u32 %v8403, 16
    %v8434 = vshll.u32 %v8403, 16
    %v8436 = vrot.slane %v8434, 1
    %v8437 = vor.u32 %v8432, %v8436
    %v8439 = vshrl.u32 %v8404, 16
    %v8441 = vshll.u32 %v8404, 16
    %v8443 = vrot.slane %v8441, 1
    %v8444 = vor.u32 %v8439, %v8443
    %v8446 = vshrl.u32 %v8405, 16
    %v8448 = vshll.u32 %v8405, 16
    %v8450 = vrot.slane %v8448, 1
    %v8451 = vor.u32 %v8446, %v8450
    %v8453 = vshrl.u32 %v8406, 16
    %v8455 = vshll.u32 %v8406, 16
    %v8457 = vrot.slane %v8455, 1
    %v8458 = vor.u32 %v8453, %v8457
    %v8460 = vshrl.u32 %v8407, 16
    %v8462 = vshll.u32 %v8407, 16
    %v8464 = vrot.slane %v8462, 1
    %v8465 = vor.u32 %v8460, %v8464
    %v8467 = vshrl.u32 %v8408, 16
    %v8469 = vshll.u32 %v8408, 16
    %v8471 = vrot.slane %v8469, 1
    %v8472 = vor.u32 %v8467, %v8471
    %v8474 = vshrl.u32 %v8409, 16
    %v8476 = vshll.u32 %v8409, 16
    %v8478 = vrot.slane %v8476, 1
    %v8479 = vor.u32 %v8474, %v8478
    %v8481 = vshrl.u32 %v8410, 16
    %v8483 = vshll.u32 %v8410, 16
    %v8485 = vrot.slane %v8483, 1
    %v8486 = vor.u32 %v8481, %v8485
    %v8488 = vshrl.u32 %v8411, 16
    %v8490 = vshll.u32 %v8411, 16
    %v8492 = vrot.slane %v8490, 1
    %v8493 = vor.u32 %v8488, %v8492
    %v8495 = vshrl.u32 %v8412, 16
    %v8497 = vshll.u32 %v8412, 16
    %v8499 = vrot.slane %v8497, 1
    %v8500 = vor.u32 %v8495, %v8499
    %v8502 = vshrl.u32 %v8413, 16
    %v8504 = vshll.u32 %v8413, 16
    %v8506 = vrot.slane %v8504, 1
    %v8507 = vor.u32 %v8502, %v8506
    %v8509 = vshrl.u32 %v8414, 16
    %v8511 = vshll.u32 %v8414, 16
    %v8513 = vrot.slane %v8511, 1
    %v8514 = vor.u32 %v8509, %v8513
    %v8516 = vshrl.u32 %v8415, 16
    %v8518 = vshll.u32 %v8415, 16
    %v8520 = vrot.slane %v8518, 1
    %v8521 = vor.u32 %v8516, %v8520
    %v8523 = vshrl.u32 %v8416, 16
    %v8525 = vshll.u32 %v8416, 16
    %v8527 = vrot.slane %v8525, 1
    %v8528 = vor.u32 %v8523, %v8527
    %8529 = vrot.lane.b32.xlu0 %v8423, 64
    %v8530 = vpop.permute.xlu0 %8529
    %8531 = vrot.lane.b32.xlu0 %v8430, 64
    %v8532 = vpop.permute.xlu0 %8531
    %8533 = vrot.lane.b32.xlu0 %v8437, 64
    %v8534 = vpop.permute.xlu0 %8533
    %8535 = vrot.lane.b32.xlu0 %v8444, 64
    %v8536 = vpop.permute.xlu0 %8535
    %8537 = vrot.lane.b32.xlu0 %v8451, 64
    %v8538 = vpop.permute.xlu0 %8537
    %8539 = vrot.lane.b32.xlu0 %v8458, 64
    %v8540 = vpop.permute.xlu0 %8539
    %8541 = vrot.lane.b32.xlu0 %v8465, 64
    %v8542 = vpop.permute.xlu0 %8541
    %8543 = vrot.lane.b32.xlu0 %v8472, 64
    %v8544 = vpop.permute.xlu0 %8543
    %8545 = vrot.lane.b32.xlu0 %v8479, 64
    %v8546 = vpop.permute.xlu0 %8545
    %8547 = vrot.lane.b32.xlu0 %v8486, 64
    %v8548 = vpop.permute.xlu0 %8547
    %8549 = vrot.lane.b32.xlu0 %v8493, 64
    %v8550 = vpop.permute.xlu0 %8549
    %8551 = vrot.lane.b32.xlu0 %v8500, 64
    %v8552 = vpop.permute.xlu0 %8551
    %8553 = vrot.lane.b32.xlu0 %v8507, 64
    %v8554 = vpop.permute.xlu0 %8553
    %8555 = vrot.lane.b32.xlu0 %v8514, 64
    %v8556 = vpop.permute.xlu0 %8555
    %8557 = vrot.lane.b32.xlu0 %v8521, 64
    %v8558 = vpop.permute.xlu0 %8557
    %8559 = vrot.lane.b32.xlu0 %v8528, 64
    %v8560 = vpop.permute.xlu0 %8559
    %v8577 = vunpack.c.l.b16 %v8321
    %v8578 = vunpack.c.l.b16 %v8322
    %v8579 = vunpack.c.l.b16 %v8323
    %v8580 = vunpack.c.l.b16 %v8324
    %v8581 = vunpack.c.l.b16 %v8325
    %v8582 = vunpack.c.l.b16 %v8326
    %v8583 = vunpack.c.l.b16 %v8327
    %v8584 = vunpack.c.l.b16 %v8328
    %v8585 = vunpack.c.l.b16 %v8329
    %v8586 = vunpack.c.l.b16 %v8330
    %v8587 = vunpack.c.l.b16 %v8331
    %v8588 = vunpack.c.l.b16 %v8332
    %v8589 = vunpack.c.l.b16 %v8333
    %v8590 = vunpack.c.l.b16 %v8334
    %v8591 = vunpack.c.l.b16 %v8335
    %v8592 = vunpack.c.l.b16 %v8336
    %v8593 = vpack.c.b16 %v8370, %v8577
    %v8594 = vpack.c.b16 %v8372, %v8578
    %v8595 = vpack.c.b16 %v8374, %v8579
    %v8596 = vpack.c.b16 %v8376, %v8580
    %v8597 = vpack.c.b16 %v8378, %v8581
    %v8598 = vpack.c.b16 %v8380, %v8582
    %v8599 = vpack.c.b16 %v8382, %v8583
    %v8600 = vpack.c.b16 %v8384, %v8584
    %v8601 = vpack.c.b16 %v8386, %v8585
    %v8602 = vpack.c.b16 %v8388, %v8586
    %v8603 = vpack.c.b16 %v8390, %v8587
    %v8604 = vpack.c.b16 %v8392, %v8588
    %v8605 = vpack.c.b16 %v8394, %v8589
    %v8606 = vpack.c.b16 %v8396, %v8590
    %v8607 = vpack.c.b16 %v8398, %v8591
    %v8608 = vpack.c.b16 %v8400, %v8592
    %v8609 = vrot.slane %v8593, 1
    %v8610 = vrot.slane %v8594, 1
    %v8611 = vrot.slane %v8595, 1
    %v8612 = vrot.slane %v8596, 1
    %v8613 = vrot.slane %v8597, 1
    %v8614 = vrot.slane %v8598, 1
    %v8615 = vrot.slane %v8599, 1
    %v8616 = vrot.slane %v8600, 1
    %v8617 = vrot.slane %v8601, 1
    %v8618 = vrot.slane %v8602, 1
    %v8619 = vrot.slane %v8603, 1
    %v8620 = vrot.slane %v8604, 1
    %v8621 = vrot.slane %v8605, 1
    %v8622 = vrot.slane %v8606, 1
    %v8623 = vrot.slane %v8607, 1
    %v8624 = vrot.slane %v8608, 1
    %v8627 = vsel %vm972, %v8289, %v8530
    %v8630 = vsel %vm972, %v8290, %v8532
    %v8633 = vsel %vm972, %v8291, %v8534
    %v8636 = vsel %vm972, %v8292, %v8536
    %v8639 = vsel %vm972, %v8293, %v8538
    %v8642 = vsel %vm972, %v8294, %v8540
    %v8645 = vsel %vm972, %v8295, %v8542
    %v8648 = vsel %vm972, %v8296, %v8544
    %v8651 = vsel %vm972, %v8297, %v8546
    %v8654 = vsel %vm972, %v8298, %v8548
    %v8657 = vsel %vm972, %v8299, %v8550
    %v8660 = vsel %vm972, %v8300, %v8552
    %v8663 = vsel %vm972, %v8301, %v8554
    %v8666 = vsel %vm972, %v8302, %v8556
    %v8669 = vsel %vm972, %v8303, %v8558
    %v8672 = vsel %vm972, %v8304, %v8560
    %v8689 = vunpack.c.l.b16 %v8627
    %v8690 = vunpack.c.l.b16 %v8609
    %v8691 = vunpack.c.l.b16 %v8630
    %v8692 = vunpack.c.l.b16 %v8610
    %v8693 = vunpack.c.l.b16 %v8633
    %v8694 = vunpack.c.l.b16 %v8611
    %v8695 = vunpack.c.l.b16 %v8636
    %v8696 = vunpack.c.l.b16 %v8612
    %v8697 = vunpack.c.l.b16 %v8639
    %v8698 = vunpack.c.l.b16 %v8613
    %v8699 = vunpack.c.l.b16 %v8642
    %v8700 = vunpack.c.l.b16 %v8614
    %v8701 = vunpack.c.l.b16 %v8645
    %v8702 = vunpack.c.l.b16 %v8615
    %v8703 = vunpack.c.l.b16 %v8648
    %v8704 = vunpack.c.l.b16 %v8616
    %v8705 = vunpack.c.l.b16 %v8651
    %v8706 = vunpack.c.l.b16 %v8617
    %v8707 = vunpack.c.l.b16 %v8654
    %v8708 = vunpack.c.l.b16 %v8618
    %v8709 = vunpack.c.l.b16 %v8657
    %v8710 = vunpack.c.l.b16 %v8619
    %v8711 = vunpack.c.l.b16 %v8660
    %v8712 = vunpack.c.l.b16 %v8620
    %v8713 = vunpack.c.l.b16 %v8663
    %v8714 = vunpack.c.l.b16 %v8621
    %v8715 = vunpack.c.l.b16 %v8666
    %v8716 = vunpack.c.l.b16 %v8622
    %v8717 = vunpack.c.l.b16 %v8669
    %v8718 = vunpack.c.l.b16 %v8623
    %v8719 = vunpack.c.l.b16 %v8672
    %v8720 = vunpack.c.l.b16 %v8624
    %s8721 = scalar_lea.vmem %s1, 960
    %v8722 = vld [vmem:[%s8721] sm:$0xf]
    %v8723 = vld [vmem:[%s8721 + $0x4] sm:$0xf]
    %v8724 = vld [vmem:[%s8721 + $0x8] sm:$0xf]
    %v8725 = vld [vmem:[%s8721 + $0xc] sm:$0xf]
    %v8726 = vld [vmem:[%s8721 + $0x10] sm:$0xf]
    %v8727 = vld [vmem:[%s8721 + $0x14] sm:$0xf]
    %v8728 = vld [vmem:[%s8721 + $0x18] sm:$0xf]
    %v8729 = vld [vmem:[%s8721 + $0x1c] sm:$0xf]
    %v8730 = vld [vmem:[%s8721 + $0x20] sm:$0xf]
    %v8731 = vld [vmem:[%s8721 + $0x24] sm:$0xf]
    %v8732 = vld [vmem:[%s8721 + $0x28] sm:$0xf]
    %v8733 = vld [vmem:[%s8721 + $0x2c] sm:$0xf]
    %v8734 = vld [vmem:[%s8721 + $0x30] sm:$0xf]
    %v8735 = vld [vmem:[%s8721 + $0x34] sm:$0xf]
    %v8736 = vld [vmem:[%s8721 + $0x38] sm:$0xf]
    %v8737 = vld [vmem:[%s8721 + $0x3c] sm:$0xf]
    %v8738 = vld [vmem:[%s8721 + $0x40] sm:$0xf]
    %v8739 = vld [vmem:[%s8721 + $0x44] sm:$0xf]
    %v8740 = vld [vmem:[%s8721 + $0x48] sm:$0xf]
    %v8741 = vld [vmem:[%s8721 + $0x4c] sm:$0xf]
    %v8742 = vld [vmem:[%s8721 + $0x50] sm:$0xf]
    %v8743 = vld [vmem:[%s8721 + $0x54] sm:$0xf]
    %v8744 = vld [vmem:[%s8721 + $0x58] sm:$0xf]
    %v8745 = vld [vmem:[%s8721 + $0x5c] sm:$0xf]
    %v8746 = vpack.c.b16 %v8691, %v8689
    %v8747 = vpack.c.b16 %v8692, %v8690
    %v8748 = vpack.c.b16 %v8695, %v8693
    %v8749 = vpack.c.b16 %v8696, %v8694
    %v8750 = vpack.c.b16 %v8699, %v8697
    %v8751 = vpack.c.b16 %v8700, %v8698
    %v8752 = vpack.c.b16 %v8703, %v8701
    %v8753 = vpack.c.b16 %v8704, %v8702
    %v8754 = vpack.c.b16 %v8707, %v8705
    %v8755 = vpack.c.b16 %v8708, %v8706
    %v8756 = vpack.c.b16 %v8711, %v8709
    %v8757 = vpack.c.b16 %v8712, %v8710
    %v8758 = vpack.c.b16 %v8715, %v8713
    %v8759 = vpack.c.b16 %v8716, %v8714
    %v8760 = vpack.c.b16 %v8719, %v8717
    %v8761 = vpack.c.b16 %v8720, %v8718
    %v8794 = vunpack.c.l.b16 %v8722
    %v8795 = vunpack.c.l.b16 %v8723
    %v8796 = vunpack.c.l.b16 %v8724
    %v8797 = vunpack.c.l.b16 %v8725
    %v8798 = vunpack.c.l.b16 %v8726
    %v8799 = vunpack.c.l.b16 %v8727
    %v8800 = vunpack.c.l.b16 %v8728
    %v8801 = vunpack.c.l.b16 %v8729
    %v8802 = vunpack.c.l.b16 %v8730
    %v8803 = vunpack.c.l.b16 %v8731
    %v8804 = vunpack.c.l.b16 %v8732
    %v8805 = vunpack.c.l.b16 %v8733
    %v8806 = vunpack.c.l.b16 %v8734
    %v8807 = vunpack.c.l.b16 %v8735
    %v8808 = vunpack.c.l.b16 %v8736
    %v8809 = vunpack.c.l.b16 %v8737
    %v8810 = vunpack.c.l.b16 %v8738
    %v8811 = vunpack.c.l.b16 %v8739
    %v8812 = vunpack.c.l.b16 %v8740
    %v8813 = vunpack.c.l.b16 %v8741
    %v8814 = vunpack.c.l.b16 %v8742
    %v8815 = vunpack.c.l.b16 %v8743
    %v8816 = vunpack.c.l.b16 %v8744
    %v8817 = vunpack.c.l.b16 %v8745
    %v8818 = vpack.c.b16 %v8795, %v8794
    %v8819 = vpack.c.b16 %v8797, %v8796
    %v8820 = vpack.c.b16 %v8799, %v8798
    %v8821 = vpack.c.b16 %v8801, %v8800
    %v8822 = vpack.c.b16 %v8803, %v8802
    %v8823 = vpack.c.b16 %v8805, %v8804
    %v8824 = vpack.c.b16 %v8807, %v8806
    %v8825 = vpack.c.b16 %v8809, %v8808
    %v8826 = vpack.c.b16 %v8811, %v8810
    %v8827 = vpack.c.b16 %v8813, %v8812
    %v8828 = vpack.c.b16 %v8815, %v8814
    %v8829 = vpack.c.b16 %v8817, %v8816
    %v8843 = vsel %vm972, %v8747, 0
    %v8846 = vsel %vm972, %v8749, 0
    %v8849 = vsel %vm972, %v8751, 0
    %v8852 = vsel %vm972, %v8753, 0
    %v8855 = vsel %vm972, %v8755, 0
    %v8858 = vsel %vm972, %v8757, 0
    %v8861 = vsel %vm972, %v8759, 0
    %v8864 = vsel %vm972, %v8761, 0
    %8866 = vmatprep.subr.bf16.mxu0 0
    %8867 = vmatpush1.bf16.msra.mxu0 %v8818
    %8868 = vmatprep.subr.bf16.mxu0 0
    %8869 = vmatpush1.bf16.msra.mxu0 %v8819
    %8870 = vmatprep.subr.bf16.mxu0 0
    %8871 = vmatpush1.bf16.msra.mxu0 %v8820
    %8872 = vmatprep.subr.bf16.mxu0 0
    %8873 = vmatpush1.bf16.msra.mxu0 %v8821
    %8874 = vmatprep.subr.bf16.mxu0 0
    %8875 = vmatpush1.bf16.msra.mxu0 %v8822
    %8876 = vmatprep.subr.bf16.mxu0 0
    %8877 = vmatpush1.bf16.msra.mxu0 %v8823
    %8878 = vmatprep.subr.bf16.mxu0 0
    %8879 = vmatpush1.bf16.msra.mxu0 %v8824
    %8880 = vmatprep.subr.bf16.mxu0 0
    %8881 = vmatpush1.bf16.msra.mxu0 %v8825
    %8882 = vmatprep.subr.bf16.mxu0 0
    %8883 = vmatpush1.bf16.msra.mxu0 %v8826
    %8884 = vmatprep.subr.bf16.mxu0 0
    %8885 = vmatpush1.bf16.msra.mxu0 %v8827
    %8886 = vmatprep.subr.bf16.mxu0 0
    %8887 = vmatpush1.bf16.msra.mxu0 %v8828
    %8888 = vmatprep.subr.bf16.mxu0 0
    %8889 = vmatpush1.bf16.msra.mxu0 %v8829
    %8890 = vmatprep.subr.bf16.mxu0 0
    %8891 = vmatpush1.bf16.msra.mxu0 0
    %8892 = vmatprep.subr.bf16.mxu0 0
    %8893 = vmatpush1.bf16.msra.mxu0 0
    %8894 = vmatprep.subr.bf16.mxu0 0
    %8895 = vmatpush1.bf16.msra.mxu0 0
    %8896 = vmatprep.subr.bf16.mxu0 0
    %8897 = vmatpush1.bf16.msra.mxu0 0
    %8898 = vmatprep.mubr.bf16.mxu0 %v8843
    %8899 = vmatmul.mubr.bf16.gmra.mrb[0].mxu0 %v8746
    %v8900 = vpop.f32.mrb[0].mxu0
    %v8901 = vadd.f32 0.0, %v8900
    %v8902 = vpop.f32.mrb[0].mxu0
    %v8903 = vpop.f32.mrb[0].mxu0
    %v8904 = vadd.f32 0.0, %v8903
    %v8905 = vpop.f32.mrb[0].mxu0
    %8906 = vmatprep.mubr.bf16.mxu0 %v8846
    %8907 = vmatmul.mubr.bf16.gmra.mrb[0].mxu0 %v8748
    %v8908 = vpop.f32.mrb[0].mxu0
    %v8909 = vadd.f32 0.0, %v8908
    %v8910 = vpop.f32.mrb[0].mxu0
    %v8911 = vpop.f32.mrb[0].mxu0
    %v8912 = vadd.f32 0.0, %v8911
    %v8913 = vpop.f32.mrb[0].mxu0
    %8914 = vmatprep.mubr.bf16.mxu0 %v8849
    %8915 = vmatmul.mubr.bf16.gmra.mrb[0].mxu0 %v8750
    %v8916 = vpop.f32.mrb[0].mxu0
    %v8917 = vadd.f32 0.0, %v8916
    %v8918 = vpop.f32.mrb[0].mxu0
    %v8919 = vpop.f32.mrb[0].mxu0
    %v8920 = vadd.f32 0.0, %v8919
    %v8921 = vpop.f32.mrb[0].mxu0
    %8922 = vmatprep.mubr.bf16.mxu0 %v8852
    %8923 = vmatmul.mubr.bf16.gmra.mrb[0].mxu0 %v8752
    %v8924 = vpop.f32.mrb[0].mxu0
    %v8925 = vadd.f32 0.0, %v8924
    %v8926 = vpop.f32.mrb[0].mxu0
    %v8927 = vpop.f32.mrb[0].mxu0
    %v8928 = vadd.f32 0.0, %v8927
    %v8929 = vpop.f32.mrb[0].mxu0
    %8930 = vmatprep.mubr.bf16.mxu0 %v8855
    %8931 = vmatmul.mubr.bf16.gmra.mrb[0].mxu0 %v8754
    %v8932 = vpop.f32.mrb[0].mxu0
    %v8933 = vadd.f32 0.0, %v8932
    %v8934 = vpop.f32.mrb[0].mxu0
    %v8935 = vpop.f32.mrb[0].mxu0
    %v8936 = vadd.f32 0.0, %v8935
    %v8937 = vpop.f32.mrb[0].mxu0
    %8938 = vmatprep.mubr.bf16.mxu0 %v8858
    %8939 = vmatmul.mubr.bf16.gmra.mrb[0].mxu0 %v8756
    %v8940 = vpop.f32.mrb[0].mxu0
    %v8941 = vadd.f32 0.0, %v8940
    %v8942 = vpop.f32.mrb[0].mxu0
    %v8943 = vpop.f32.mrb[0].mxu0
    %v8944 = vadd.f32 0.0, %v8943
    %v8945 = vpop.f32.mrb[0].mxu0
    %8946 = vmatprep.mubr.bf16.mxu0 %v8861
    %8947 = vmatmul.mubr.bf16.gmra.mrb[0].mxu0 %v8758
    %v8948 = vpop.f32.mrb[0].mxu0
    %v8949 = vadd.f32 0.0, %v8948
    %v8950 = vpop.f32.mrb[0].mxu0
    %v8951 = vpop.f32.mrb[0].mxu0
    %v8952 = vadd.f32 0.0, %v8951
    %v8953 = vpop.f32.mrb[0].mxu0
    %8954 = vmatprep.mubr.bf16.mxu0 %v8864
    %8955 = vmatmul.mubr.bf16.gmra.mrb[0].mxu0 %v8760
    %v8956 = vpop.f32.mrb[0].mxu0
    %v8957 = vadd.f32 0.0, %v8956
    %v8958 = vpop.f32.mrb[0].mxu0
    %v8959 = vpop.f32.mrb[0].mxu0
    %v8960 = vadd.f32 0.0, %v8959
    %v8961 = vpop.f32.mrb[0].mxu0
    %8962 = vdwg.mxu0
    %v8963 = vpack.c.b16 %v8234, %v8232
    %v8964 = vpack.c.b16 %v8235, %v8233
    %v8965 = vpack.c.b16 %v8238, %v8236
    %v8966 = vpack.c.b16 %v8239, %v8237
    %v8967 = vpack.c.b16 %v8242, %v8240
    %v8968 = vpack.c.b16 %v8243, %v8241
    %v8969 = vpack.c.b16 %v8246, %v8244
    %v8970 = vpack.c.b16 %v8247, %v8245
    %v8971 = vpack.c.b16 %v8250, %v8248
    %v8972 = vpack.c.b16 %v8251, %v8249
    %v8973 = vpack.c.b16 %v8254, %v8252
    %v8974 = vpack.c.b16 %v8255, %v8253
    %v8975 = vpack.c.b16 %v8258, %v8256
    %v8976 = vpack.c.b16 %v8259, %v8257
    %v8977 = vpack.c.b16 %v8262, %v8260
    %v8978 = vpack.c.b16 %v8263, %v8261
    %v9011 = vunpack.c.l.b16 %v8265
    %v9012 = vunpack.c.l.b16 %v8266
    %v9013 = vunpack.c.l.b16 %v8267
    %v9014 = vunpack.c.l.b16 %v8268
    %v9015 = vunpack.c.l.b16 %v8269
    %v9016 = vunpack.c.l.b16 %v8270
    %v9017 = vunpack.c.l.b16 %v8271
    %v9018 = vunpack.c.l.b16 %v8272
    %v9019 = vunpack.c.l.b16 %v8273
    %v9020 = vunpack.c.l.b16 %v8274
    %v9021 = vunpack.c.l.b16 %v8275
    %v9022 = vunpack.c.l.b16 %v8276
    %v9023 = vunpack.c.l.b16 %v8277
    %v9024 = vunpack.c.l.b16 %v8278
    %v9025 = vunpack.c.l.b16 %v8279
    %v9026 = vunpack.c.l.b16 %v8280
    %v9027 = vunpack.c.l.b16 %v8281
    %v9028 = vunpack.c.l.b16 %v8282
    %v9029 = vunpack.c.l.b16 %v8283
    %v9030 = vunpack.c.l.b16 %v8284
    %v9031 = vunpack.c.l.b16 %v8285
    %v9032 = vunpack.c.l.b16 %v8286
    %v9033 = vunpack.c.l.b16 %v8287
    %v9034 = vunpack.c.l.b16 %v8288
    %v9035 = vpack.c.b16 %v9012, %v9011
    %v9036 = vpack.c.b16 %v9014, %v9013
    %v9037 = vpack.c.b16 %v9016, %v9015
    %v9038 = vpack.c.b16 %v9018, %v9017
    %v9039 = vpack.c.b16 %v9020, %v9019
    %v9040 = vpack.c.b16 %v9022, %v9021
    %v9041 = vpack.c.b16 %v9024, %v9023
    %v9042 = vpack.c.b16 %v9026, %v9025
    %v9043 = vpack.c.b16 %v9028, %v9027
    %v9044 = vpack.c.b16 %v9030, %v9029
    %v9045 = vpack.c.b16 %v9032, %v9031
    %v9046 = vpack.c.b16 %v9034, %v9033
    %v9060 = vsel %vm972, %v8964, 0
    %v9063 = vsel %vm972, %v8966, 0
    %v9066 = vsel %vm972, %v8968, 0
    %v9069 = vsel %vm972, %v8970, 0
    %v9072 = vsel %vm972, %v8972, 0
    %v9075 = vsel %vm972, %v8974, 0
    %v9078 = vsel %vm972, %v8976, 0
    %v9081 = vsel %vm972, %v8978, 0
    %9083 = vmatprep.subr.bf16.mxu0 0
    %9084 = vmatpush1.bf16.msra.mxu0 %v9035
    %9085 = vmatprep.subr.bf16.mxu0 0
    %9086 = vmatpush1.bf16.msra.mxu0 %v9036
    %9087 = vmatprep.subr.bf16.mxu0 0
    %9088 = vmatpush1.bf16.msra.mxu0 %v9037
    %9089 = vmatprep.subr.bf16.mxu0 0
    %9090 = vmatpush1.bf16.msra.mxu0 %v9038
    %9091 = vmatprep.subr.bf16.mxu0 0
    %9092 = vmatpush1.bf16.msra.mxu0 %v9039
    %9093 = vmatprep.subr.bf16.mxu0 0
    %9094 = vmatpush1.bf16.msra.mxu0 %v9040
    %9095 = vmatprep.subr.bf16.mxu0 0
    %9096 = vmatpush1.bf16.msra.mxu0 %v9041
    %9097 = vmatprep.subr.bf16.mxu0 0
    %9098 = vmatpush1.bf16.msra.mxu0 %v9042
    %9099 = vmatprep.subr.bf16.mxu0 0
    %9100 = vmatpush1.bf16.msra.mxu0 %v9043
    %9101 = vmatprep.subr.bf16.mxu0 0
    %9102 = vmatpush1.bf16.msra.mxu0 %v9044
    %9103 = vmatprep.subr.bf16.mxu0 0
    %9104 = vmatpush1.bf16.msra.mxu0 %v9045
    %9105 = vmatprep.subr.bf16.mxu0 0
    %9106 = vmatpush1.bf16.msra.mxu0 %v9046
    %9107 = vmatprep.subr.bf16.mxu0 0
    %9108 = vmatpush1.bf16.msra.mxu0 0
    %9109 = vmatprep.subr.bf16.mxu0 0
    %9110 = vmatpush1.bf16.msra.mxu0 0
    %9111 = vmatprep.subr.bf16.mxu0 0
    %9112 = vmatpush1.bf16.msra.mxu0 0
    %9113 = vmatprep.subr.bf16.mxu0 0
    %9114 = vmatpush1.bf16.msra.mxu0 0
    %9115 = vmatprep.mubr.bf16.mxu0 %v9060
    %9116 = vmatmul.mubr.bf16.gmra.mrb[0].mxu0 %v8963
    %v9117 = vpop.f32.mrb[0].mxu0
    %v9118 = vadd.f32 %v8901, %v9117
    %v9119 = vpop.f32.mrb[0].mxu0
    %v9120 = vpop.f32.mrb[0].mxu0
    %v9121 = vadd.f32 %v8904, %v9120
    %v9122 = vpop.f32.mrb[0].mxu0
    %9123 = vmatprep.mubr.bf16.mxu0 %v9063
    %9124 = vmatmul.mubr.bf16.gmra.mrb[0].mxu0 %v8965
    %v9125 = vpop.f32.mrb[0].mxu0
    %v9126 = vadd.f32 %v8909, %v9125
    %v9127 = vpop.f32.mrb[0].mxu0
    %v9128 = vpop.f32.mrb[0].mxu0
    %v9129 = vadd.f32 %v8912, %v9128
    %v9130 = vpop.f32.mrb[0].mxu0
    %9131 = vmatprep.mubr.bf16.mxu0 %v9066
    %9132 = vmatmul.mubr.bf16.gmra.mrb[0].mxu0 %v8967
    %v9133 = vpop.f32.mrb[0].mxu0
    %v9134 = vadd.f32 %v8917, %v9133
    %v9135 = vpop.f32.mrb[0].mxu0
    %v9136 = vpop.f32.mrb[0].mxu0
    %v9137 = vadd.f32 %v8920, %v9136
    %v9138 = vpop.f32.mrb[0].mxu0
    %9139 = vmatprep.mubr.bf16.mxu0 %v9069
    %9140 = vmatmul.mubr.bf16.gmra.mrb[0].mxu0 %v8969
    %v9141 = vpop.f32.mrb[0].mxu0
    %v9142 = vadd.f32 %v8925, %v9141
    %v9143 = vpop.f32.mrb[0].mxu0
    %v9144 = vpop.f32.mrb[0].mxu0
    %v9145 = vadd.f32 %v8928, %v9144
    %v9146 = vpop.f32.mrb[0].mxu0
    %9147 = vmatprep.mubr.bf16.mxu0 %v9072
    %9148 = vmatmul.mubr.bf16.gmra.mrb[0].mxu0 %v8971
    %v9149 = vpop.f32.mrb[0].mxu0
    %v9150 = vadd.f32 %v8933, %v9149
    %v9151 = vpop.f32.mrb[0].mxu0
    %v9152 = vpop.f32.mrb[0].mxu0
    %v9153 = vadd.f32 %v8936, %v9152
    %v9154 = vpop.f32.mrb[0].mxu0
    %9155 = vmatprep.mubr.bf16.mxu0 %v9075
    %9156 = vmatmul.mubr.bf16.gmra.mrb[0].mxu0 %v8973
    %v9157 = vpop.f32.mrb[0].mxu0
    %v9158 = vadd.f32 %v8941, %v9157
    %v9159 = vpop.f32.mrb[0].mxu0
    %v9160 = vpop.f32.mrb[0].mxu0
    %v9161 = vadd.f32 %v8944, %v9160
    %v9162 = vpop.f32.mrb[0].mxu0
    %9163 = vmatprep.mubr.bf16.mxu0 %v9078
    %9164 = vmatmul.mubr.bf16.gmra.mrb[0].mxu0 %v8975
    %v9165 = vpop.f32.mrb[0].mxu0
    %v9166 = vadd.f32 %v8949, %v9165
    %v9167 = vpop.f32.mrb[0].mxu0
    %v9168 = vpop.f32.mrb[0].mxu0
    %v9169 = vadd.f32 %v8952, %v9168
    %v9170 = vpop.f32.mrb[0].mxu0
    %9171 = vmatprep.mubr.bf16.mxu0 %v9081
    %9172 = vmatmul.mubr.bf16.gmra.mrb[0].mxu0 %v8977
    %v9173 = vpop.f32.mrb[0].mxu0
    %v9174 = vadd.f32 %v8957, %v9173
    %v9175 = vpop.f32.mrb[0].mxu0
    %v9176 = vpop.f32.mrb[0].mxu0
    %v9177 = vadd.f32 %v8960, %v9176
    %v9178 = vpop.f32.mrb[0].mxu0
    %9179 = vdwg.mxu0
    %v9180 = vld [vmem:[%s4383] sm:$0xf]
    %v9181 = vld [vmem:[%s4383 + $0x8] sm:$0xf]
    %v9182 = vld [vmem:[%s4383 + $0x10] sm:$0xf]
    %v9183 = vld [vmem:[%s4383 + $0x18] sm:$0xf]
    %v9184 = vld [vmem:[%s4383 + $0x20] sm:$0xf]
    %v9185 = vld [vmem:[%s4383 + $0x28] sm:$0xf]
    %v9186 = vld [vmem:[%s4383 + $0x30] sm:$0xf]
    %v9187 = vld [vmem:[%s4383 + $0x38] sm:$0xf]
    %v9188 = vld [vmem:[%s4383 + $0x50] sm:$0xf]
    %v9189 = vld [vmem:[%s4383 + $0x58] sm:$0xf]
    %v9190 = vld [vmem:[%s4383 + $0x60] sm:$0xf]
    %v9191 = vld [vmem:[%s4383 + $0x68] sm:$0xf]
    %v9192 = vld [vmem:[%s4383 + $0x70] sm:$0xf]
    %v9193 = vld [vmem:[%s4383 + $0x78] sm:$0xf]
    %v9194 = vld [vmem:[%s4383 + $0x80] sm:$0xf]
    %v9195 = vld [vmem:[%s4383 + $0x88] sm:$0xf]
    %v9196 = vld [vmem:[%s4383 + $0x4] sm:$0x1]
    %v9197 = vld [vmem:[%s4383 + $0xc] sm:$0x1]
    %v9198 = vld [vmem:[%s4383 + $0x14] sm:$0x1]
    %v9199 = vld [vmem:[%s4383 + $0x1c] sm:$0x1]
    %v9200 = vld [vmem:[%s4383 + $0x24] sm:$0x1]
    %v9201 = vld [vmem:[%s4383 + $0x2c] sm:$0x1]
    %v9202 = vld [vmem:[%s4383 + $0x34] sm:$0x1]
    %v9203 = vld [vmem:[%s4383 + $0x3c] sm:$0x1]
    %v9204 = vld [vmem:[%s4383 + $0x54] sm:$0x1]
    %v9205 = vld [vmem:[%s4383 + $0x5c] sm:$0x1]
    %v9206 = vld [vmem:[%s4383 + $0x64] sm:$0x1]
    %v9207 = vld [vmem:[%s4383 + $0x6c] sm:$0x1]
    %v9208 = vld [vmem:[%s4383 + $0x74] sm:$0x1]
    %v9209 = vld [vmem:[%s4383 + $0x7c] sm:$0x1]
    %v9210 = vld [vmem:[%s4383 + $0x84] sm:$0x1]
    %v9211 = vld [vmem:[%s4383 + $0x8c] sm:$0x1]
    %v9212 = vld [vmem:[%s4383] sm:$0xe]
    %v9213 = vld [vmem:[%s4383 + $0x8] sm:$0xe]
    %v9214 = vld [vmem:[%s4383 + $0x10] sm:$0xe]
    %v9215 = vld [vmem:[%s4383 + $0x18] sm:$0xe]
    %v9216 = vld [vmem:[%s4383 + $0x20] sm:$0xe]
    %v9217 = vld [vmem:[%s4383 + $0x28] sm:$0xe]
    %v9218 = vld [vmem:[%s4383 + $0x30] sm:$0xe]
    %v9219 = vld [vmem:[%s4383 + $0x38] sm:$0xe]
    %v9220 = vld [vmem:[%s4383 + $0x50] sm:$0xe]
    %v9221 = vld [vmem:[%s4383 + $0x58] sm:$0xe]
    %v9222 = vld [vmem:[%s4383 + $0x60] sm:$0xe]
    %v9223 = vld [vmem:[%s4383 + $0x68] sm:$0xe]
    %v9224 = vld [vmem:[%s4383 + $0x70] sm:$0xe]
    %v9225 = vld [vmem:[%s4383 + $0x78] sm:$0xe]
    %v9226 = vld [vmem:[%s4383 + $0x80] sm:$0xe]
    %v9227 = vld [vmem:[%s4383 + $0x88] sm:$0xe]
    %v9260 = vunpack.c.l.b16 %v9180
    %v9261 = vunpack.c.l.b16 %v9196
    %v9262 = vunpack.c.l.b16 %v9181
    %v9263 = vunpack.c.l.b16 %v9197
    %v9264 = vunpack.c.l.b16 %v9182
    %v9265 = vunpack.c.l.b16 %v9198
    %v9266 = vunpack.c.l.b16 %v9183
    %v9267 = vunpack.c.l.b16 %v9199
    %v9268 = vunpack.c.l.b16 %v9184
    %v9269 = vunpack.c.l.b16 %v9200
    %v9270 = vunpack.c.l.b16 %v9185
    %v9271 = vunpack.c.l.b16 %v9201
    %v9272 = vunpack.c.l.b16 %v9186
    %v9273 = vunpack.c.l.b16 %v9202
    %v9274 = vunpack.c.l.b16 %v9187
    %v9275 = vunpack.c.l.b16 %v9203
    %v9276 = vunpack.c.l.b16 %v9188
    %v9277 = vunpack.c.l.b16 %v9204
    %v9278 = vunpack.c.l.b16 %v9189
    %v9279 = vunpack.c.l.b16 %v9205
    %v9280 = vunpack.c.l.b16 %v9190
    %v9281 = vunpack.c.l.b16 %v9206
    %v9282 = vunpack.c.l.b16 %v9191
    %v9283 = vunpack.c.l.b16 %v9207
    %v9284 = vunpack.c.l.b16 %v9192
    %v9285 = vunpack.c.l.b16 %v9208
    %v9286 = vunpack.c.l.b16 %v9193
    %v9287 = vunpack.c.l.b16 %v9209
    %v9288 = vunpack.c.l.b16 %v9194
    %v9289 = vunpack.c.l.b16 %v9210
    %v9290 = vunpack.c.l.b16 %v9195
    %v9291 = vunpack.c.l.b16 %v9211
    %v9292 = vpack.c.b16 %v9261, %v9260
    %v9293 = vpack.c.b16 %v9263, %v9262
    %v9294 = vpack.c.b16 %v9265, %v9264
    %v9295 = vpack.c.b16 %v9267, %v9266
    %v9296 = vpack.c.b16 %v9269, %v9268
    %v9297 = vpack.c.b16 %v9271, %v9270
    %v9298 = vpack.c.b16 %v9273, %v9272
    %v9299 = vpack.c.b16 %v9275, %v9274
    %v9300 = vpack.c.b16 %v9277, %v9276
    %v9301 = vpack.c.b16 %v9279, %v9278
    %v9302 = vpack.c.b16 %v9281, %v9280
    %v9303 = vpack.c.b16 %v9283, %v9282
    %v9304 = vpack.c.b16 %v9285, %v9284
    %v9305 = vpack.c.b16 %v9287, %v9286
    %v9306 = vpack.c.b16 %v9289, %v9288
    %v9307 = vpack.c.b16 %v9291, %v9290
    %v9309 = vshrl.u32 %v9292, 16
    %v9311 = vshll.u32 %v9292, 16
    %v9313 = vrot.slane %v9311, 1
    %v9314 = vor.u32 %v9309, %v9313
    %v9316 = vshrl.u32 %v9293, 16
    %v9318 = vshll.u32 %v9293, 16
    %v9320 = vrot.slane %v9318, 1
    %v9321 = vor.u32 %v9316, %v9320
    %v9323 = vshrl.u32 %v9294, 16
    %v9325 = vshll.u32 %v9294, 16
    %v9327 = vrot.slane %v9325, 1
    %v9328 = vor.u32 %v9323, %v9327
    %v9330 = vshrl.u32 %v9295, 16
    %v9332 = vshll.u32 %v9295, 16
    %v9334 = vrot.slane %v9332, 1
    %v9335 = vor.u32 %v9330, %v9334
    %v9337 = vshrl.u32 %v9296, 16
    %v9339 = vshll.u32 %v9296, 16
    %v9341 = vrot.slane %v9339, 1
    %v9342 = vor.u32 %v9337, %v9341
    %v9344 = vshrl.u32 %v9297, 16
    %v9346 = vshll.u32 %v9297, 16
    %v9348 = vrot.slane %v9346, 1
    %v9349 = vor.u32 %v9344, %v9348
    %v9351 = vshrl.u32 %v9298, 16
    %v9353 = vshll.u32 %v9298, 16
    %v9355 = vrot.slane %v9353, 1
    %v9356 = vor.u32 %v9351, %v9355
    %v9358 = vshrl.u32 %v9299, 16
    %v9360 = vshll.u32 %v9299, 16
    %v9362 = vrot.slane %v9360, 1
    %v9363 = vor.u32 %v9358, %v9362
    %v9365 = vshrl.u32 %v9300, 16
    %v9367 = vshll.u32 %v9300, 16
    %v9369 = vrot.slane %v9367, 1
    %v9370 = vor.u32 %v9365, %v9369
    %v9372 = vshrl.u32 %v9301, 16
    %v9374 = vshll.u32 %v9301, 16
    %v9376 = vrot.slane %v9374, 1
    %v9377 = vor.u32 %v9372, %v9376
    %v9379 = vshrl.u32 %v9302, 16
    %v9381 = vshll.u32 %v9302, 16
    %v9383 = vrot.slane %v9381, 1
    %v9384 = vor.u32 %v9379, %v9383
    %v9386 = vshrl.u32 %v9303, 16
    %v9388 = vshll.u32 %v9303, 16
    %v9390 = vrot.slane %v9388, 1
    %v9391 = vor.u32 %v9386, %v9390
    %v9393 = vshrl.u32 %v9304, 16
    %v9395 = vshll.u32 %v9304, 16
    %v9397 = vrot.slane %v9395, 1
    %v9398 = vor.u32 %v9393, %v9397
    %v9400 = vshrl.u32 %v9305, 16
    %v9402 = vshll.u32 %v9305, 16
    %v9404 = vrot.slane %v9402, 1
    %v9405 = vor.u32 %v9400, %v9404
    %v9407 = vshrl.u32 %v9306, 16
    %v9409 = vshll.u32 %v9306, 16
    %v9411 = vrot.slane %v9409, 1
    %v9412 = vor.u32 %v9407, %v9411
    %v9414 = vshrl.u32 %v9307, 16
    %v9416 = vshll.u32 %v9307, 16
    %v9418 = vrot.slane %v9416, 1
    %v9419 = vor.u32 %v9414, %v9418
    %9420 = vrot.lane.b32.xlu0 %v9314, 64
    %v9421 = vpop.permute.xlu0 %9420
    %9422 = vrot.lane.b32.xlu0 %v9321, 64
    %v9423 = vpop.permute.xlu0 %9422
    %9424 = vrot.lane.b32.xlu0 %v9328, 64
    %v9425 = vpop.permute.xlu0 %9424
    %9426 = vrot.lane.b32.xlu0 %v9335, 64
    %v9427 = vpop.permute.xlu0 %9426
    %9428 = vrot.lane.b32.xlu0 %v9342, 64
    %v9429 = vpop.permute.xlu0 %9428
    %9430 = vrot.lane.b32.xlu0 %v9349, 64
    %v9431 = vpop.permute.xlu0 %9430
    %9432 = vrot.lane.b32.xlu0 %v9356, 64
    %v9433 = vpop.permute.xlu0 %9432
    %9434 = vrot.lane.b32.xlu0 %v9363, 64
    %v9435 = vpop.permute.xlu0 %9434
    %9436 = vrot.lane.b32.xlu0 %v9370, 64
    %v9437 = vpop.permute.xlu0 %9436
    %9438 = vrot.lane.b32.xlu0 %v9377, 64
    %v9439 = vpop.permute.xlu0 %9438
    %9440 = vrot.lane.b32.xlu0 %v9384, 64
    %v9441 = vpop.permute.xlu0 %9440
    %9442 = vrot.lane.b32.xlu0 %v9391, 64
    %v9443 = vpop.permute.xlu0 %9442
    %9444 = vrot.lane.b32.xlu0 %v9398, 64
    %v9445 = vpop.permute.xlu0 %9444
    %9446 = vrot.lane.b32.xlu0 %v9405, 64
    %v9447 = vpop.permute.xlu0 %9446
    %9448 = vrot.lane.b32.xlu0 %v9412, 64
    %v9449 = vpop.permute.xlu0 %9448
    %9450 = vrot.lane.b32.xlu0 %v9419, 64
    %v9451 = vpop.permute.xlu0 %9450
    %v9468 = vunpack.c.l.b16 %v9212
    %v9469 = vunpack.c.l.b16 %v9213
    %v9470 = vunpack.c.l.b16 %v9214
    %v9471 = vunpack.c.l.b16 %v9215
    %v9472 = vunpack.c.l.b16 %v9216
    %v9473 = vunpack.c.l.b16 %v9217
    %v9474 = vunpack.c.l.b16 %v9218
    %v9475 = vunpack.c.l.b16 %v9219
    %v9476 = vunpack.c.l.b16 %v9220
    %v9477 = vunpack.c.l.b16 %v9221
    %v9478 = vunpack.c.l.b16 %v9222
    %v9479 = vunpack.c.l.b16 %v9223
    %v9480 = vunpack.c.l.b16 %v9224
    %v9481 = vunpack.c.l.b16 %v9225
    %v9482 = vunpack.c.l.b16 %v9226
    %v9483 = vunpack.c.l.b16 %v9227
    %v9484 = vpack.c.b16 %v9261, %v9468
    %v9485 = vpack.c.b16 %v9263, %v9469
    %v9486 = vpack.c.b16 %v9265, %v9470
    %v9487 = vpack.c.b16 %v9267, %v9471
    %v9488 = vpack.c.b16 %v9269, %v9472
    %v9489 = vpack.c.b16 %v9271, %v9473
    %v9490 = vpack.c.b16 %v9273, %v9474
    %v9491 = vpack.c.b16 %v9275, %v9475
    %v9492 = vpack.c.b16 %v9277, %v9476
    %v9493 = vpack.c.b16 %v9279, %v9477
    %v9494 = vpack.c.b16 %v9281, %v9478
    %v9495 = vpack.c.b16 %v9283, %v9479
    %v9496 = vpack.c.b16 %v9285, %v9480
    %v9497 = vpack.c.b16 %v9287, %v9481
    %v9498 = vpack.c.b16 %v9289, %v9482
    %v9499 = vpack.c.b16 %v9291, %v9483
    %v9500 = vrot.slane %v9484, 1
    %v9501 = vrot.slane %v9485, 1
    %v9502 = vrot.slane %v9486, 1
    %v9503 = vrot.slane %v9487, 1
    %v9504 = vrot.slane %v9488, 1
    %v9505 = vrot.slane %v9489, 1
    %v9506 = vrot.slane %v9490, 1
    %v9507 = vrot.slane %v9491, 1
    %v9508 = vrot.slane %v9492, 1
    %v9509 = vrot.slane %v9493, 1
    %v9510 = vrot.slane %v9494, 1
    %v9511 = vrot.slane %v9495, 1
    %v9512 = vrot.slane %v9496, 1
    %v9513 = vrot.slane %v9497, 1
    %v9514 = vrot.slane %v9498, 1
    %v9515 = vrot.slane %v9499, 1
    %v9518 = vsel %vm972, %v9180, %v9421
    %v9521 = vsel %vm972, %v9181, %v9423
    %v9524 = vsel %vm972, %v9182, %v9425
    %v9527 = vsel %vm972, %v9183, %v9427
    %v9530 = vsel %vm972, %v9184, %v9429
    %v9533 = vsel %vm972, %v9185, %v9431
    %v9536 = vsel %vm972, %v9186, %v9433
    %v9539 = vsel %vm972, %v9187, %v9435
    %v9542 = vsel %vm972, %v9188, %v9437
    %v9545 = vsel %vm972, %v9189, %v9439
    %v9548 = vsel %vm972, %v9190, %v9441
    %v9551 = vsel %vm972, %v9191, %v9443
    %v9554 = vsel %vm972, %v9192, %v9445
    %v9557 = vsel %vm972, %v9193, %v9447
    %v9560 = vsel %vm972, %v9194, %v9449
    %v9563 = vsel %vm972, %v9195, %v9451
    %v9580 = vunpack.c.l.b16 %v9518
    %v9581 = vunpack.c.l.b16 %v9500
    %v9582 = vunpack.c.l.b16 %v9521
    %v9583 = vunpack.c.l.b16 %v9501
    %v9584 = vunpack.c.l.b16 %v9524
    %v9585 = vunpack.c.l.b16 %v9502
    %v9586 = vunpack.c.l.b16 %v9527
    %v9587 = vunpack.c.l.b16 %v9503
    %v9588 = vunpack.c.l.b16 %v9530
    %v9589 = vunpack.c.l.b16 %v9504
    %v9590 = vunpack.c.l.b16 %v9533
    %v9591 = vunpack.c.l.b16 %v9505
    %v9592 = vunpack.c.l.b16 %v9536
    %v9593 = vunpack.c.l.b16 %v9506
    %v9594 = vunpack.c.l.b16 %v9539
    %v9595 = vunpack.c.l.b16 %v9507
    %v9596 = vunpack.c.l.b16 %v9542
    %v9597 = vunpack.c.l.b16 %v9508
    %v9598 = vunpack.c.l.b16 %v9545
    %v9599 = vunpack.c.l.b16 %v9509
    %v9600 = vunpack.c.l.b16 %v9548
    %v9601 = vunpack.c.l.b16 %v9510
    %v9602 = vunpack.c.l.b16 %v9551
    %v9603 = vunpack.c.l.b16 %v9511
    %v9604 = vunpack.c.l.b16 %v9554
    %v9605 = vunpack.c.l.b16 %v9512
    %v9606 = vunpack.c.l.b16 %v9557
    %v9607 = vunpack.c.l.b16 %v9513
    %v9608 = vunpack.c.l.b16 %v9560
    %v9609 = vunpack.c.l.b16 %v9514
    %v9610 = vunpack.c.l.b16 %v9563
    %v9611 = vunpack.c.l.b16 %v9515
    %s9612 = scalar_lea.vmem %s1, 1056
    %v9613 = vld [vmem:[%s9612] sm:$0xf]
    %v9614 = vld [vmem:[%s9612 + $0x4] sm:$0xf]
    %v9615 = vld [vmem:[%s9612 + $0x8] sm:$0xf]
    %v9616 = vld [vmem:[%s9612 + $0xc] sm:$0xf]
    %v9617 = vld [vmem:[%s9612 + $0x10] sm:$0xf]
    %v9618 = vld [vmem:[%s9612 + $0x14] sm:$0xf]
    %v9619 = vld [vmem:[%s9612 + $0x18] sm:$0xf]
    %v9620 = vld [vmem:[%s9612 + $0x1c] sm:$0xf]
    %v9621 = vld [vmem:[%s9612 + $0x20] sm:$0xf]
    %v9622 = vld [vmem:[%s9612 + $0x24] sm:$0xf]
    %v9623 = vld [vmem:[%s9612 + $0x28] sm:$0xf]
    %v9624 = vld [vmem:[%s9612 + $0x2c] sm:$0xf]
    %v9625 = vld [vmem:[%s9612 + $0x30] sm:$0xf]
    %v9626 = vld [vmem:[%s9612 + $0x34] sm:$0xf]
    %v9627 = vld [vmem:[%s9612 + $0x38] sm:$0xf]
    %v9628 = vld [vmem:[%s9612 + $0x3c] sm:$0xf]
    %v9629 = vld [vmem:[%s9612 + $0x40] sm:$0xf]
    %v9630 = vld [vmem:[%s9612 + $0x44] sm:$0xf]
    %v9631 = vld [vmem:[%s9612 + $0x48] sm:$0xf]
    %v9632 = vld [vmem:[%s9612 + $0x4c] sm:$0xf]
    %v9633 = vld [vmem:[%s9612 + $0x50] sm:$0xf]
    %v9634 = vld [vmem:[%s9612 + $0x54] sm:$0xf]
    %v9635 = vld [vmem:[%s9612 + $0x58] sm:$0xf]
    %v9636 = vld [vmem:[%s9612 + $0x5c] sm:$0xf]
    %v9637 = vpack.c.b16 %v9582, %v9580
    %v9638 = vpack.c.b16 %v9583, %v9581
    %v9639 = vpack.c.b16 %v9586, %v9584
    %v9640 = vpack.c.b16 %v9587, %v9585
    %v9641 = vpack.c.b16 %v9590, %v9588
    %v9642 = vpack.c.b16 %v9591, %v9589
    %v9643 = vpack.c.b16 %v9594, %v9592
    %v9644 = vpack.c.b16 %v9595, %v9593
    %v9645 = vpack.c.b16 %v9598, %v9596
    %v9646 = vpack.c.b16 %v9599, %v9597
    %v9647 = vpack.c.b16 %v9602, %v9600
    %v9648 = vpack.c.b16 %v9603, %v9601
    %v9649 = vpack.c.b16 %v9606, %v9604
    %v9650 = vpack.c.b16 %v9607, %v9605
    %v9651 = vpack.c.b16 %v9610, %v9608
    %v9652 = vpack.c.b16 %v9611, %v9609
    %v9685 = vunpack.c.l.b16 %v9613
    %v9686 = vunpack.c.l.b16 %v9614
    %v9687 = vunpack.c.l.b16 %v9615
    %v9688 = vunpack.c.l.b16 %v9616
    %v9689 = vunpack.c.l.b16 %v9617
    %v9690 = vunpack.c.l.b16 %v9618
    %v9691 = vunpack.c.l.b16 %v9619
    %v9692 = vunpack.c.l.b16 %v9620
    %v9693 = vunpack.c.l.b16 %v9621
    %v9694 = vunpack.c.l.b16 %v9622
    %v9695 = vunpack.c.l.b16 %v9623
    %v9696 = vunpack.c.l.b16 %v9624
    %v9697 = vunpack.c.l.b16 %v9625
    %v9698 = vunpack.c.l.b16 %v9626
    %v9699 = vunpack.c.l.b16 %v9627
    %v9700 = vunpack.c.l.b16 %v9628
    %v9701 = vunpack.c.l.b16 %v9629
    %v9702 = vunpack.c.l.b16 %v9630
    %v9703 = vunpack.c.l.b16 %v9631
    %v9704 = vunpack.c.l.b16 %v9632
    %v9705 = vunpack.c.l.b16 %v9633
    %v9706 = vunpack.c.l.b16 %v9634
    %v9707 = vunpack.c.l.b16 %v9635
    %v9708 = vunpack.c.l.b16 %v9636
    %v9709 = vpack.c.b16 %v9686, %v9685
    %v9710 = vpack.c.b16 %v9688, %v9687
    %v9711 = vpack.c.b16 %v9690, %v9689
    %v9712 = vpack.c.b16 %v9692, %v9691
    %v9713 = vpack.c.b16 %v9694, %v9693
    %v9714 = vpack.c.b16 %v9696, %v9695
    %v9715 = vpack.c.b16 %v9698, %v9697
    %v9716 = vpack.c.b16 %v9700, %v9699
    %v9717 = vpack.c.b16 %v9702, %v9701
    %v9718 = vpack.c.b16 %v9704, %v9703
    %v9719 = vpack.c.b16 %v9706, %v9705
    %v9720 = vpack.c.b16 %v9708, %v9707
    %v9734 = vsel %vm972, %v9638, 0
    %v9737 = vsel %vm972, %v9640, 0
    %v9740 = vsel %vm972, %v9642, 0
    %v9743 = vsel %vm972, %v9644, 0
    %v9746 = vsel %vm972, %v9646, 0
    %v9749 = vsel %vm972, %v9648, 0
    %v9752 = vsel %vm972, %v9650, 0
    %v9755 = vsel %vm972, %v9652, 0
    %9757 = vmatprep.subr.bf16.mxu0 0
    %9758 = vmatpush1.bf16.msra.mxu0 %v9709
    %9759 = vmatprep.subr.bf16.mxu0 0
    %9760 = vmatpush1.bf16.msra.mxu0 %v9710
    %9761 = vmatprep.subr.bf16.mxu0 0
    %9762 = vmatpush1.bf16.msra.mxu0 %v9711
    %9763 = vmatprep.subr.bf16.mxu0 0
    %9764 = vmatpush1.bf16.msra.mxu0 %v9712
    %9765 = vmatprep.subr.bf16.mxu0 0
    %9766 = vmatpush1.bf16.msra.mxu0 %v9713
    %9767 = vmatprep.subr.bf16.mxu0 0
    %9768 = vmatpush1.bf16.msra.mxu0 %v9714
    %9769 = vmatprep.subr.bf16.mxu0 0
    %9770 = vmatpush1.bf16.msra.mxu0 %v9715
    %9771 = vmatprep.subr.bf16.mxu0 0
    %9772 = vmatpush1.bf16.msra.mxu0 %v9716
    %9773 = vmatprep.subr.bf16.mxu0 0
    %9774 = vmatpush1.bf16.msra.mxu0 %v9717
    %9775 = vmatprep.subr.bf16.mxu0 0
    %9776 = vmatpush1.bf16.msra.mxu0 %v9718
    %9777 = vmatprep.subr.bf16.mxu0 0
    %9778 = vmatpush1.bf16.msra.mxu0 %v9719
    %9779 = vmatprep.subr.bf16.mxu0 0
    %9780 = vmatpush1.bf16.msra.mxu0 %v9720
    %9781 = vmatprep.subr.bf16.mxu0 0
    %9782 = vmatpush1.bf16.msra.mxu0 0
    %9783 = vmatprep.subr.bf16.mxu0 0
    %9784 = vmatpush1.bf16.msra.mxu0 0
    %9785 = vmatprep.subr.bf16.mxu0 0
    %9786 = vmatpush1.bf16.msra.mxu0 0
    %9787 = vmatprep.subr.bf16.mxu0 0
    %9788 = vmatpush1.bf16.msra.mxu0 0
    %9789 = vmatprep.mubr.bf16.mxu0 %v9734
    %9790 = vmatmul.mubr.bf16.gmra.mrb[0].mxu0 %v9637
    %v9791 = vpop.f32.mrb[0].mxu0
    %v9792 = vadd.f32 0.0, %v9791
    %v9793 = vpop.f32.mrb[0].mxu0
    %v9794 = vpop.f32.mrb[0].mxu0
    %v9795 = vadd.f32 0.0, %v9794
    %v9796 = vpop.f32.mrb[0].mxu0
    %9797 = vmatprep.mubr.bf16.mxu0 %v9737
    %9798 = vmatmul.mubr.bf16.gmra.mrb[0].mxu0 %v9639
    %v9799 = vpop.f32.mrb[0].mxu0
    %v9800 = vadd.f32 0.0, %v9799
    %v9801 = vpop.f32.mrb[0].mxu0
    %v9802 = vpop.f32.mrb[0].mxu0
    %v9803 = vadd.f32 0.0, %v9802
    %v9804 = vpop.f32.mrb[0].mxu0
    %9805 = vmatprep.mubr.bf16.mxu0 %v9740
    %9806 = vmatmul.mubr.bf16.gmra.mrb[0].mxu0 %v9641
    %v9807 = vpop.f32.mrb[0].mxu0
    %v9808 = vadd.f32 0.0, %v9807
    %v9809 = vpop.f32.mrb[0].mxu0
    %v9810 = vpop.f32.mrb[0].mxu0
    %v9811 = vadd.f32 0.0, %v9810
    %v9812 = vpop.f32.mrb[0].mxu0
    %9813 = vmatprep.mubr.bf16.mxu0 %v9743
    %9814 = vmatmul.mubr.bf16.gmra.mrb[0].mxu0 %v9643
    %v9815 = vpop.f32.mrb[0].mxu0
    %v9816 = vadd.f32 0.0, %v9815
    %v9817 = vpop.f32.mrb[0].mxu0
    %v9818 = vpop.f32.mrb[0].mxu0
    %v9819 = vadd.f32 0.0, %v9818
    %v9820 = vpop.f32.mrb[0].mxu0
    %9821 = vmatprep.mubr.bf16.mxu0 %v9746
    %9822 = vmatmul.mubr.bf16.gmra.mrb[0].mxu0 %v9645
    %v9823 = vpop.f32.mrb[0].mxu0
    %v9824 = vadd.f32 0.0, %v9823
    %v9825 = vpop.f32.mrb[0].mxu0
    %v9826 = vpop.f32.mrb[0].mxu0
    %v9827 = vadd.f32 0.0, %v9826
    %v9828 = vpop.f32.mrb[0].mxu0
    %9829 = vmatprep.mubr.bf16.mxu0 %v9749
    %9830 = vmatmul.mubr.bf16.gmra.mrb[0].mxu0 %v9647
    %v9831 = vpop.f32.mrb[0].mxu0
    %v9832 = vadd.f32 0.0, %v9831
    %v9833 = vpop.f32.mrb[0].mxu0
    %v9834 = vpop.f32.mrb[0].mxu0
    %v9835 = vadd.f32 0.0, %v9834
    %v9836 = vpop.f32.mrb[0].mxu0
    %9837 = vmatprep.mubr.bf16.mxu0 %v9752
    %9838 = vmatmul.mubr.bf16.gmra.mrb[0].mxu0 %v9649
    %v9839 = vpop.f32.mrb[0].mxu0
    %v9840 = vadd.f32 0.0, %v9839
    %v9841 = vpop.f32.mrb[0].mxu0
    %v9842 = vpop.f32.mrb[0].mxu0
    %v9843 = vadd.f32 0.0, %v9842
    %v9844 = vpop.f32.mrb[0].mxu0
    %9845 = vmatprep.mubr.bf16.mxu0 %v9755
    %9846 = vmatmul.mubr.bf16.gmra.mrb[0].mxu0 %v9651
    %v9847 = vpop.f32.mrb[0].mxu0
    %v9848 = vadd.f32 0.0, %v9847
    %v9849 = vpop.f32.mrb[0].mxu0
    %v9850 = vpop.f32.mrb[0].mxu0
    %v9851 = vadd.f32 0.0, %v9850
    %v9852 = vpop.f32.mrb[0].mxu0
    %9853 = vdwg.mxu0
    %v9854 = vadd.f32 %v9118, %v9792
    %v9855 = vadd.f32 %v9121, %v9795
    %v9856 = vadd.f32 %v9126, %v9800
    %v9857 = vadd.f32 %v9129, %v9803
    %v9858 = vadd.f32 %v9134, %v9808
    %v9859 = vadd.f32 %v9137, %v9811
    %v9860 = vadd.f32 %v9142, %v9816
    %v9861 = vadd.f32 %v9145, %v9819
    %v9862 = vadd.f32 %v9150, %v9824
    %v9863 = vadd.f32 %v9153, %v9827
    %v9864 = vadd.f32 %v9158, %v9832
    %v9865 = vadd.f32 %v9161, %v9835
    %v9866 = vadd.f32 %v9166, %v9840
    %v9867 = vadd.f32 %v9169, %v9843
    %v9868 = vadd.f32 %v9174, %v9848
    %v9869 = vadd.f32 %v9177, %v9851
    %s9870 = scalar_lea.vmem %s2, 3
    %v9871 = vld [vmem:[%s9870] sm:$0x1]
    %v9873 = vlaneseq
    %v9874 = vshrl.u32 %v9873, 7
    %v9875 = vsub.s32 0, %v9874
    %v9876 = vrot.slane %v9871, %v9875
    %v9878 = vadd.f32 %v9854, %v9876
    %v9879 = vadd.f32 %v9855, %v9876
    %v9880 = vadd.f32 %v9856, %v9876
    %v9881 = vadd.f32 %v9857, %v9876
    %v9882 = vadd.f32 %v9858, %v9876
    %v9883 = vadd.f32 %v9859, %v9876
    %v9884 = vadd.f32 %v9860, %v9876
    %v9885 = vadd.f32 %v9861, %v9876
    %v9886 = vadd.f32 %v9862, %v9876
    %v9887 = vadd.f32 %v9863, %v9876
    %v9888 = vadd.f32 %v9864, %v9876
    %v9889 = vadd.f32 %v9865, %v9876
    %v9890 = vadd.f32 %v9866, %v9876
    %v9891 = vadd.f32 %v9867, %v9876
    %v9892 = vadd.f32 %v9868, %v9876
    %v9893 = vadd.f32 %v9869, %v9876
    %v9894 = vadd.f32 %v9878, %v281
    %v9895 = vadd.f32 %v9879, %v282
    %v9896 = vadd.f32 %v9880, %v283
    %v9897 = vadd.f32 %v9881, %v284
    %v9898 = vadd.f32 %v9882, %v285
    %v9899 = vadd.f32 %v9883, %v286
    %v9900 = vadd.f32 %v9884, %v287
    %v9901 = vadd.f32 %v9885, %v288
    %v9902 = vadd.f32 %v9886, %v289
    %v9903 = vadd.f32 %v9887, %v290
    %v9904 = vadd.f32 %v9888, %v291
    %v9905 = vadd.f32 %v9889, %v292
    %v9906 = vadd.f32 %v9890, %v293
    %v9907 = vadd.f32 %v9891, %v294
    %v9908 = vadd.f32 %v9892, %v295
    %v9909 = vadd.f32 %v9893, %v296
    %9910 = vst.msk [vmem:[#allocation4] sm:$0xff] %vm972, %v9894
    %9911 = vst.msk [vmem:[#allocation4 + $0x8] sm:$0xff] %vm972, %v9895
    %9912 = vst.msk [vmem:[#allocation4 + $0x10] sm:$0xff] %vm972, %v9896
    %9913 = vst.msk [vmem:[#allocation4 + $0x18] sm:$0xff] %vm972, %v9897
    %9914 = vst.msk [vmem:[#allocation4 + $0x20] sm:$0xff] %vm972, %v9898
    %9915 = vst.msk [vmem:[#allocation4 + $0x28] sm:$0xff] %vm972, %v9899
    %9916 = vst.msk [vmem:[#allocation4 + $0x30] sm:$0xff] %vm972, %v9900
    %9917 = vst.msk [vmem:[#allocation4 + $0x38] sm:$0xff] %vm972, %v9901
    %9918 = vst.msk [vmem:[#allocation4 + $0x40] sm:$0xff] %vm972, %v9902
    %9919 = vst.msk [vmem:[#allocation4 + $0x48] sm:$0xff] %vm972, %v9903
    %9920 = vst.msk [vmem:[#allocation4 + $0x50] sm:$0xff] %vm972, %v9904
    %9921 = vst.msk [vmem:[#allocation4 + $0x58] sm:$0xff] %vm972, %v9905
    %9922 = vst.msk [vmem:[#allocation4 + $0x60] sm:$0xff] %vm972, %v9906
    %9923 = vst.msk [vmem:[#allocation4 + $0x68] sm:$0xff] %vm972, %v9907
    %9924 = vst.msk [vmem:[#allocation4 + $0x70] sm:$0xff] %vm972, %v9908
    %9925 = vst.msk [vmem:[#allocation4 + $0x78] sm:$0xff] %vm972, %v9909
    // Predicated region
    $region14: #{basic_group.1} parent=1 // pred_check
      _
    $region15: #{basic_group.1} parent=1 // pred_check_branch
      %9927 = sbr.rel (0) target = $region17
    $region16: #{basic_group.1} parent=1 // pred_region
      %s9929 = ssub.s32 2048, 2048
      %9930 = vsyncadd [#allocation5], %s9929
      %s9931 = sshll.u32 [#allocation4], 4
      %s9932 = int_to_ptr.vmem [resolvable:$true] %s9931
      %9937 = dma.vmem_to_hbm [thread:$0]  %s9932, 2048, %s3, [#allocation5], 128, 128, 8
    $region17: #{basic_group.1} parent=1 // pred_fallthru
      _
    // Predicated region
    $region18: #{basic_group.1} parent=1 // pred_check
      _
    $region19: #{basic_group.1} parent=1 // pred_check_branch
      %9939 = sbr.rel (0) target = $region21
    $region20: #{basic_group.1} parent=1 // pred_region
      %9940 = dma.done [#allocation5], 2048
    $region21: #{basic_group.1} parent=1 // pred_fallthru
      _
    %9941 = vsyncpa [#allocation5], 1

</llo_original>
